<compile_context>
chip_gen: v7x
topology: tpu7x:2x2x1
jax: 0.10.0
libtpu: 0.0.40
codegen_flags: <defaults>
</compile_context>

<pallas_src>
import functools

import jax
import jax.numpy as jnp
from jax import lax
from jax.experimental import pallas as pl
from jax.experimental.pallas import tpu as pltpu

EPS = 1e-5                      # nn.BatchNorm2d default
LANE = 128                      # channel (lane) padding grain
MM_TILE = 256                   # matmul row tile (good for v6e 256x256 MXU, fine on v5e/v7x)
EW_TILE = 512                   # elementwise / pooling row tile
VMEM_LIMIT = 48 * 1024 * 1024   # leaves headroom under v7x's 64 MiB physical VMEM


def _round_up(x, m):
    return ((x + m - 1) // m) * m


def _cpad(c):
    return _round_up(c, LANE)


def _tile(m, pref):
    """Row tile: `pref` when m is big enough, else the whole (8-aligned) m.  Returns (tm, m_padded)."""
    tm = pref if m >= pref else _round_up(max(m, 1), 8)
    return tm, _round_up(m, tm)


def _ew_pick(mp):
    """Largest elementwise tile <= EW_TILE that divides mp (mp is always a multiple of 8)."""
    if mp <= EW_TILE:
        return mp
    for t in (EW_TILE, 256, 128, 64, 32, 16, 8):
        if mp % t == 0:
            return t
    return 8


def _cparams():
    return pltpu.CompilerParams(dimension_semantics=("parallel",),
                                vmem_limit_bytes=VMEM_LIMIT)


# --------------------------------------------------------------------------
# Pallas kernels
# --------------------------------------------------------------------------

def _mm_stats_kernel(x_ref, w_ref, y_ref, st_ref):
    """y = x @ w on the MXU; rows 0/1 of st get the per-tile channel sum / sum-of-squares."""
    y = jnp.dot(x_ref[...], w_ref[...], preferred_element_type=jnp.float32)
    y_ref[...] = y
    ssum = jnp.sum(y, axis=0, keepdims=True)           # (1, C)
    ssq = jnp.sum(y * y, axis=0, keepdims=True)        # (1, C)
    c = y.shape[1]
    rows = lax.broadcasted_iota(jnp.int32, (8, c), 0)
    st_ref[...] = jnp.where(rows == 0, jnp.broadcast_to(ssum, (8, c)),
                            jnp.where(rows == 1, jnp.broadcast_to(ssq, (8, c)), 0.0))


def pallas_matmul_stats(x, w, tm):
    """x: (Mp, K), w: (K, C) -> (y: (Mp, C), stats: (Mp//tm * 8, C))."""
    mp, k = x.shape
    _, c = w.shape
    nt = mp // tm
    return pl.pallas_call(
        _mm_stats_kernel,
        out_shape=(jax.ShapeDtypeStruct((mp, c), jnp.float32),
                   jax.ShapeDtypeStruct((nt * 8, c), jnp.float32)),
        grid=(nt,),
        in_specs=[pl.BlockSpec((tm, k), lambda i: (i, 0)),
                  pl.BlockSpec((k, c), lambda i: (0, 0))],
        out_specs=(pl.BlockSpec((tm, c), lambda i: (i, 0)),
                   pl.BlockSpec((8, c), lambda i: (i, 0))),
        compiler_params=_cparams(),
    )(x, w)


def _affine_kernel(y_ref, s_ref, b_ref, o_ref, *, relu):
    out = y_ref[...] * s_ref[...] + b_ref[...]
    if relu:
        out = jnp.maximum(out, 0.0)
    o_ref[...] = out


def _affine_res_kernel(y_ref, s_ref, b_ref, r_ref, o_ref, *, relu):
    out = y_ref[...] * s_ref[...] + b_ref[...] + r_ref[...]
    if relu:
        out = jnp.maximum(out, 0.0)
    o_ref[...] = out


def pallas_affine(y, scale, bias, residual=None, relu=False):
    """out = y * scale + bias (+ residual) (+ ReLU), per-channel scale/bias, tiled over rows."""
    mp, c = y.shape
    te = _ew_pick(mp)
    grid = (mp // te,)
    scale = scale.reshape(1, c).astype(jnp.float32)
    bias = bias.reshape(1, c).astype(jnp.float32)
    tile_spec = pl.BlockSpec((te, c), lambda i: (i, 0))
    vec_spec = pl.BlockSpec((1, c), lambda i: (0, 0))
    if residual is None:
        kern = functools.partial(_affine_kernel, relu=relu)
        in_specs = [tile_spec, vec_spec, vec_spec]
        args = (y, scale, bias)
    else:
        kern = functools.partial(_affine_res_kernel, relu=relu)
        in_specs = [tile_spec, vec_spec, vec_spec, tile_spec]
        args = (y, scale, bias, residual.astype(jnp.float32))
    return pl.pallas_call(
        kern,
        out_shape=jax.ShapeDtypeStruct((mp, c), jnp.float32),
        grid=grid,
        in_specs=in_specs,
        out_specs=tile_spec,
        compiler_params=_cparams(),
    )(*args)


def _maxpool_kernel(p_ref, o_ref):
    o_ref[...] = jnp.max(p_ref[...], axis=0)


def pallas_max_over_taps(patches, tm):
    """patches: (KK, Mp, C) -> elementwise max over the KK pooling taps, (Mp, C). Tiled over rows."""
    kk, mp, c = patches.shape
    return pl.pallas_call(
        _maxpool_kernel,
        out_shape=jax.ShapeDtypeStruct((mp, c), jnp.float32),
        grid=(mp // tm,),
        in_specs=[pl.BlockSpec((kk, tm, c), lambda i: (0, i, 0))],
        out_specs=pl.BlockSpec((tm, c), lambda i: (i, 0)),
        compiler_params=_cparams(),
    )(patches)


def _avgpool_kernel(x_ref, o_ref):
    o_ref[...] = jnp.mean(x_ref[...], axis=1)


def pallas_avgpool(x):
    """x: (Np, HW, C), Np a multiple of 8 -> per-image spatial mean, (Np, C)."""
    np_, hw, c = x.shape
    tb = 8
    return pl.pallas_call(
        _avgpool_kernel,
        out_shape=jax.ShapeDtypeStruct((np_, c), jnp.float32),
        grid=(np_ // tb,),
        in_specs=[pl.BlockSpec((tb, hw, c), lambda i: (i, 0, 0))],
        out_specs=pl.BlockSpec((tb, c), lambda i: (i, 0)),
        compiler_params=_cparams(),
    )(x)


def _matmul_bias_kernel(x_ref, w_ref, b_ref, o_ref):
    o_ref[...] = (jnp.dot(x_ref[...], w_ref[...], preferred_element_type=jnp.float32)
                  + b_ref[...])


def pallas_matmul_bias(x, w, b):
    """Fused FC: x @ w + b (bias folded into the matmul kernel)."""
    m, k = x.shape
    _, n = w.shape
    return pl.pallas_call(
        _matmul_bias_kernel,
        out_shape=jax.ShapeDtypeStruct((m, n), jnp.float32),
        grid=(1,),
        in_specs=[pl.BlockSpec((m, k), lambda i: (0, 0)),
                  pl.BlockSpec((k, n), lambda i: (0, 0)),
                  pl.BlockSpec((1, n), lambda i: (0, 0))],
        out_specs=pl.BlockSpec((m, n), lambda i: (0, 0)),
        compiler_params=_cparams(),
    )(x, w, b.reshape(1, n))


# --------------------------------------------------------------------------
# Conv / BN / pooling wrappers (im2col & parameter plumbing = thin JAX glue)
# --------------------------------------------------------------------------

def _im2col(x, kh, kw, stride, padding, pad_value=0.0):
    """x: (N, H, W, C) NHWC -> ((N*Ho*Wo, kh*kw*C), (N, Ho, Wo)).  Tap order = (kh, kw, c)."""
    n, h, w, c = x.shape
    ho = (h + 2 * padding - kh) // stride + 1
    wo = (w + 2 * padding - kw) // stride + 1
    xp = jnp.pad(x, ((0, 0), (padding, padding), (padding, padding), (0, 0)),
                 constant_values=pad_value)
    cols = []
    for ih in range(kh):
        for iw in range(kw):
            cols.append(xp[:, ih:ih + (ho - 1) * stride + 1:stride,
                           iw:iw + (wo - 1) * stride + 1:stride, :])
    patches = jnp.concatenate(cols, axis=-1)
    return patches.reshape(n * ho * wo, kh * kw * c), (n, ho, wo)


# TODO(synk): the 3x3 convs still materialize an im2col patch matrix in HBM; a fully
# tap-accumulated conv (shifted per-tap BlockSpec windows + VMEM accumulator) would cut conv
# input traffic ~9x, but the stride-2 convs need strided windows that BlockSpec cannot express.
def conv_bn_act(x, w, gamma, beta, stride, padding, relu, residual=None):
    """Conv (no bias) + BatchNorm (train-mode batch stats) [+ residual] [+ ReLU]."""
    kh, kw, cin, cout = w.shape
    patches, (n, ho, wo) = _im2col(x, kh, kw, stride, padding)
    m, k = patches.shape
    # Pad the contraction dim to a sublane multiple.  3x3 convs already have K a multiple of 128
    # (channels are lane-padded); this mainly catches conv1's K = 7*7*3 = 147.
    kp = _round_up(k, 8)
    wmat = w.reshape(k, cout).astype(jnp.float32)
    if kp != k:
        patches = jnp.pad(patches, ((0, 0), (0, kp - k)))
        wmat = jnp.pad(wmat, ((0, kp - k), (0, 0)))
    tm, mp = _tile(m, MM_TILE)
    if mp != m:
        patches = jnp.pad(patches, ((0, mp - m), (0, 0)))

    # Fused matmul + per-tile BN statistics (single pass over the conv output).
    y, stats = pallas_matmul_stats(patches.astype(jnp.float32), wmat, tm)

    st = stats.reshape(mp // tm, 8, cout)
    s = jnp.sum(st[:, 0, :], axis=0)
    sq = jnp.sum(st[:, 1, :], axis=0)
    mean = s / m                                   # padded rows are zero -> harmless
    var = jnp.maximum(sq / m - mean * mean, 0.0)   # biased variance (PyTorch train mode), clamped
    scale = gamma / jnp.sqrt(var + EPS)            # padded channels: gamma = 0 -> scale = 0
    bias = beta - mean * scale

    res = None
    if residual is not None:
        res = residual.reshape(m, cout)
        if mp != m:
            res = jnp.pad(res, ((0, mp - m), (0, 0)))

    out = pallas_affine(y, scale, bias, residual=res, relu=relu)
    return out[:m].reshape(n, ho, wo, cout)


def maxpool3x3_s2(x):
    """nn.MaxPool2d(kernel_size=3, stride=2, padding=1) on NHWC."""
    n, h, w, c = x.shape
    ho = (h + 2 - 3) // 2 + 1
    wo = (w + 2 - 3) // 2 + 1
    xp = jnp.pad(x, ((0, 0), (1, 1), (1, 1), (0, 0)), constant_values=-jnp.inf)
    cols = [xp[:, ih:ih + (ho - 1) * 2 + 1:2, iw:iw + (wo - 1) * 2 + 1:2, :]
            .reshape(n * ho * wo, c)
            for ih in range(3) for iw in range(3)]
    patches = jnp.stack(cols, axis=0).astype(jnp.float32)          # (9, M, C)
    m = n * ho * wo
    tm, mp = _tile(m, EW_TILE)
    if mp != m:
        patches = jnp.pad(patches, ((0, 0), (0, mp - m), (0, 0)))
    out = pallas_max_over_taps(patches, tm)
    return out[:m].reshape(n, ho, wo, c)


# --------------------------------------------------------------------------
# ResNet_ImageNet (depth=18 / 34 path, BasicBlock) in JAX/Pallas
# --------------------------------------------------------------------------

def init_params(key, cfg, blocks, num_classes):
    keys = iter(jax.random.split(key, 512))

    def conv_w(cin, cout, k, pad_in=True):
        cin_p = _cpad(cin) if pad_in else cin
        cout_p = _cpad(cout)
        w = 0.1 * jax.random.normal(next(keys), (k, k, cin, cout), jnp.float32)
        return jnp.zeros((k, k, cin_p, cout_p), jnp.float32).at[:, :, :cin, :cout].set(w)

    def bn(c):
        cp = _cpad(c)
        g = 1.0 + 0.1 * jax.random.normal(next(keys), (c,), jnp.float32)
        b = 0.1 * jax.random.normal(next(keys), (c,), jnp.float32)
        return (jnp.zeros((cp,), jnp.float32).at[:c].set(g),
                jnp.zeros((cp,), jnp.float32).at[:c].set(b))

    params = {}
    inplanes = cfg[0]
    params["conv1_w"] = conv_w(3, inplanes, 7, pad_in=False)
    params["conv1_bn"] = bn(inplanes)

    layers = []
    idx = 1
    for li, nb in enumerate(blocks):
        planes = cfg[idx: idx + nb + 1]
        idx += nb + 1
        p1, p2 = planes[0], planes[1]
        # first block of every layer gets a conv1x1 + BN downsample branch, as in the PyTorch code
        layer = [dict(conv1_w=conv_w(inplanes, p1, 3), bn1=bn(p1),
                      conv2_w=conv_w(p1, p2, 3), bn2=bn(p2),
                      ds_w=conv_w(inplanes, p2, 1), ds_bn=bn(p2))]
        inplanes = p2
        later = planes[2:]
        for j in range(1, nb):
            pj = later[j - 1]
            layer.append(dict(conv1_w=conv_w(inplanes, pj, 3), bn1=bn(pj),
                              conv2_w=conv_w(pj, inplanes, 3), bn2=bn(inplanes)))
        layers.append(layer)
    params["layers"] = layers

    fw = 0.1 * jax.random.normal(next(keys), (inplanes, num_classes), jnp.float32)
    fb = 0.01 * jax.random.normal(next(keys), (num_classes,), jnp.float32)
    params["fc_w"] = (jnp.zeros((_cpad(inplanes), _cpad(num_classes)), jnp.float32)
                      .at[:inplanes, :num_classes].set(fw))
    params["fc_b"] = jnp.zeros((_cpad(num_classes),), jnp.float32).at[:num_classes].set(fb)
    return params


def basic_block(x, blk, stride):
    out = conv_bn_act(x, blk["conv1_w"], blk["bn1"][0], blk["bn1"][1],
                      stride=stride, padding=1, relu=True)
    if "ds_w" in blk:
        identity = conv_bn_act(x, blk["ds_w"], blk["ds_bn"][0], blk["ds_bn"][1],
                               stride=stride, padding=0, relu=False)
    else:
        identity = x
    # conv2 + bn2 + residual add + ReLU, with the add/ReLU fused in the Pallas affine kernel
    return conv_bn_act(out, blk["conv2_w"], blk["bn2"][0], blk["bn2"][1],
                       stride=1, padding=1, relu=True, residual=identity)


def resnet_forward(params, x_nchw, num_classes):
    x = jnp.transpose(x_nchw, (0, 2, 3, 1)).astype(jnp.float32)     # NCHW -> NHWC
    x = conv_bn_act(x, params["conv1_w"], params["conv1_bn"][0], params["conv1_bn"][1],
                    stride=2, padding=3, relu=True)
    x = maxpool3x3_s2(x)
    for li, layer in enumerate(params["layers"]):
        for bi, blk in enumerate(layer):
            stride = 2 if (li > 0 and bi == 0) else 1               # static Python ints under jit
            x = basic_block(x, blk, stride)
    n, h, w, c = x.shape
    feat = x.reshape(n, h * w, c)
    np_ = _round_up(n, 8)
    if np_ != n:
        feat = jnp.pad(feat, ((0, np_ - n), (0, 0), (0, 0)))
    pooled = pallas_avgpool(feat)                                   # AdaptiveAvgPool2d((1,1)) + flatten
    logits = pallas_matmul_bias(pooled, params["fc_w"], params["fc_b"])
    return logits[:n, :num_classes]


# TODO(synk): depth=50 (Bottleneck) path is not exercised here; only the default
#             depth=18/34 BasicBlock path of ResNet_ImageNet is built.

if __name__ == "__main__":
    key = jax.random.PRNGKey(0)
    k_param, k_x = jax.random.split(key)

    # Small, cfg-scaled ResNet-18: channels [8,8,8,8,16,16,16,32,32,32,64,64,64], 10 classes.
    cfg = [8, 8, 8, 8, 16, 16, 16, 32, 32, 32, 64, 64, 64]
    blocks = [2, 2, 2, 2]
    num_classes = 10

    params = init_params(k_param, cfg, blocks, num_classes)
    x = jax.random.normal(k_x, (2, 3, 32, 32), jnp.float32)         # NCHW, like the PyTorch module

    fwd = jax.jit(resnet_forward, static_argnums=(2,))
    out = fwd(params, x, num_classes)
    out = jax.block_until_ready(out)
    assert out.shape == (2, num_classes), out.shape
    print("KERNEL_OK")
</pallas_src>

<mosaic_0001>
module attributes {stable_mosaic.version = 11 : i64} {
  func.func @_mm_stats_kernel(%arg0: i32, %arg1: memref<256x152xf32, #tpu.memory_space<vmem>>, %arg2: memref<152x128xf32, #tpu.memory_space<vmem>>, %arg3: memref<256x128xf32, #tpu.memory_space<vmem>>, %arg4: memref<8x128xf32, #tpu.memory_space<vmem>>) attributes {dimension_semantics = [#tpu.dimension_semantics<parallel>], iteration_bounds = array<i64: 2>, scalar_prefetch = 0 : i64, scratch_operands = 0 : i64, tpu.core_type = #tpu.core_type<tc>, window_params = [{transform_indices = @transform_0, window_bounds = array<i64: 256, 152>}, {pipeline_mode = #tpu.pipeline_mode<synchronous>, transform_indices = @transform_1, window_bounds = array<i64: 152, 128>}, {transform_indices = @transform_2, window_bounds = array<i64: 256, 128>}, {transform_indices = @transform_3, window_bounds = array<i64: 8, 128>}]} {
    %c0 = arith.constant 0 : index
    %c0_0 = arith.constant 0 : index
    %0 = vector.load %arg1[%c0, %c0_0] : memref<256x152xf32, #tpu.memory_space<vmem>>, vector<256x152xf32>
    %c0_1 = arith.constant 0 : index
    %c0_2 = arith.constant 0 : index
    %1 = vector.load %arg2[%c0_1, %c0_2] : memref<152x128xf32, #tpu.memory_space<vmem>>, vector<152x128xf32>
    %cst = arith.constant dense<0.000000e+00> : vector<256x128xf32>
    %2 = tpu.matmul %0, %1, %cst {dimension_numbers = #tpu.dot_dimension_numbers<[1], [0], [0], [1], [0, 0, 1, 1], [], []>} : vector<256x152xf32>, vector<152x128xf32>, vector<256x128xf32> -> vector<256x128xf32>
    %c0_3 = arith.constant 0 : index
    %c0_4 = arith.constant 0 : index
    %3 = vector.load %arg3[%c0_3, %c0_4] : memref<256x128xf32, #tpu.memory_space<vmem>>, vector<256x128xf32>
    tpu.vector_store %arg3[%c0_3, %c0_4], %2 {strides = array<i32>} : memref<256x128xf32, #tpu.memory_space<vmem>>, vector<256x128xf32>,
    %cst_5 = arith.constant dense<0.000000e+00> : vector<128xf32>
    %4 = vector.multi_reduction <add>, %2, %cst_5 [0] : vector<256x128xf32> to vector<128xf32>
    %5 = vector.shape_cast %4 : vector<128xf32> to vector<1x128xf32>
    %6 = arith.mulf %2, %2 : vector<256x128xf32>
    %cst_6 = arith.constant dense<0.000000e+00> : vector<128xf32>
    %7 = vector.multi_reduction <add>, %6, %cst_6 [0] : vector<256x128xf32> to vector<128xf32>
    %8 = vector.shape_cast %7 : vector<128xf32> to vector<1x128xf32>
    %9 = tpu.iota {dimensions = array<i32: 0>} : vector<8x128xi32>
    %c0_i32 = arith.constant 0 : i32
    %10 = vector.broadcast %c0_i32 : i32 to vector<8x128xi32>
    %11 = arith.cmpi eq, %9, %10 : vector<8x128xi32>
    %12 = vector.shape_cast %5 : vector<1x128xf32> to vector<1x128xf32>
    %13 = vector.broadcast %12 : vector<1x128xf32> to vector<8x128xf32>
    %c1_i32 = arith.constant 1 : i32
    %14 = vector.broadcast %c1_i32 : i32 to vector<8x128xi32>
    %15 = arith.cmpi eq, %9, %14 : vector<8x128xi32>
    %16 = vector.shape_cast %8 : vector<1x128xf32> to vector<1x128xf32>
    %17 = vector.broadcast %16 : vector<1x128xf32> to vector<8x128xf32>
    %cst_7 = arith.constant 0.000000e+00 : f32
    %18 = vector.broadcast %cst_7 : f32 to vector<8x128xf32>
    %19 = arith.select %15, %17, %18 : vector<8x128xi1>, vector<8x128xf32>
    %20 = arith.select %11, %13, %19 : vector<8x128xi1>, vector<8x128xf32>
    %c0_8 = arith.constant 0 : index
    %c0_9 = arith.constant 0 : index
    %21 = vector.load %arg4[%c0_8, %c0_9] : memref<8x128xf32, #tpu.memory_space<vmem>>, vector<8x128xf32>
    tpu.vector_store %arg4[%c0_8, %c0_9], %20 {strides = array<i32>} : memref<8x128xf32, #tpu.memory_space<vmem>>, vector<8x128xf32>,
    return
  }
  func.func @transform_0(%arg0: i32) -> (i32, i32) {
    %c0_i32 = arith.constant 0 : i32
    %c0_i32_0 = arith.constant 0 : i32
    return %arg0, %c0_i32 : i32, i32
  }
  func.func @transform_1(%arg0: i32) -> (i32, i32) {
    %c0_i32 = arith.constant 0 : i32
    %c0_i32_0 = arith.constant 0 : i32
    %c0_i32_1 = arith.constant 0 : i32
    return %c0_i32, %c0_i32_0 : i32, i32
  }
  func.func @transform_2(%arg0: i32) -> (i32, i32) {
    %c0_i32 = arith.constant 0 : i32
    %c0_i32_0 = arith.constant 0 : i32
    return %arg0, %c0_i32 : i32, i32
  }
  func.func @transform_3(%arg0: i32) -> (i32, i32) {
    %c0_i32 = arith.constant 0 : i32
    %c0_i32_0 = arith.constant 0 : i32
    return %arg0, %c0_i32 : i32, i32
  }
}

module attributes {stable_mosaic.version = 11 : i64} {
  func.func @_affine_kernel(%arg0: i32, %arg1: memref<512x128xf32, #tpu.memory_space<vmem>>, %arg2: memref<1x128xf32, #tpu.memory_space<vmem>>, %arg3: memref<1x128xf32, #tpu.memory_space<vmem>>, %arg4: memref<512x128xf32, #tpu.memory_space<vmem>>) attributes {dimension_semantics = [#tpu.dimension_semantics<parallel>], iteration_bounds = array<i64: 1>, scalar_prefetch = 0 : i64, scratch_operands = 0 : i64, tpu.core_type = #tpu.core_type<tc>, window_params = [{transform_indices = @transform_0, window_bounds = array<i64: 512, 128>}, {pipeline_mode = #tpu.pipeline_mode<synchronous>, transform_indices = @transform_1, window_bounds = array<i64: 1, 128>}, {pipeline_mode = #tpu.pipeline_mode<synchronous>, transform_indices = @transform_2, window_bounds = array<i64: 1, 128>}, {transform_indices = @transform_3, window_bounds = array<i64: 512, 128>}]} {
    %c0 = arith.constant 0 : index
    %c0_0 = arith.constant 0 : index
    %0 = vector.load %arg1[%c0, %c0_0] : memref<512x128xf32, #tpu.memory_space<vmem>>, vector<512x128xf32>
    %c0_1 = arith.constant 0 : index
    %c0_2 = arith.constant 0 : index
    %1 = vector.load %arg2[%c0_1, %c0_2] : memref<1x128xf32, #tpu.memory_space<vmem>>, vector<1x128xf32>
    %2 = vector.broadcast %1 : vector<1x128xf32> to vector<512x128xf32>
    %3 = arith.mulf %0, %2 : vector<512x128xf32>
    %c0_3 = arith.constant 0 : index
    %c0_4 = arith.constant 0 : index
    %4 = vector.load %arg3[%c0_3, %c0_4] : memref<1x128xf32, #tpu.memory_space<vmem>>, vector<1x128xf32>
    %5 = vector.broadcast %4 : vector<1x128xf32> to vector<512x128xf32>
    %6 = arith.addf %3, %5 : vector<512x128xf32>
    %cst = arith.constant 0.000000e+00 : f32
    %7 = vector.broadcast %cst : f32 to vector<512x128xf32>
    %8 = arith.maximumf %6, %7 : vector<512x128xf32>
    %c0_5 = arith.constant 0 : index
    %c0_6 = arith.constant 0 : index
    %9 = vector.load %arg4[%c0_5, %c0_6] : memref<512x128xf32, #tpu.memory_space<vmem>>, vector<512x128xf32>
    tpu.vector_store %arg4[%c0_5, %c0_6], %8 {strides = array<i32>} : memref<512x128xf32, #tpu.memory_space<vmem>>, vector<512x128xf32>,
    return
  }
  func.func @transform_0(%arg0: i32) -> (i32, i32) {
    %c0_i32 = arith.constant 0 : i32
    %c0_i32_0 = arith.constant 0 : i32
    return %arg0, %c0_i32 : i32, i32
  }
  func.func @transform_1(%arg0: i32) -> (i32, i32) {
    %c0_i32 = arith.constant 0 : i32
    %c0_i32_0 = arith.constant 0 : i32
    %c0_i32_1 = arith.constant 0 : i32
    return %c0_i32, %c0_i32_0 : i32, i32
  }
  func.func @transform_2(%arg0: i32) -> (i32, i32) {
    %c0_i32 = arith.constant 0 : i32
    %c0_i32_0 = arith.constant 0 : i32
    %c0_i32_1 = arith.constant 0 : i32
    return %c0_i32, %c0_i32_0 : i32, i32
  }
  func.func @transform_3(%arg0: i32) -> (i32, i32) {
    %c0_i32 = arith.constant 0 : i32
    %c0_i32_0 = arith.constant 0 : i32
    return %arg0, %c0_i32 : i32, i32
  }
}

module attributes {stable_mosaic.version = 11 : i64} {
  func.func @_maxpool_kernel(%arg0: i32, %arg1: memref<9x128x128xf32, #tpu.memory_space<vmem>>, %arg2: memref<128x128xf32, #tpu.memory_space<vmem>>) attributes {dimension_semantics = [#tpu.dimension_semantics<parallel>], iteration_bounds = array<i64: 1>, scalar_prefetch = 0 : i64, scratch_operands = 0 : i64, tpu.core_type = #tpu.core_type<tc>, window_params = [{transform_indices = @transform_0, window_bounds = array<i64: 9, 128, 128>}, {transform_indices = @transform_1, window_bounds = array<i64: 128, 128>}]} {
    %c0 = arith.constant 0 : index
    %c0_0 = arith.constant 0 : index
    %c0_1 = arith.constant 0 : index
    %0 = vector.load %arg1[%c0, %c0_0, %c0_1] : memref<9x128x128xf32, #tpu.memory_space<vmem>>, vector<9x128x128xf32>
    %cst = arith.constant dense<0xFF800000> : vector<128x128xf32>
    %1 = vector.multi_reduction <maximumf>, %0, %cst [0] : vector<9x128x128xf32> to vector<128x128xf32>
    %c0_2 = arith.constant 0 : index
    %c0_3 = arith.constant 0 : index
    %2 = vector.load %arg2[%c0_2, %c0_3] : memref<128x128xf32, #tpu.memory_space<vmem>>, vector<128x128xf32>
    tpu.vector_store %arg2[%c0_2, %c0_3], %1 {strides = array<i32>} : memref<128x128xf32, #tpu.memory_space<vmem>>, vector<128x128xf32>,
    return
  }
  func.func @transform_0(%arg0: i32) -> (i32, i32, i32) {
    %c0_i32 = arith.constant 0 : i32
    %c0_i32_0 = arith.constant 0 : i32
    %c0_i32_1 = arith.constant 0 : i32
    return %c0_i32, %arg0, %c0_i32_0 : i32, i32, i32
  }
  func.func @transform_1(%arg0: i32) -> (i32, i32) {
    %c0_i32 = arith.constant 0 : i32
    %c0_i32_0 = arith.constant 0 : i32
    return %arg0, %c0_i32 : i32, i32
  }
}

module attributes {stable_mosaic.version = 11 : i64} {
  func.func @_mm_stats_kernel(%arg0: i32, %arg1: memref<128x128xf32, #tpu.memory_space<vmem>>, %arg2: memref<128x128xf32, #tpu.memory_space<vmem>>, %arg3: memref<128x128xf32, #tpu.memory_space<vmem>>, %arg4: memref<8x128xf32, #tpu.memory_space<vmem>>) attributes {dimension_semantics = [#tpu.dimension_semantics<parallel>], iteration_bounds = array<i64: 1>, scalar_prefetch = 0 : i64, scratch_operands = 0 : i64, tpu.core_type = #tpu.core_type<tc>, window_params = [{transform_indices = @transform_0, window_bounds = array<i64: 128, 128>}, {pipeline_mode = #tpu.pipeline_mode<synchronous>, transform_indices = @transform_1, window_bounds = array<i64: 128, 128>}, {transform_indices = @transform_2, window_bounds = array<i64: 128, 128>}, {transform_indices = @transform_3, window_bounds = array<i64: 8, 128>}]} {
    %c0 = arith.constant 0 : index
    %c0_0 = arith.constant 0 : index
    %0 = vector.load %arg1[%c0, %c0_0] : memref<128x128xf32, #tpu.memory_space<vmem>>, vector<128x128xf32>
    %c0_1 = arith.constant 0 : index
    %c0_2 = arith.constant 0 : index
    %1 = vector.load %arg2[%c0_1, %c0_2] : memref<128x128xf32, #tpu.memory_space<vmem>>, vector<128x128xf32>
    %cst = arith.constant dense<0.000000e+00> : vector<128x128xf32>
    %2 = tpu.matmul %0, %1, %cst {dimension_numbers = #tpu.dot_dimension_numbers<[1], [0], [0], [1], [0, 0, 1, 1], [], []>} : vector<128x128xf32>, vector<128x128xf32>, vector<128x128xf32> -> vector<128x128xf32>
    %c0_3 = arith.constant 0 : index
    %c0_4 = arith.constant 0 : index
    %3 = vector.load %arg3[%c0_3, %c0_4] : memref<128x128xf32, #tpu.memory_space<vmem>>, vector<128x128xf32>
    tpu.vector_store %arg3[%c0_3, %c0_4], %2 {strides = array<i32>} : memref<128x128xf32, #tpu.memory_space<vmem>>, vector<128x128xf32>,
    %cst_5 = arith.constant dense<0.000000e+00> : vector<128xf32>
    %4 = vector.multi_reduction <add>, %2, %cst_5 [0] : vector<128x128xf32> to vector<128xf32>
    %5 = vector.shape_cast %4 : vector<128xf32> to vector<1x128xf32>
    %6 = arith.mulf %2, %2 : vector<128x128xf32>
    %cst_6 = arith.constant dense<0.000000e+00> : vector<128xf32>
    %7 = vector.multi_reduction <add>, %6, %cst_6 [0] : vector<128x128xf32> to vector<128xf32>
    %8 = vector.shape_cast %7 : vector<128xf32> to vector<1x128xf32>
    %9 = tpu.iota {dimensions = array<i32: 0>} : vector<8x128xi32>
    %c0_i32 = arith.constant 0 : i32
    %10 = vector.broadcast %c0_i32 : i32 to vector<8x128xi32>
    %11 = arith.cmpi eq, %9, %10 : vector<8x128xi32>
    %12 = vector.shape_cast %5 : vector<1x128xf32> to vector<1x128xf32>
    %13 = vector.broadcast %12 : vector<1x128xf32> to vector<8x128xf32>
    %c1_i32 = arith.constant 1 : i32
    %14 = vector.broadcast %c1_i32 : i32 to vector<8x128xi32>
    %15 = arith.cmpi eq, %9, %14 : vector<8x128xi32>
    %16 = vector.shape_cast %8 : vector<1x128xf32> to vector<1x128xf32>
    %17 = vector.broadcast %16 : vector<1x128xf32> to vector<8x128xf32>
    %cst_7 = arith.constant 0.000000e+00 : f32
    %18 = vector.broadcast %cst_7 : f32 to vector<8x128xf32>
    %19 = arith.select %15, %17, %18 : vector<8x128xi1>, vector<8x128xf32>
    %20 = arith.select %11, %13, %19 : vector<8x128xi1>, vector<8x128xf32>
    %c0_8 = arith.constant 0 : index
    %c0_9 = arith.constant 0 : index
    %21 = vector.load %arg4[%c0_8, %c0_9] : memref<8x128xf32, #tpu.memory_space<vmem>>, vector<8x128xf32>
    tpu.vector_store %arg4[%c0_8, %c0_9], %20 {strides = array<i32>} : memref<8x128xf32, #tpu.memory_space<vmem>>, vector<8x128xf32>,
    return
  }
  func.func @transform_0(%arg0: i32) -> (i32, i32) {
    %c0_i32 = arith.constant 0 : i32
    %c0_i32_0 = arith.constant 0 : i32
    return %arg0, %c0_i32 : i32, i32
  }
  func.func @transform_1(%arg0: i32) -> (i32, i32) {
    %c0_i32 = arith.constant 0 : i32
    %c0_i32_0 = arith.constant 0 : i32
    %c0_i32_1 = arith.constant 0 : i32
    return %c0_i32, %c0_i32_0 : i32, i32
  }
  func.func @transform_2(%arg0: i32) -> (i32, i32) {
    %c0_i32 = arith.constant 0 : i32
    %c0_i32_0 = arith.constant 0 : i32
    return %arg0, %c0_i32 : i32, i32
  }
  func.func @transform_3(%arg0: i32) -> (i32, i32) {
    %c0_i32 = arith.constant 0 : i32
    %c0_i32_0 = arith.constant 0 : i32
    return %arg0, %c0_i32 : i32, i32
  }
}

module attributes {stable_mosaic.version = 11 : i64} {
  func.func @_affine_kernel(%arg0: i32, %arg1: memref<128x128xf32, #tpu.memory_space<vmem>>, %arg2: memref<1x128xf32, #tpu.memory_space<vmem>>, %arg3: memref<1x128xf32, #tpu.memory_space<vmem>>, %arg4: memref<128x128xf32, #tpu.memory_space<vmem>>) attributes {dimension_semantics = [#tpu.dimension_semantics<parallel>], iteration_bounds = array<i64: 1>, scalar_prefetch = 0 : i64, scratch_operands = 0 : i64, tpu.core_type = #tpu.core_type<tc>, window_params = [{transform_indices = @transform_0, window_bounds = array<i64: 128, 128>}, {pipeline_mode = #tpu.pipeline_mode<synchronous>, transform_indices = @transform_1, window_bounds = array<i64: 1, 128>}, {pipeline_mode = #tpu.pipeline_mode<synchronous>, transform_indices = @transform_2, window_bounds = array<i64: 1, 128>}, {transform_indices = @transform_3, window_bounds = array<i64: 128, 128>}]} {
    %c0 = arith.constant 0 : index
    %c0_0 = arith.constant 0 : index
    %0 = vector.load %arg1[%c0, %c0_0] : memref<128x128xf32, #tpu.memory_space<vmem>>, vector<128x128xf32>
    %c0_1 = arith.constant 0 : index
    %c0_2 = arith.constant 0 : index
    %1 = vector.load %arg2[%c0_1, %c0_2] : memref<1x128xf32, #tpu.memory_space<vmem>>, vector<1x128xf32>
    %2 = vector.broadcast %1 : vector<1x128xf32> to vector<128x128xf32>
    %3 = arith.mulf %0, %2 : vector<128x128xf32>
    %c0_3 = arith.constant 0 : index
    %c0_4 = arith.constant 0 : index
    %4 = vector.load %arg3[%c0_3, %c0_4] : memref<1x128xf32, #tpu.memory_space<vmem>>, vector<1x128xf32>
    %5 = vector.broadcast %4 : vector<1x128xf32> to vector<128x128xf32>
    %6 = arith.addf %3, %5 : vector<128x128xf32>
    %c0_5 = arith.constant 0 : index
    %c0_6 = arith.constant 0 : index
    %7 = vector.load %arg4[%c0_5, %c0_6] : memref<128x128xf32, #tpu.memory_space<vmem>>, vector<128x128xf32>
    tpu.vector_store %arg4[%c0_5, %c0_6], %6 {strides = array<i32>} : memref<128x128xf32, #tpu.memory_space<vmem>>, vector<128x128xf32>,
    return
  }
  func.func @transform_0(%arg0: i32) -> (i32, i32) {
    %c0_i32 = arith.constant 0 : i32
    %c0_i32_0 = arith.constant 0 : i32
    return %arg0, %c0_i32 : i32, i32
  }
  func.func @transform_1(%arg0: i32) -> (i32, i32) {
    %c0_i32 = arith.constant 0 : i32
    %c0_i32_0 = arith.constant 0 : i32
    %c0_i32_1 = arith.constant 0 : i32
    return %c0_i32, %c0_i32_0 : i32, i32
  }
  func.func @transform_2(%arg0: i32) -> (i32, i32) {
    %c0_i32 = arith.constant 0 : i32
    %c0_i32_0 = arith.constant 0 : i32
    %c0_i32_1 = arith.constant 0 : i32
    return %c0_i32, %c0_i32_0 : i32, i32
  }
  func.func @transform_3(%arg0: i32) -> (i32, i32) {
    %c0_i32 = arith.constant 0 : i32
    %c0_i32_0 = arith.constant 0 : i32
    return %arg0, %c0_i32 : i32, i32
  }
}

module attributes {stable_mosaic.version = 11 : i64} {
  func.func @_mm_stats_kernel(%arg0: i32, %arg1: memref<128x1152xf32, #tpu.memory_space<vmem>>, %arg2: memref<1152x128xf32, #tpu.memory_space<vmem>>, %arg3: memref<128x128xf32, #tpu.memory_space<vmem>>, %arg4: memref<8x128xf32, #tpu.memory_space<vmem>>) attributes {dimension_semantics = [#tpu.dimension_semantics<parallel>], iteration_bounds = array<i64: 1>, scalar_prefetch = 0 : i64, scratch_operands = 0 : i64, tpu.core_type = #tpu.core_type<tc>, window_params = [{transform_indices = @transform_0, window_bounds = array<i64: 128, 1152>}, {pipeline_mode = #tpu.pipeline_mode<synchronous>, transform_indices = @transform_1, window_bounds = array<i64: 1152, 128>}, {transform_indices = @transform_2, window_bounds = array<i64: 128, 128>}, {transform_indices = @transform_3, window_bounds = array<i64: 8, 128>}]} {
    %c0 = arith.constant 0 : index
    %c0_0 = arith.constant 0 : index
    %0 = vector.load %arg1[%c0, %c0_0] : memref<128x1152xf32, #tpu.memory_space<vmem>>, vector<128x1152xf32>
    %c0_1 = arith.constant 0 : index
    %c0_2 = arith.constant 0 : index
    %1 = vector.load %arg2[%c0_1, %c0_2] : memref<1152x128xf32, #tpu.memory_space<vmem>>, vector<1152x128xf32>
    %cst = arith.constant dense<0.000000e+00> : vector<128x128xf32>
    %2 = tpu.matmul %0, %1, %cst {dimension_numbers = #tpu.dot_dimension_numbers<[1], [0], [0], [1], [0, 0, 1, 1], [], []>} : vector<128x1152xf32>, vector<1152x128xf32>, vector<128x128xf32> -> vector<128x128xf32>
    %c0_3 = arith.constant 0 : index
    %c0_4 = arith.constant 0 : index
    %3 = vector.load %arg3[%c0_3, %c0_4] : memref<128x128xf32, #tpu.memory_space<vmem>>, vector<128x128xf32>
    tpu.vector_store %arg3[%c0_3, %c0_4], %2 {strides = array<i32>} : memref<128x128xf32, #tpu.memory_space<vmem>>, vector<128x128xf32>,
    %cst_5 = arith.constant dense<0.000000e+00> : vector<128xf32>
    %4 = vector.multi_reduction <add>, %2, %cst_5 [0] : vector<128x128xf32> to vector<128xf32>
    %5 = vector.shape_cast %4 : vector<128xf32> to vector<1x128xf32>
    %6 = arith.mulf %2, %2 : vector<128x128xf32>
    %cst_6 = arith.constant dense<0.000000e+00> : vector<128xf32>
    %7 = vector.multi_reduction <add>, %6, %cst_6 [0] : vector<128x128xf32> to vector<128xf32>
    %8 = vector.shape_cast %7 : vector<128xf32> to vector<1x128xf32>
    %9 = tpu.iota {dimensions = array<i32: 0>} : vector<8x128xi32>
    %c0_i32 = arith.constant 0 : i32
    %10 = vector.broadcast %c0_i32 : i32 to vector<8x128xi32>
    %11 = arith.cmpi eq, %9, %10 : vector<8x128xi32>
    %12 = vector.shape_cast %5 : vector<1x128xf32> to vector<1x128xf32>
    %13 = vector.broadcast %12 : vector<1x128xf32> to vector<8x128xf32>
    %c1_i32 = arith.constant 1 : i32
    %14 = vector.broadcast %c1_i32 : i32 to vector<8x128xi32>
    %15 = arith.cmpi eq, %9, %14 : vector<8x128xi32>
    %16 = vector.shape_cast %8 : vector<1x128xf32> to vector<1x128xf32>
    %17 = vector.broadcast %16 : vector<1x128xf32> to vector<8x128xf32>
    %cst_7 = arith.constant 0.000000e+00 : f32
    %18 = vector.broadcast %cst_7 : f32 to vector<8x128xf32>
    %19 = arith.select %15, %17, %18 : vector<8x128xi1>, vector<8x128xf32>
    %20 = arith.select %11, %13, %19 : vector<8x128xi1>, vector<8x128xf32>
    %c0_8 = arith.constant 0 : index
    %c0_9 = arith.constant 0 : index
    %21 = vector.load %arg4[%c0_8, %c0_9] : memref<8x128xf32, #tpu.memory_space<vmem>>, vector<8x128xf32>
    tpu.vector_store %arg4[%c0_8, %c0_9], %20 {strides = array<i32>} : memref<8x128xf32, #tpu.memory_space<vmem>>, vector<8x128xf32>,
    return
  }
  func.func @transform_0(%arg0: i32) -> (i32, i32) {
    %c0_i32 = arith.constant 0 : i32
    %c0_i32_0 = arith.constant 0 : i32
    return %arg0, %c0_i32 : i32, i32
  }
  func.func @transform_1(%arg0: i32) -> (i32, i32) {
    %c0_i32 = arith.constant 0 : i32
    %c0_i32_0 = arith.constant 0 : i32
    %c0_i32_1 = arith.constant 0 : i32
    return %c0_i32, %c0_i32_0 : i32, i32
  }
  func.func @transform_2(%arg0: i32) -> (i32, i32) {
    %c0_i32 = arith.constant 0 : i32
    %c0_i32_0 = arith.constant 0 : i32
    return %arg0, %c0_i32 : i32, i32
  }
  func.func @transform_3(%arg0: i32) -> (i32, i32) {
    %c0_i32 = arith.constant 0 : i32
    %c0_i32_0 = arith.constant 0 : i32
    return %arg0, %c0_i32 : i32, i32
  }
}

module attributes {stable_mosaic.version = 11 : i64} {
  func.func @_affine_kernel(%arg0: i32, %arg1: memref<128x128xf32, #tpu.memory_space<vmem>>, %arg2: memref<1x128xf32, #tpu.memory_space<vmem>>, %arg3: memref<1x128xf32, #tpu.memory_space<vmem>>, %arg4: memref<128x128xf32, #tpu.memory_space<vmem>>) attributes {dimension_semantics = [#tpu.dimension_semantics<parallel>], iteration_bounds = array<i64: 1>, scalar_prefetch = 0 : i64, scratch_operands = 0 : i64, tpu.core_type = #tpu.core_type<tc>, window_params = [{transform_indices = @transform_0, window_bounds = array<i64: 128, 128>}, {pipeline_mode = #tpu.pipeline_mode<synchronous>, transform_indices = @transform_1, window_bounds = array<i64: 1, 128>}, {pipeline_mode = #tpu.pipeline_mode<synchronous>, transform_indices = @transform_2, window_bounds = array<i64: 1, 128>}, {transform_indices = @transform_3, window_bounds = array<i64: 128, 128>}]} {
    %c0 = arith.constant 0 : index
    %c0_0 = arith.constant 0 : index
    %0 = vector.load %arg1[%c0, %c0_0] : memref<128x128xf32, #tpu.memory_space<vmem>>, vector<128x128xf32>
    %c0_1 = arith.constant 0 : index
    %c0_2 = arith.constant 0 : index
    %1 = vector.load %arg2[%c0_1, %c0_2] : memref<1x128xf32, #tpu.memory_space<vmem>>, vector<1x128xf32>
    %2 = vector.broadcast %1 : vector<1x128xf32> to vector<128x128xf32>
    %3 = arith.mulf %0, %2 : vector<128x128xf32>
    %c0_3 = arith.constant 0 : index
    %c0_4 = arith.constant 0 : index
    %4 = vector.load %arg3[%c0_3, %c0_4] : memref<1x128xf32, #tpu.memory_space<vmem>>, vector<1x128xf32>
    %5 = vector.broadcast %4 : vector<1x128xf32> to vector<128x128xf32>
    %6 = arith.addf %3, %5 : vector<128x128xf32>
    %cst = arith.constant 0.000000e+00 : f32
    %7 = vector.broadcast %cst : f32 to vector<128x128xf32>
    %8 = arith.maximumf %6, %7 : vector<128x128xf32>
    %c0_5 = arith.constant 0 : index
    %c0_6 = arith.constant 0 : index
    %9 = vector.load %arg4[%c0_5, %c0_6] : memref<128x128xf32, #tpu.memory_space<vmem>>, vector<128x128xf32>
    tpu.vector_store %arg4[%c0_5, %c0_6], %8 {strides = array<i32>} : memref<128x128xf32, #tpu.memory_space<vmem>>, vector<128x128xf32>,
    return
  }
  func.func @transform_0(%arg0: i32) -> (i32, i32) {
    %c0_i32 = arith.constant 0 : i32
    %c0_i32_0 = arith.constant 0 : i32
    return %arg0, %c0_i32 : i32, i32
  }
  func.func @transform_1(%arg0: i32) -> (i32, i32) {
    %c0_i32 = arith.constant 0 : i32
    %c0_i32_0 = arith.constant 0 : i32
    %c0_i32_1 = arith.constant 0 : i32
    return %c0_i32, %c0_i32_0 : i32, i32
  }
  func.func @transform_2(%arg0: i32) -> (i32, i32) {
    %c0_i32 = arith.constant 0 : i32
    %c0_i32_0 = arith.constant 0 : i32
    %c0_i32_1 = arith.constant 0 : i32
    return %c0_i32, %c0_i32_0 : i32, i32
  }
  func.func @transform_3(%arg0: i32) -> (i32, i32) {
    %c0_i32 = arith.constant 0 : i32
    %c0_i32_0 = arith.constant 0 : i32
    return %arg0, %c0_i32 : i32, i32
  }
}

module attributes {stable_mosaic.version = 11 : i64} {
  func.func @_mm_stats_kernel(%arg0: i32, %arg1: memref<32x128xf32, #tpu.memory_space<vmem>>, %arg2: memref<128x128xf32, #tpu.memory_space<vmem>>, %arg3: memref<32x128xf32, #tpu.memory_space<vmem>>, %arg4: memref<8x128xf32, #tpu.memory_space<vmem>>) attributes {dimension_semantics = [#tpu.dimension_semantics<parallel>], iteration_bounds = array<i64: 1>, scalar_prefetch = 0 : i64, scratch_operands = 0 : i64, tpu.core_type = #tpu.core_type<tc>, window_params = [{transform_indices = @transform_0, window_bounds = array<i64: 32, 128>}, {pipeline_mode = #tpu.pipeline_mode<synchronous>, transform_indices = @transform_1, window_bounds = array<i64: 128, 128>}, {transform_indices = @transform_2, window_bounds = array<i64: 32, 128>}, {transform_indices = @transform_3, window_bounds = array<i64: 8, 128>}]} {
    %c0 = arith.constant 0 : index
    %c0_0 = arith.constant 0 : index
    %0 = vector.load %arg1[%c0, %c0_0] : memref<32x128xf32, #tpu.memory_space<vmem>>, vector<32x128xf32>
    %c0_1 = arith.constant 0 : index
    %c0_2 = arith.constant 0 : index
    %1 = vector.load %arg2[%c0_1, %c0_2] : memref<128x128xf32, #tpu.memory_space<vmem>>, vector<128x128xf32>
    %cst = arith.constant dense<0.000000e+00> : vector<32x128xf32>
    %2 = tpu.matmul %0, %1, %cst {dimension_numbers = #tpu.dot_dimension_numbers<[1], [0], [0], [1], [0, 0, 1, 1], [], []>} : vector<32x128xf32>, vector<128x128xf32>, vector<32x128xf32> -> vector<32x128xf32>
    %c0_3 = arith.constant 0 : index
    %c0_4 = arith.constant 0 : index
    %3 = vector.load %arg3[%c0_3, %c0_4] : memref<32x128xf32, #tpu.memory_space<vmem>>, vector<32x128xf32>
    tpu.vector_store %arg3[%c0_3, %c0_4], %2 {strides = array<i32>} : memref<32x128xf32, #tpu.memory_space<vmem>>, vector<32x128xf32>,
    %cst_5 = arith.constant dense<0.000000e+00> : vector<128xf32>
    %4 = vector.multi_reduction <add>, %2, %cst_5 [0] : vector<32x128xf32> to vector<128xf32>
    %5 = vector.shape_cast %4 : vector<128xf32> to vector<1x128xf32>
    %6 = arith.mulf %2, %2 : vector<32x128xf32>
    %cst_6 = arith.constant dense<0.000000e+00> : vector<128xf32>
    %7 = vector.multi_reduction <add>, %6, %cst_6 [0] : vector<32x128xf32> to vector<128xf32>
    %8 = vector.shape_cast %7 : vector<128xf32> to vector<1x128xf32>
    %9 = tpu.iota {dimensions = array<i32: 0>} : vector<8x128xi32>
    %c0_i32 = arith.constant 0 : i32
    %10 = vector.broadcast %c0_i32 : i32 to vector<8x128xi32>
    %11 = arith.cmpi eq, %9, %10 : vector<8x128xi32>
    %12 = vector.shape_cast %5 : vector<1x128xf32> to vector<1x128xf32>
    %13 = vector.broadcast %12 : vector<1x128xf32> to vector<8x128xf32>
    %c1_i32 = arith.constant 1 : i32
    %14 = vector.broadcast %c1_i32 : i32 to vector<8x128xi32>
    %15 = arith.cmpi eq, %9, %14 : vector<8x128xi32>
    %16 = vector.shape_cast %8 : vector<1x128xf32> to vector<1x128xf32>
    %17 = vector.broadcast %16 : vector<1x128xf32> to vector<8x128xf32>
    %cst_7 = arith.constant 0.000000e+00 : f32
    %18 = vector.broadcast %cst_7 : f32 to vector<8x128xf32>
    %19 = arith.select %15, %17, %18 : vector<8x128xi1>, vector<8x128xf32>
    %20 = arith.select %11, %13, %19 : vector<8x128xi1>, vector<8x128xf32>
    %c0_8 = arith.constant 0 : index
    %c0_9 = arith.constant 0 : index
    %21 = vector.load %arg4[%c0_8, %c0_9] : memref<8x128xf32, #tpu.memory_space<vmem>>, vector<8x128xf32>
    tpu.vector_store %arg4[%c0_8, %c0_9], %20 {strides = array<i32>} : memref<8x128xf32, #tpu.memory_space<vmem>>, vector<8x128xf32>,
    return
  }
  func.func @transform_0(%arg0: i32) -> (i32, i32) {
    %c0_i32 = arith.constant 0 : i32
    %c0_i32_0 = arith.constant 0 : i32
    return %arg0, %c0_i32 : i32, i32
  }
  func.func @transform_1(%arg0: i32) -> (i32, i32) {
    %c0_i32 = arith.constant 0 : i32
    %c0_i32_0 = arith.constant 0 : i32
    %c0_i32_1 = arith.constant 0 : i32
    return %c0_i32, %c0_i32_0 : i32, i32
  }
  func.func @transform_2(%arg0: i32) -> (i32, i32) {
    %c0_i32 = arith.constant 0 : i32
    %c0_i32_0 = arith.constant 0 : i32
    return %arg0, %c0_i32 : i32, i32
  }
  func.func @transform_3(%arg0: i32) -> (i32, i32) {
    %c0_i32 = arith.constant 0 : i32
    %c0_i32_0 = arith.constant 0 : i32
    return %arg0, %c0_i32 : i32, i32
  }
}

module attributes {stable_mosaic.version = 11 : i64} {
  func.func @_affine_res_kernel(%arg0: i32, %arg1: memref<128x128xf32, #tpu.memory_space<vmem>>, %arg2: memref<1x128xf32, #tpu.memory_space<vmem>>, %arg3: memref<1x128xf32, #tpu.memory_space<vmem>>, %arg4: memref<128x128xf32, #tpu.memory_space<vmem>>, %arg5: memref<128x128xf32, #tpu.memory_space<vmem>>) attributes {dimension_semantics = [#tpu.dimension_semantics<parallel>], iteration_bounds = array<i64: 1>, scalar_prefetch = 0 : i64, scratch_operands = 0 : i64, tpu.core_type = #tpu.core_type<tc>, window_params = [{transform_indices = @transform_0, window_bounds = array<i64: 128, 128>}, {pipeline_mode = #tpu.pipeline_mode<synchronous>, transform_indices = @transform_1, window_bounds = array<i64: 1, 128>}, {pipeline_mode = #tpu.pipeline_mode<synchronous>, transform_indices = @transform_2, window_bounds = array<i64: 1, 128>}, {transform_indices = @transform_3, window_bounds = array<i64: 128, 128>}, {transform_indices = @transform_4, window_bounds = array<i64: 128, 128>}]} {
    %c0 = arith.constant 0 : index
    %c0_0 = arith.constant 0 : index
    %0 = vector.load %arg1[%c0, %c0_0] : memref<128x128xf32, #tpu.memory_space<vmem>>, vector<128x128xf32>
    %c0_1 = arith.constant 0 : index
    %c0_2 = arith.constant 0 : index
    %1 = vector.load %arg2[%c0_1, %c0_2] : memref<1x128xf32, #tpu.memory_space<vmem>>, vector<1x128xf32>
    %2 = vector.broadcast %1 : vector<1x128xf32> to vector<128x128xf32>
    %3 = arith.mulf %0, %2 : vector<128x128xf32>
    %c0_3 = arith.constant 0 : index
    %c0_4 = arith.constant 0 : index
    %4 = vector.load %arg3[%c0_3, %c0_4] : memref<1x128xf32, #tpu.memory_space<vmem>>, vector<1x128xf32>
    %5 = vector.broadcast %4 : vector<1x128xf32> to vector<128x128xf32>
    %6 = arith.addf %3, %5 : vector<128x128xf32>
    %c0_5 = arith.constant 0 : index
    %c0_6 = arith.constant 0 : index
    %7 = vector.load %arg4[%c0_5, %c0_6] : memref<128x128xf32, #tpu.memory_space<vmem>>, vector<128x128xf32>
    %8 = arith.addf %6, %7 : vector<128x128xf32>
    %cst = arith.constant 0.000000e+00 : f32
    %9 = vector.broadcast %cst : f32 to vector<128x128xf32>
    %10 = arith.maximumf %8, %9 : vector<128x128xf32>
    %c0_7 = arith.constant 0 : index
    %c0_8 = arith.constant 0 : index
    %11 = vector.load %arg5[%c0_7, %c0_8] : memref<128x128xf32, #tpu.memory_space<vmem>>, vector<128x128xf32>
    tpu.vector_store %arg5[%c0_7, %c0_8], %10 {strides = array<i32>} : memref<128x128xf32, #tpu.memory_space<vmem>>, vector<128x128xf32>,
    return
  }
  func.func @transform_0(%arg0: i32) -> (i32, i32) {
    %c0_i32 = arith.constant 0 : i32
    %c0_i32_0 = arith.constant 0 : i32
    return %arg0, %c0_i32 : i32, i32
  }
  func.func @transform_1(%arg0: i32) -> (i32, i32) {
    %c0_i32 = arith.constant 0 : i32
    %c0_i32_0 = arith.constant 0 : i32
    %c0_i32_1 = arith.constant 0 : i32
    return %c0_i32, %c0_i32_0 : i32, i32
  }
  func.func @transform_2(%arg0: i32) -> (i32, i32) {
    %c0_i32 = arith.constant 0 : i32
    %c0_i32_0 = arith.constant 0 : i32
    %c0_i32_1 = arith.constant 0 : i32
    return %c0_i32, %c0_i32_0 : i32, i32
  }
  func.func @transform_3(%arg0: i32) -> (i32, i32) {
    %c0_i32 = arith.constant 0 : i32
    %c0_i32_0 = arith.constant 0 : i32
    return %arg0, %c0_i32 : i32, i32
  }
  func.func @transform_4(%arg0: i32) -> (i32, i32) {
    %c0_i32 = arith.constant 0 : i32
    %c0_i32_0 = arith.constant 0 : i32
    return %arg0, %c0_i32 : i32, i32
  }
}

module attributes {stable_mosaic.version = 11 : i64} {
  func.func @_affine_kernel(%arg0: i32, %arg1: memref<32x128xf32, #tpu.memory_space<vmem>>, %arg2: memref<1x128xf32, #tpu.memory_space<vmem>>, %arg3: memref<1x128xf32, #tpu.memory_space<vmem>>, %arg4: memref<32x128xf32, #tpu.memory_space<vmem>>) attributes {dimension_semantics = [#tpu.dimension_semantics<parallel>], iteration_bounds = array<i64: 1>, scalar_prefetch = 0 : i64, scratch_operands = 0 : i64, tpu.core_type = #tpu.core_type<tc>, window_params = [{transform_indices = @transform_0, window_bounds = array<i64: 32, 128>}, {pipeline_mode = #tpu.pipeline_mode<synchronous>, transform_indices = @transform_1, window_bounds = array<i64: 1, 128>}, {pipeline_mode = #tpu.pipeline_mode<synchronous>, transform_indices = @transform_2, window_bounds = array<i64: 1, 128>}, {transform_indices = @transform_3, window_bounds = array<i64: 32, 128>}]} {
    %c0 = arith.constant 0 : index
    %c0_0 = arith.constant 0 : index
    %0 = vector.load %arg1[%c0, %c0_0] : memref<32x128xf32, #tpu.memory_space<vmem>>, vector<32x128xf32>
    %c0_1 = arith.constant 0 : index
    %c0_2 = arith.constant 0 : index
    %1 = vector.load %arg2[%c0_1, %c0_2] : memref<1x128xf32, #tpu.memory_space<vmem>>, vector<1x128xf32>
    %2 = vector.broadcast %1 : vector<1x128xf32> to vector<32x128xf32>
    %3 = arith.mulf %0, %2 : vector<32x128xf32>
    %c0_3 = arith.constant 0 : index
    %c0_4 = arith.constant 0 : index
    %4 = vector.load %arg3[%c0_3, %c0_4] : memref<1x128xf32, #tpu.memory_space<vmem>>, vector<1x128xf32>
    %5 = vector.broadcast %4 : vector<1x128xf32> to vector<32x128xf32>
    %6 = arith.addf %3, %5 : vector<32x128xf32>
    %c0_5 = arith.constant 0 : index
    %c0_6 = arith.constant 0 : index
    %7 = vector.load %arg4[%c0_5, %c0_6] : memref<32x128xf32, #tpu.memory_space<vmem>>, vector<32x128xf32>
    tpu.vector_store %arg4[%c0_5, %c0_6], %6 {strides = array<i32>} : memref<32x128xf32, #tpu.memory_space<vmem>>, vector<32x128xf32>,
    return
  }
  func.func @transform_0(%arg0: i32) -> (i32, i32) {
    %c0_i32 = arith.constant 0 : i32
    %c0_i32_0 = arith.constant 0 : i32
    return %arg0, %c0_i32 : i32, i32
  }
  func.func @transform_1(%arg0: i32) -> (i32, i32) {
    %c0_i32 = arith.constant 0 : i32
    %c0_i32_0 = arith.constant 0 : i32
    %c0_i32_1 = arith.constant 0 : i32
    return %c0_i32, %c0_i32_0 : i32, i32
  }
  func.func @transform_2(%arg0: i32) -> (i32, i32) {
    %c0_i32 = arith.constant 0 : i32
    %c0_i32_0 = arith.constant 0 : i32
    %c0_i32_1 = arith.constant 0 : i32
    return %c0_i32, %c0_i32_0 : i32, i32
  }
  func.func @transform_3(%arg0: i32) -> (i32, i32) {
    %c0_i32 = arith.constant 0 : i32
    %c0_i32_0 = arith.constant 0 : i32
    return %arg0, %c0_i32 : i32, i32
  }
}

module attributes {stable_mosaic.version = 11 : i64} {
  func.func @_mm_stats_kernel(%arg0: i32, %arg1: memref<32x1152xf32, #tpu.memory_space<vmem>>, %arg2: memref<1152x128xf32, #tpu.memory_space<vmem>>, %arg3: memref<32x128xf32, #tpu.memory_space<vmem>>, %arg4: memref<8x128xf32, #tpu.memory_space<vmem>>) attributes {dimension_semantics = [#tpu.dimension_semantics<parallel>], iteration_bounds = array<i64: 1>, scalar_prefetch = 0 : i64, scratch_operands = 0 : i64, tpu.core_type = #tpu.core_type<tc>, window_params = [{transform_indices = @transform_0, window_bounds = array<i64: 32, 1152>}, {pipeline_mode = #tpu.pipeline_mode<synchronous>, transform_indices = @transform_1, window_bounds = array<i64: 1152, 128>}, {transform_indices = @transform_2, window_bounds = array<i64: 32, 128>}, {transform_indices = @transform_3, window_bounds = array<i64: 8, 128>}]} {
    %c0 = arith.constant 0 : index
    %c0_0 = arith.constant 0 : index
    %0 = vector.load %arg1[%c0, %c0_0] : memref<32x1152xf32, #tpu.memory_space<vmem>>, vector<32x1152xf32>
    %c0_1 = arith.constant 0 : index
    %c0_2 = arith.constant 0 : index
    %1 = vector.load %arg2[%c0_1, %c0_2] : memref<1152x128xf32, #tpu.memory_space<vmem>>, vector<1152x128xf32>
    %cst = arith.constant dense<0.000000e+00> : vector<32x128xf32>
    %2 = tpu.matmul %0, %1, %cst {dimension_numbers = #tpu.dot_dimension_numbers<[1], [0], [0], [1], [0, 0, 1, 1], [], []>} : vector<32x1152xf32>, vector<1152x128xf32>, vector<32x128xf32> -> vector<32x128xf32>
    %c0_3 = arith.constant 0 : index
    %c0_4 = arith.constant 0 : index
    %3 = vector.load %arg3[%c0_3, %c0_4] : memref<32x128xf32, #tpu.memory_space<vmem>>, vector<32x128xf32>
    tpu.vector_store %arg3[%c0_3, %c0_4], %2 {strides = array<i32>} : memref<32x128xf32, #tpu.memory_space<vmem>>, vector<32x128xf32>,
    %cst_5 = arith.constant dense<0.000000e+00> : vector<128xf32>
    %4 = vector.multi_reduction <add>, %2, %cst_5 [0] : vector<32x128xf32> to vector<128xf32>
    %5 = vector.shape_cast %4 : vector<128xf32> to vector<1x128xf32>
    %6 = arith.mulf %2, %2 : vector<32x128xf32>
    %cst_6 = arith.constant dense<0.000000e+00> : vector<128xf32>
    %7 = vector.multi_reduction <add>, %6, %cst_6 [0] : vector<32x128xf32> to vector<128xf32>
    %8 = vector.shape_cast %7 : vector<128xf32> to vector<1x128xf32>
    %9 = tpu.iota {dimensions = array<i32: 0>} : vector<8x128xi32>
    %c0_i32 = arith.constant 0 : i32
    %10 = vector.broadcast %c0_i32 : i32 to vector<8x128xi32>
    %11 = arith.cmpi eq, %9, %10 : vector<8x128xi32>
    %12 = vector.shape_cast %5 : vector<1x128xf32> to vector<1x128xf32>
    %13 = vector.broadcast %12 : vector<1x128xf32> to vector<8x128xf32>
    %c1_i32 = arith.constant 1 : i32
    %14 = vector.broadcast %c1_i32 : i32 to vector<8x128xi32>
    %15 = arith.cmpi eq, %9, %14 : vector<8x128xi32>
    %16 = vector.shape_cast %8 : vector<1x128xf32> to vector<1x128xf32>
    %17 = vector.broadcast %16 : vector<1x128xf32> to vector<8x128xf32>
    %cst_7 = arith.constant 0.000000e+00 : f32
    %18 = vector.broadcast %cst_7 : f32 to vector<8x128xf32>
    %19 = arith.select %15, %17, %18 : vector<8x128xi1>, vector<8x128xf32>
    %20 = arith.select %11, %13, %19 : vector<8x128xi1>, vector<8x128xf32>
    %c0_8 = arith.constant 0 : index
    %c0_9 = arith.constant 0 : index
    %21 = vector.load %arg4[%c0_8, %c0_9] : memref<8x128xf32, #tpu.memory_space<vmem>>, vector<8x128xf32>
    tpu.vector_store %arg4[%c0_8, %c0_9], %20 {strides = array<i32>} : memref<8x128xf32, #tpu.memory_space<vmem>>, vector<8x128xf32>,
    return
  }
  func.func @transform_0(%arg0: i32) -> (i32, i32) {
    %c0_i32 = arith.constant 0 : i32
    %c0_i32_0 = arith.constant 0 : i32
    return %arg0, %c0_i32 : i32, i32
  }
  func.func @transform_1(%arg0: i32) -> (i32, i32) {
    %c0_i32 = arith.constant 0 : i32
    %c0_i32_0 = arith.constant 0 : i32
    %c0_i32_1 = arith.constant 0 : i32
    return %c0_i32, %c0_i32_0 : i32, i32
  }
  func.func @transform_2(%arg0: i32) -> (i32, i32) {
    %c0_i32 = arith.constant 0 : i32
    %c0_i32_0 = arith.constant 0 : i32
    return %arg0, %c0_i32 : i32, i32
  }
  func.func @transform_3(%arg0: i32) -> (i32, i32) {
    %c0_i32 = arith.constant 0 : i32
    %c0_i32_0 = arith.constant 0 : i32
    return %arg0, %c0_i32 : i32, i32
  }
}

module attributes {stable_mosaic.version = 11 : i64} {
  func.func @_affine_kernel(%arg0: i32, %arg1: memref<32x128xf32, #tpu.memory_space<vmem>>, %arg2: memref<1x128xf32, #tpu.memory_space<vmem>>, %arg3: memref<1x128xf32, #tpu.memory_space<vmem>>, %arg4: memref<32x128xf32, #tpu.memory_space<vmem>>) attributes {dimension_semantics = [#tpu.dimension_semantics<parallel>], iteration_bounds = array<i64: 1>, scalar_prefetch = 0 : i64, scratch_operands = 0 : i64, tpu.core_type = #tpu.core_type<tc>, window_params = [{transform_indices = @transform_0, window_bounds = array<i64: 32, 128>}, {pipeline_mode = #tpu.pipeline_mode<synchronous>, transform_indices = @transform_1, window_bounds = array<i64: 1, 128>}, {pipeline_mode = #tpu.pipeline_mode<synchronous>, transform_indices = @transform_2, window_bounds = array<i64: 1, 128>}, {transform_indices = @transform_3, window_bounds = array<i64: 32, 128>}]} {
    %c0 = arith.constant 0 : index
    %c0_0 = arith.constant 0 : index
    %0 = vector.load %arg1[%c0, %c0_0] : memref<32x128xf32, #tpu.memory_space<vmem>>, vector<32x128xf32>
    %c0_1 = arith.constant 0 : index
    %c0_2 = arith.constant 0 : index
    %1 = vector.load %arg2[%c0_1, %c0_2] : memref<1x128xf32, #tpu.memory_space<vmem>>, vector<1x128xf32>
    %2 = vector.broadcast %1 : vector<1x128xf32> to vector<32x128xf32>
    %3 = arith.mulf %0, %2 : vector<32x128xf32>
    %c0_3 = arith.constant 0 : index
    %c0_4 = arith.constant 0 : index
    %4 = vector.load %arg3[%c0_3, %c0_4] : memref<1x128xf32, #tpu.memory_space<vmem>>, vector<1x128xf32>
    %5 = vector.broadcast %4 : vector<1x128xf32> to vector<32x128xf32>
    %6 = arith.addf %3, %5 : vector<32x128xf32>
    %cst = arith.constant 0.000000e+00 : f32
    %7 = vector.broadcast %cst : f32 to vector<32x128xf32>
    %8 = arith.maximumf %6, %7 : vector<32x128xf32>
    %c0_5 = arith.constant 0 : index
    %c0_6 = arith.constant 0 : index
    %9 = vector.load %arg4[%c0_5, %c0_6] : memref<32x128xf32, #tpu.memory_space<vmem>>, vector<32x128xf32>
    tpu.vector_store %arg4[%c0_5, %c0_6], %8 {strides = array<i32>} : memref<32x128xf32, #tpu.memory_space<vmem>>, vector<32x128xf32>,
    return
  }
  func.func @transform_0(%arg0: i32) -> (i32, i32) {
    %c0_i32 = arith.constant 0 : i32
    %c0_i32_0 = arith.constant 0 : i32
    return %arg0, %c0_i32 : i32, i32
  }
  func.func @transform_1(%arg0: i32) -> (i32, i32) {
    %c0_i32 = arith.constant 0 : i32
    %c0_i32_0 = arith.constant 0 : i32
    %c0_i32_1 = arith.constant 0 : i32
    return %c0_i32, %c0_i32_0 : i32, i32
  }
  func.func @transform_2(%arg0: i32) -> (i32, i32) {
    %c0_i32 = arith.constant 0 : i32
    %c0_i32_0 = arith.constant 0 : i32
    %c0_i32_1 = arith.constant 0 : i32
    return %c0_i32, %c0_i32_0 : i32, i32
  }
  func.func @transform_3(%arg0: i32) -> (i32, i32) {
    %c0_i32 = arith.constant 0 : i32
    %c0_i32_0 = arith.constant 0 : i32
    return %arg0, %c0_i32 : i32, i32
  }
}

module attributes {stable_mosaic.version = 11 : i64} {
  func.func @_affine_res_kernel(%arg0: i32, %arg1: memref<32x128xf32, #tpu.memory_space<vmem>>, %arg2: memref<1x128xf32, #tpu.memory_space<vmem>>, %arg3: memref<1x128xf32, #tpu.memory_space<vmem>>, %arg4: memref<32x128xf32, #tpu.memory_space<vmem>>, %arg5: memref<32x128xf32, #tpu.memory_space<vmem>>) attributes {dimension_semantics = [#tpu.dimension_semantics<parallel>], iteration_bounds = array<i64: 1>, scalar_prefetch = 0 : i64, scratch_operands = 0 : i64, tpu.core_type = #tpu.core_type<tc>, window_params = [{transform_indices = @transform_0, window_bounds = array<i64: 32, 128>}, {pipeline_mode = #tpu.pipeline_mode<synchronous>, transform_indices = @transform_1, window_bounds = array<i64: 1, 128>}, {pipeline_mode = #tpu.pipeline_mode<synchronous>, transform_indices = @transform_2, window_bounds = array<i64: 1, 128>}, {transform_indices = @transform_3, window_bounds = array<i64: 32, 128>}, {transform_indices = @transform_4, window_bounds = array<i64: 32, 128>}]} {
    %c0 = arith.constant 0 : index
    %c0_0 = arith.constant 0 : index
    %0 = vector.load %arg1[%c0, %c0_0] : memref<32x128xf32, #tpu.memory_space<vmem>>, vector<32x128xf32>
    %c0_1 = arith.constant 0 : index
    %c0_2 = arith.constant 0 : index
    %1 = vector.load %arg2[%c0_1, %c0_2] : memref<1x128xf32, #tpu.memory_space<vmem>>, vector<1x128xf32>
    %2 = vector.broadcast %1 : vector<1x128xf32> to vector<32x128xf32>
    %3 = arith.mulf %0, %2 : vector<32x128xf32>
    %c0_3 = arith.constant 0 : index
    %c0_4 = arith.constant 0 : index
    %4 = vector.load %arg3[%c0_3, %c0_4] : memref<1x128xf32, #tpu.memory_space<vmem>>, vector<1x128xf32>
    %5 = vector.broadcast %4 : vector<1x128xf32> to vector<32x128xf32>
    %6 = arith.addf %3, %5 : vector<32x128xf32>
    %c0_5 = arith.constant 0 : index
    %c0_6 = arith.constant 0 : index
    %7 = vector.load %arg4[%c0_5, %c0_6] : memref<32x128xf32, #tpu.memory_space<vmem>>, vector<32x128xf32>
    %8 = arith.addf %6, %7 : vector<32x128xf32>
    %cst = arith.constant 0.000000e+00 : f32
    %9 = vector.broadcast %cst : f32 to vector<32x128xf32>
    %10 = arith.maximumf %8, %9 : vector<32x128xf32>
    %c0_7 = arith.constant 0 : index
    %c0_8 = arith.constant 0 : index
    %11 = vector.load %arg5[%c0_7, %c0_8] : memref<32x128xf32, #tpu.memory_space<vmem>>, vector<32x128xf32>
    tpu.vector_store %arg5[%c0_7, %c0_8], %10 {strides = array<i32>} : memref<32x128xf32, #tpu.memory_space<vmem>>, vector<32x128xf32>,
    return
  }
  func.func @transform_0(%arg0: i32) -> (i32, i32) {
    %c0_i32 = arith.constant 0 : i32
    %c0_i32_0 = arith.constant 0 : i32
    return %arg0, %c0_i32 : i32, i32
  }
  func.func @transform_1(%arg0: i32) -> (i32, i32) {
    %c0_i32 = arith.constant 0 : i32
    %c0_i32_0 = arith.constant 0 : i32
    %c0_i32_1 = arith.constant 0 : i32
    return %c0_i32, %c0_i32_0 : i32, i32
  }
  func.func @transform_2(%arg0: i32) -> (i32, i32) {
    %c0_i32 = arith.constant 0 : i32
    %c0_i32_0 = arith.constant 0 : i32
    %c0_i32_1 = arith.constant 0 : i32
    return %c0_i32, %c0_i32_0 : i32, i32
  }
  func.func @transform_3(%arg0: i32) -> (i32, i32) {
    %c0_i32 = arith.constant 0 : i32
    %c0_i32_0 = arith.constant 0 : i32
    return %arg0, %c0_i32 : i32, i32
  }
  func.func @transform_4(%arg0: i32) -> (i32, i32) {
    %c0_i32 = arith.constant 0 : i32
    %c0_i32_0 = arith.constant 0 : i32
    return %arg0, %c0_i32 : i32, i32
  }
}

module attributes {stable_mosaic.version = 11 : i64} {
  func.func @_affine_kernel(%arg0: i32, %arg1: memref<8x128xf32, #tpu.memory_space<vmem>>, %arg2: memref<1x128xf32, #tpu.memory_space<vmem>>, %arg3: memref<1x128xf32, #tpu.memory_space<vmem>>, %arg4: memref<8x128xf32, #tpu.memory_space<vmem>>) attributes {dimension_semantics = [#tpu.dimension_semantics<parallel>], iteration_bounds = array<i64: 1>, scalar_prefetch = 0 : i64, scratch_operands = 0 : i64, tpu.core_type = #tpu.core_type<tc>, window_params = [{transform_indices = @transform_0, window_bounds = array<i64: 8, 128>}, {pipeline_mode = #tpu.pipeline_mode<synchronous>, transform_indices = @transform_1, window_bounds = array<i64: 1, 128>}, {pipeline_mode = #tpu.pipeline_mode<synchronous>, transform_indices = @transform_2, window_bounds = array<i64: 1, 128>}, {transform_indices = @transform_3, window_bounds = array<i64: 8, 128>}]} {
    %c0 = arith.constant 0 : index
    %c0_0 = arith.constant 0 : index
    %0 = vector.load %arg1[%c0, %c0_0] : memref<8x128xf32, #tpu.memory_space<vmem>>, vector<8x128xf32>
    %c0_1 = arith.constant 0 : index
    %c0_2 = arith.constant 0 : index
    %1 = vector.load %arg2[%c0_1, %c0_2] : memref<1x128xf32, #tpu.memory_space<vmem>>, vector<1x128xf32>
    %2 = vector.broadcast %1 : vector<1x128xf32> to vector<8x128xf32>
    %3 = arith.mulf %0, %2 : vector<8x128xf32>
    %c0_3 = arith.constant 0 : index
    %c0_4 = arith.constant 0 : index
    %4 = vector.load %arg3[%c0_3, %c0_4] : memref<1x128xf32, #tpu.memory_space<vmem>>, vector<1x128xf32>
    %5 = vector.broadcast %4 : vector<1x128xf32> to vector<8x128xf32>
    %6 = arith.addf %3, %5 : vector<8x128xf32>
    %c0_5 = arith.constant 0 : index
    %c0_6 = arith.constant 0 : index
    %7 = vector.load %arg4[%c0_5, %c0_6] : memref<8x128xf32, #tpu.memory_space<vmem>>, vector<8x128xf32>
    tpu.vector_store %arg4[%c0_5, %c0_6], %6 {strides = array<i32>} : memref<8x128xf32, #tpu.memory_space<vmem>>, vector<8x128xf32>,
    return
  }
  func.func @transform_0(%arg0: i32) -> (i32, i32) {
    %c0_i32 = arith.constant 0 : i32
    %c0_i32_0 = arith.constant 0 : i32
    return %arg0, %c0_i32 : i32, i32
  }
  func.func @transform_1(%arg0: i32) -> (i32, i32) {
    %c0_i32 = arith.constant 0 : i32
    %c0_i32_0 = arith.constant 0 : i32
    %c0_i32_1 = arith.constant 0 : i32
    return %c0_i32, %c0_i32_0 : i32, i32
  }
  func.func @transform_2(%arg0: i32) -> (i32, i32) {
    %c0_i32 = arith.constant 0 : i32
    %c0_i32_0 = arith.constant 0 : i32
    %c0_i32_1 = arith.constant 0 : i32
    return %c0_i32, %c0_i32_0 : i32, i32
  }
  func.func @transform_3(%arg0: i32) -> (i32, i32) {
    %c0_i32 = arith.constant 0 : i32
    %c0_i32_0 = arith.constant 0 : i32
    return %arg0, %c0_i32 : i32, i32
  }
}

module attributes {stable_mosaic.version = 11 : i64} {
  func.func @_mm_stats_kernel(%arg0: i32, %arg1: memref<8x128xf32, #tpu.memory_space<vmem>>, %arg2: memref<128x128xf32, #tpu.memory_space<vmem>>, %arg3: memref<8x128xf32, #tpu.memory_space<vmem>>, %arg4: memref<8x128xf32, #tpu.memory_space<vmem>>) attributes {dimension_semantics = [#tpu.dimension_semantics<parallel>], iteration_bounds = array<i64: 1>, scalar_prefetch = 0 : i64, scratch_operands = 0 : i64, tpu.core_type = #tpu.core_type<tc>, window_params = [{transform_indices = @transform_0, window_bounds = array<i64: 8, 128>}, {pipeline_mode = #tpu.pipeline_mode<synchronous>, transform_indices = @transform_1, window_bounds = array<i64: 128, 128>}, {transform_indices = @transform_2, window_bounds = array<i64: 8, 128>}, {transform_indices = @transform_3, window_bounds = array<i64: 8, 128>}]} {
    %c0 = arith.constant 0 : index
    %c0_0 = arith.constant 0 : index
    %0 = vector.load %arg1[%c0, %c0_0] : memref<8x128xf32, #tpu.memory_space<vmem>>, vector<8x128xf32>
    %c0_1 = arith.constant 0 : index
    %c0_2 = arith.constant 0 : index
    %1 = vector.load %arg2[%c0_1, %c0_2] : memref<128x128xf32, #tpu.memory_space<vmem>>, vector<128x128xf32>
    %cst = arith.constant dense<0.000000e+00> : vector<8x128xf32>
    %2 = tpu.matmul %0, %1, %cst {dimension_numbers = #tpu.dot_dimension_numbers<[1], [0], [0], [1], [0, 0, 1, 1], [], []>} : vector<8x128xf32>, vector<128x128xf32>, vector<8x128xf32> -> vector<8x128xf32>
    %c0_3 = arith.constant 0 : index
    %c0_4 = arith.constant 0 : index
    %3 = vector.load %arg3[%c0_3, %c0_4] : memref<8x128xf32, #tpu.memory_space<vmem>>, vector<8x128xf32>
    tpu.vector_store %arg3[%c0_3, %c0_4], %2 {strides = array<i32>} : memref<8x128xf32, #tpu.memory_space<vmem>>, vector<8x128xf32>,
    %cst_5 = arith.constant dense<0.000000e+00> : vector<128xf32>
    %4 = vector.multi_reduction <add>, %2, %cst_5 [0] : vector<8x128xf32> to vector<128xf32>
    %5 = vector.shape_cast %4 : vector<128xf32> to vector<1x128xf32>
    %6 = arith.mulf %2, %2 : vector<8x128xf32>
    %cst_6 = arith.constant dense<0.000000e+00> : vector<128xf32>
    %7 = vector.multi_reduction <add>, %6, %cst_6 [0] : vector<8x128xf32> to vector<128xf32>
    %8 = vector.shape_cast %7 : vector<128xf32> to vector<1x128xf32>
    %9 = tpu.iota {dimensions = array<i32: 0>} : vector<8x128xi32>
    %c0_i32 = arith.constant 0 : i32
    %10 = vector.broadcast %c0_i32 : i32 to vector<8x128xi32>
    %11 = arith.cmpi eq, %9, %10 : vector<8x128xi32>
    %12 = vector.shape_cast %5 : vector<1x128xf32> to vector<1x128xf32>
    %13 = vector.broadcast %12 : vector<1x128xf32> to vector<8x128xf32>
    %c1_i32 = arith.constant 1 : i32
    %14 = vector.broadcast %c1_i32 : i32 to vector<8x128xi32>
    %15 = arith.cmpi eq, %9, %14 : vector<8x128xi32>
    %16 = vector.shape_cast %8 : vector<1x128xf32> to vector<1x128xf32>
    %17 = vector.broadcast %16 : vector<1x128xf32> to vector<8x128xf32>
    %cst_7 = arith.constant 0.000000e+00 : f32
    %18 = vector.broadcast %cst_7 : f32 to vector<8x128xf32>
    %19 = arith.select %15, %17, %18 : vector<8x128xi1>, vector<8x128xf32>
    %20 = arith.select %11, %13, %19 : vector<8x128xi1>, vector<8x128xf32>
    %c0_8 = arith.constant 0 : index
    %c0_9 = arith.constant 0 : index
    %21 = vector.load %arg4[%c0_8, %c0_9] : memref<8x128xf32, #tpu.memory_space<vmem>>, vector<8x128xf32>
    tpu.vector_store %arg4[%c0_8, %c0_9], %20 {strides = array<i32>} : memref<8x128xf32, #tpu.memory_space<vmem>>, vector<8x128xf32>,
    return
  }
  func.func @transform_0(%arg0: i32) -> (i32, i32) {
    %c0_i32 = arith.constant 0 : i32
    %c0_i32_0 = arith.constant 0 : i32
    return %arg0, %c0_i32 : i32, i32
  }
  func.func @transform_1(%arg0: i32) -> (i32, i32) {
    %c0_i32 = arith.constant 0 : i32
    %c0_i32_0 = arith.constant 0 : i32
    %c0_i32_1 = arith.constant 0 : i32
    return %c0_i32, %c0_i32_0 : i32, i32
  }
  func.func @transform_2(%arg0: i32) -> (i32, i32) {
    %c0_i32 = arith.constant 0 : i32
    %c0_i32_0 = arith.constant 0 : i32
    return %arg0, %c0_i32 : i32, i32
  }
  func.func @transform_3(%arg0: i32) -> (i32, i32) {
    %c0_i32 = arith.constant 0 : i32
    %c0_i32_0 = arith.constant 0 : i32
    return %arg0, %c0_i32 : i32, i32
  }
}

module attributes {stable_mosaic.version = 11 : i64} {
  func.func @_mm_stats_kernel(%arg0: i32, %arg1: memref<8x1152xf32, #tpu.memory_space<vmem>>, %arg2: memref<1152x128xf32, #tpu.memory_space<vmem>>, %arg3: memref<8x128xf32, #tpu.memory_space<vmem>>, %arg4: memref<8x128xf32, #tpu.memory_space<vmem>>) attributes {dimension_semantics = [#tpu.dimension_semantics<parallel>], iteration_bounds = array<i64: 1>, scalar_prefetch = 0 : i64, scratch_operands = 0 : i64, tpu.core_type = #tpu.core_type<tc>, window_params = [{transform_indices = @transform_0, window_bounds = array<i64: 8, 1152>}, {pipeline_mode = #tpu.pipeline_mode<synchronous>, transform_indices = @transform_1, window_bounds = array<i64: 1152, 128>}, {transform_indices = @transform_2, window_bounds = array<i64: 8, 128>}, {transform_indices = @transform_3, window_bounds = array<i64: 8, 128>}]} {
    %c0 = arith.constant 0 : index
    %c0_0 = arith.constant 0 : index
    %0 = vector.load %arg1[%c0, %c0_0] : memref<8x1152xf32, #tpu.memory_space<vmem>>, vector<8x1152xf32>
    %c0_1 = arith.constant 0 : index
    %c0_2 = arith.constant 0 : index
    %1 = vector.load %arg2[%c0_1, %c0_2] : memref<1152x128xf32, #tpu.memory_space<vmem>>, vector<1152x128xf32>
    %cst = arith.constant dense<0.000000e+00> : vector<8x128xf32>
    %2 = tpu.matmul %0, %1, %cst {dimension_numbers = #tpu.dot_dimension_numbers<[1], [0], [0], [1], [0, 0, 1, 1], [], []>} : vector<8x1152xf32>, vector<1152x128xf32>, vector<8x128xf32> -> vector<8x128xf32>
    %c0_3 = arith.constant 0 : index
    %c0_4 = arith.constant 0 : index
    %3 = vector.load %arg3[%c0_3, %c0_4] : memref<8x128xf32, #tpu.memory_space<vmem>>, vector<8x128xf32>
    tpu.vector_store %arg3[%c0_3, %c0_4], %2 {strides = array<i32>} : memref<8x128xf32, #tpu.memory_space<vmem>>, vector<8x128xf32>,
    %cst_5 = arith.constant dense<0.000000e+00> : vector<128xf32>
    %4 = vector.multi_reduction <add>, %2, %cst_5 [0] : vector<8x128xf32> to vector<128xf32>
    %5 = vector.shape_cast %4 : vector<128xf32> to vector<1x128xf32>
    %6 = arith.mulf %2, %2 : vector<8x128xf32>
    %cst_6 = arith.constant dense<0.000000e+00> : vector<128xf32>
    %7 = vector.multi_reduction <add>, %6, %cst_6 [0] : vector<8x128xf32> to vector<128xf32>
    %8 = vector.shape_cast %7 : vector<128xf32> to vector<1x128xf32>
    %9 = tpu.iota {dimensions = array<i32: 0>} : vector<8x128xi32>
    %c0_i32 = arith.constant 0 : i32
    %10 = vector.broadcast %c0_i32 : i32 to vector<8x128xi32>
    %11 = arith.cmpi eq, %9, %10 : vector<8x128xi32>
    %12 = vector.shape_cast %5 : vector<1x128xf32> to vector<1x128xf32>
    %13 = vector.broadcast %12 : vector<1x128xf32> to vector<8x128xf32>
    %c1_i32 = arith.constant 1 : i32
    %14 = vector.broadcast %c1_i32 : i32 to vector<8x128xi32>
    %15 = arith.cmpi eq, %9, %14 : vector<8x128xi32>
    %16 = vector.shape_cast %8 : vector<1x128xf32> to vector<1x128xf32>
    %17 = vector.broadcast %16 : vector<1x128xf32> to vector<8x128xf32>
    %cst_7 = arith.constant 0.000000e+00 : f32
    %18 = vector.broadcast %cst_7 : f32 to vector<8x128xf32>
    %19 = arith.select %15, %17, %18 : vector<8x128xi1>, vector<8x128xf32>
    %20 = arith.select %11, %13, %19 : vector<8x128xi1>, vector<8x128xf32>
    %c0_8 = arith.constant 0 : index
    %c0_9 = arith.constant 0 : index
    %21 = vector.load %arg4[%c0_8, %c0_9] : memref<8x128xf32, #tpu.memory_space<vmem>>, vector<8x128xf32>
    tpu.vector_store %arg4[%c0_8, %c0_9], %20 {strides = array<i32>} : memref<8x128xf32, #tpu.memory_space<vmem>>, vector<8x128xf32>,
    return
  }
  func.func @transform_0(%arg0: i32) -> (i32, i32) {
    %c0_i32 = arith.constant 0 : i32
    %c0_i32_0 = arith.constant 0 : i32
    return %arg0, %c0_i32 : i32, i32
  }
  func.func @transform_1(%arg0: i32) -> (i32, i32) {
    %c0_i32 = arith.constant 0 : i32
    %c0_i32_0 = arith.constant 0 : i32
    %c0_i32_1 = arith.constant 0 : i32
    return %c0_i32, %c0_i32_0 : i32, i32
  }
  func.func @transform_2(%arg0: i32) -> (i32, i32) {
    %c0_i32 = arith.constant 0 : i32
    %c0_i32_0 = arith.constant 0 : i32
    return %arg0, %c0_i32 : i32, i32
  }
  func.func @transform_3(%arg0: i32) -> (i32, i32) {
    %c0_i32 = arith.constant 0 : i32
    %c0_i32_0 = arith.constant 0 : i32
    return %arg0, %c0_i32 : i32, i32
  }
}

module attributes {stable_mosaic.version = 11 : i64} {
  func.func @_affine_kernel(%arg0: i32, %arg1: memref<8x128xf32, #tpu.memory_space<vmem>>, %arg2: memref<1x128xf32, #tpu.memory_space<vmem>>, %arg3: memref<1x128xf32, #tpu.memory_space<vmem>>, %arg4: memref<8x128xf32, #tpu.memory_space<vmem>>) attributes {dimension_semantics = [#tpu.dimension_semantics<parallel>], iteration_bounds = array<i64: 1>, scalar_prefetch = 0 : i64, scratch_operands = 0 : i64, tpu.core_type = #tpu.core_type<tc>, window_params = [{transform_indices = @transform_0, window_bounds = array<i64: 8, 128>}, {pipeline_mode = #tpu.pipeline_mode<synchronous>, transform_indices = @transform_1, window_bounds = array<i64: 1, 128>}, {pipeline_mode = #tpu.pipeline_mode<synchronous>, transform_indices = @transform_2, window_bounds = array<i64: 1, 128>}, {transform_indices = @transform_3, window_bounds = array<i64: 8, 128>}]} {
    %c0 = arith.constant 0 : index
    %c0_0 = arith.constant 0 : index
    %0 = vector.load %arg1[%c0, %c0_0] : memref<8x128xf32, #tpu.memory_space<vmem>>, vector<8x128xf32>
    %c0_1 = arith.constant 0 : index
    %c0_2 = arith.constant 0 : index
    %1 = vector.load %arg2[%c0_1, %c0_2] : memref<1x128xf32, #tpu.memory_space<vmem>>, vector<1x128xf32>
    %2 = vector.broadcast %1 : vector<1x128xf32> to vector<8x128xf32>
    %3 = arith.mulf %0, %2 : vector<8x128xf32>
    %c0_3 = arith.constant 0 : index
    %c0_4 = arith.constant 0 : index
    %4 = vector.load %arg3[%c0_3, %c0_4] : memref<1x128xf32, #tpu.memory_space<vmem>>, vector<1x128xf32>
    %5 = vector.broadcast %4 : vector<1x128xf32> to vector<8x128xf32>
    %6 = arith.addf %3, %5 : vector<8x128xf32>
    %cst = arith.constant 0.000000e+00 : f32
    %7 = vector.broadcast %cst : f32 to vector<8x128xf32>
    %8 = arith.maximumf %6, %7 : vector<8x128xf32>
    %c0_5 = arith.constant 0 : index
    %c0_6 = arith.constant 0 : index
    %9 = vector.load %arg4[%c0_5, %c0_6] : memref<8x128xf32, #tpu.memory_space<vmem>>, vector<8x128xf32>
    tpu.vector_store %arg4[%c0_5, %c0_6], %8 {strides = array<i32>} : memref<8x128xf32, #tpu.memory_space<vmem>>, vector<8x128xf32>,
    return
  }
  func.func @transform_0(%arg0: i32) -> (i32, i32) {
    %c0_i32 = arith.constant 0 : i32
    %c0_i32_0 = arith.constant 0 : i32
    return %arg0, %c0_i32 : i32, i32
  }
  func.func @transform_1(%arg0: i32) -> (i32, i32) {
    %c0_i32 = arith.constant 0 : i32
    %c0_i32_0 = arith.constant 0 : i32
    %c0_i32_1 = arith.constant 0 : i32
    return %c0_i32, %c0_i32_0 : i32, i32
  }
  func.func @transform_2(%arg0: i32) -> (i32, i32) {
    %c0_i32 = arith.constant 0 : i32
    %c0_i32_0 = arith.constant 0 : i32
    %c0_i32_1 = arith.constant 0 : i32
    return %c0_i32, %c0_i32_0 : i32, i32
  }
  func.func @transform_3(%arg0: i32) -> (i32, i32) {
    %c0_i32 = arith.constant 0 : i32
    %c0_i32_0 = arith.constant 0 : i32
    return %arg0, %c0_i32 : i32, i32
  }
}

module attributes {stable_mosaic.version = 11 : i64} {
  func.func @_affine_res_kernel(%arg0: i32, %arg1: memref<8x128xf32, #tpu.memory_space<vmem>>, %arg2: memref<1x128xf32, #tpu.memory_space<vmem>>, %arg3: memref<1x128xf32, #tpu.memory_space<vmem>>, %arg4: memref<8x128xf32, #tpu.memory_space<vmem>>, %arg5: memref<8x128xf32, #tpu.memory_space<vmem>>) attributes {dimension_semantics = [#tpu.dimension_semantics<parallel>], iteration_bounds = array<i64: 1>, scalar_prefetch = 0 : i64, scratch_operands = 0 : i64, tpu.core_type = #tpu.core_type<tc>, window_params = [{transform_indices = @transform_0, window_bounds = array<i64: 8, 128>}, {pipeline_mode = #tpu.pipeline_mode<synchronous>, transform_indices = @transform_1, window_bounds = array<i64: 1, 128>}, {pipeline_mode = #tpu.pipeline_mode<synchronous>, transform_indices = @transform_2, window_bounds = array<i64: 1, 128>}, {transform_indices = @transform_3, window_bounds = array<i64: 8, 128>}, {transform_indices = @transform_4, window_bounds = array<i64: 8, 128>}]} {
    %c0 = arith.constant 0 : index
    %c0_0 = arith.constant 0 : index
    %0 = vector.load %arg1[%c0, %c0_0] : memref<8x128xf32, #tpu.memory_space<vmem>>, vector<8x128xf32>
    %c0_1 = arith.constant 0 : index
    %c0_2 = arith.constant 0 : index
    %1 = vector.load %arg2[%c0_1, %c0_2] : memref<1x128xf32, #tpu.memory_space<vmem>>, vector<1x128xf32>
    %2 = vector.broadcast %1 : vector<1x128xf32> to vector<8x128xf32>
    %3 = arith.mulf %0, %2 : vector<8x128xf32>
    %c0_3 = arith.constant 0 : index
    %c0_4 = arith.constant 0 : index
    %4 = vector.load %arg3[%c0_3, %c0_4] : memref<1x128xf32, #tpu.memory_space<vmem>>, vector<1x128xf32>
    %5 = vector.broadcast %4 : vector<1x128xf32> to vector<8x128xf32>
    %6 = arith.addf %3, %5 : vector<8x128xf32>
    %c0_5 = arith.constant 0 : index
    %c0_6 = arith.constant 0 : index
    %7 = vector.load %arg4[%c0_5, %c0_6] : memref<8x128xf32, #tpu.memory_space<vmem>>, vector<8x128xf32>
    %8 = arith.addf %6, %7 : vector<8x128xf32>
    %cst = arith.constant 0.000000e+00 : f32
    %9 = vector.broadcast %cst : f32 to vector<8x128xf32>
    %10 = arith.maximumf %8, %9 : vector<8x128xf32>
    %c0_7 = arith.constant 0 : index
    %c0_8 = arith.constant 0 : index
    %11 = vector.load %arg5[%c0_7, %c0_8] : memref<8x128xf32, #tpu.memory_space<vmem>>, vector<8x128xf32>
    tpu.vector_store %arg5[%c0_7, %c0_8], %10 {strides = array<i32>} : memref<8x128xf32, #tpu.memory_space<vmem>>, vector<8x128xf32>,
    return
  }
  func.func @transform_0(%arg0: i32) -> (i32, i32) {
    %c0_i32 = arith.constant 0 : i32
    %c0_i32_0 = arith.constant 0 : i32
    return %arg0, %c0_i32 : i32, i32
  }
  func.func @transform_1(%arg0: i32) -> (i32, i32) {
    %c0_i32 = arith.constant 0 : i32
    %c0_i32_0 = arith.constant 0 : i32
    %c0_i32_1 = arith.constant 0 : i32
    return %c0_i32, %c0_i32_0 : i32, i32
  }
  func.func @transform_2(%arg0: i32) -> (i32, i32) {
    %c0_i32 = arith.constant 0 : i32
    %c0_i32_0 = arith.constant 0 : i32
    %c0_i32_1 = arith.constant 0 : i32
    return %c0_i32, %c0_i32_0 : i32, i32
  }
  func.func @transform_3(%arg0: i32) -> (i32, i32) {
    %c0_i32 = arith.constant 0 : i32
    %c0_i32_0 = arith.constant 0 : i32
    return %arg0, %c0_i32 : i32, i32
  }
  func.func @transform_4(%arg0: i32) -> (i32, i32) {
    %c0_i32 = arith.constant 0 : i32
    %c0_i32_0 = arith.constant 0 : i32
    return %arg0, %c0_i32 : i32, i32
  }
}

module attributes {stable_mosaic.version = 11 : i64} {
  func.func @_matmul_bias_kernel(%arg0: i32, %arg1: memref<8x128xf32, #tpu.memory_space<vmem>>, %arg2: memref<128x128xf32, #tpu.memory_space<vmem>>, %arg3: memref<1x128xf32, #tpu.memory_space<vmem>>, %arg4: memref<8x128xf32, #tpu.memory_space<vmem>>) attributes {dimension_semantics = [#tpu.dimension_semantics<parallel>], iteration_bounds = array<i64: 1>, scalar_prefetch = 0 : i64, scratch_operands = 0 : i64, tpu.core_type = #tpu.core_type<tc>, window_params = [{pipeline_mode = #tpu.pipeline_mode<synchronous>, transform_indices = @transform_0, window_bounds = array<i64: 8, 128>}, {pipeline_mode = #tpu.pipeline_mode<synchronous>, transform_indices = @transform_1, window_bounds = array<i64: 128, 128>}, {pipeline_mode = #tpu.pipeline_mode<synchronous>, transform_indices = @transform_2, window_bounds = array<i64: 1, 128>}, {pipeline_mode = #tpu.pipeline_mode<synchronous>, transform_indices = @transform_3, window_bounds = array<i64: 8, 128>}]} {
    %c0 = arith.constant 0 : index
    %c0_0 = arith.constant 0 : index
    %0 = vector.load %arg1[%c0, %c0_0] : memref<8x128xf32, #tpu.memory_space<vmem>>, vector<8x128xf32>
    %c0_1 = arith.constant 0 : index
    %c0_2 = arith.constant 0 : index
    %1 = vector.load %arg2[%c0_1, %c0_2] : memref<128x128xf32, #tpu.memory_space<vmem>>, vector<128x128xf32>
    %cst = arith.constant dense<0.000000e+00> : vector<8x128xf32>
    %2 = tpu.matmul %0, %1, %cst {dimension_numbers = #tpu.dot_dimension_numbers<[1], [0], [0], [1], [0, 0, 1, 1], [], []>} : vector<8x128xf32>, vector<128x128xf32>, vector<8x128xf32> -> vector<8x128xf32>
    %c0_3 = arith.constant 0 : index
    %c0_4 = arith.constant 0 : index
    %3 = vector.load %arg3[%c0_3, %c0_4] : memref<1x128xf32, #tpu.memory_space<vmem>>, vector<1x128xf32>
    %4 = vector.broadcast %3 : vector<1x128xf32> to vector<8x128xf32>
    %5 = arith.addf %2, %4 : vector<8x128xf32>
    %c0_5 = arith.constant 0 : index
    %c0_6 = arith.constant 0 : index
    %6 = vector.load %arg4[%c0_5, %c0_6] : memref<8x128xf32, #tpu.memory_space<vmem>>, vector<8x128xf32>
    tpu.vector_store %arg4[%c0_5, %c0_6], %5 {strides = array<i32>} : memref<8x128xf32, #tpu.memory_space<vmem>>, vector<8x128xf32>,
    return
  }
  func.func @transform_0(%arg0: i32) -> (i32, i32) {
    %c0_i32 = arith.constant 0 : i32
    %c0_i32_0 = arith.constant 0 : i32
    %c0_i32_1 = arith.constant 0 : i32
    return %c0_i32, %c0_i32_0 : i32, i32
  }
  func.func @transform_1(%arg0: i32) -> (i32, i32) {
    %c0_i32 = arith.constant 0 : i32
    %c0_i32_0 = arith.constant 0 : i32
    %c0_i32_1 = arith.constant 0 : i32
    return %c0_i32, %c0_i32_0 : i32, i32
  }
  func.func @transform_2(%arg0: i32) -> (i32, i32) {
    %c0_i32 = arith.constant 0 : i32
    %c0_i32_0 = arith.constant 0 : i32
    %c0_i32_1 = arith.constant 0 : i32
    return %c0_i32, %c0_i32_0 : i32, i32
  }
  func.func @transform_3(%arg0: i32) -> (i32, i32) {
    %c0_i32 = arith.constant 0 : i32
    %c0_i32_0 = arith.constant 0 : i32
    %c0_i32_1 = arith.constant 0 : i32
    return %c0_i32, %c0_i32_0 : i32, i32
  }
}

module attributes {stable_mosaic.version = 11 : i64} {
  func.func @_avgpool_kernel(%arg0: i32, %arg1: memref<8x1x128xf32, #tpu.memory_space<vmem>>, %arg2: memref<8x128xf32, #tpu.memory_space<vmem>>) attributes {dimension_semantics = [#tpu.dimension_semantics<parallel>], iteration_bounds = array<i64: 1>, scalar_prefetch = 0 : i64, scratch_operands = 0 : i64, tpu.core_type = #tpu.core_type<tc>, window_params = [{transform_indices = @transform_0, window_bounds = array<i64: 8, 1, 128>}, {transform_indices = @transform_1, window_bounds = array<i64: 8, 128>}]} {
    %c0 = arith.constant 0 : index
    %c0_0 = arith.constant 0 : index
    %c0_1 = arith.constant 0 : index
    %0 = vector.load %arg1[%c0, %c0_0, %c0_1] : memref<8x1x128xf32, #tpu.memory_space<vmem>>, vector<8x1x128xf32>
    %cst = arith.constant dense<0.000000e+00> : vector<8x128xf32>
    %1 = vector.multi_reduction <add>, %0, %cst [1] : vector<8x1x128xf32> to vector<8x128xf32>
    %cst_2 = arith.constant 1.000000e+00 : f32
    %2 = vector.broadcast %cst_2 : f32 to vector<8x128xf32>
    %3 = arith.divf %1, %2 : vector<8x128xf32>
    %c0_3 = arith.constant 0 : index
    %c0_4 = arith.constant 0 : index
    %4 = vector.load %arg2[%c0_3, %c0_4] : memref<8x128xf32, #tpu.memory_space<vmem>>, vector<8x128xf32>
    tpu.vector_store %arg2[%c0_3, %c0_4], %3 {strides = array<i32>} : memref<8x128xf32, #tpu.memory_space<vmem>>, vector<8x128xf32>,
    return
  }
  func.func @transform_0(%arg0: i32) -> (i32, i32, i32) {
    %c0_i32 = arith.constant 0 : i32
    %c0_i32_0 = arith.constant 0 : i32
    %c0_i32_1 = arith.constant 0 : i32
    return %arg0, %c0_i32, %c0_i32_0 : i32, i32, i32
  }
  func.func @transform_1(%arg0: i32) -> (i32, i32) {
    %c0_i32 = arith.constant 0 : i32
    %c0_i32_0 = arith.constant 0 : i32
    return %arg0, %c0_i32 : i32, i32
  }
}

</mosaic_0001>

<llo_original>
// kernel: resnet_forward.46
$region0: #{resnet_forward.46}
  #allocation0 [shape = 'u32[]', space=smem, size = 0x4, offset = 0x4, fixed_abs, tag = 'smem constant byte address 0x4 - core index']
  #allocation1 [shape = 'u32[144,128]{1,0:T(1,128)}', space=vmem, size = 0x12000, scoped, tag = 'internal scratch']
  %s0 = inlined_call_operand.vmem [shape: f32[512,128], index: 0, kind: input, shape index: {}]
  %s1 = inlined_call_operand.vmem [shape: f32[1,128], index: 1, kind: input, shape index: {}]
  %s2 = inlined_call_operand.vmem [shape: f32[1,128], index: 2, kind: input, shape index: {}]
  %s3 = inlined_call_operand.vmem [shape: f32[512,128], index: 3, kind: output, shape index: {}]
  %s4 = sld [smem:[#allocation0]]
  $region22: #{resnet_forward.46} parent=0
    _
  %s6 = ssub.s32 1, %s4
  %s7 = scalar_select 0, %s6, %s4
  // Predicated region
  $region2: #{resnet_forward.46} parent=0 // pred_check
    _
  $region3: #{resnet_forward.46} parent=0 // pred_check_branch
    %9 = sbr.rel (0) target = $region5
  $region4: #{resnet_forward.46} parent=0 // pred_region
    _
  $region5: #{resnet_forward.46} parent=0 // pred_fallthru
    _
  // Predicated region
  $region6: #{resnet_forward.46} parent=0 // pred_check
    _
  $region7: #{resnet_forward.46} parent=0 // pred_check_branch
    %11 = sbr.rel (0) target = $region9
  $region8: #{resnet_forward.46} parent=0 // pred_region
    _
  $region9: #{resnet_forward.46} parent=0 // pred_fallthru
    _
  // Predicated region
  $region10: #{resnet_forward.46} parent=0 // pred_check
    _
  $region11: #{resnet_forward.46} parent=0 // pred_check_branch
    %13 = sbr.rel (0) target = $region13
  $region12: #{resnet_forward.46} parent=0 // pred_region
    _
  $region13: #{resnet_forward.46} parent=0 // pred_fallthru
    _
  %v14 = vld [vmem:[%s0] sm:$0xff]
  %v15 = vld [vmem:[%s0 + $0x8] sm:$0xff]
  %v16 = vld [vmem:[%s0 + $0x10] sm:$0xff]
  %v17 = vld [vmem:[%s0 + $0x18] sm:$0xff]
  %v18 = vld [vmem:[%s0 + $0x20] sm:$0xff]
  %v19 = vld [vmem:[%s0 + $0x28] sm:$0xff]
  %v20 = vld [vmem:[%s0 + $0x30] sm:$0xff]
  %v21 = vld [vmem:[%s0 + $0x38] sm:$0xff]
  %v22 = vld [vmem:[%s0 + $0x40] sm:$0xff]
  %v23 = vld [vmem:[%s0 + $0x48] sm:$0xff]
  %v24 = vld [vmem:[%s0 + $0x50] sm:$0xff]
  %v25 = vld [vmem:[%s0 + $0x58] sm:$0xff]
  %v26 = vld [vmem:[%s0 + $0x60] sm:$0xff]
  %v27 = vld [vmem:[%s0 + $0x68] sm:$0xff]
  %v28 = vld [vmem:[%s0 + $0x70] sm:$0xff]
  %v29 = vld [vmem:[%s0 + $0x78] sm:$0xff]
  %v30 = vld [vmem:[%s0 + $0x80] sm:$0xff]
  %v31 = vld [vmem:[%s0 + $0x88] sm:$0xff]
  %v32 = vld [vmem:[%s0 + $0x90] sm:$0xff]
  %v33 = vld [vmem:[%s0 + $0x98] sm:$0xff]
  %v34 = vld [vmem:[%s0 + $0xa0] sm:$0xff]
  %v35 = vld [vmem:[%s0 + $0xa8] sm:$0xff]
  %v36 = vld [vmem:[%s0 + $0xb0] sm:$0xff]
  %v37 = vld [vmem:[%s0 + $0xb8] sm:$0xff]
  %v38 = vld [vmem:[%s0 + $0xc0] sm:$0xff]
  %v39 = vld [vmem:[%s0 + $0xc8] sm:$0xff]
  %v40 = vld [vmem:[%s0 + $0xd0] sm:$0xff]
  %v41 = vld [vmem:[%s0 + $0xd8] sm:$0xff]
  %v42 = vld [vmem:[%s0 + $0xe0] sm:$0xff]
  %v43 = vld [vmem:[%s0 + $0xe8] sm:$0xff]
  %v44 = vld [vmem:[%s0 + $0xf0] sm:$0xff]
  %v45 = vld [vmem:[%s0 + $0xf8] sm:$0xff]
  %v46 = vld [vmem:[%s0 + $0x100] sm:$0xff]
  %v47 = vld [vmem:[%s0 + $0x108] sm:$0xff]
  %v48 = vld [vmem:[%s0 + $0x110] sm:$0xff]
  %v49 = vld [vmem:[%s0 + $0x118] sm:$0xff]
  %v50 = vld [vmem:[%s0 + $0x120] sm:$0xff]
  %v51 = vld [vmem:[%s0 + $0x128] sm:$0xff]
  %v52 = vld [vmem:[%s0 + $0x130] sm:$0xff]
  %v53 = vld [vmem:[%s0 + $0x138] sm:$0xff]
  %v54 = vld [vmem:[%s0 + $0x140] sm:$0xff]
  %v55 = vld [vmem:[%s0 + $0x148] sm:$0xff]
  %v56 = vld [vmem:[%s0 + $0x150] sm:$0xff]
  %v57 = vld [vmem:[%s0 + $0x158] sm:$0xff]
  %v58 = vld [vmem:[%s0 + $0x160] sm:$0xff]
  %v59 = vld [vmem:[%s0 + $0x168] sm:$0xff]
  %v60 = vld [vmem:[%s0 + $0x170] sm:$0xff]
  %v61 = vld [vmem:[%s0 + $0x178] sm:$0xff]
  %v62 = vld [vmem:[%s0 + $0x180] sm:$0xff]
  %v63 = vld [vmem:[%s0 + $0x188] sm:$0xff]
  %v64 = vld [vmem:[%s0 + $0x190] sm:$0xff]
  %v65 = vld [vmem:[%s0 + $0x198] sm:$0xff]
  %v66 = vld [vmem:[%s0 + $0x1a0] sm:$0xff]
  %v67 = vld [vmem:[%s0 + $0x1a8] sm:$0xff]
  %v68 = vld [vmem:[%s0 + $0x1b0] sm:$0xff]
  %v69 = vld [vmem:[%s0 + $0x1b8] sm:$0xff]
  %v70 = vld [vmem:[%s0 + $0x1c0] sm:$0xff]
  %v71 = vld [vmem:[%s0 + $0x1c8] sm:$0xff]
  %v72 = vld [vmem:[%s0 + $0x1d0] sm:$0xff]
  %v73 = vld [vmem:[%s0 + $0x1d8] sm:$0xff]
  %v74 = vld [vmem:[%s0 + $0x1e0] sm:$0xff]
  %v75 = vld [vmem:[%s0 + $0x1e8] sm:$0xff]
  %v76 = vld [vmem:[%s0 + $0x1f0] sm:$0xff]
  %v77 = vld [vmem:[%s0 + $0x1f8] sm:$0xff]
  %v78 = vld [vmem:[%s1] sm:$0x1]
  %v80 = vlaneseq
  %v81 = vshrl.u32 %v80, 7
  %v82 = vsub.s32 0, %v81
  %v83 = vrot.slane %v78, %v82
  %v85 = vmul.f32 %v14, %v83
  %v86 = vmul.f32 %v15, %v83
  %v87 = vmul.f32 %v16, %v83
  %v88 = vmul.f32 %v17, %v83
  %v89 = vmul.f32 %v18, %v83
  %v90 = vmul.f32 %v19, %v83
  %v91 = vmul.f32 %v20, %v83
  %v92 = vmul.f32 %v21, %v83
  %v93 = vmul.f32 %v22, %v83
  %v94 = vmul.f32 %v23, %v83
  %v95 = vmul.f32 %v24, %v83
  %v96 = vmul.f32 %v25, %v83
  %v97 = vmul.f32 %v26, %v83
  %v98 = vmul.f32 %v27, %v83
  %v99 = vmul.f32 %v28, %v83
  %v100 = vmul.f32 %v29, %v83
  %v101 = vmul.f32 %v30, %v83
  %v102 = vmul.f32 %v31, %v83
  %v103 = vmul.f32 %v32, %v83
  %v104 = vmul.f32 %v33, %v83
  %v105 = vmul.f32 %v34, %v83
  %v106 = vmul.f32 %v35, %v83
  %v107 = vmul.f32 %v36, %v83
  %v108 = vmul.f32 %v37, %v83
  %v109 = vmul.f32 %v38, %v83
  %v110 = vmul.f32 %v39, %v83
  %v111 = vmul.f32 %v40, %v83
  %v112 = vmul.f32 %v41, %v83
  %v113 = vmul.f32 %v42, %v83
  %v114 = vmul.f32 %v43, %v83
  %v115 = vmul.f32 %v44, %v83
  %v116 = vmul.f32 %v45, %v83
  %v117 = vmul.f32 %v46, %v83
  %v118 = vmul.f32 %v47, %v83
  %v119 = vmul.f32 %v48, %v83
  %v120 = vmul.f32 %v49, %v83
  %v121 = vmul.f32 %v50, %v83
  %v122 = vmul.f32 %v51, %v83
  %v123 = vmul.f32 %v52, %v83
  %v124 = vmul.f32 %v53, %v83
  %v125 = vmul.f32 %v54, %v83
  %v126 = vmul.f32 %v55, %v83
  %v127 = vmul.f32 %v56, %v83
  %v128 = vmul.f32 %v57, %v83
  %v129 = vmul.f32 %v58, %v83
  %v130 = vmul.f32 %v59, %v83
  %v131 = vmul.f32 %v60, %v83
  %v132 = vmul.f32 %v61, %v83
  %v133 = vmul.f32 %v62, %v83
  %v134 = vmul.f32 %v63, %v83
  %v135 = vmul.f32 %v64, %v83
  %v136 = vmul.f32 %v65, %v83
  %v137 = vmul.f32 %v66, %v83
  %v138 = vmul.f32 %v67, %v83
  %v139 = vmul.f32 %v68, %v83
  %v140 = vmul.f32 %v69, %v83
  %v141 = vmul.f32 %v70, %v83
  %v142 = vmul.f32 %v71, %v83
  %v143 = vmul.f32 %v72, %v83
  %v144 = vmul.f32 %v73, %v83
  %v145 = vmul.f32 %v74, %v83
  %v146 = vmul.f32 %v75, %v83
  %v147 = vmul.f32 %v76, %v83
  %v148 = vmul.f32 %v77, %v83
  %v149 = vld [vmem:[%s2] sm:$0x1]
  %v151 = vlaneseq
  %v152 = vshrl.u32 %v151, 7
  %v153 = vsub.s32 0, %v152
  %v154 = vrot.slane %v149, %v153
  %v156 = vadd.f32 %v85, %v154
  %v157 = vadd.f32 %v86, %v154
  %v158 = vadd.f32 %v87, %v154
  %v159 = vadd.f32 %v88, %v154
  %v160 = vadd.f32 %v89, %v154
  %v161 = vadd.f32 %v90, %v154
  %v162 = vadd.f32 %v91, %v154
  %v163 = vadd.f32 %v92, %v154
  %v164 = vadd.f32 %v93, %v154
  %v165 = vadd.f32 %v94, %v154
  %v166 = vadd.f32 %v95, %v154
  %v167 = vadd.f32 %v96, %v154
  %v168 = vadd.f32 %v97, %v154
  %v169 = vadd.f32 %v98, %v154
  %v170 = vadd.f32 %v99, %v154
  %v171 = vadd.f32 %v100, %v154
  %v172 = vadd.f32 %v101, %v154
  %v173 = vadd.f32 %v102, %v154
  %v174 = vadd.f32 %v103, %v154
  %v175 = vadd.f32 %v104, %v154
  %v176 = vadd.f32 %v105, %v154
  %v177 = vadd.f32 %v106, %v154
  %v178 = vadd.f32 %v107, %v154
  %v179 = vadd.f32 %v108, %v154
  %v180 = vadd.f32 %v109, %v154
  %v181 = vadd.f32 %v110, %v154
  %v182 = vadd.f32 %v111, %v154
  %v183 = vadd.f32 %v112, %v154
  %v184 = vadd.f32 %v113, %v154
  %v185 = vadd.f32 %v114, %v154
  %v186 = vadd.f32 %v115, %v154
  %v187 = vadd.f32 %v116, %v154
  %v188 = vadd.f32 %v117, %v154
  %v189 = vadd.f32 %v118, %v154
  %v190 = vadd.f32 %v119, %v154
  %v191 = vadd.f32 %v120, %v154
  %v192 = vadd.f32 %v121, %v154
  %v193 = vadd.f32 %v122, %v154
  %v194 = vadd.f32 %v123, %v154
  %v195 = vadd.f32 %v124, %v154
  %v196 = vadd.f32 %v125, %v154
  %v197 = vadd.f32 %v126, %v154
  %v198 = vadd.f32 %v127, %v154
  %v199 = vadd.f32 %v128, %v154
  %v200 = vadd.f32 %v129, %v154
  %v201 = vadd.f32 %v130, %v154
  %v202 = vadd.f32 %v131, %v154
  %v203 = vadd.f32 %v132, %v154
  %v204 = vadd.f32 %v133, %v154
  %v205 = vadd.f32 %v134, %v154
  %v206 = vadd.f32 %v135, %v154
  %v207 = vadd.f32 %v136, %v154
  %v208 = vadd.f32 %v137, %v154
  %v209 = vadd.f32 %v138, %v154
  %v210 = vadd.f32 %v139, %v154
  %v211 = vadd.f32 %v140, %v154
  %v212 = vadd.f32 %v141, %v154
  %v213 = vadd.f32 %v142, %v154
  %v214 = vadd.f32 %v143, %v154
  %v215 = vadd.f32 %v144, %v154
  %v216 = vadd.f32 %v145, %v154
  %v217 = vadd.f32 %v146, %v154
  %v218 = vadd.f32 %v147, %v154
  %v219 = vadd.f32 %v148, %v154
  %v220 = vmax.f32 %v156, 0.0
  %v221 = vmax.f32 %v157, 0.0
  %v222 = vmax.f32 %v158, 0.0
  %v223 = vmax.f32 %v159, 0.0
  %v224 = vmax.f32 %v160, 0.0
  %v225 = vmax.f32 %v161, 0.0
  %v226 = vmax.f32 %v162, 0.0
  %v227 = vmax.f32 %v163, 0.0
  %v228 = vmax.f32 %v164, 0.0
  %v229 = vmax.f32 %v165, 0.0
  %v230 = vmax.f32 %v166, 0.0
  %v231 = vmax.f32 %v167, 0.0
  %v232 = vmax.f32 %v168, 0.0
  %v233 = vmax.f32 %v169, 0.0
  %v234 = vmax.f32 %v170, 0.0
  %v235 = vmax.f32 %v171, 0.0
  %v236 = vmax.f32 %v172, 0.0
  %v237 = vmax.f32 %v173, 0.0
  %v238 = vmax.f32 %v174, 0.0
  %v239 = vmax.f32 %v175, 0.0
  %v240 = vmax.f32 %v176, 0.0
  %v241 = vmax.f32 %v177, 0.0
  %v242 = vmax.f32 %v178, 0.0
  %v243 = vmax.f32 %v179, 0.0
  %v244 = vmax.f32 %v180, 0.0
  %v245 = vmax.f32 %v181, 0.0
  %v246 = vmax.f32 %v182, 0.0
  %v247 = vmax.f32 %v183, 0.0
  %v248 = vmax.f32 %v184, 0.0
  %v249 = vmax.f32 %v185, 0.0
  %v250 = vmax.f32 %v186, 0.0
  %v251 = vmax.f32 %v187, 0.0
  %v252 = vmax.f32 %v188, 0.0
  %v253 = vmax.f32 %v189, 0.0
  %v254 = vmax.f32 %v190, 0.0
  %v255 = vmax.f32 %v191, 0.0
  %v256 = vmax.f32 %v192, 0.0
  %v257 = vmax.f32 %v193, 0.0
  %v258 = vmax.f32 %v194, 0.0
  %v259 = vmax.f32 %v195, 0.0
  %v260 = vmax.f32 %v196, 0.0
  %v261 = vmax.f32 %v197, 0.0
  %v262 = vmax.f32 %v198, 0.0
  %v263 = vmax.f32 %v199, 0.0
  %v264 = vmax.f32 %v200, 0.0
  %v265 = vmax.f32 %v201, 0.0
  %v266 = vmax.f32 %v202, 0.0
  %v267 = vmax.f32 %v203, 0.0
  %v268 = vmax.f32 %v204, 0.0
  %v269 = vmax.f32 %v205, 0.0
  %v270 = vmax.f32 %v206, 0.0
  %v271 = vmax.f32 %v207, 0.0
  %v272 = vmax.f32 %v208, 0.0
  %v273 = vmax.f32 %v209, 0.0
  %v274 = vmax.f32 %v210, 0.0
  %v275 = vmax.f32 %v211, 0.0
  %v276 = vmax.f32 %v212, 0.0
  %v277 = vmax.f32 %v213, 0.0
  %v278 = vmax.f32 %v214, 0.0
  %v279 = vmax.f32 %v215, 0.0
  %v280 = vmax.f32 %v216, 0.0
  %v281 = vmax.f32 %v217, 0.0
  %v282 = vmax.f32 %v218, 0.0
  %v283 = vmax.f32 %v219, 0.0
  %284 = vst [vmem:[%s3] sm:$0xff] %v220
  %285 = vst [vmem:[%s3 + $0x8] sm:$0xff] %v221
  %286 = vst [vmem:[%s3 + $0x10] sm:$0xff] %v222
  %287 = vst [vmem:[%s3 + $0x18] sm:$0xff] %v223
  %288 = vst [vmem:[%s3 + $0x20] sm:$0xff] %v224
  %289 = vst [vmem:[%s3 + $0x28] sm:$0xff] %v225
  %290 = vst [vmem:[%s3 + $0x30] sm:$0xff] %v226
  %291 = vst [vmem:[%s3 + $0x38] sm:$0xff] %v227
  %292 = vst [vmem:[%s3 + $0x40] sm:$0xff] %v228
  %293 = vst [vmem:[%s3 + $0x48] sm:$0xff] %v229
  %294 = vst [vmem:[%s3 + $0x50] sm:$0xff] %v230
  %295 = vst [vmem:[%s3 + $0x58] sm:$0xff] %v231
  %296 = vst [vmem:[%s3 + $0x60] sm:$0xff] %v232
  %297 = vst [vmem:[%s3 + $0x68] sm:$0xff] %v233
  %298 = vst [vmem:[%s3 + $0x70] sm:$0xff] %v234
  %299 = vst [vmem:[%s3 + $0x78] sm:$0xff] %v235
  %300 = vst [vmem:[%s3 + $0x80] sm:$0xff] %v236
  %301 = vst [vmem:[%s3 + $0x88] sm:$0xff] %v237
  %302 = vst [vmem:[%s3 + $0x90] sm:$0xff] %v238
  %303 = vst [vmem:[%s3 + $0x98] sm:$0xff] %v239
  %304 = vst [vmem:[%s3 + $0xa0] sm:$0xff] %v240
  %305 = vst [vmem:[%s3 + $0xa8] sm:$0xff] %v241
  %306 = vst [vmem:[%s3 + $0xb0] sm:$0xff] %v242
  %307 = vst [vmem:[%s3 + $0xb8] sm:$0xff] %v243
  %308 = vst [vmem:[%s3 + $0xc0] sm:$0xff] %v244
  %309 = vst [vmem:[%s3 + $0xc8] sm:$0xff] %v245
  %310 = vst [vmem:[%s3 + $0xd0] sm:$0xff] %v246
  %311 = vst [vmem:[%s3 + $0xd8] sm:$0xff] %v247
  %312 = vst [vmem:[%s3 + $0xe0] sm:$0xff] %v248
  %313 = vst [vmem:[%s3 + $0xe8] sm:$0xff] %v249
  %314 = vst [vmem:[%s3 + $0xf0] sm:$0xff] %v250
  %315 = vst [vmem:[%s3 + $0xf8] sm:$0xff] %v251
  %316 = vst [vmem:[%s3 + $0x100] sm:$0xff] %v252
  %317 = vst [vmem:[%s3 + $0x108] sm:$0xff] %v253
  %318 = vst [vmem:[%s3 + $0x110] sm:$0xff] %v254
  %319 = vst [vmem:[%s3 + $0x118] sm:$0xff] %v255
  %320 = vst [vmem:[%s3 + $0x120] sm:$0xff] %v256
  %321 = vst [vmem:[%s3 + $0x128] sm:$0xff] %v257
  %322 = vst [vmem:[%s3 + $0x130] sm:$0xff] %v258
  %323 = vst [vmem:[%s3 + $0x138] sm:$0xff] %v259
  %324 = vst [vmem:[%s3 + $0x140] sm:$0xff] %v260
  %325 = vst [vmem:[%s3 + $0x148] sm:$0xff] %v261
  %326 = vst [vmem:[%s3 + $0x150] sm:$0xff] %v262
  %327 = vst [vmem:[%s3 + $0x158] sm:$0xff] %v263
  %328 = vst [vmem:[%s3 + $0x160] sm:$0xff] %v264
  %329 = vst [vmem:[%s3 + $0x168] sm:$0xff] %v265
  %330 = vst [vmem:[%s3 + $0x170] sm:$0xff] %v266
  %331 = vst [vmem:[%s3 + $0x178] sm:$0xff] %v267
  %332 = vst [vmem:[%s3 + $0x180] sm:$0xff] %v268
  %333 = vst [vmem:[%s3 + $0x188] sm:$0xff] %v269
  %334 = vst [vmem:[%s3 + $0x190] sm:$0xff] %v270
  %335 = vst [vmem:[%s3 + $0x198] sm:$0xff] %v271
  %336 = vst [vmem:[%s3 + $0x1a0] sm:$0xff] %v272
  %337 = vst [vmem:[%s3 + $0x1a8] sm:$0xff] %v273
  %338 = vst [vmem:[%s3 + $0x1b0] sm:$0xff] %v274
  %339 = vst [vmem:[%s3 + $0x1b8] sm:$0xff] %v275
  %340 = vst [vmem:[%s3 + $0x1c0] sm:$0xff] %v276
  %341 = vst [vmem:[%s3 + $0x1c8] sm:$0xff] %v277
  %342 = vst [vmem:[%s3 + $0x1d0] sm:$0xff] %v278
  %343 = vst [vmem:[%s3 + $0x1d8] sm:$0xff] %v279
  %344 = vst [vmem:[%s3 + $0x1e0] sm:$0xff] %v280
  %345 = vst [vmem:[%s3 + $0x1e8] sm:$0xff] %v281
  %346 = vst [vmem:[%s3 + $0x1f0] sm:$0xff] %v282
  %347 = vst [vmem:[%s3 + $0x1f8] sm:$0xff] %v283
  // Predicated region
  $region14: #{resnet_forward.46} parent=0 // pred_check
    _
  $region15: #{resnet_forward.46} parent=0 // pred_check_branch
    %349 = sbr.rel (0) target = $region17
  $region16: #{resnet_forward.46} parent=0 // pred_region
    _
  $region17: #{resnet_forward.46} parent=0 // pred_fallthru
    _
  // Predicated region
  $region18: #{resnet_forward.46} parent=0 // pred_check
    _
  $region19: #{resnet_forward.46} parent=0 // pred_check_branch
    %351 = sbr.rel (0) target = $region21
  $region20: #{resnet_forward.46} parent=0 // pred_region
    _
  $region21: #{resnet_forward.46} parent=0 // pred_fallthru
    _

// kernel: resnet_forward.45
$region0: #{resnet_forward.45}
  #allocation0 [shape = 'u32[]', space=smem, size = 0x4, offset = 0x4, fixed_abs, tag = 'smem constant byte address 0x4 - core index']
  #allocation1 [shape = 'u32[144,128]{1,0:T(1,128)}', space=vmem, size = 0x12000, scoped, tag = 'internal scratch']
  %s0 = inlined_call_operand.vmem [shape: f32[512,152], index: 0, kind: input, shape index: {}]
  %s1 = inlined_call_operand.vmem [shape: f32[152,128], index: 1, kind: input, shape index: {}]
  %s2 = inlined_call_operand.vmem [shape: f32[512,128], index: 2, kind: output, shape index: {0}]
  %s3 = inlined_call_operand.vmem [shape: f32[16,128], index: 3, kind: output, shape index: {1}]
  %4 = xla_tuple %s2, %s3
  %s5 = sld [smem:[#allocation0]]
  $region49: #{resnet_forward.45} parent=0
    _
  %s7 = ssub.s32 1, %s5
  %s8 = scalar_select 0, %s7, %s5
  loop: start=0, step=1, limit=4
  $region2: #{resnet_forward.45} parent=0 // loop_pre_header
    _
  $region3: #{resnet_forward.45} parent=0 // loop_header
    %s10 = sphi 0, %s14
    %p11 = scmp.ge.s32.totalorder %s10, 4
    %s20 = sphi 0, %s22
    %s23 = sphi 0, %s20
    %s24 = sphi 0, %s23
    %s40 = sphi 0, %s24
    %s44 = sphi 0, %s44
    %s46 = sphi 0, %s44
    %s47 = sphi 0, %s46
    %s61 = sphi 0, %s47
    %s67 = sphi 0, %s69
    %s70 = sphi 0, %s67
    %s71 = sphi 0, %s70
    %s87 = sphi 0, %s71
    %s93 = sphi 0, %s95
    %s96 = sphi 0, %s93
    %s97 = sphi 0, %s96
    %s113 = sphi 0, %s97
  $region4: #{resnet_forward.45} parent=0 // loop_header_branch
    %13 = sbr.rel (%p11) target = $region8
  $region5: #{resnet_forward.45} parent=0 // loop_body
    %s15 = ssub.s32 %s10, 1
    %s16 = ssub.s32 %s10, 2
    %s17 = sadd.s32 %s10, 1
    %s18 = ssub.s32 %s10, %s17
    %p19 = scmp.eq.s32.totalorder %s18, 0
    %s21 = sadd.s32 %s20, 1
    %s22 = scalar_select %p19, %s20, %s21
    %p25 = pneg %p19
    %p26 = scmp.eq.s32.totalorder %s10, 1
    %p27 = por %p25, %p26
    %p28 = scmp.ne.s32.totalorder %s20, %s23
    %p29 = scmp.eq.s32.totalorder %s10, 0
    %p30 = por %p28, %p29
    %p31 = scmp.ne.s32.totalorder %s20, %s23
    %p32 = scmp.eq.s32.totalorder %s15, 1
    %p33 = por %p31, %p32
    %p34 = scmp.ne.s32.totalorder %s23, %s24
    %p35 = scmp.eq.s32.totalorder %s15, 0
    %p36 = por %p34, %p35
    %p37 = scmp.ne.s32.totalorder %s23, %s24
    %p38 = scmp.eq.s32.totalorder %s16, 1
    %p39 = por %p37, %p38
    %p41 = scmp.ne.s32.totalorder %s24, %s40
    %p42 = scmp.eq.s32.totalorder %s16, 0
    %p43 = por %p41, %p42
    %s45 = sadd.s32 %s44, 1
    %p48 = scmp.eq.s32.totalorder %s10, 1
    %p49 = scmp.ne.s32.totalorder %s44, %s46
    %p50 = scmp.eq.s32.totalorder %s10, 0
    %p51 = por %p49, %p50
    %p52 = scmp.ne.s32.totalorder %s44, %s46
    %p53 = scmp.eq.s32.totalorder %s15, 1
    %p54 = por %p52, %p53
    %p55 = scmp.ne.s32.totalorder %s46, %s47
    %p56 = scmp.eq.s32.totalorder %s15, 0
    %p57 = por %p55, %p56
    %p58 = scmp.ne.s32.totalorder %s46, %s47
    %p59 = scmp.eq.s32.totalorder %s16, 1
    %p60 = por %p58, %p59
    %p62 = scmp.ne.s32.totalorder %s47, %s61
    %p63 = scmp.eq.s32.totalorder %s16, 0
    %p64 = por %p62, %p63
    %s65 = ssub.s32 %s10, %s17
    %p66 = scmp.eq.s32.totalorder %s65, 0
    %s68 = sadd.s32 %s67, 1
    %s69 = scalar_select %p66, %s67, %s68
    %p72 = pneg %p66
    %p73 = scmp.eq.s32.totalorder %s10, 1
    %p74 = por %p72, %p73
    %p75 = scmp.ne.s32.totalorder %s67, %s70
    %p76 = scmp.eq.s32.totalorder %s10, 0
    %p77 = por %p75, %p76
    %p78 = scmp.ne.s32.totalorder %s67, %s70
    %p79 = scmp.eq.s32.totalorder %s15, 1
    %p80 = por %p78, %p79
    %p81 = scmp.ne.s32.totalorder %s70, %s71
    %p82 = scmp.eq.s32.totalorder %s15, 0
    %p83 = por %p81, %p82
    %p84 = scmp.ne.s32.totalorder %s70, %s71
    %p85 = scmp.eq.s32.totalorder %s16, 1
    %p86 = por %p84, %p85
    %p88 = scmp.ne.s32.totalorder %s71, %s87
    %p89 = scmp.eq.s32.totalorder %s16, 0
    %p90 = por %p88, %p89
    %s91 = ssub.s32 %s10, %s17
    %p92 = scmp.eq.s32.totalorder %s91, 0
    %s94 = sadd.s32 %s93, 1
    %s95 = scalar_select %p92, %s93, %s94
    %p98 = pneg %p92
    %p99 = scmp.eq.s32.totalorder %s10, 1
    %p100 = por %p98, %p99
    %p101 = scmp.ne.s32.totalorder %s93, %s96
    %p102 = scmp.eq.s32.totalorder %s10, 0
    %p103 = por %p101, %p102
    %p104 = scmp.ne.s32.totalorder %s93, %s96
    %p105 = scmp.eq.s32.totalorder %s15, 1
    %p106 = por %p104, %p105
    %p107 = scmp.ne.s32.totalorder %s96, %s97
    %p108 = scmp.eq.s32.totalorder %s15, 0
    %p109 = por %p107, %p108
    %p110 = scmp.ne.s32.totalorder %s96, %s97
    %p111 = scmp.eq.s32.totalorder %s16, 1
    %p112 = por %p110, %p111
    %p114 = scmp.ne.s32.totalorder %s97, %s113
    %p115 = scmp.eq.s32.totalorder %s16, 0
    %p116 = por %p114, %p115
    %p117 = scmp.le.s32.totalorder 1, %s10
    %p118 = scmp.lt.s32.totalorder %s10, 3
    %p119 = pnand %p117, %p118
    %p120 = pneg %p119
    // Predicated region
    $region9: #{resnet_forward.45} parent=5 // pred_check
      _
    $region10: #{resnet_forward.45} parent=5 // pred_check_branch
      %122 = sbr.rel (%p119) target = $region12
    $region11: #{resnet_forward.45} parent=5 // pred_region
      %s123 = ssub.s32 %s10, 1
      // Predicated region
      $region13: #{resnet_forward.45} parent=11 // pred_check
        %p124 = pneg %p57
      $region14: #{resnet_forward.45} parent=11 // pred_check_branch
        %126 = sbr.rel (%p124) target = $region16
      $region15: #{resnet_forward.45} parent=11 // pred_region
        _
      $region16: #{resnet_forward.45} parent=11 // pred_fallthru
        _
    $region12: #{resnet_forward.45} parent=5 // pred_fallthru
      _
    %p127 = scmp.lt.s32.totalorder %s10, 2
    // Predicated region
    $region17: #{resnet_forward.45} parent=5 // pred_check
      %p128 = pneg %p127
    $region18: #{resnet_forward.45} parent=5 // pred_check_branch
      %130 = sbr.rel (%p128) target = $region20
    $region19: #{resnet_forward.45} parent=5 // pred_region
      // Predicated region
      $region21: #{resnet_forward.45} parent=19 // pred_check
        %p131 = pneg %p30
      $region22: #{resnet_forward.45} parent=19 // pred_check_branch
        %133 = sbr.rel (%p131) target = $region24
      $region23: #{resnet_forward.45} parent=19 // pred_region
        %s134 = smul.u32 32, %s10
        %p135 = scmp.lt.s32.totalorder %s134, 63
        %s136 = scalar_select %p135, %s134, 63
        %s137 = smul.addr %s136, 2
        %s138 = smul.addr %s137, 8
        %s139 = scalar_lea.vmem %s0, %s138
        %s140 = smul.u32 32, %s10
      $region24: #{resnet_forward.45} parent=19 // pred_fallthru
        _
    $region20: #{resnet_forward.45} parent=5 // pred_fallthru
      _
    %p141 = scmp.le.s32.totalorder 1, %s10
    %p142 = scmp.lt.s32.totalorder %s10, 3
    %p143 = pnand %p141, %p142
    %p144 = pneg %p143
    // Predicated region
    $region25: #{resnet_forward.45} parent=5 // pred_check
      _
    $region26: #{resnet_forward.45} parent=5 // pred_check_branch
      %146 = sbr.rel (%p143) target = $region28
    $region27: #{resnet_forward.45} parent=5 // pred_region
      %s147 = ssub.s32 %s10, 1
      %s148 = smul.u32 32, %s15
      %p149 = scmp.lt.s32.totalorder %s148, 63
      %s150 = scalar_select %p149, %s148, 63
      %s151 = smul.addr %s150, 2
      %s152 = smul.addr %s151, 8
      %s153 = scalar_lea.vmem %s0, %s152
      %p154 = pneg %p36
      %p155 = pneg %p33
      %p156 = pneg %p57
      %p157 = pneg %p54
      %p158 = pneg %p83
      %p159 = pneg %p80
      %s160 = smul.u32 32, %s15
      %p161 = scmp.lt.s32.totalorder %s160, 63
      %s162 = scalar_select %p161, %s160, 63
      %s163 = smul.addr %s162, 8
      %s164 = scalar_lea.vmem %s2, %s163
      %p165 = pneg %p109
      %p166 = pneg %p106
      %p167 = scmp.lt.s32.totalorder %s15, 1
      %s168 = scalar_select %p167, %s15, 1
      %s169 = smul.addr %s168, 8
      %s170 = scalar_lea.vmem %s3, %s169
      %s171 = smul.u32 32, %s15
      %p172 = scmp.lt.s32.totalorder %s171, 63
      %s173 = scalar_select %p172, %s171, 63
      %s174 = smul.addr %s173, 2
      %s175 = smul.addr %s174, 8
      %s176 = scalar_lea.vmem %s0, %s175
      %s177 = smul.u32 32, %s15
      %s178 = smul.u32 32, %s15
      %p179 = scmp.lt.s32.totalorder %s178, 63
      %s180 = scalar_select %p179, %s178, 63
      %s181 = smul.addr %s180, 8
      %s182 = scalar_lea.vmem %s2, %s181
      %s183 = smul.u32 32, %s15
      %p184 = scmp.lt.s32.totalorder %s15, 1
      %s185 = scalar_select %p184, %s15, 1
      %s186 = smul.addr %s185, 8
      %s187 = scalar_lea.vmem %s3, %s186
      %v188 = vld [vmem:[%s176] sm:$0xff]
      %v189 = vld [vmem:[%s176 + $0x8] sm:$0xff]
      %v190 = vld [vmem:[%s176 + $0x10] sm:$0xff]
      %v191 = vld [vmem:[%s176 + $0x18] sm:$0xff]
      %v192 = vld [vmem:[%s176 + $0x20] sm:$0xff]
      %v193 = vld [vmem:[%s176 + $0x28] sm:$0xff]
      %v194 = vld [vmem:[%s176 + $0x30] sm:$0xff]
      %v195 = vld [vmem:[%s176 + $0x38] sm:$0xff]
      %v196 = vld [vmem:[%s176 + $0x40] sm:$0xff]
      %v197 = vld [vmem:[%s176 + $0x48] sm:$0xff]
      %v198 = vld [vmem:[%s176 + $0x50] sm:$0xff]
      %v199 = vld [vmem:[%s176 + $0x58] sm:$0xff]
      %v200 = vld [vmem:[%s176 + $0x60] sm:$0xff]
      %v201 = vld [vmem:[%s176 + $0x68] sm:$0xff]
      %v202 = vld [vmem:[%s176 + $0x70] sm:$0xff]
      %v203 = vld [vmem:[%s176 + $0x78] sm:$0xff]
      %v204 = vld [vmem:[%s176 + $0x80] sm:$0xff]
      %v205 = vld [vmem:[%s176 + $0x88] sm:$0xff]
      %v206 = vld [vmem:[%s176 + $0x90] sm:$0xff]
      %v207 = vld [vmem:[%s176 + $0x98] sm:$0xff]
      %v208 = vld [vmem:[%s176 + $0xa0] sm:$0xff]
      %v209 = vld [vmem:[%s176 + $0xa8] sm:$0xff]
      %v210 = vld [vmem:[%s176 + $0xb0] sm:$0xff]
      %v211 = vld [vmem:[%s176 + $0xb8] sm:$0xff]
      %v212 = vld [vmem:[%s176 + $0xc0] sm:$0xff]
      %v213 = vld [vmem:[%s176 + $0xc8] sm:$0xff]
      %v214 = vld [vmem:[%s176 + $0xd0] sm:$0xff]
      %v215 = vld [vmem:[%s176 + $0xd8] sm:$0xff]
      %v216 = vld [vmem:[%s176 + $0xe0] sm:$0xff]
      %v217 = vld [vmem:[%s176 + $0xe8] sm:$0xff]
      %v218 = vld [vmem:[%s176 + $0xf0] sm:$0xff]
      %v219 = vld [vmem:[%s176 + $0xf8] sm:$0xff]
      %v220 = vld [vmem:[%s176 + $0x100] sm:$0xff]
      %v221 = vld [vmem:[%s176 + $0x108] sm:$0xff]
      %v222 = vld [vmem:[%s176 + $0x110] sm:$0xff]
      %v223 = vld [vmem:[%s176 + $0x118] sm:$0xff]
      %v224 = vld [vmem:[%s176 + $0x120] sm:$0xff]
      %v225 = vld [vmem:[%s176 + $0x128] sm:$0xff]
      %v226 = vld [vmem:[%s176 + $0x130] sm:$0xff]
      %v227 = vld [vmem:[%s176 + $0x138] sm:$0xff]
      %v228 = vld [vmem:[%s176 + $0x140] sm:$0xff]
      %v229 = vld [vmem:[%s176 + $0x148] sm:$0xff]
      %v230 = vld [vmem:[%s176 + $0x150] sm:$0xff]
      %v231 = vld [vmem:[%s176 + $0x158] sm:$0xff]
      %v232 = vld [vmem:[%s176 + $0x160] sm:$0xff]
      %v233 = vld [vmem:[%s176 + $0x168] sm:$0xff]
      %v234 = vld [vmem:[%s176 + $0x170] sm:$0xff]
      %v235 = vld [vmem:[%s176 + $0x178] sm:$0xff]
      %v236 = vld [vmem:[%s176 + $0x180] sm:$0xff]
      %v237 = vld [vmem:[%s176 + $0x188] sm:$0xff]
      %v238 = vld [vmem:[%s176 + $0x190] sm:$0xff]
      %v239 = vld [vmem:[%s176 + $0x198] sm:$0xff]
      %v240 = vld [vmem:[%s176 + $0x1a0] sm:$0xff]
      %v241 = vld [vmem:[%s176 + $0x1a8] sm:$0xff]
      %v242 = vld [vmem:[%s176 + $0x1b0] sm:$0xff]
      %v243 = vld [vmem:[%s176 + $0x1b8] sm:$0xff]
      %v244 = vld [vmem:[%s176 + $0x1c0] sm:$0xff]
      %v245 = vld [vmem:[%s176 + $0x1c8] sm:$0xff]
      %v246 = vld [vmem:[%s176 + $0x1d0] sm:$0xff]
      %v247 = vld [vmem:[%s176 + $0x1d8] sm:$0xff]
      %v248 = vld [vmem:[%s176 + $0x1e0] sm:$0xff]
      %v249 = vld [vmem:[%s176 + $0x1e8] sm:$0xff]
      %v250 = vld [vmem:[%s176 + $0x1f0] sm:$0xff]
      %v251 = vld [vmem:[%s176 + $0x1f8] sm:$0xff]
      %v252 = vld [vmem:[%s1] sm:$0xff]
      %v253 = vld [vmem:[%s1 + $0x8] sm:$0xff]
      %v254 = vld [vmem:[%s1 + $0x10] sm:$0xff]
      %v255 = vld [vmem:[%s1 + $0x18] sm:$0xff]
      %v256 = vld [vmem:[%s1 + $0x20] sm:$0xff]
      %v257 = vld [vmem:[%s1 + $0x28] sm:$0xff]
      %v258 = vld [vmem:[%s1 + $0x30] sm:$0xff]
      %v259 = vld [vmem:[%s1 + $0x38] sm:$0xff]
      %v260 = vld [vmem:[%s1 + $0x40] sm:$0xff]
      %v261 = vld [vmem:[%s1 + $0x48] sm:$0xff]
      %v262 = vld [vmem:[%s1 + $0x50] sm:$0xff]
      %v263 = vld [vmem:[%s1 + $0x58] sm:$0xff]
      %v264 = vld [vmem:[%s1 + $0x60] sm:$0xff]
      %v265 = vld [vmem:[%s1 + $0x68] sm:$0xff]
      %v266 = vld [vmem:[%s1 + $0x70] sm:$0xff]
      %v267 = vld [vmem:[%s1 + $0x78] sm:$0xff]
      %v268 = vld [vmem:[%s1 + $0x80] sm:$0xff]
      %v269 = vld [vmem:[%s1 + $0x88] sm:$0xff]
      %v270 = vld [vmem:[%s1 + $0x90] sm:$0xff]
      %vm271 = vcmask 195584
      %v273 = vsel %vm271, %v189, 0
      %v276 = vsel %vm271, %v191, 0
      %v279 = vsel %vm271, %v193, 0
      %v282 = vsel %vm271, %v195, 0
      %v285 = vsel %vm271, %v197, 0
      %v288 = vsel %vm271, %v199, 0
      %v291 = vsel %vm271, %v201, 0
      %v294 = vsel %vm271, %v203, 0
      %v297 = vsel %vm271, %v205, 0
      %v300 = vsel %vm271, %v207, 0
      %v303 = vsel %vm271, %v209, 0
      %v306 = vsel %vm271, %v211, 0
      %v309 = vsel %vm271, %v213, 0
      %v312 = vsel %vm271, %v215, 0
      %v315 = vsel %vm271, %v217, 0
      %v318 = vsel %vm271, %v219, 0
      %v321 = vsel %vm271, %v221, 0
      %v324 = vsel %vm271, %v223, 0
      %v327 = vsel %vm271, %v225, 0
      %v330 = vsel %vm271, %v227, 0
      %v333 = vsel %vm271, %v229, 0
      %v336 = vsel %vm271, %v231, 0
      %v339 = vsel %vm271, %v233, 0
      %v342 = vsel %vm271, %v235, 0
      %v345 = vsel %vm271, %v237, 0
      %v348 = vsel %vm271, %v239, 0
      %v351 = vsel %vm271, %v241, 0
      %v354 = vsel %vm271, %v243, 0
      %v357 = vsel %vm271, %v245, 0
      %v360 = vsel %vm271, %v247, 0
      %v363 = vsel %vm271, %v249, 0
      %v366 = vsel %vm271, %v251, 0
      %368 = vmatprep.subr.mxu0 0.0
      %369 = vmatpush1.msra.mxu0 %v252
      %370 = vmatprep.subr.mxu0 0.0
      %371 = vmatpush1.msra.mxu0 %v253
      %372 = vmatprep.subr.mxu0 0.0
      %373 = vmatpush1.msra.mxu0 %v254
      %374 = vmatprep.subr.mxu0 0.0
      %375 = vmatpush1.msra.mxu0 %v255
      %376 = vmatprep.subr.mxu0 0.0
      %377 = vmatpush1.msra.mxu0 %v256
      %378 = vmatprep.subr.mxu0 0.0
      %379 = vmatpush1.msra.mxu0 %v257
      %380 = vmatprep.subr.mxu0 0.0
      %381 = vmatpush1.msra.mxu0 %v258
      %382 = vmatprep.subr.mxu0 0.0
      %383 = vmatpush1.msra.mxu0 %v259
      %384 = vmatprep.subr.mxu0 0.0
      %385 = vmatpush1.msra.mxu0 %v260
      %386 = vmatprep.subr.mxu0 0.0
      %387 = vmatpush1.msra.mxu0 %v261
      %388 = vmatprep.subr.mxu0 0.0
      %389 = vmatpush1.msra.mxu0 %v262
      %390 = vmatprep.subr.mxu0 0.0
      %391 = vmatpush1.msra.mxu0 %v263
      %392 = vmatprep.subr.mxu0 0.0
      %393 = vmatpush1.msra.mxu0 %v264
      %394 = vmatprep.subr.mxu0 0.0
      %395 = vmatpush1.msra.mxu0 %v265
      %396 = vmatprep.subr.mxu0 0.0
      %397 = vmatpush1.msra.mxu0 %v266
      %398 = vmatprep.subr.mxu0 0.0
      %399 = vmatpush1.msra.mxu0 %v267
      %400 = vmatprep.subr.mxu0 0.0
      %401 = vmatpush1.msra.mxu0 %v268
      %402 = vmatprep.subr.mxu0 0.0
      %403 = vmatpush1.msra.mxu0 %v269
      %404 = vmatprep.subr.mxu0 0.0
      %405 = vmatpush1.msra.mxu0 %v270
      %406 = vmatprep.subr.mxu0 0.0
      %407 = vmatpush1.msra.mxu0 0.0
      %408 = vmatprep.subr.mxu0 0.0
      %409 = vmatpush1.msra.mxu0 0.0
      %410 = vmatprep.subr.mxu0 0.0
      %411 = vmatpush1.msra.mxu0 0.0
      %412 = vmatprep.subr.mxu0 0.0
      %413 = vmatpush1.msra.mxu0 0.0
      %414 = vmatprep.subr.mxu0 0.0
      %415 = vmatpush1.msra.mxu0 0.0
      %416 = vmatprep.subr.mxu0 0.0
      %417 = vmatpush1.msra.mxu0 0.0
      %418 = vmatprep.subr.mxu0 0.0
      %419 = vmatpush1.msra.mxu0 0.0
      %420 = vmatprep.subr.mxu0 0.0
      %421 = vmatpush1.msra.mxu0 0.0
      %422 = vmatprep.subr.mxu0 0.0
      %423 = vmatpush1.msra.mxu0 0.0
      %424 = vmatprep.subr.mxu0 0.0
      %425 = vmatpush1.msra.mxu0 0.0
      %426 = vmatprep.subr.mxu0 0.0
      %427 = vmatpush1.msra.mxu0 0.0
      %428 = vmatprep.subr.mxu0 0.0
      %429 = vmatpush1.msra.mxu0 0.0
      %430 = vmatprep.subr.mxu0 0.0
      %431 = vmatpush1.msra.mxu0 0.0
      %432 = vmatprep.mubr.f32.mxu0 %v273
      %433 = vmatmul.mubr.f32.gmra.mrb[0].mxu0 %v188
      %v434 = vpop.f32.mrb[0].mxu0
      %v435 = vadd.f32 0.0, %v434
      %v436 = vpop.f32.mrb[0].mxu0
      %437 = vmatprep.mubr.f32.mxu0 %v276
      %438 = vmatmul.mubr.f32.gmra.mrb[0].mxu0 %v190
      %v439 = vpop.f32.mrb[0].mxu0
      %v440 = vadd.f32 0.0, %v439
      %v441 = vpop.f32.mrb[0].mxu0
      %442 = vmatprep.mubr.f32.mxu0 %v279
      %443 = vmatmul.mubr.f32.gmra.mrb[0].mxu0 %v192
      %v444 = vpop.f32.mrb[0].mxu0
      %v445 = vadd.f32 0.0, %v444
      %v446 = vpop.f32.mrb[0].mxu0
      %447 = vmatprep.mubr.f32.mxu0 %v282
      %448 = vmatmul.mubr.f32.gmra.mrb[0].mxu0 %v194
      %v449 = vpop.f32.mrb[0].mxu0
      %v450 = vadd.f32 0.0, %v449
      %v451 = vpop.f32.mrb[0].mxu0
      %452 = vmatprep.mubr.f32.mxu0 %v285
      %453 = vmatmul.mubr.f32.gmra.mrb[0].mxu0 %v196
      %v454 = vpop.f32.mrb[0].mxu0
      %v455 = vadd.f32 0.0, %v454
      %v456 = vpop.f32.mrb[0].mxu0
      %457 = vmatprep.mubr.f32.mxu0 %v288
      %458 = vmatmul.mubr.f32.gmra.mrb[0].mxu0 %v198
      %v459 = vpop.f32.mrb[0].mxu0
      %v460 = vadd.f32 0.0, %v459
      %v461 = vpop.f32.mrb[0].mxu0
      %462 = vmatprep.mubr.f32.mxu0 %v291
      %463 = vmatmul.mubr.f32.gmra.mrb[0].mxu0 %v200
      %v464 = vpop.f32.mrb[0].mxu0
      %v465 = vadd.f32 0.0, %v464
      %v466 = vpop.f32.mrb[0].mxu0
      %467 = vmatprep.mubr.f32.mxu0 %v294
      %468 = vmatmul.mubr.f32.gmra.mrb[0].mxu0 %v202
      %v469 = vpop.f32.mrb[0].mxu0
      %v470 = vadd.f32 0.0, %v469
      %v471 = vpop.f32.mrb[0].mxu0
      %472 = vmatprep.mubr.f32.mxu0 %v297
      %473 = vmatmul.mubr.f32.gmra.mrb[0].mxu0 %v204
      %v474 = vpop.f32.mrb[0].mxu0
      %v475 = vadd.f32 0.0, %v474
      %v476 = vpop.f32.mrb[0].mxu0
      %477 = vmatprep.mubr.f32.mxu0 %v300
      %478 = vmatmul.mubr.f32.gmra.mrb[0].mxu0 %v206
      %v479 = vpop.f32.mrb[0].mxu0
      %v480 = vadd.f32 0.0, %v479
      %v481 = vpop.f32.mrb[0].mxu0
      %482 = vmatprep.mubr.f32.mxu0 %v303
      %483 = vmatmul.mubr.f32.gmra.mrb[0].mxu0 %v208
      %v484 = vpop.f32.mrb[0].mxu0
      %v485 = vadd.f32 0.0, %v484
      %v486 = vpop.f32.mrb[0].mxu0
      %487 = vmatprep.mubr.f32.mxu0 %v306
      %488 = vmatmul.mubr.f32.gmra.mrb[0].mxu0 %v210
      %v489 = vpop.f32.mrb[0].mxu0
      %v490 = vadd.f32 0.0, %v489
      %v491 = vpop.f32.mrb[0].mxu0
      %492 = vmatprep.mubr.f32.mxu0 %v309
      %493 = vmatmul.mubr.f32.gmra.mrb[0].mxu0 %v212
      %v494 = vpop.f32.mrb[0].mxu0
      %v495 = vadd.f32 0.0, %v494
      %v496 = vpop.f32.mrb[0].mxu0
      %497 = vmatprep.mubr.f32.mxu0 %v312
      %498 = vmatmul.mubr.f32.gmra.mrb[0].mxu0 %v214
      %v499 = vpop.f32.mrb[0].mxu0
      %v500 = vadd.f32 0.0, %v499
      %v501 = vpop.f32.mrb[0].mxu0
      %502 = vmatprep.mubr.f32.mxu0 %v315
      %503 = vmatmul.mubr.f32.gmra.mrb[0].mxu0 %v216
      %v504 = vpop.f32.mrb[0].mxu0
      %v505 = vadd.f32 0.0, %v504
      %v506 = vpop.f32.mrb[0].mxu0
      %507 = vmatprep.mubr.f32.mxu0 %v318
      %508 = vmatmul.mubr.f32.gmra.mrb[0].mxu0 %v218
      %v509 = vpop.f32.mrb[0].mxu0
      %v510 = vadd.f32 0.0, %v509
      %v511 = vpop.f32.mrb[0].mxu0
      %512 = vmatprep.mubr.f32.mxu0 %v321
      %513 = vmatmul.mubr.f32.gmra.mrb[0].mxu0 %v220
      %v514 = vpop.f32.mrb[0].mxu0
      %v515 = vadd.f32 0.0, %v514
      %v516 = vpop.f32.mrb[0].mxu0
      %517 = vmatprep.mubr.f32.mxu0 %v324
      %518 = vmatmul.mubr.f32.gmra.mrb[0].mxu0 %v222
      %v519 = vpop.f32.mrb[0].mxu0
      %v520 = vadd.f32 0.0, %v519
      %v521 = vpop.f32.mrb[0].mxu0
      %522 = vmatprep.mubr.f32.mxu0 %v327
      %523 = vmatmul.mubr.f32.gmra.mrb[0].mxu0 %v224
      %v524 = vpop.f32.mrb[0].mxu0
      %v525 = vadd.f32 0.0, %v524
      %v526 = vpop.f32.mrb[0].mxu0
      %527 = vmatprep.mubr.f32.mxu0 %v330
      %528 = vmatmul.mubr.f32.gmra.mrb[0].mxu0 %v226
      %v529 = vpop.f32.mrb[0].mxu0
      %v530 = vadd.f32 0.0, %v529
      %v531 = vpop.f32.mrb[0].mxu0
      %532 = vmatprep.mubr.f32.mxu0 %v333
      %533 = vmatmul.mubr.f32.gmra.mrb[0].mxu0 %v228
      %v534 = vpop.f32.mrb[0].mxu0
      %v535 = vadd.f32 0.0, %v534
      %v536 = vpop.f32.mrb[0].mxu0
      %537 = vmatprep.mubr.f32.mxu0 %v336
      %538 = vmatmul.mubr.f32.gmra.mrb[0].mxu0 %v230
      %v539 = vpop.f32.mrb[0].mxu0
      %v540 = vadd.f32 0.0, %v539
      %v541 = vpop.f32.mrb[0].mxu0
      %542 = vmatprep.mubr.f32.mxu0 %v339
      %543 = vmatmul.mubr.f32.gmra.mrb[0].mxu0 %v232
      %v544 = vpop.f32.mrb[0].mxu0
      %v545 = vadd.f32 0.0, %v544
      %v546 = vpop.f32.mrb[0].mxu0
      %547 = vmatprep.mubr.f32.mxu0 %v342
      %548 = vmatmul.mubr.f32.gmra.mrb[0].mxu0 %v234
      %v549 = vpop.f32.mrb[0].mxu0
      %v550 = vadd.f32 0.0, %v549
      %v551 = vpop.f32.mrb[0].mxu0
      %552 = vmatprep.mubr.f32.mxu0 %v345
      %553 = vmatmul.mubr.f32.gmra.mrb[0].mxu0 %v236
      %v554 = vpop.f32.mrb[0].mxu0
      %v555 = vadd.f32 0.0, %v554
      %v556 = vpop.f32.mrb[0].mxu0
      %557 = vmatprep.mubr.f32.mxu0 %v348
      %558 = vmatmul.mubr.f32.gmra.mrb[0].mxu0 %v238
      %v559 = vpop.f32.mrb[0].mxu0
      %v560 = vadd.f32 0.0, %v559
      %v561 = vpop.f32.mrb[0].mxu0
      %562 = vmatprep.mubr.f32.mxu0 %v351
      %563 = vmatmul.mubr.f32.gmra.mrb[0].mxu0 %v240
      %v564 = vpop.f32.mrb[0].mxu0
      %v565 = vadd.f32 0.0, %v564
      %v566 = vpop.f32.mrb[0].mxu0
      %567 = vmatprep.mubr.f32.mxu0 %v354
      %568 = vmatmul.mubr.f32.gmra.mrb[0].mxu0 %v242
      %v569 = vpop.f32.mrb[0].mxu0
      %v570 = vadd.f32 0.0, %v569
      %v571 = vpop.f32.mrb[0].mxu0
      %572 = vmatprep.mubr.f32.mxu0 %v357
      %573 = vmatmul.mubr.f32.gmra.mrb[0].mxu0 %v244
      %v574 = vpop.f32.mrb[0].mxu0
      %v575 = vadd.f32 0.0, %v574
      %v576 = vpop.f32.mrb[0].mxu0
      %577 = vmatprep.mubr.f32.mxu0 %v360
      %578 = vmatmul.mubr.f32.gmra.mrb[0].mxu0 %v246
      %v579 = vpop.f32.mrb[0].mxu0
      %v580 = vadd.f32 0.0, %v579
      %v581 = vpop.f32.mrb[0].mxu0
      %582 = vmatprep.mubr.f32.mxu0 %v363
      %583 = vmatmul.mubr.f32.gmra.mrb[0].mxu0 %v248
      %v584 = vpop.f32.mrb[0].mxu0
      %v585 = vadd.f32 0.0, %v584
      %v586 = vpop.f32.mrb[0].mxu0
      %587 = vmatprep.mubr.f32.mxu0 %v366
      %588 = vmatmul.mubr.f32.gmra.mrb[0].mxu0 %v250
      %v589 = vpop.f32.mrb[0].mxu0
      %v590 = vadd.f32 0.0, %v589
      %v591 = vpop.f32.mrb[0].mxu0
      %592 = vdwg.mxu0
      %593 = vst [vmem:[%s182] sm:$0xff] %v435
      %594 = vst [vmem:[%s182 + $0x8] sm:$0xff] %v440
      %595 = vst [vmem:[%s182 + $0x10] sm:$0xff] %v445
      %596 = vst [vmem:[%s182 + $0x18] sm:$0xff] %v450
      %597 = vst [vmem:[%s182 + $0x20] sm:$0xff] %v455
      %598 = vst [vmem:[%s182 + $0x28] sm:$0xff] %v460
      %599 = vst [vmem:[%s182 + $0x30] sm:$0xff] %v465
      %600 = vst [vmem:[%s182 + $0x38] sm:$0xff] %v470
      %601 = vst [vmem:[%s182 + $0x40] sm:$0xff] %v475
      %602 = vst [vmem:[%s182 + $0x48] sm:$0xff] %v480
      %603 = vst [vmem:[%s182 + $0x50] sm:$0xff] %v485
      %604 = vst [vmem:[%s182 + $0x58] sm:$0xff] %v490
      %605 = vst [vmem:[%s182 + $0x60] sm:$0xff] %v495
      %606 = vst [vmem:[%s182 + $0x68] sm:$0xff] %v500
      %607 = vst [vmem:[%s182 + $0x70] sm:$0xff] %v505
      %608 = vst [vmem:[%s182 + $0x78] sm:$0xff] %v510
      %609 = vst [vmem:[%s182 + $0x80] sm:$0xff] %v515
      %610 = vst [vmem:[%s182 + $0x88] sm:$0xff] %v520
      %611 = vst [vmem:[%s182 + $0x90] sm:$0xff] %v525
      %612 = vst [vmem:[%s182 + $0x98] sm:$0xff] %v530
      %613 = vst [vmem:[%s182 + $0xa0] sm:$0xff] %v535
      %614 = vst [vmem:[%s182 + $0xa8] sm:$0xff] %v540
      %615 = vst [vmem:[%s182 + $0xb0] sm:$0xff] %v545
      %616 = vst [vmem:[%s182 + $0xb8] sm:$0xff] %v550
      %617 = vst [vmem:[%s182 + $0xc0] sm:$0xff] %v555
      %618 = vst [vmem:[%s182 + $0xc8] sm:$0xff] %v560
      %619 = vst [vmem:[%s182 + $0xd0] sm:$0xff] %v565
      %620 = vst [vmem:[%s182 + $0xd8] sm:$0xff] %v570
      %621 = vst [vmem:[%s182 + $0xe0] sm:$0xff] %v575
      %622 = vst [vmem:[%s182 + $0xe8] sm:$0xff] %v580
      %623 = vst [vmem:[%s182 + $0xf0] sm:$0xff] %v585
      %624 = vst [vmem:[%s182 + $0xf8] sm:$0xff] %v590
      %v625 = vadd.f32 %v435, %v440
      %v626 = vadd.f32 %v625, %v445
      %v627 = vadd.f32 %v626, %v450
      %v628 = vadd.f32 %v627, %v455
      %v629 = vadd.f32 %v628, %v460
      %v630 = vadd.f32 %v629, %v465
      %v631 = vadd.f32 %v630, %v470
      %v632 = vadd.f32 %v631, %v475
      %v633 = vadd.f32 %v632, %v480
      %v634 = vadd.f32 %v633, %v485
      %v635 = vadd.f32 %v634, %v490
      %v636 = vadd.f32 %v635, %v495
      %v637 = vadd.f32 %v636, %v500
      %v638 = vadd.f32 %v637, %v505
      %v639 = vadd.f32 %v638, %v510
      %v640 = vadd.f32 %v639, %v515
      %v641 = vadd.f32 %v640, %v520
      %v642 = vadd.f32 %v641, %v525
      %v643 = vadd.f32 %v642, %v530
      %v644 = vadd.f32 %v643, %v535
      %v645 = vadd.f32 %v644, %v540
      %v646 = vadd.f32 %v645, %v545
      %v647 = vadd.f32 %v646, %v550
      %v648 = vadd.f32 %v647, %v555
      %v649 = vadd.f32 %v648, %v560
      %v650 = vadd.f32 %v649, %v565
      %v651 = vadd.f32 %v650, %v570
      %v652 = vadd.f32 %v651, %v575
      %v653 = vadd.f32 %v652, %v580
      %v654 = vadd.f32 %v653, %v585
      %v655 = vadd.f32 %v654, %v590
      %v656 = vrot.slane %v655, 4
      %v657 = vadd.f32 %v655, %v656
      %v658 = vrot.slane %v657, 2
      %v659 = vadd.f32 %v657, %v658
      %v660 = vrot.slane %v659, 1
      %v661 = vadd.f32 %v659, %v660
      %v662 = vmul.f32 %v435, %v435
      %v663 = vmul.f32 %v440, %v440
      %v664 = vmul.f32 %v445, %v445
      %v665 = vmul.f32 %v450, %v450
      %v666 = vmul.f32 %v455, %v455
      %v667 = vmul.f32 %v460, %v460
      %v668 = vmul.f32 %v465, %v465
      %v669 = vmul.f32 %v470, %v470
      %v670 = vmul.f32 %v475, %v475
      %v671 = vmul.f32 %v480, %v480
      %v672 = vmul.f32 %v485, %v485
      %v673 = vmul.f32 %v490, %v490
      %v674 = vmul.f32 %v495, %v495
      %v675 = vmul.f32 %v500, %v500
      %v676 = vmul.f32 %v505, %v505
      %v677 = vmul.f32 %v510, %v510
      %v678 = vmul.f32 %v515, %v515
      %v679 = vmul.f32 %v520, %v520
      %v680 = vmul.f32 %v525, %v525
      %v681 = vmul.f32 %v530, %v530
      %v682 = vmul.f32 %v535, %v535
      %v683 = vmul.f32 %v540, %v540
      %v684 = vmul.f32 %v545, %v545
      %v685 = vmul.f32 %v550, %v550
      %v686 = vmul.f32 %v555, %v555
      %v687 = vmul.f32 %v560, %v560
      %v688 = vmul.f32 %v565, %v565
      %v689 = vmul.f32 %v570, %v570
      %v690 = vmul.f32 %v575, %v575
      %v691 = vmul.f32 %v580, %v580
      %v692 = vmul.f32 %v585, %v585
      %v693 = vmul.f32 %v590, %v590
      %v694 = vadd.f32 %v662, %v663
      %v695 = vadd.f32 %v694, %v664
      %v696 = vadd.f32 %v695, %v665
      %v697 = vadd.f32 %v696, %v666
      %v698 = vadd.f32 %v697, %v667
      %v699 = vadd.f32 %v698, %v668
      %v700 = vadd.f32 %v699, %v669
      %v701 = vadd.f32 %v700, %v670
      %v702 = vadd.f32 %v701, %v671
      %v703 = vadd.f32 %v702, %v672
      %v704 = vadd.f32 %v703, %v673
      %v705 = vadd.f32 %v704, %v674
      %v706 = vadd.f32 %v705, %v675
      %v707 = vadd.f32 %v706, %v676
      %v708 = vadd.f32 %v707, %v677
      %v709 = vadd.f32 %v708, %v678
      %v710 = vadd.f32 %v709, %v679
      %v711 = vadd.f32 %v710, %v680
      %v712 = vadd.f32 %v711, %v681
      %v713 = vadd.f32 %v712, %v682
      %v714 = vadd.f32 %v713, %v683
      %v715 = vadd.f32 %v714, %v684
      %v716 = vadd.f32 %v715, %v685
      %v717 = vadd.f32 %v716, %v686
      %v718 = vadd.f32 %v717, %v687
      %v719 = vadd.f32 %v718, %v688
      %v720 = vadd.f32 %v719, %v689
      %v721 = vadd.f32 %v720, %v690
      %v722 = vadd.f32 %v721, %v691
      %v723 = vadd.f32 %v722, %v692
      %v724 = vadd.f32 %v723, %v693
      %v725 = vrot.slane %v724, 4
      %v726 = vadd.f32 %v724, %v725
      %v727 = vrot.slane %v726, 2
      %v728 = vadd.f32 %v726, %v727
      %v729 = vrot.slane %v728, 1
      %v730 = vadd.f32 %v728, %v729
      %v731 = vlaneseq
      %v732 = vshrl.u32 %v731, 7
      %vm733 = vcmp.eq.s32.totalorder %v732, 0
      %vm734 = vcmp.eq.s32.totalorder %v732, 1
      %v735 = vsel %vm734, %v730, 0.0
      %v736 = vsel %vm733, %v661, %v735
      %737 = vst [vmem:[%s187] sm:$0xff] %v736
      %s738 = smul.u32 32, %s15
      %p739 = scmp.lt.s32.totalorder %s738, 63
      %s740 = scalar_select %p739, %s738, 63
      %s741 = smul.addr %s740, 8
      %s742 = scalar_lea.vmem %s2, %s741
      %p743 = scmp.lt.s32.totalorder %s15, 1
      %s744 = scalar_select %p743, %s15, 1
      %s745 = smul.addr %s744, 8
      %s746 = scalar_lea.vmem %s3, %s745
      // Predicated region
      $region29: #{resnet_forward.45} parent=27 // pred_check
        %p747 = pneg %p80
      $region30: #{resnet_forward.45} parent=27 // pred_check_branch
        %749 = sbr.rel (%p747) target = $region32
      $region31: #{resnet_forward.45} parent=27 // pred_region
        %s750 = smul.u32 32, %s15
      $region32: #{resnet_forward.45} parent=27 // pred_fallthru
        _
      // Predicated region
      $region33: #{resnet_forward.45} parent=27 // pred_check
        %p751 = pneg %p106
      $region34: #{resnet_forward.45} parent=27 // pred_check_branch
        %753 = sbr.rel (%p751) target = $region36
      $region35: #{resnet_forward.45} parent=27 // pred_region
        _
      $region36: #{resnet_forward.45} parent=27 // pred_fallthru
        _
    $region28: #{resnet_forward.45} parent=5 // pred_fallthru
      _
    %p754 = scmp.le.s32.totalorder 2, %s10
    // Predicated region
    $region37: #{resnet_forward.45} parent=5 // pred_check
      %p755 = pneg %p754
    $region38: #{resnet_forward.45} parent=5 // pred_check_branch
      %757 = sbr.rel (%p755) target = $region40
    $region39: #{resnet_forward.45} parent=5 // pred_region
      %s758 = ssub.s32 %s10, 2
      // Predicated region
      $region41: #{resnet_forward.45} parent=39 // pred_check
        %p759 = pneg %p86
      $region42: #{resnet_forward.45} parent=39 // pred_check_branch
        %761 = sbr.rel (%p759) target = $region44
      $region43: #{resnet_forward.45} parent=39 // pred_region
        %s762 = smul.u32 32, %s16
        %p763 = scmp.lt.s32.totalorder %s762, 63
        %s764 = scalar_select %p763, %s762, 63
        %s765 = smul.addr %s764, 8
        %s766 = scalar_lea.vmem %s2, %s765
      $region44: #{resnet_forward.45} parent=39 // pred_fallthru
        _
      // Predicated region
      $region45: #{resnet_forward.45} parent=39 // pred_check
        %p767 = pneg %p112
      $region46: #{resnet_forward.45} parent=39 // pred_check_branch
        %769 = sbr.rel (%p767) target = $region48
      $region47: #{resnet_forward.45} parent=39 // pred_region
        %p770 = scmp.lt.s32.totalorder %s16, 1
        %s771 = scalar_select %p770, %s16, 1
        %s772 = smul.addr %s771, 8
        %s773 = scalar_lea.vmem %s3, %s772
      $region48: #{resnet_forward.45} parent=39 // pred_fallthru
        _
    $region40: #{resnet_forward.45} parent=5 // pred_fallthru
      _
  $region6: #{resnet_forward.45} parent=0 // loop_footer
    %s14 = sadd.s32 1, %s10
  $region7: #{resnet_forward.45} parent=0 // loop_footer_branch
    %9 = sbr.rel target = $region3
  $region8: #{resnet_forward.45} parent=0 // loop_exit
    _

// kernel: resnet_forward.47
$region0: #{resnet_forward.47}
  #allocation0 [shape = 'u32[]', space=smem, size = 0x4, offset = 0x4, fixed_abs, tag = 'smem constant byte address 0x4 - core index']
  #allocation1 [shape = 'u32[144,128]{1,0:T(1,128)}', space=vmem, size = 0x12000, scoped, tag = 'internal scratch']
  %s0 = inlined_call_operand.vmem [shape: f32[9,128,128], index: 0, kind: input, shape index: {}]
  %s1 = inlined_call_operand.vmem [shape: f32[128,128], index: 1, kind: output, shape index: {}]
  %s2 = sld [smem:[#allocation0]]
  $region14: #{resnet_forward.47} parent=0
    _
  %s4 = ssub.s32 1, %s2
  %s5 = scalar_select 0, %s4, %s2
  // Predicated region
  $region2: #{resnet_forward.47} parent=0 // pred_check
    _
  $region3: #{resnet_forward.47} parent=0 // pred_check_branch
    %7 = sbr.rel (0) target = $region5
  $region4: #{resnet_forward.47} parent=0 // pred_region
    _
  $region5: #{resnet_forward.47} parent=0 // pred_fallthru
    _
  %v8 = vld [vmem:[%s0] sm:$0xff]
  %v9 = vld [vmem:[%s0 + $0x8] sm:$0xff]
  %v10 = vld [vmem:[%s0 + $0x10] sm:$0xff]
  %v11 = vld [vmem:[%s0 + $0x18] sm:$0xff]
  %v12 = vld [vmem:[%s0 + $0x20] sm:$0xff]
  %v13 = vld [vmem:[%s0 + $0x28] sm:$0xff]
  %v14 = vld [vmem:[%s0 + $0x30] sm:$0xff]
  %v15 = vld [vmem:[%s0 + $0x38] sm:$0xff]
  %v16 = vld [vmem:[%s0 + $0x40] sm:$0xff]
  %v17 = vld [vmem:[%s0 + $0x48] sm:$0xff]
  %v18 = vld [vmem:[%s0 + $0x50] sm:$0xff]
  %v19 = vld [vmem:[%s0 + $0x58] sm:$0xff]
  %v20 = vld [vmem:[%s0 + $0x60] sm:$0xff]
  %v21 = vld [vmem:[%s0 + $0x68] sm:$0xff]
  %v22 = vld [vmem:[%s0 + $0x70] sm:$0xff]
  %v23 = vld [vmem:[%s0 + $0x78] sm:$0xff]
  %v24 = vld [vmem:[%s0 + $0x80] sm:$0xff]
  %v25 = vld [vmem:[%s0 + $0x88] sm:$0xff]
  %v26 = vld [vmem:[%s0 + $0x90] sm:$0xff]
  %v27 = vld [vmem:[%s0 + $0x98] sm:$0xff]
  %v28 = vld [vmem:[%s0 + $0xa0] sm:$0xff]
  %v29 = vld [vmem:[%s0 + $0xa8] sm:$0xff]
  %v30 = vld [vmem:[%s0 + $0xb0] sm:$0xff]
  %v31 = vld [vmem:[%s0 + $0xb8] sm:$0xff]
  %v32 = vld [vmem:[%s0 + $0xc0] sm:$0xff]
  %v33 = vld [vmem:[%s0 + $0xc8] sm:$0xff]
  %v34 = vld [vmem:[%s0 + $0xd0] sm:$0xff]
  %v35 = vld [vmem:[%s0 + $0xd8] sm:$0xff]
  %v36 = vld [vmem:[%s0 + $0xe0] sm:$0xff]
  %v37 = vld [vmem:[%s0 + $0xe8] sm:$0xff]
  %v38 = vld [vmem:[%s0 + $0xf0] sm:$0xff]
  %v39 = vld [vmem:[%s0 + $0xf8] sm:$0xff]
  %v40 = vld [vmem:[%s0 + $0x100] sm:$0xff]
  %v41 = vld [vmem:[%s0 + $0x108] sm:$0xff]
  %v42 = vld [vmem:[%s0 + $0x110] sm:$0xff]
  %v43 = vld [vmem:[%s0 + $0x118] sm:$0xff]
  %v44 = vld [vmem:[%s0 + $0x120] sm:$0xff]
  %v45 = vld [vmem:[%s0 + $0x128] sm:$0xff]
  %v46 = vld [vmem:[%s0 + $0x130] sm:$0xff]
  %v47 = vld [vmem:[%s0 + $0x138] sm:$0xff]
  %v48 = vld [vmem:[%s0 + $0x140] sm:$0xff]
  %v49 = vld [vmem:[%s0 + $0x148] sm:$0xff]
  %v50 = vld [vmem:[%s0 + $0x150] sm:$0xff]
  %v51 = vld [vmem:[%s0 + $0x158] sm:$0xff]
  %v52 = vld [vmem:[%s0 + $0x160] sm:$0xff]
  %v53 = vld [vmem:[%s0 + $0x168] sm:$0xff]
  %v54 = vld [vmem:[%s0 + $0x170] sm:$0xff]
  %v55 = vld [vmem:[%s0 + $0x178] sm:$0xff]
  %v56 = vld [vmem:[%s0 + $0x180] sm:$0xff]
  %v57 = vld [vmem:[%s0 + $0x188] sm:$0xff]
  %v58 = vld [vmem:[%s0 + $0x190] sm:$0xff]
  %v59 = vld [vmem:[%s0 + $0x198] sm:$0xff]
  %v60 = vld [vmem:[%s0 + $0x1a0] sm:$0xff]
  %v61 = vld [vmem:[%s0 + $0x1a8] sm:$0xff]
  %v62 = vld [vmem:[%s0 + $0x1b0] sm:$0xff]
  %v63 = vld [vmem:[%s0 + $0x1b8] sm:$0xff]
  %v64 = vld [vmem:[%s0 + $0x1c0] sm:$0xff]
  %v65 = vld [vmem:[%s0 + $0x1c8] sm:$0xff]
  %v66 = vld [vmem:[%s0 + $0x1d0] sm:$0xff]
  %v67 = vld [vmem:[%s0 + $0x1d8] sm:$0xff]
  %v68 = vld [vmem:[%s0 + $0x1e0] sm:$0xff]
  %v69 = vld [vmem:[%s0 + $0x1e8] sm:$0xff]
  %v70 = vld [vmem:[%s0 + $0x1f0] sm:$0xff]
  %v71 = vld [vmem:[%s0 + $0x1f8] sm:$0xff]
  %v72 = vld [vmem:[%s0 + $0x200] sm:$0xff]
  %v73 = vld [vmem:[%s0 + $0x208] sm:$0xff]
  %v74 = vld [vmem:[%s0 + $0x210] sm:$0xff]
  %v75 = vld [vmem:[%s0 + $0x218] sm:$0xff]
  %v76 = vld [vmem:[%s0 + $0x220] sm:$0xff]
  %v77 = vld [vmem:[%s0 + $0x228] sm:$0xff]
  %v78 = vld [vmem:[%s0 + $0x230] sm:$0xff]
  %v79 = vld [vmem:[%s0 + $0x238] sm:$0xff]
  %v80 = vld [vmem:[%s0 + $0x240] sm:$0xff]
  %v81 = vld [vmem:[%s0 + $0x248] sm:$0xff]
  %v82 = vld [vmem:[%s0 + $0x250] sm:$0xff]
  %v83 = vld [vmem:[%s0 + $0x258] sm:$0xff]
  %v84 = vld [vmem:[%s0 + $0x260] sm:$0xff]
  %v85 = vld [vmem:[%s0 + $0x268] sm:$0xff]
  %v86 = vld [vmem:[%s0 + $0x270] sm:$0xff]
  %v87 = vld [vmem:[%s0 + $0x278] sm:$0xff]
  %v88 = vld [vmem:[%s0 + $0x280] sm:$0xff]
  %v89 = vld [vmem:[%s0 + $0x288] sm:$0xff]
  %v90 = vld [vmem:[%s0 + $0x290] sm:$0xff]
  %v91 = vld [vmem:[%s0 + $0x298] sm:$0xff]
  %v92 = vld [vmem:[%s0 + $0x2a0] sm:$0xff]
  %v93 = vld [vmem:[%s0 + $0x2a8] sm:$0xff]
  %v94 = vld [vmem:[%s0 + $0x2b0] sm:$0xff]
  %v95 = vld [vmem:[%s0 + $0x2b8] sm:$0xff]
  %v96 = vld [vmem:[%s0 + $0x2c0] sm:$0xff]
  %v97 = vld [vmem:[%s0 + $0x2c8] sm:$0xff]
  %v98 = vld [vmem:[%s0 + $0x2d0] sm:$0xff]
  %v99 = vld [vmem:[%s0 + $0x2d8] sm:$0xff]
  %v100 = vld [vmem:[%s0 + $0x2e0] sm:$0xff]
  %v101 = vld [vmem:[%s0 + $0x2e8] sm:$0xff]
  %v102 = vld [vmem:[%s0 + $0x2f0] sm:$0xff]
  %v103 = vld [vmem:[%s0 + $0x2f8] sm:$0xff]
  %v104 = vld [vmem:[%s0 + $0x300] sm:$0xff]
  %v105 = vld [vmem:[%s0 + $0x308] sm:$0xff]
  %v106 = vld [vmem:[%s0 + $0x310] sm:$0xff]
  %v107 = vld [vmem:[%s0 + $0x318] sm:$0xff]
  %v108 = vld [vmem:[%s0 + $0x320] sm:$0xff]
  %v109 = vld [vmem:[%s0 + $0x328] sm:$0xff]
  %v110 = vld [vmem:[%s0 + $0x330] sm:$0xff]
  %v111 = vld [vmem:[%s0 + $0x338] sm:$0xff]
  %v112 = vld [vmem:[%s0 + $0x340] sm:$0xff]
  %v113 = vld [vmem:[%s0 + $0x348] sm:$0xff]
  %v114 = vld [vmem:[%s0 + $0x350] sm:$0xff]
  %v115 = vld [vmem:[%s0 + $0x358] sm:$0xff]
  %v116 = vld [vmem:[%s0 + $0x360] sm:$0xff]
  %v117 = vld [vmem:[%s0 + $0x368] sm:$0xff]
  %v118 = vld [vmem:[%s0 + $0x370] sm:$0xff]
  %v119 = vld [vmem:[%s0 + $0x378] sm:$0xff]
  %v120 = vld [vmem:[%s0 + $0x380] sm:$0xff]
  %v121 = vld [vmem:[%s0 + $0x388] sm:$0xff]
  %v122 = vld [vmem:[%s0 + $0x390] sm:$0xff]
  %v123 = vld [vmem:[%s0 + $0x398] sm:$0xff]
  %v124 = vld [vmem:[%s0 + $0x3a0] sm:$0xff]
  %v125 = vld [vmem:[%s0 + $0x3a8] sm:$0xff]
  %v126 = vld [vmem:[%s0 + $0x3b0] sm:$0xff]
  %v127 = vld [vmem:[%s0 + $0x3b8] sm:$0xff]
  %v128 = vld [vmem:[%s0 + $0x3c0] sm:$0xff]
  %v129 = vld [vmem:[%s0 + $0x3c8] sm:$0xff]
  %v130 = vld [vmem:[%s0 + $0x3d0] sm:$0xff]
  %v131 = vld [vmem:[%s0 + $0x3d8] sm:$0xff]
  %v132 = vld [vmem:[%s0 + $0x3e0] sm:$0xff]
  %v133 = vld [vmem:[%s0 + $0x3e8] sm:$0xff]
  %v134 = vld [vmem:[%s0 + $0x3f0] sm:$0xff]
  %v135 = vld [vmem:[%s0 + $0x3f8] sm:$0xff]
  %v136 = vld [vmem:[%s0 + $0x400] sm:$0xff]
  %v137 = vld [vmem:[%s0 + $0x408] sm:$0xff]
  %v138 = vld [vmem:[%s0 + $0x410] sm:$0xff]
  %v139 = vld [vmem:[%s0 + $0x418] sm:$0xff]
  %v140 = vld [vmem:[%s0 + $0x420] sm:$0xff]
  %v141 = vld [vmem:[%s0 + $0x428] sm:$0xff]
  %v142 = vld [vmem:[%s0 + $0x430] sm:$0xff]
  %v143 = vld [vmem:[%s0 + $0x438] sm:$0xff]
  %v144 = vld [vmem:[%s0 + $0x440] sm:$0xff]
  %v145 = vld [vmem:[%s0 + $0x448] sm:$0xff]
  %v146 = vld [vmem:[%s0 + $0x450] sm:$0xff]
  %v147 = vld [vmem:[%s0 + $0x458] sm:$0xff]
  %v148 = vld [vmem:[%s0 + $0x460] sm:$0xff]
  %v149 = vld [vmem:[%s0 + $0x468] sm:$0xff]
  %v150 = vld [vmem:[%s0 + $0x470] sm:$0xff]
  %v151 = vld [vmem:[%s0 + $0x478] sm:$0xff]
  %v152 = vmax.f32 %v8, %v24
  %v153 = vmax.f32 %v152, %v40
  %v154 = vmax.f32 %v153, %v56
  %v155 = vmax.f32 %v154, %v72
  %v156 = vmax.f32 %v155, %v88
  %v157 = vmax.f32 %v156, %v104
  %v158 = vmax.f32 %v157, %v120
  %v159 = vmax.f32 %v158, %v136
  %v160 = vmax.f32 %v9, %v25
  %v161 = vmax.f32 %v160, %v41
  %v162 = vmax.f32 %v161, %v57
  %v163 = vmax.f32 %v162, %v73
  %v164 = vmax.f32 %v163, %v89
  %v165 = vmax.f32 %v164, %v105
  %v166 = vmax.f32 %v165, %v121
  %v167 = vmax.f32 %v166, %v137
  %v168 = vmax.f32 %v10, %v26
  %v169 = vmax.f32 %v168, %v42
  %v170 = vmax.f32 %v169, %v58
  %v171 = vmax.f32 %v170, %v74
  %v172 = vmax.f32 %v171, %v90
  %v173 = vmax.f32 %v172, %v106
  %v174 = vmax.f32 %v173, %v122
  %v175 = vmax.f32 %v174, %v138
  %v176 = vmax.f32 %v11, %v27
  %v177 = vmax.f32 %v176, %v43
  %v178 = vmax.f32 %v177, %v59
  %v179 = vmax.f32 %v178, %v75
  %v180 = vmax.f32 %v179, %v91
  %v181 = vmax.f32 %v180, %v107
  %v182 = vmax.f32 %v181, %v123
  %v183 = vmax.f32 %v182, %v139
  %v184 = vmax.f32 %v12, %v28
  %v185 = vmax.f32 %v184, %v44
  %v186 = vmax.f32 %v185, %v60
  %v187 = vmax.f32 %v186, %v76
  %v188 = vmax.f32 %v187, %v92
  %v189 = vmax.f32 %v188, %v108
  %v190 = vmax.f32 %v189, %v124
  %v191 = vmax.f32 %v190, %v140
  %v192 = vmax.f32 %v13, %v29
  %v193 = vmax.f32 %v192, %v45
  %v194 = vmax.f32 %v193, %v61
  %v195 = vmax.f32 %v194, %v77
  %v196 = vmax.f32 %v195, %v93
  %v197 = vmax.f32 %v196, %v109
  %v198 = vmax.f32 %v197, %v125
  %v199 = vmax.f32 %v198, %v141
  %v200 = vmax.f32 %v14, %v30
  %v201 = vmax.f32 %v200, %v46
  %v202 = vmax.f32 %v201, %v62
  %v203 = vmax.f32 %v202, %v78
  %v204 = vmax.f32 %v203, %v94
  %v205 = vmax.f32 %v204, %v110
  %v206 = vmax.f32 %v205, %v126
  %v207 = vmax.f32 %v206, %v142
  %v208 = vmax.f32 %v15, %v31
  %v209 = vmax.f32 %v208, %v47
  %v210 = vmax.f32 %v209, %v63
  %v211 = vmax.f32 %v210, %v79
  %v212 = vmax.f32 %v211, %v95
  %v213 = vmax.f32 %v212, %v111
  %v214 = vmax.f32 %v213, %v127
  %v215 = vmax.f32 %v214, %v143
  %v216 = vmax.f32 %v16, %v32
  %v217 = vmax.f32 %v216, %v48
  %v218 = vmax.f32 %v217, %v64
  %v219 = vmax.f32 %v218, %v80
  %v220 = vmax.f32 %v219, %v96
  %v221 = vmax.f32 %v220, %v112
  %v222 = vmax.f32 %v221, %v128
  %v223 = vmax.f32 %v222, %v144
  %v224 = vmax.f32 %v17, %v33
  %v225 = vmax.f32 %v224, %v49
  %v226 = vmax.f32 %v225, %v65
  %v227 = vmax.f32 %v226, %v81
  %v228 = vmax.f32 %v227, %v97
  %v229 = vmax.f32 %v228, %v113
  %v230 = vmax.f32 %v229, %v129
  %v231 = vmax.f32 %v230, %v145
  %v232 = vmax.f32 %v18, %v34
  %v233 = vmax.f32 %v232, %v50
  %v234 = vmax.f32 %v233, %v66
  %v235 = vmax.f32 %v234, %v82
  %v236 = vmax.f32 %v235, %v98
  %v237 = vmax.f32 %v236, %v114
  %v238 = vmax.f32 %v237, %v130
  %v239 = vmax.f32 %v238, %v146
  %v240 = vmax.f32 %v19, %v35
  %v241 = vmax.f32 %v240, %v51
  %v242 = vmax.f32 %v241, %v67
  %v243 = vmax.f32 %v242, %v83
  %v244 = vmax.f32 %v243, %v99
  %v245 = vmax.f32 %v244, %v115
  %v246 = vmax.f32 %v245, %v131
  %v247 = vmax.f32 %v246, %v147
  %v248 = vmax.f32 %v20, %v36
  %v249 = vmax.f32 %v248, %v52
  %v250 = vmax.f32 %v249, %v68
  %v251 = vmax.f32 %v250, %v84
  %v252 = vmax.f32 %v251, %v100
  %v253 = vmax.f32 %v252, %v116
  %v254 = vmax.f32 %v253, %v132
  %v255 = vmax.f32 %v254, %v148
  %v256 = vmax.f32 %v21, %v37
  %v257 = vmax.f32 %v256, %v53
  %v258 = vmax.f32 %v257, %v69
  %v259 = vmax.f32 %v258, %v85
  %v260 = vmax.f32 %v259, %v101
  %v261 = vmax.f32 %v260, %v117
  %v262 = vmax.f32 %v261, %v133
  %v263 = vmax.f32 %v262, %v149
  %v264 = vmax.f32 %v22, %v38
  %v265 = vmax.f32 %v264, %v54
  %v266 = vmax.f32 %v265, %v70
  %v267 = vmax.f32 %v266, %v86
  %v268 = vmax.f32 %v267, %v102
  %v269 = vmax.f32 %v268, %v118
  %v270 = vmax.f32 %v269, %v134
  %v271 = vmax.f32 %v270, %v150
  %v272 = vmax.f32 %v23, %v39
  %v273 = vmax.f32 %v272, %v55
  %v274 = vmax.f32 %v273, %v71
  %v275 = vmax.f32 %v274, %v87
  %v276 = vmax.f32 %v275, %v103
  %v277 = vmax.f32 %v276, %v119
  %v278 = vmax.f32 %v277, %v135
  %v279 = vmax.f32 %v278, %v151
  %280 = vst [vmem:[%s1] sm:$0xff] %v159
  %281 = vst [vmem:[%s1 + $0x8] sm:$0xff] %v167
  %282 = vst [vmem:[%s1 + $0x10] sm:$0xff] %v175
  %283 = vst [vmem:[%s1 + $0x18] sm:$0xff] %v183
  %284 = vst [vmem:[%s1 + $0x20] sm:$0xff] %v191
  %285 = vst [vmem:[%s1 + $0x28] sm:$0xff] %v199
  %286 = vst [vmem:[%s1 + $0x30] sm:$0xff] %v207
  %287 = vst [vmem:[%s1 + $0x38] sm:$0xff] %v215
  %288 = vst [vmem:[%s1 + $0x40] sm:$0xff] %v223
  %289 = vst [vmem:[%s1 + $0x48] sm:$0xff] %v231
  %290 = vst [vmem:[%s1 + $0x50] sm:$0xff] %v239
  %291 = vst [vmem:[%s1 + $0x58] sm:$0xff] %v247
  %292 = vst [vmem:[%s1 + $0x60] sm:$0xff] %v255
  %293 = vst [vmem:[%s1 + $0x68] sm:$0xff] %v263
  %294 = vst [vmem:[%s1 + $0x70] sm:$0xff] %v271
  %295 = vst [vmem:[%s1 + $0x78] sm:$0xff] %v279
  // Predicated region
  $region6: #{resnet_forward.47} parent=0 // pred_check
    _
  $region7: #{resnet_forward.47} parent=0 // pred_check_branch
    %297 = sbr.rel (0) target = $region9
  $region8: #{resnet_forward.47} parent=0 // pred_region
    _
  $region9: #{resnet_forward.47} parent=0 // pred_fallthru
    _
  // Predicated region
  $region10: #{resnet_forward.47} parent=0 // pred_check
    _
  $region11: #{resnet_forward.47} parent=0 // pred_check_branch
    %299 = sbr.rel (0) target = $region13
  $region12: #{resnet_forward.47} parent=0 // pred_region
    _
  $region13: #{resnet_forward.47} parent=0 // pred_fallthru
    _

// kernel: resnet_forward.50
$region0: #{resnet_forward.50}
  #allocation0 [shape = 'u32[]', space=smem, size = 0x4, offset = 0x4, fixed_abs, tag = 'smem constant byte address 0x4 - core index']
  #allocation1 [shape = 'u32[144,128]{1,0:T(1,128)}', space=vmem, size = 0x12000, scoped, tag = 'internal scratch']
  %s0 = inlined_call_operand.vmem [shape: f32[128,128], index: 0, kind: input, shape index: {}]
  %s1 = inlined_call_operand.vmem [shape: f32[128,128], index: 1, kind: input, shape index: {}]
  %s2 = inlined_call_operand.vmem [shape: f32[128,128], index: 2, kind: output, shape index: {0}]
  %s3 = inlined_call_operand.vmem [shape: f32[8,128], index: 3, kind: output, shape index: {1}]
  %4 = xla_tuple %s2, %s3
  %s5 = sld [smem:[#allocation0]]
  $region26: #{resnet_forward.50} parent=0
    _
  %s7 = ssub.s32 1, %s5
  %s8 = scalar_select 0, %s7, %s5
  // Predicated region
  $region2: #{resnet_forward.50} parent=0 // pred_check
    _
  $region3: #{resnet_forward.50} parent=0 // pred_check_branch
    %10 = sbr.rel (0) target = $region5
  $region4: #{resnet_forward.50} parent=0 // pred_region
    _
  $region5: #{resnet_forward.50} parent=0 // pred_fallthru
    _
  // Predicated region
  $region6: #{resnet_forward.50} parent=0 // pred_check
    _
  $region7: #{resnet_forward.50} parent=0 // pred_check_branch
    %12 = sbr.rel (0) target = $region9
  $region8: #{resnet_forward.50} parent=0 // pred_region
    _
  $region9: #{resnet_forward.50} parent=0 // pred_fallthru
    _
  %v13 = vld [vmem:[%s0] sm:$0xff]
  %v14 = vld [vmem:[%s0 + $0x8] sm:$0xff]
  %v15 = vld [vmem:[%s0 + $0x10] sm:$0xff]
  %v16 = vld [vmem:[%s0 + $0x18] sm:$0xff]
  %v17 = vld [vmem:[%s0 + $0x20] sm:$0xff]
  %v18 = vld [vmem:[%s0 + $0x28] sm:$0xff]
  %v19 = vld [vmem:[%s0 + $0x30] sm:$0xff]
  %v20 = vld [vmem:[%s0 + $0x38] sm:$0xff]
  %v21 = vld [vmem:[%s0 + $0x40] sm:$0xff]
  %v22 = vld [vmem:[%s0 + $0x48] sm:$0xff]
  %v23 = vld [vmem:[%s0 + $0x50] sm:$0xff]
  %v24 = vld [vmem:[%s0 + $0x58] sm:$0xff]
  %v25 = vld [vmem:[%s0 + $0x60] sm:$0xff]
  %v26 = vld [vmem:[%s0 + $0x68] sm:$0xff]
  %v27 = vld [vmem:[%s0 + $0x70] sm:$0xff]
  %v28 = vld [vmem:[%s0 + $0x78] sm:$0xff]
  %v29 = vld [vmem:[%s1] sm:$0xff]
  %v30 = vld [vmem:[%s1 + $0x8] sm:$0xff]
  %v31 = vld [vmem:[%s1 + $0x10] sm:$0xff]
  %v32 = vld [vmem:[%s1 + $0x18] sm:$0xff]
  %v33 = vld [vmem:[%s1 + $0x20] sm:$0xff]
  %v34 = vld [vmem:[%s1 + $0x28] sm:$0xff]
  %v35 = vld [vmem:[%s1 + $0x30] sm:$0xff]
  %v36 = vld [vmem:[%s1 + $0x38] sm:$0xff]
  %v37 = vld [vmem:[%s1 + $0x40] sm:$0xff]
  %v38 = vld [vmem:[%s1 + $0x48] sm:$0xff]
  %v39 = vld [vmem:[%s1 + $0x50] sm:$0xff]
  %v40 = vld [vmem:[%s1 + $0x58] sm:$0xff]
  %v41 = vld [vmem:[%s1 + $0x60] sm:$0xff]
  %v42 = vld [vmem:[%s1 + $0x68] sm:$0xff]
  %v43 = vld [vmem:[%s1 + $0x70] sm:$0xff]
  %v44 = vld [vmem:[%s1 + $0x78] sm:$0xff]
  %45 = vmatprep.subr.mxu0 0.0
  %46 = vmatpush1.msra.mxu0 %v29
  %47 = vmatprep.subr.mxu0 0.0
  %48 = vmatpush1.msra.mxu0 %v30
  %49 = vmatprep.subr.mxu0 0.0
  %50 = vmatpush1.msra.mxu0 %v31
  %51 = vmatprep.subr.mxu0 0.0
  %52 = vmatpush1.msra.mxu0 %v32
  %53 = vmatprep.subr.mxu0 0.0
  %54 = vmatpush1.msra.mxu0 %v33
  %55 = vmatprep.subr.mxu0 0.0
  %56 = vmatpush1.msra.mxu0 %v34
  %57 = vmatprep.subr.mxu0 0.0
  %58 = vmatpush1.msra.mxu0 %v35
  %59 = vmatprep.subr.mxu0 0.0
  %60 = vmatpush1.msra.mxu0 %v36
  %61 = vmatprep.subr.mxu0 0.0
  %62 = vmatpush1.msra.mxu0 %v37
  %63 = vmatprep.subr.mxu0 0.0
  %64 = vmatpush1.msra.mxu0 %v38
  %65 = vmatprep.subr.mxu0 0.0
  %66 = vmatpush1.msra.mxu0 %v39
  %67 = vmatprep.subr.mxu0 0.0
  %68 = vmatpush1.msra.mxu0 %v40
  %69 = vmatprep.subr.mxu0 0.0
  %70 = vmatpush1.msra.mxu0 %v41
  %71 = vmatprep.subr.mxu0 0.0
  %72 = vmatpush1.msra.mxu0 %v42
  %73 = vmatprep.subr.mxu0 0.0
  %74 = vmatpush1.msra.mxu0 %v43
  %75 = vmatprep.subr.mxu0 0.0
  %76 = vmatpush1.msra.mxu0 %v44
  %77 = vmatprep.subr.mxu0 0.0
  %78 = vmatpush1.msra.mxu0 0.0
  %79 = vmatprep.subr.mxu0 0.0
  %80 = vmatpush1.msra.mxu0 0.0
  %81 = vmatprep.subr.mxu0 0.0
  %82 = vmatpush1.msra.mxu0 0.0
  %83 = vmatprep.subr.mxu0 0.0
  %84 = vmatpush1.msra.mxu0 0.0
  %85 = vmatprep.subr.mxu0 0.0
  %86 = vmatpush1.msra.mxu0 0.0
  %87 = vmatprep.subr.mxu0 0.0
  %88 = vmatpush1.msra.mxu0 0.0
  %89 = vmatprep.subr.mxu0 0.0
  %90 = vmatpush1.msra.mxu0 0.0
  %91 = vmatprep.subr.mxu0 0.0
  %92 = vmatpush1.msra.mxu0 0.0
  %93 = vmatprep.subr.mxu0 0.0
  %94 = vmatpush1.msra.mxu0 0.0
  %95 = vmatprep.subr.mxu0 0.0
  %96 = vmatpush1.msra.mxu0 0.0
  %97 = vmatprep.subr.mxu0 0.0
  %98 = vmatpush1.msra.mxu0 0.0
  %99 = vmatprep.subr.mxu0 0.0
  %100 = vmatpush1.msra.mxu0 0.0
  %101 = vmatprep.subr.mxu0 0.0
  %102 = vmatpush1.msra.mxu0 0.0
  %103 = vmatprep.subr.mxu0 0.0
  %104 = vmatpush1.msra.mxu0 0.0
  %105 = vmatprep.subr.mxu0 0.0
  %106 = vmatpush1.msra.mxu0 0.0
  %107 = vmatprep.subr.mxu0 0.0
  %108 = vmatpush1.msra.mxu0 0.0
  %109 = vmatprep.mubr.f32.mxu0 0.0
  %110 = vmatmul.mubr.f32.gmra.mrb[0].mxu0 %v13
  %v111 = vpop.f32.mrb[0].mxu0
  %v112 = vadd.f32 0.0, %v111
  %v113 = vpop.f32.mrb[0].mxu0
  %114 = vmatprep.mubr.f32.mxu0 0.0
  %115 = vmatmul.mubr.f32.gmra.mrb[0].mxu0 %v14
  %v116 = vpop.f32.mrb[0].mxu0
  %v117 = vadd.f32 0.0, %v116
  %v118 = vpop.f32.mrb[0].mxu0
  %119 = vmatprep.mubr.f32.mxu0 0.0
  %120 = vmatmul.mubr.f32.gmra.mrb[0].mxu0 %v15
  %v121 = vpop.f32.mrb[0].mxu0
  %v122 = vadd.f32 0.0, %v121
  %v123 = vpop.f32.mrb[0].mxu0
  %124 = vmatprep.mubr.f32.mxu0 0.0
  %125 = vmatmul.mubr.f32.gmra.mrb[0].mxu0 %v16
  %v126 = vpop.f32.mrb[0].mxu0
  %v127 = vadd.f32 0.0, %v126
  %v128 = vpop.f32.mrb[0].mxu0
  %129 = vmatprep.mubr.f32.mxu0 0.0
  %130 = vmatmul.mubr.f32.gmra.mrb[0].mxu0 %v17
  %v131 = vpop.f32.mrb[0].mxu0
  %v132 = vadd.f32 0.0, %v131
  %v133 = vpop.f32.mrb[0].mxu0
  %134 = vmatprep.mubr.f32.mxu0 0.0
  %135 = vmatmul.mubr.f32.gmra.mrb[0].mxu0 %v18
  %v136 = vpop.f32.mrb[0].mxu0
  %v137 = vadd.f32 0.0, %v136
  %v138 = vpop.f32.mrb[0].mxu0
  %139 = vmatprep.mubr.f32.mxu0 0.0
  %140 = vmatmul.mubr.f32.gmra.mrb[0].mxu0 %v19
  %v141 = vpop.f32.mrb[0].mxu0
  %v142 = vadd.f32 0.0, %v141
  %v143 = vpop.f32.mrb[0].mxu0
  %144 = vmatprep.mubr.f32.mxu0 0.0
  %145 = vmatmul.mubr.f32.gmra.mrb[0].mxu0 %v20
  %v146 = vpop.f32.mrb[0].mxu0
  %v147 = vadd.f32 0.0, %v146
  %v148 = vpop.f32.mrb[0].mxu0
  %149 = vmatprep.mubr.f32.mxu0 0.0
  %150 = vmatmul.mubr.f32.gmra.mrb[0].mxu0 %v21
  %v151 = vpop.f32.mrb[0].mxu0
  %v152 = vadd.f32 0.0, %v151
  %v153 = vpop.f32.mrb[0].mxu0
  %154 = vmatprep.mubr.f32.mxu0 0.0
  %155 = vmatmul.mubr.f32.gmra.mrb[0].mxu0 %v22
  %v156 = vpop.f32.mrb[0].mxu0
  %v157 = vadd.f32 0.0, %v156
  %v158 = vpop.f32.mrb[0].mxu0
  %159 = vmatprep.mubr.f32.mxu0 0.0
  %160 = vmatmul.mubr.f32.gmra.mrb[0].mxu0 %v23
  %v161 = vpop.f32.mrb[0].mxu0
  %v162 = vadd.f32 0.0, %v161
  %v163 = vpop.f32.mrb[0].mxu0
  %164 = vmatprep.mubr.f32.mxu0 0.0
  %165 = vmatmul.mubr.f32.gmra.mrb[0].mxu0 %v24
  %v166 = vpop.f32.mrb[0].mxu0
  %v167 = vadd.f32 0.0, %v166
  %v168 = vpop.f32.mrb[0].mxu0
  %169 = vmatprep.mubr.f32.mxu0 0.0
  %170 = vmatmul.mubr.f32.gmra.mrb[0].mxu0 %v25
  %v171 = vpop.f32.mrb[0].mxu0
  %v172 = vadd.f32 0.0, %v171
  %v173 = vpop.f32.mrb[0].mxu0
  %174 = vmatprep.mubr.f32.mxu0 0.0
  %175 = vmatmul.mubr.f32.gmra.mrb[0].mxu0 %v26
  %v176 = vpop.f32.mrb[0].mxu0
  %v177 = vadd.f32 0.0, %v176
  %v178 = vpop.f32.mrb[0].mxu0
  %179 = vmatprep.mubr.f32.mxu0 0.0
  %180 = vmatmul.mubr.f32.gmra.mrb[0].mxu0 %v27
  %v181 = vpop.f32.mrb[0].mxu0
  %v182 = vadd.f32 0.0, %v181
  %v183 = vpop.f32.mrb[0].mxu0
  %184 = vmatprep.mubr.f32.mxu0 0.0
  %185 = vmatmul.mubr.f32.gmra.mrb[0].mxu0 %v28
  %v186 = vpop.f32.mrb[0].mxu0
  %v187 = vadd.f32 0.0, %v186
  %v188 = vpop.f32.mrb[0].mxu0
  %189 = vdwg.mxu0
  %190 = vst [vmem:[%s2] sm:$0xff] %v112
  %191 = vst [vmem:[%s2 + $0x8] sm:$0xff] %v117
  %192 = vst [vmem:[%s2 + $0x10] sm:$0xff] %v122
  %193 = vst [vmem:[%s2 + $0x18] sm:$0xff] %v127
  %194 = vst [vmem:[%s2 + $0x20] sm:$0xff] %v132
  %195 = vst [vmem:[%s2 + $0x28] sm:$0xff] %v137
  %196 = vst [vmem:[%s2 + $0x30] sm:$0xff] %v142
  %197 = vst [vmem:[%s2 + $0x38] sm:$0xff] %v147
  %198 = vst [vmem:[%s2 + $0x40] sm:$0xff] %v152
  %199 = vst [vmem:[%s2 + $0x48] sm:$0xff] %v157
  %200 = vst [vmem:[%s2 + $0x50] sm:$0xff] %v162
  %201 = vst [vmem:[%s2 + $0x58] sm:$0xff] %v167
  %202 = vst [vmem:[%s2 + $0x60] sm:$0xff] %v172
  %203 = vst [vmem:[%s2 + $0x68] sm:$0xff] %v177
  %204 = vst [vmem:[%s2 + $0x70] sm:$0xff] %v182
  %205 = vst [vmem:[%s2 + $0x78] sm:$0xff] %v187
  %v206 = vadd.f32 %v112, %v117
  %v207 = vadd.f32 %v206, %v122
  %v208 = vadd.f32 %v207, %v127
  %v209 = vadd.f32 %v208, %v132
  %v210 = vadd.f32 %v209, %v137
  %v211 = vadd.f32 %v210, %v142
  %v212 = vadd.f32 %v211, %v147
  %v213 = vadd.f32 %v212, %v152
  %v214 = vadd.f32 %v213, %v157
  %v215 = vadd.f32 %v214, %v162
  %v216 = vadd.f32 %v215, %v167
  %v217 = vadd.f32 %v216, %v172
  %v218 = vadd.f32 %v217, %v177
  %v219 = vadd.f32 %v218, %v182
  %v220 = vadd.f32 %v219, %v187
  %v221 = vrot.slane %v220, 4
  %v222 = vadd.f32 %v220, %v221
  %v223 = vrot.slane %v222, 2
  %v224 = vadd.f32 %v222, %v223
  %v225 = vrot.slane %v224, 1
  %v226 = vadd.f32 %v224, %v225
  %v227 = vmul.f32 %v112, %v112
  %v228 = vmul.f32 %v117, %v117
  %v229 = vmul.f32 %v122, %v122
  %v230 = vmul.f32 %v127, %v127
  %v231 = vmul.f32 %v132, %v132
  %v232 = vmul.f32 %v137, %v137
  %v233 = vmul.f32 %v142, %v142
  %v234 = vmul.f32 %v147, %v147
  %v235 = vmul.f32 %v152, %v152
  %v236 = vmul.f32 %v157, %v157
  %v237 = vmul.f32 %v162, %v162
  %v238 = vmul.f32 %v167, %v167
  %v239 = vmul.f32 %v172, %v172
  %v240 = vmul.f32 %v177, %v177
  %v241 = vmul.f32 %v182, %v182
  %v242 = vmul.f32 %v187, %v187
  %v243 = vadd.f32 %v227, %v228
  %v244 = vadd.f32 %v243, %v229
  %v245 = vadd.f32 %v244, %v230
  %v246 = vadd.f32 %v245, %v231
  %v247 = vadd.f32 %v246, %v232
  %v248 = vadd.f32 %v247, %v233
  %v249 = vadd.f32 %v248, %v234
  %v250 = vadd.f32 %v249, %v235
  %v251 = vadd.f32 %v250, %v236
  %v252 = vadd.f32 %v251, %v237
  %v253 = vadd.f32 %v252, %v238
  %v254 = vadd.f32 %v253, %v239
  %v255 = vadd.f32 %v254, %v240
  %v256 = vadd.f32 %v255, %v241
  %v257 = vadd.f32 %v256, %v242
  %v258 = vrot.slane %v257, 4
  %v259 = vadd.f32 %v257, %v258
  %v260 = vrot.slane %v259, 2
  %v261 = vadd.f32 %v259, %v260
  %v262 = vrot.slane %v261, 1
  %v263 = vadd.f32 %v261, %v262
  %v264 = vlaneseq
  %v265 = vshrl.u32 %v264, 7
  %vm266 = vcmp.eq.s32.totalorder %v265, 0
  %vm267 = vcmp.eq.s32.totalorder %v265, 1
  %v268 = vsel %vm267, %v263, 0.0
  %v269 = vsel %vm266, %v226, %v268
  %270 = vst [vmem:[%s3] sm:$0xff] %v269
  // Predicated region
  $region10: #{resnet_forward.50} parent=0 // pred_check
    _
  $region11: #{resnet_forward.50} parent=0 // pred_check_branch
    %272 = sbr.rel (0) target = $region13
  $region12: #{resnet_forward.50} parent=0 // pred_region
    _
  $region13: #{resnet_forward.50} parent=0 // pred_fallthru
    _
  // Predicated region
  $region14: #{resnet_forward.50} parent=0 // pred_check
    _
  $region15: #{resnet_forward.50} parent=0 // pred_check_branch
    %274 = sbr.rel (0) target = $region17
  $region16: #{resnet_forward.50} parent=0 // pred_region
    _
  $region17: #{resnet_forward.50} parent=0 // pred_fallthru
    _
  // Predicated region
  $region18: #{resnet_forward.50} parent=0 // pred_check
    _
  $region19: #{resnet_forward.50} parent=0 // pred_check_branch
    %276 = sbr.rel (0) target = $region21
  $region20: #{resnet_forward.50} parent=0 // pred_region
    _
  $region21: #{resnet_forward.50} parent=0 // pred_fallthru
    _
  // Predicated region
  $region22: #{resnet_forward.50} parent=0 // pred_check
    _
  $region23: #{resnet_forward.50} parent=0 // pred_check_branch
    %278 = sbr.rel (0) target = $region25
  $region24: #{resnet_forward.50} parent=0 // pred_region
    _
  $region25: #{resnet_forward.50} parent=0 // pred_fallthru
    _

// kernel: resnet_forward.51
$region0: #{resnet_forward.51}
  #allocation0 [shape = 'u32[]', space=smem, size = 0x4, offset = 0x4, fixed_abs, tag = 'smem constant byte address 0x4 - core index']
  #allocation1 [shape = 'u32[144,128]{1,0:T(1,128)}', space=vmem, size = 0x12000, scoped, tag = 'internal scratch']
  %s0 = inlined_call_operand.vmem [shape: f32[128,128], index: 0, kind: input, shape index: {}]
  %s1 = inlined_call_operand.vmem [shape: f32[1,128], index: 1, kind: input, shape index: {}]
  %s2 = inlined_call_operand.vmem [shape: f32[1,128], index: 2, kind: input, shape index: {}]
  %s3 = inlined_call_operand.vmem [shape: f32[128,128], index: 3, kind: output, shape index: {}]
  %s4 = sld [smem:[#allocation0]]
  $region22: #{resnet_forward.51} parent=0
    _
  %s6 = ssub.s32 1, %s4
  %s7 = scalar_select 0, %s6, %s4
  // Predicated region
  $region2: #{resnet_forward.51} parent=0 // pred_check
    _
  $region3: #{resnet_forward.51} parent=0 // pred_check_branch
    %9 = sbr.rel (0) target = $region5
  $region4: #{resnet_forward.51} parent=0 // pred_region
    _
  $region5: #{resnet_forward.51} parent=0 // pred_fallthru
    _
  // Predicated region
  $region6: #{resnet_forward.51} parent=0 // pred_check
    _
  $region7: #{resnet_forward.51} parent=0 // pred_check_branch
    %11 = sbr.rel (0) target = $region9
  $region8: #{resnet_forward.51} parent=0 // pred_region
    _
  $region9: #{resnet_forward.51} parent=0 // pred_fallthru
    _
  // Predicated region
  $region10: #{resnet_forward.51} parent=0 // pred_check
    _
  $region11: #{resnet_forward.51} parent=0 // pred_check_branch
    %13 = sbr.rel (0) target = $region13
  $region12: #{resnet_forward.51} parent=0 // pred_region
    _
  $region13: #{resnet_forward.51} parent=0 // pred_fallthru
    _
  %v14 = vld [vmem:[%s0] sm:$0xff]
  %v15 = vld [vmem:[%s0 + $0x8] sm:$0xff]
  %v16 = vld [vmem:[%s0 + $0x10] sm:$0xff]
  %v17 = vld [vmem:[%s0 + $0x18] sm:$0xff]
  %v18 = vld [vmem:[%s0 + $0x20] sm:$0xff]
  %v19 = vld [vmem:[%s0 + $0x28] sm:$0xff]
  %v20 = vld [vmem:[%s0 + $0x30] sm:$0xff]
  %v21 = vld [vmem:[%s0 + $0x38] sm:$0xff]
  %v22 = vld [vmem:[%s0 + $0x40] sm:$0xff]
  %v23 = vld [vmem:[%s0 + $0x48] sm:$0xff]
  %v24 = vld [vmem:[%s0 + $0x50] sm:$0xff]
  %v25 = vld [vmem:[%s0 + $0x58] sm:$0xff]
  %v26 = vld [vmem:[%s0 + $0x60] sm:$0xff]
  %v27 = vld [vmem:[%s0 + $0x68] sm:$0xff]
  %v28 = vld [vmem:[%s0 + $0x70] sm:$0xff]
  %v29 = vld [vmem:[%s0 + $0x78] sm:$0xff]
  %v30 = vld [vmem:[%s1] sm:$0x1]
  %v32 = vlaneseq
  %v33 = vshrl.u32 %v32, 7
  %v34 = vsub.s32 0, %v33
  %v35 = vrot.slane %v30, %v34
  %v37 = vmul.f32 %v14, %v35
  %v38 = vmul.f32 %v15, %v35
  %v39 = vmul.f32 %v16, %v35
  %v40 = vmul.f32 %v17, %v35
  %v41 = vmul.f32 %v18, %v35
  %v42 = vmul.f32 %v19, %v35
  %v43 = vmul.f32 %v20, %v35
  %v44 = vmul.f32 %v21, %v35
  %v45 = vmul.f32 %v22, %v35
  %v46 = vmul.f32 %v23, %v35
  %v47 = vmul.f32 %v24, %v35
  %v48 = vmul.f32 %v25, %v35
  %v49 = vmul.f32 %v26, %v35
  %v50 = vmul.f32 %v27, %v35
  %v51 = vmul.f32 %v28, %v35
  %v52 = vmul.f32 %v29, %v35
  %v53 = vld [vmem:[%s2] sm:$0x1]
  %v55 = vlaneseq
  %v56 = vshrl.u32 %v55, 7
  %v57 = vsub.s32 0, %v56
  %v58 = vrot.slane %v53, %v57
  %v60 = vadd.f32 %v37, %v58
  %v61 = vadd.f32 %v38, %v58
  %v62 = vadd.f32 %v39, %v58
  %v63 = vadd.f32 %v40, %v58
  %v64 = vadd.f32 %v41, %v58
  %v65 = vadd.f32 %v42, %v58
  %v66 = vadd.f32 %v43, %v58
  %v67 = vadd.f32 %v44, %v58
  %v68 = vadd.f32 %v45, %v58
  %v69 = vadd.f32 %v46, %v58
  %v70 = vadd.f32 %v47, %v58
  %v71 = vadd.f32 %v48, %v58
  %v72 = vadd.f32 %v49, %v58
  %v73 = vadd.f32 %v50, %v58
  %v74 = vadd.f32 %v51, %v58
  %v75 = vadd.f32 %v52, %v58
  %76 = vst [vmem:[%s3] sm:$0xff] %v60
  %77 = vst [vmem:[%s3 + $0x8] sm:$0xff] %v61
  %78 = vst [vmem:[%s3 + $0x10] sm:$0xff] %v62
  %79 = vst [vmem:[%s3 + $0x18] sm:$0xff] %v63
  %80 = vst [vmem:[%s3 + $0x20] sm:$0xff] %v64
  %81 = vst [vmem:[%s3 + $0x28] sm:$0xff] %v65
  %82 = vst [vmem:[%s3 + $0x30] sm:$0xff] %v66
  %83 = vst [vmem:[%s3 + $0x38] sm:$0xff] %v67
  %84 = vst [vmem:[%s3 + $0x40] sm:$0xff] %v68
  %85 = vst [vmem:[%s3 + $0x48] sm:$0xff] %v69
  %86 = vst [vmem:[%s3 + $0x50] sm:$0xff] %v70
  %87 = vst [vmem:[%s3 + $0x58] sm:$0xff] %v71
  %88 = vst [vmem:[%s3 + $0x60] sm:$0xff] %v72
  %89 = vst [vmem:[%s3 + $0x68] sm:$0xff] %v73
  %90 = vst [vmem:[%s3 + $0x70] sm:$0xff] %v74
  %91 = vst [vmem:[%s3 + $0x78] sm:$0xff] %v75
  // Predicated region
  $region14: #{resnet_forward.51} parent=0 // pred_check
    _
  $region15: #{resnet_forward.51} parent=0 // pred_check_branch
    %93 = sbr.rel (0) target = $region17
  $region16: #{resnet_forward.51} parent=0 // pred_region
    _
  $region17: #{resnet_forward.51} parent=0 // pred_fallthru
    _
  // Predicated region
  $region18: #{resnet_forward.51} parent=0 // pred_check
    _
  $region19: #{resnet_forward.51} parent=0 // pred_check_branch
    %95 = sbr.rel (0) target = $region21
  $region20: #{resnet_forward.51} parent=0 // pred_region
    _
  $region21: #{resnet_forward.51} parent=0 // pred_fallthru
    _

// kernel: resnet_forward.49
$region0: #{resnet_forward.49}
  #allocation0 [shape = 'u32[]', space=smem, size = 0x4, offset = 0x4, fixed_abs, tag = 'smem constant byte address 0x4 - core index']
  #allocation1 [shape = 'u32[144,128]{1,0:T(1,128)}', space=vmem, size = 0x12000, scoped, tag = 'internal scratch']
  %s0 = inlined_call_operand.vmem [shape: f32[128,128], index: 0, kind: input, shape index: {}]
  %s1 = inlined_call_operand.vmem [shape: f32[1,128], index: 1, kind: input, shape index: {}]
  %s2 = inlined_call_operand.vmem [shape: f32[1,128], index: 2, kind: input, shape index: {}]
  %s3 = inlined_call_operand.vmem [shape: f32[128,128], index: 3, kind: output, shape index: {}]
  %s4 = sld [smem:[#allocation0]]
  $region22: #{resnet_forward.49} parent=0
    _
  %s6 = ssub.s32 1, %s4
  %s7 = scalar_select 0, %s6, %s4
  // Predicated region
  $region2: #{resnet_forward.49} parent=0 // pred_check
    _
  $region3: #{resnet_forward.49} parent=0 // pred_check_branch
    %9 = sbr.rel (0) target = $region5
  $region4: #{resnet_forward.49} parent=0 // pred_region
    _
  $region5: #{resnet_forward.49} parent=0 // pred_fallthru
    _
  // Predicated region
  $region6: #{resnet_forward.49} parent=0 // pred_check
    _
  $region7: #{resnet_forward.49} parent=0 // pred_check_branch
    %11 = sbr.rel (0) target = $region9
  $region8: #{resnet_forward.49} parent=0 // pred_region
    _
  $region9: #{resnet_forward.49} parent=0 // pred_fallthru
    _
  // Predicated region
  $region10: #{resnet_forward.49} parent=0 // pred_check
    _
  $region11: #{resnet_forward.49} parent=0 // pred_check_branch
    %13 = sbr.rel (0) target = $region13
  $region12: #{resnet_forward.49} parent=0 // pred_region
    _
  $region13: #{resnet_forward.49} parent=0 // pred_fallthru
    _
  %v14 = vld [vmem:[%s0] sm:$0xff]
  %v15 = vld [vmem:[%s0 + $0x8] sm:$0xff]
  %v16 = vld [vmem:[%s0 + $0x10] sm:$0xff]
  %v17 = vld [vmem:[%s0 + $0x18] sm:$0xff]
  %v18 = vld [vmem:[%s0 + $0x20] sm:$0xff]
  %v19 = vld [vmem:[%s0 + $0x28] sm:$0xff]
  %v20 = vld [vmem:[%s0 + $0x30] sm:$0xff]
  %v21 = vld [vmem:[%s0 + $0x38] sm:$0xff]
  %v22 = vld [vmem:[%s0 + $0x40] sm:$0xff]
  %v23 = vld [vmem:[%s0 + $0x48] sm:$0xff]
  %v24 = vld [vmem:[%s0 + $0x50] sm:$0xff]
  %v25 = vld [vmem:[%s0 + $0x58] sm:$0xff]
  %v26 = vld [vmem:[%s0 + $0x60] sm:$0xff]
  %v27 = vld [vmem:[%s0 + $0x68] sm:$0xff]
  %v28 = vld [vmem:[%s0 + $0x70] sm:$0xff]
  %v29 = vld [vmem:[%s0 + $0x78] sm:$0xff]
  %v30 = vld [vmem:[%s1] sm:$0x1]
  %v32 = vlaneseq
  %v33 = vshrl.u32 %v32, 7
  %v34 = vsub.s32 0, %v33
  %v35 = vrot.slane %v30, %v34
  %v37 = vmul.f32 %v14, %v35
  %v38 = vmul.f32 %v15, %v35
  %v39 = vmul.f32 %v16, %v35
  %v40 = vmul.f32 %v17, %v35
  %v41 = vmul.f32 %v18, %v35
  %v42 = vmul.f32 %v19, %v35
  %v43 = vmul.f32 %v20, %v35
  %v44 = vmul.f32 %v21, %v35
  %v45 = vmul.f32 %v22, %v35
  %v46 = vmul.f32 %v23, %v35
  %v47 = vmul.f32 %v24, %v35
  %v48 = vmul.f32 %v25, %v35
  %v49 = vmul.f32 %v26, %v35
  %v50 = vmul.f32 %v27, %v35
  %v51 = vmul.f32 %v28, %v35
  %v52 = vmul.f32 %v29, %v35
  %v53 = vld [vmem:[%s2] sm:$0x1]
  %v55 = vlaneseq
  %v56 = vshrl.u32 %v55, 7
  %v57 = vsub.s32 0, %v56
  %v58 = vrot.slane %v53, %v57
  %v60 = vadd.f32 %v37, %v58
  %v61 = vadd.f32 %v38, %v58
  %v62 = vadd.f32 %v39, %v58
  %v63 = vadd.f32 %v40, %v58
  %v64 = vadd.f32 %v41, %v58
  %v65 = vadd.f32 %v42, %v58
  %v66 = vadd.f32 %v43, %v58
  %v67 = vadd.f32 %v44, %v58
  %v68 = vadd.f32 %v45, %v58
  %v69 = vadd.f32 %v46, %v58
  %v70 = vadd.f32 %v47, %v58
  %v71 = vadd.f32 %v48, %v58
  %v72 = vadd.f32 %v49, %v58
  %v73 = vadd.f32 %v50, %v58
  %v74 = vadd.f32 %v51, %v58
  %v75 = vadd.f32 %v52, %v58
  %v76 = vmax.f32 %v60, 0.0
  %v77 = vmax.f32 %v61, 0.0
  %v78 = vmax.f32 %v62, 0.0
  %v79 = vmax.f32 %v63, 0.0
  %v80 = vmax.f32 %v64, 0.0
  %v81 = vmax.f32 %v65, 0.0
  %v82 = vmax.f32 %v66, 0.0
  %v83 = vmax.f32 %v67, 0.0
  %v84 = vmax.f32 %v68, 0.0
  %v85 = vmax.f32 %v69, 0.0
  %v86 = vmax.f32 %v70, 0.0
  %v87 = vmax.f32 %v71, 0.0
  %v88 = vmax.f32 %v72, 0.0
  %v89 = vmax.f32 %v73, 0.0
  %v90 = vmax.f32 %v74, 0.0
  %v91 = vmax.f32 %v75, 0.0
  %92 = vst [vmem:[%s3] sm:$0xff] %v76
  %93 = vst [vmem:[%s3 + $0x8] sm:$0xff] %v77
  %94 = vst [vmem:[%s3 + $0x10] sm:$0xff] %v78
  %95 = vst [vmem:[%s3 + $0x18] sm:$0xff] %v79
  %96 = vst [vmem:[%s3 + $0x20] sm:$0xff] %v80
  %97 = vst [vmem:[%s3 + $0x28] sm:$0xff] %v81
  %98 = vst [vmem:[%s3 + $0x30] sm:$0xff] %v82
  %99 = vst [vmem:[%s3 + $0x38] sm:$0xff] %v83
  %100 = vst [vmem:[%s3 + $0x40] sm:$0xff] %v84
  %101 = vst [vmem:[%s3 + $0x48] sm:$0xff] %v85
  %102 = vst [vmem:[%s3 + $0x50] sm:$0xff] %v86
  %103 = vst [vmem:[%s3 + $0x58] sm:$0xff] %v87
  %104 = vst [vmem:[%s3 + $0x60] sm:$0xff] %v88
  %105 = vst [vmem:[%s3 + $0x68] sm:$0xff] %v89
  %106 = vst [vmem:[%s3 + $0x70] sm:$0xff] %v90
  %107 = vst [vmem:[%s3 + $0x78] sm:$0xff] %v91
  // Predicated region
  $region14: #{resnet_forward.49} parent=0 // pred_check
    _
  $region15: #{resnet_forward.49} parent=0 // pred_check_branch
    %109 = sbr.rel (0) target = $region17
  $region16: #{resnet_forward.49} parent=0 // pred_region
    _
  $region17: #{resnet_forward.49} parent=0 // pred_fallthru
    _
  // Predicated region
  $region18: #{resnet_forward.49} parent=0 // pred_check
    _
  $region19: #{resnet_forward.49} parent=0 // pred_check_branch
    %111 = sbr.rel (0) target = $region21
  $region20: #{resnet_forward.49} parent=0 // pred_region
    _
  $region21: #{resnet_forward.49} parent=0 // pred_fallthru
    _

// kernel: resnet_forward.60
$region0: #{resnet_forward.60}
  #allocation0 [shape = 'u32[]', space=smem, size = 0x4, offset = 0x4, fixed_abs, tag = 'smem constant byte address 0x4 - core index']
  #allocation1 [shape = 'u32[144,128]{1,0:T(1,128)}', space=vmem, size = 0x12000, scoped, tag = 'internal scratch']
  %s0 = inlined_call_operand.vmem [shape: f32[32,128], index: 0, kind: input, shape index: {}]
  %s1 = inlined_call_operand.vmem [shape: f32[128,128], index: 1, kind: input, shape index: {}]
  %s2 = inlined_call_operand.vmem [shape: f32[32,128], index: 2, kind: output, shape index: {0}]
  %s3 = inlined_call_operand.vmem [shape: f32[8,128], index: 3, kind: output, shape index: {1}]
  %4 = xla_tuple %s2, %s3
  %s5 = sld [smem:[#allocation0]]
  $region26: #{resnet_forward.60} parent=0
    _
  %s7 = ssub.s32 1, %s5
  %s8 = scalar_select 0, %s7, %s5
  // Predicated region
  $region2: #{resnet_forward.60} parent=0 // pred_check
    _
  $region3: #{resnet_forward.60} parent=0 // pred_check_branch
    %10 = sbr.rel (0) target = $region5
  $region4: #{resnet_forward.60} parent=0 // pred_region
    _
  $region5: #{resnet_forward.60} parent=0 // pred_fallthru
    _
  // Predicated region
  $region6: #{resnet_forward.60} parent=0 // pred_check
    _
  $region7: #{resnet_forward.60} parent=0 // pred_check_branch
    %12 = sbr.rel (0) target = $region9
  $region8: #{resnet_forward.60} parent=0 // pred_region
    _
  $region9: #{resnet_forward.60} parent=0 // pred_fallthru
    _
  %v13 = vld [vmem:[%s0] sm:$0xff]
  %v14 = vld [vmem:[%s0 + $0x8] sm:$0xff]
  %v15 = vld [vmem:[%s0 + $0x10] sm:$0xff]
  %v16 = vld [vmem:[%s0 + $0x18] sm:$0xff]
  %v17 = vld [vmem:[%s1] sm:$0xff]
  %v18 = vld [vmem:[%s1 + $0x8] sm:$0xff]
  %v19 = vld [vmem:[%s1 + $0x10] sm:$0xff]
  %v20 = vld [vmem:[%s1 + $0x18] sm:$0xff]
  %v21 = vld [vmem:[%s1 + $0x20] sm:$0xff]
  %v22 = vld [vmem:[%s1 + $0x28] sm:$0xff]
  %v23 = vld [vmem:[%s1 + $0x30] sm:$0xff]
  %v24 = vld [vmem:[%s1 + $0x38] sm:$0xff]
  %v25 = vld [vmem:[%s1 + $0x40] sm:$0xff]
  %v26 = vld [vmem:[%s1 + $0x48] sm:$0xff]
  %v27 = vld [vmem:[%s1 + $0x50] sm:$0xff]
  %v28 = vld [vmem:[%s1 + $0x58] sm:$0xff]
  %v29 = vld [vmem:[%s1 + $0x60] sm:$0xff]
  %v30 = vld [vmem:[%s1 + $0x68] sm:$0xff]
  %v31 = vld [vmem:[%s1 + $0x70] sm:$0xff]
  %v32 = vld [vmem:[%s1 + $0x78] sm:$0xff]
  %33 = vmatprep.subr.mxu0 0.0
  %34 = vmatpush1.msra.mxu0 %v17
  %35 = vmatprep.subr.mxu0 0.0
  %36 = vmatpush1.msra.mxu0 %v18
  %37 = vmatprep.subr.mxu0 0.0
  %38 = vmatpush1.msra.mxu0 %v19
  %39 = vmatprep.subr.mxu0 0.0
  %40 = vmatpush1.msra.mxu0 %v20
  %41 = vmatprep.subr.mxu0 0.0
  %42 = vmatpush1.msra.mxu0 %v21
  %43 = vmatprep.subr.mxu0 0.0
  %44 = vmatpush1.msra.mxu0 %v22
  %45 = vmatprep.subr.mxu0 0.0
  %46 = vmatpush1.msra.mxu0 %v23
  %47 = vmatprep.subr.mxu0 0.0
  %48 = vmatpush1.msra.mxu0 %v24
  %49 = vmatprep.subr.mxu0 0.0
  %50 = vmatpush1.msra.mxu0 %v25
  %51 = vmatprep.subr.mxu0 0.0
  %52 = vmatpush1.msra.mxu0 %v26
  %53 = vmatprep.subr.mxu0 0.0
  %54 = vmatpush1.msra.mxu0 %v27
  %55 = vmatprep.subr.mxu0 0.0
  %56 = vmatpush1.msra.mxu0 %v28
  %57 = vmatprep.subr.mxu0 0.0
  %58 = vmatpush1.msra.mxu0 %v29
  %59 = vmatprep.subr.mxu0 0.0
  %60 = vmatpush1.msra.mxu0 %v30
  %61 = vmatprep.subr.mxu0 0.0
  %62 = vmatpush1.msra.mxu0 %v31
  %63 = vmatprep.subr.mxu0 0.0
  %64 = vmatpush1.msra.mxu0 %v32
  %65 = vmatprep.subr.mxu0 0.0
  %66 = vmatpush1.msra.mxu0 0.0
  %67 = vmatprep.subr.mxu0 0.0
  %68 = vmatpush1.msra.mxu0 0.0
  %69 = vmatprep.subr.mxu0 0.0
  %70 = vmatpush1.msra.mxu0 0.0
  %71 = vmatprep.subr.mxu0 0.0
  %72 = vmatpush1.msra.mxu0 0.0
  %73 = vmatprep.subr.mxu0 0.0
  %74 = vmatpush1.msra.mxu0 0.0
  %75 = vmatprep.subr.mxu0 0.0
  %76 = vmatpush1.msra.mxu0 0.0
  %77 = vmatprep.subr.mxu0 0.0
  %78 = vmatpush1.msra.mxu0 0.0
  %79 = vmatprep.subr.mxu0 0.0
  %80 = vmatpush1.msra.mxu0 0.0
  %81 = vmatprep.subr.mxu0 0.0
  %82 = vmatpush1.msra.mxu0 0.0
  %83 = vmatprep.subr.mxu0 0.0
  %84 = vmatpush1.msra.mxu0 0.0
  %85 = vmatprep.subr.mxu0 0.0
  %86 = vmatpush1.msra.mxu0 0.0
  %87 = vmatprep.subr.mxu0 0.0
  %88 = vmatpush1.msra.mxu0 0.0
  %89 = vmatprep.subr.mxu0 0.0
  %90 = vmatpush1.msra.mxu0 0.0
  %91 = vmatprep.subr.mxu0 0.0
  %92 = vmatpush1.msra.mxu0 0.0
  %93 = vmatprep.subr.mxu0 0.0
  %94 = vmatpush1.msra.mxu0 0.0
  %95 = vmatprep.subr.mxu0 0.0
  %96 = vmatpush1.msra.mxu0 0.0
  %97 = vmatprep.mubr.f32.mxu0 0.0
  %98 = vmatmul.mubr.f32.gmra.mrb[0].mxu0 %v13
  %v99 = vpop.f32.mrb[0].mxu0
  %v100 = vadd.f32 0.0, %v99
  %v101 = vpop.f32.mrb[0].mxu0
  %102 = vmatprep.mubr.f32.mxu0 0.0
  %103 = vmatmul.mubr.f32.gmra.mrb[0].mxu0 %v14
  %v104 = vpop.f32.mrb[0].mxu0
  %v105 = vadd.f32 0.0, %v104
  %v106 = vpop.f32.mrb[0].mxu0
  %107 = vmatprep.mubr.f32.mxu0 0.0
  %108 = vmatmul.mubr.f32.gmra.mrb[0].mxu0 %v15
  %v109 = vpop.f32.mrb[0].mxu0
  %v110 = vadd.f32 0.0, %v109
  %v111 = vpop.f32.mrb[0].mxu0
  %112 = vmatprep.mubr.f32.mxu0 0.0
  %113 = vmatmul.mubr.f32.gmra.mrb[0].mxu0 %v16
  %v114 = vpop.f32.mrb[0].mxu0
  %v115 = vadd.f32 0.0, %v114
  %v116 = vpop.f32.mrb[0].mxu0
  %117 = vdwg.mxu0
  %118 = vst [vmem:[%s2] sm:$0xff] %v100
  %119 = vst [vmem:[%s2 + $0x8] sm:$0xff] %v105
  %120 = vst [vmem:[%s2 + $0x10] sm:$0xff] %v110
  %121 = vst [vmem:[%s2 + $0x18] sm:$0xff] %v115
  %v122 = vadd.f32 %v100, %v105
  %v123 = vadd.f32 %v122, %v110
  %v124 = vadd.f32 %v123, %v115
  %v125 = vrot.slane %v124, 4
  %v126 = vadd.f32 %v124, %v125
  %v127 = vrot.slane %v126, 2
  %v128 = vadd.f32 %v126, %v127
  %v129 = vrot.slane %v128, 1
  %v130 = vadd.f32 %v128, %v129
  %v131 = vmul.f32 %v100, %v100
  %v132 = vmul.f32 %v105, %v105
  %v133 = vmul.f32 %v110, %v110
  %v134 = vmul.f32 %v115, %v115
  %v135 = vadd.f32 %v131, %v132
  %v136 = vadd.f32 %v135, %v133
  %v137 = vadd.f32 %v136, %v134
  %v138 = vrot.slane %v137, 4
  %v139 = vadd.f32 %v137, %v138
  %v140 = vrot.slane %v139, 2
  %v141 = vadd.f32 %v139, %v140
  %v142 = vrot.slane %v141, 1
  %v143 = vadd.f32 %v141, %v142
  %v144 = vlaneseq
  %v145 = vshrl.u32 %v144, 7
  %vm146 = vcmp.eq.s32.totalorder %v145, 0
  %vm147 = vcmp.eq.s32.totalorder %v145, 1
  %v148 = vsel %vm147, %v143, 0.0
  %v149 = vsel %vm146, %v130, %v148
  %150 = vst [vmem:[%s3] sm:$0xff] %v149
  // Predicated region
  $region10: #{resnet_forward.60} parent=0 // pred_check
    _
  $region11: #{resnet_forward.60} parent=0 // pred_check_branch
    %152 = sbr.rel (0) target = $region13
  $region12: #{resnet_forward.60} parent=0 // pred_region
    _
  $region13: #{resnet_forward.60} parent=0 // pred_fallthru
    _
  // Predicated region
  $region14: #{resnet_forward.60} parent=0 // pred_check
    _
  $region15: #{resnet_forward.60} parent=0 // pred_check_branch
    %154 = sbr.rel (0) target = $region17
  $region16: #{resnet_forward.60} parent=0 // pred_region
    _
  $region17: #{resnet_forward.60} parent=0 // pred_fallthru
    _
  // Predicated region
  $region18: #{resnet_forward.60} parent=0 // pred_check
    _
  $region19: #{resnet_forward.60} parent=0 // pred_check_branch
    %156 = sbr.rel (0) target = $region21
  $region20: #{resnet_forward.60} parent=0 // pred_region
    _
  $region21: #{resnet_forward.60} parent=0 // pred_fallthru
    _
  // Predicated region
  $region22: #{resnet_forward.60} parent=0 // pred_check
    _
  $region23: #{resnet_forward.60} parent=0 // pred_check_branch
    %158 = sbr.rel (0) target = $region25
  $region24: #{resnet_forward.60} parent=0 // pred_region
    _
  $region25: #{resnet_forward.60} parent=0 // pred_fallthru
    _

// kernel: resnet_forward.53
$region0: #{resnet_forward.53}
  #allocation0 [shape = 'u32[]', space=smem, size = 0x4, offset = 0x4, fixed_abs, tag = 'smem constant byte address 0x4 - core index']
  #allocation1 [shape = 'u32[144,128]{1,0:T(1,128)}', space=vmem, size = 0x12000, scoped, tag = 'internal scratch']
  %s0 = inlined_call_operand.vmem [shape: f32[128,128], index: 0, kind: input, shape index: {}]
  %s1 = inlined_call_operand.vmem [shape: f32[1,128], index: 1, kind: input, shape index: {}]
  %s2 = inlined_call_operand.vmem [shape: f32[1,128], index: 2, kind: input, shape index: {}]
  %s3 = inlined_call_operand.vmem [shape: f32[128,128], index: 3, kind: input, shape index: {}]
  %s4 = inlined_call_operand.vmem [shape: f32[128,128], index: 4, kind: output, shape index: {}]
  %s5 = sld [smem:[#allocation0]]
  $region26: #{resnet_forward.53} parent=0
    _
  %s7 = ssub.s32 1, %s5
  %s8 = scalar_select 0, %s7, %s5
  // Predicated region
  $region2: #{resnet_forward.53} parent=0 // pred_check
    _
  $region3: #{resnet_forward.53} parent=0 // pred_check_branch
    %10 = sbr.rel (0) target = $region5
  $region4: #{resnet_forward.53} parent=0 // pred_region
    _
  $region5: #{resnet_forward.53} parent=0 // pred_fallthru
    _
  // Predicated region
  $region6: #{resnet_forward.53} parent=0 // pred_check
    _
  $region7: #{resnet_forward.53} parent=0 // pred_check_branch
    %12 = sbr.rel (0) target = $region9
  $region8: #{resnet_forward.53} parent=0 // pred_region
    _
  $region9: #{resnet_forward.53} parent=0 // pred_fallthru
    _
  // Predicated region
  $region10: #{resnet_forward.53} parent=0 // pred_check
    _
  $region11: #{resnet_forward.53} parent=0 // pred_check_branch
    %14 = sbr.rel (0) target = $region13
  $region12: #{resnet_forward.53} parent=0 // pred_region
    _
  $region13: #{resnet_forward.53} parent=0 // pred_fallthru
    _
  // Predicated region
  $region14: #{resnet_forward.53} parent=0 // pred_check
    _
  $region15: #{resnet_forward.53} parent=0 // pred_check_branch
    %16 = sbr.rel (0) target = $region17
  $region16: #{resnet_forward.53} parent=0 // pred_region
    _
  $region17: #{resnet_forward.53} parent=0 // pred_fallthru
    _
  %v17 = vld [vmem:[%s0] sm:$0xff]
  %v18 = vld [vmem:[%s0 + $0x8] sm:$0xff]
  %v19 = vld [vmem:[%s0 + $0x10] sm:$0xff]
  %v20 = vld [vmem:[%s0 + $0x18] sm:$0xff]
  %v21 = vld [vmem:[%s0 + $0x20] sm:$0xff]
  %v22 = vld [vmem:[%s0 + $0x28] sm:$0xff]
  %v23 = vld [vmem:[%s0 + $0x30] sm:$0xff]
  %v24 = vld [vmem:[%s0 + $0x38] sm:$0xff]
  %v25 = vld [vmem:[%s0 + $0x40] sm:$0xff]
  %v26 = vld [vmem:[%s0 + $0x48] sm:$0xff]
  %v27 = vld [vmem:[%s0 + $0x50] sm:$0xff]
  %v28 = vld [vmem:[%s0 + $0x58] sm:$0xff]
  %v29 = vld [vmem:[%s0 + $0x60] sm:$0xff]
  %v30 = vld [vmem:[%s0 + $0x68] sm:$0xff]
  %v31 = vld [vmem:[%s0 + $0x70] sm:$0xff]
  %v32 = vld [vmem:[%s0 + $0x78] sm:$0xff]
  %v33 = vld [vmem:[%s1] sm:$0x1]
  %v35 = vlaneseq
  %v36 = vshrl.u32 %v35, 7
  %v37 = vsub.s32 0, %v36
  %v38 = vrot.slane %v33, %v37
  %v40 = vmul.f32 %v17, %v38
  %v41 = vmul.f32 %v18, %v38
  %v42 = vmul.f32 %v19, %v38
  %v43 = vmul.f32 %v20, %v38
  %v44 = vmul.f32 %v21, %v38
  %v45 = vmul.f32 %v22, %v38
  %v46 = vmul.f32 %v23, %v38
  %v47 = vmul.f32 %v24, %v38
  %v48 = vmul.f32 %v25, %v38
  %v49 = vmul.f32 %v26, %v38
  %v50 = vmul.f32 %v27, %v38
  %v51 = vmul.f32 %v28, %v38
  %v52 = vmul.f32 %v29, %v38
  %v53 = vmul.f32 %v30, %v38
  %v54 = vmul.f32 %v31, %v38
  %v55 = vmul.f32 %v32, %v38
  %v56 = vld [vmem:[%s2] sm:$0x1]
  %v58 = vlaneseq
  %v59 = vshrl.u32 %v58, 7
  %v60 = vsub.s32 0, %v59
  %v61 = vrot.slane %v56, %v60
  %v63 = vadd.f32 %v40, %v61
  %v64 = vadd.f32 %v41, %v61
  %v65 = vadd.f32 %v42, %v61
  %v66 = vadd.f32 %v43, %v61
  %v67 = vadd.f32 %v44, %v61
  %v68 = vadd.f32 %v45, %v61
  %v69 = vadd.f32 %v46, %v61
  %v70 = vadd.f32 %v47, %v61
  %v71 = vadd.f32 %v48, %v61
  %v72 = vadd.f32 %v49, %v61
  %v73 = vadd.f32 %v50, %v61
  %v74 = vadd.f32 %v51, %v61
  %v75 = vadd.f32 %v52, %v61
  %v76 = vadd.f32 %v53, %v61
  %v77 = vadd.f32 %v54, %v61
  %v78 = vadd.f32 %v55, %v61
  %v79 = vld [vmem:[%s3] sm:$0xff]
  %v80 = vld [vmem:[%s3 + $0x8] sm:$0xff]
  %v81 = vld [vmem:[%s3 + $0x10] sm:$0xff]
  %v82 = vld [vmem:[%s3 + $0x18] sm:$0xff]
  %v83 = vld [vmem:[%s3 + $0x20] sm:$0xff]
  %v84 = vld [vmem:[%s3 + $0x28] sm:$0xff]
  %v85 = vld [vmem:[%s3 + $0x30] sm:$0xff]
  %v86 = vld [vmem:[%s3 + $0x38] sm:$0xff]
  %v87 = vld [vmem:[%s3 + $0x40] sm:$0xff]
  %v88 = vld [vmem:[%s3 + $0x48] sm:$0xff]
  %v89 = vld [vmem:[%s3 + $0x50] sm:$0xff]
  %v90 = vld [vmem:[%s3 + $0x58] sm:$0xff]
  %v91 = vld [vmem:[%s3 + $0x60] sm:$0xff]
  %v92 = vld [vmem:[%s3 + $0x68] sm:$0xff]
  %v93 = vld [vmem:[%s3 + $0x70] sm:$0xff]
  %v94 = vld [vmem:[%s3 + $0x78] sm:$0xff]
  %v95 = vadd.f32 %v63, %v79
  %v96 = vadd.f32 %v64, %v80
  %v97 = vadd.f32 %v65, %v81
  %v98 = vadd.f32 %v66, %v82
  %v99 = vadd.f32 %v67, %v83
  %v100 = vadd.f32 %v68, %v84
  %v101 = vadd.f32 %v69, %v85
  %v102 = vadd.f32 %v70, %v86
  %v103 = vadd.f32 %v71, %v87
  %v104 = vadd.f32 %v72, %v88
  %v105 = vadd.f32 %v73, %v89
  %v106 = vadd.f32 %v74, %v90
  %v107 = vadd.f32 %v75, %v91
  %v108 = vadd.f32 %v76, %v92
  %v109 = vadd.f32 %v77, %v93
  %v110 = vadd.f32 %v78, %v94
  %v111 = vmax.f32 %v95, 0.0
  %v112 = vmax.f32 %v96, 0.0
  %v113 = vmax.f32 %v97, 0.0
  %v114 = vmax.f32 %v98, 0.0
  %v115 = vmax.f32 %v99, 0.0
  %v116 = vmax.f32 %v100, 0.0
  %v117 = vmax.f32 %v101, 0.0
  %v118 = vmax.f32 %v102, 0.0
  %v119 = vmax.f32 %v103, 0.0
  %v120 = vmax.f32 %v104, 0.0
  %v121 = vmax.f32 %v105, 0.0
  %v122 = vmax.f32 %v106, 0.0
  %v123 = vmax.f32 %v107, 0.0
  %v124 = vmax.f32 %v108, 0.0
  %v125 = vmax.f32 %v109, 0.0
  %v126 = vmax.f32 %v110, 0.0
  %127 = vst [vmem:[%s4] sm:$0xff] %v111
  %128 = vst [vmem:[%s4 + $0x8] sm:$0xff] %v112
  %129 = vst [vmem:[%s4 + $0x10] sm:$0xff] %v113
  %130 = vst [vmem:[%s4 + $0x18] sm:$0xff] %v114
  %131 = vst [vmem:[%s4 + $0x20] sm:$0xff] %v115
  %132 = vst [vmem:[%s4 + $0x28] sm:$0xff] %v116
  %133 = vst [vmem:[%s4 + $0x30] sm:$0xff] %v117
  %134 = vst [vmem:[%s4 + $0x38] sm:$0xff] %v118
  %135 = vst [vmem:[%s4 + $0x40] sm:$0xff] %v119
  %136 = vst [vmem:[%s4 + $0x48] sm:$0xff] %v120
  %137 = vst [vmem:[%s4 + $0x50] sm:$0xff] %v121
  %138 = vst [vmem:[%s4 + $0x58] sm:$0xff] %v122
  %139 = vst [vmem:[%s4 + $0x60] sm:$0xff] %v123
  %140 = vst [vmem:[%s4 + $0x68] sm:$0xff] %v124
  %141 = vst [vmem:[%s4 + $0x70] sm:$0xff] %v125
  %142 = vst [vmem:[%s4 + $0x78] sm:$0xff] %v126
  // Predicated region
  $region18: #{resnet_forward.53} parent=0 // pred_check
    _
  $region19: #{resnet_forward.53} parent=0 // pred_check_branch
    %144 = sbr.rel (0) target = $region21
  $region20: #{resnet_forward.53} parent=0 // pred_region
    _
  $region21: #{resnet_forward.53} parent=0 // pred_fallthru
    _
  // Predicated region
  $region22: #{resnet_forward.53} parent=0 // pred_check
    _
  $region23: #{resnet_forward.53} parent=0 // pred_check_branch
    %146 = sbr.rel (0) target = $region25
  $region24: #{resnet_forward.53} parent=0 // pred_region
    _
  $region25: #{resnet_forward.53} parent=0 // pred_fallthru
    _

// kernel: resnet_forward.61
$region0: #{resnet_forward.61}
  #allocation0 [shape = 'u32[]', space=smem, size = 0x4, offset = 0x4, fixed_abs, tag = 'smem constant byte address 0x4 - core index']
  #allocation1 [shape = 'u32[144,128]{1,0:T(1,128)}', space=vmem, size = 0x12000, scoped, tag = 'internal scratch']
  %s0 = inlined_call_operand.vmem [shape: f32[32,128], index: 0, kind: input, shape index: {}]
  %s1 = inlined_call_operand.vmem [shape: f32[1,128], index: 1, kind: input, shape index: {}]
  %s2 = inlined_call_operand.vmem [shape: f32[1,128], index: 2, kind: input, shape index: {}]
  %s3 = inlined_call_operand.vmem [shape: f32[32,128], index: 3, kind: output, shape index: {}]
  %s4 = sld [smem:[#allocation0]]
  $region22: #{resnet_forward.61} parent=0
    _
  %s6 = ssub.s32 1, %s4
  %s7 = scalar_select 0, %s6, %s4
  // Predicated region
  $region2: #{resnet_forward.61} parent=0 // pred_check
    _
  $region3: #{resnet_forward.61} parent=0 // pred_check_branch
    %9 = sbr.rel (0) target = $region5
  $region4: #{resnet_forward.61} parent=0 // pred_region
    _
  $region5: #{resnet_forward.61} parent=0 // pred_fallthru
    _
  // Predicated region
  $region6: #{resnet_forward.61} parent=0 // pred_check
    _
  $region7: #{resnet_forward.61} parent=0 // pred_check_branch
    %11 = sbr.rel (0) target = $region9
  $region8: #{resnet_forward.61} parent=0 // pred_region
    _
  $region9: #{resnet_forward.61} parent=0 // pred_fallthru
    _
  // Predicated region
  $region10: #{resnet_forward.61} parent=0 // pred_check
    _
  $region11: #{resnet_forward.61} parent=0 // pred_check_branch
    %13 = sbr.rel (0) target = $region13
  $region12: #{resnet_forward.61} parent=0 // pred_region
    _
  $region13: #{resnet_forward.61} parent=0 // pred_fallthru
    _
  %v14 = vld [vmem:[%s0] sm:$0xff]
  %v15 = vld [vmem:[%s0 + $0x8] sm:$0xff]
  %v16 = vld [vmem:[%s0 + $0x10] sm:$0xff]
  %v17 = vld [vmem:[%s0 + $0x18] sm:$0xff]
  %v18 = vld [vmem:[%s1] sm:$0x1]
  %v20 = vlaneseq
  %v21 = vshrl.u32 %v20, 7
  %v22 = vsub.s32 0, %v21
  %v23 = vrot.slane %v18, %v22
  %v25 = vmul.f32 %v14, %v23
  %v26 = vmul.f32 %v15, %v23
  %v27 = vmul.f32 %v16, %v23
  %v28 = vmul.f32 %v17, %v23
  %v29 = vld [vmem:[%s2] sm:$0x1]
  %v31 = vlaneseq
  %v32 = vshrl.u32 %v31, 7
  %v33 = vsub.s32 0, %v32
  %v34 = vrot.slane %v29, %v33
  %v36 = vadd.f32 %v25, %v34
  %v37 = vadd.f32 %v26, %v34
  %v38 = vadd.f32 %v27, %v34
  %v39 = vadd.f32 %v28, %v34
  %40 = vst [vmem:[%s3] sm:$0xff] %v36
  %41 = vst [vmem:[%s3 + $0x8] sm:$0xff] %v37
  %42 = vst [vmem:[%s3 + $0x10] sm:$0xff] %v38
  %43 = vst [vmem:[%s3 + $0x18] sm:$0xff] %v39
  // Predicated region
  $region14: #{resnet_forward.61} parent=0 // pred_check
    _
  $region15: #{resnet_forward.61} parent=0 // pred_check_branch
    %45 = sbr.rel (0) target = $region17
  $region16: #{resnet_forward.61} parent=0 // pred_region
    _
  $region17: #{resnet_forward.61} parent=0 // pred_fallthru
    _
  // Predicated region
  $region18: #{resnet_forward.61} parent=0 // pred_check
    _
  $region19: #{resnet_forward.61} parent=0 // pred_check_branch
    %47 = sbr.rel (0) target = $region21
  $region20: #{resnet_forward.61} parent=0 // pred_region
    _
  $region21: #{resnet_forward.61} parent=0 // pred_fallthru
    _

// kernel: resnet_forward.48
$region0: #{resnet_forward.48}
  #allocation0 [shape = 'u32[]', space=smem, size = 0x4, offset = 0x4, fixed_abs, tag = 'smem constant byte address 0x4 - core index']
  #allocation1 [shape = 'u32[144,128]{1,0:T(1,128)}', space=vmem, size = 0x12000, scoped, tag = 'internal scratch']
  %s0 = inlined_call_operand.vmem [shape: f32[128,1152], index: 0, kind: input, shape index: {}]
  %s1 = inlined_call_operand.vmem [shape: f32[1152,128], index: 1, kind: input, shape index: {}]
  %s2 = inlined_call_operand.vmem [shape: f32[128,128], index: 2, kind: output, shape index: {0}]
  %s3 = inlined_call_operand.vmem [shape: f32[8,128], index: 3, kind: output, shape index: {1}]
  %4 = xla_tuple %s2, %s3
  %s5 = sld [smem:[#allocation0]]
  $region26: #{resnet_forward.48} parent=0
    _
  %s7 = ssub.s32 1, %s5
  %s8 = scalar_select 0, %s7, %s5
  // Predicated region
  $region2: #{resnet_forward.48} parent=0 // pred_check
    _
  $region3: #{resnet_forward.48} parent=0 // pred_check_branch
    %10 = sbr.rel (0) target = $region5
  $region4: #{resnet_forward.48} parent=0 // pred_region
    _
  $region5: #{resnet_forward.48} parent=0 // pred_fallthru
    _
  // Predicated region
  $region6: #{resnet_forward.48} parent=0 // pred_check
    _
  $region7: #{resnet_forward.48} parent=0 // pred_check_branch
    %12 = sbr.rel (0) target = $region9
  $region8: #{resnet_forward.48} parent=0 // pred_region
    _
  $region9: #{resnet_forward.48} parent=0 // pred_fallthru
    _
  %v13 = vld [vmem:[%s0] sm:$0xff]
  %v14 = vld [vmem:[%s0 + $0x8] sm:$0xff]
  %v15 = vld [vmem:[%s0 + $0x10] sm:$0xff]
  %v16 = vld [vmem:[%s0 + $0x18] sm:$0xff]
  %v17 = vld [vmem:[%s0 + $0x20] sm:$0xff]
  %v18 = vld [vmem:[%s0 + $0x28] sm:$0xff]
  %v19 = vld [vmem:[%s0 + $0x30] sm:$0xff]
  %v20 = vld [vmem:[%s0 + $0x38] sm:$0xff]
  %v21 = vld [vmem:[%s0 + $0x40] sm:$0xff]
  %v22 = vld [vmem:[%s0 + $0x48] sm:$0xff]
  %v23 = vld [vmem:[%s0 + $0x50] sm:$0xff]
  %v24 = vld [vmem:[%s0 + $0x58] sm:$0xff]
  %v25 = vld [vmem:[%s0 + $0x60] sm:$0xff]
  %v26 = vld [vmem:[%s0 + $0x68] sm:$0xff]
  %v27 = vld [vmem:[%s0 + $0x70] sm:$0xff]
  %v28 = vld [vmem:[%s0 + $0x78] sm:$0xff]
  %v29 = vld [vmem:[%s0 + $0x80] sm:$0xff]
  %v30 = vld [vmem:[%s0 + $0x88] sm:$0xff]
  %v31 = vld [vmem:[%s0 + $0x90] sm:$0xff]
  %v32 = vld [vmem:[%s0 + $0x98] sm:$0xff]
  %v33 = vld [vmem:[%s0 + $0xa0] sm:$0xff]
  %v34 = vld [vmem:[%s0 + $0xa8] sm:$0xff]
  %v35 = vld [vmem:[%s0 + $0xb0] sm:$0xff]
  %v36 = vld [vmem:[%s0 + $0xb8] sm:$0xff]
  %v37 = vld [vmem:[%s0 + $0xc0] sm:$0xff]
  %v38 = vld [vmem:[%s0 + $0xc8] sm:$0xff]
  %v39 = vld [vmem:[%s0 + $0xd0] sm:$0xff]
  %v40 = vld [vmem:[%s0 + $0xd8] sm:$0xff]
  %v41 = vld [vmem:[%s0 + $0xe0] sm:$0xff]
  %v42 = vld [vmem:[%s0 + $0xe8] sm:$0xff]
  %v43 = vld [vmem:[%s0 + $0xf0] sm:$0xff]
  %v44 = vld [vmem:[%s0 + $0xf8] sm:$0xff]
  %v45 = vld [vmem:[%s0 + $0x100] sm:$0xff]
  %v46 = vld [vmem:[%s0 + $0x108] sm:$0xff]
  %v47 = vld [vmem:[%s0 + $0x110] sm:$0xff]
  %v48 = vld [vmem:[%s0 + $0x118] sm:$0xff]
  %v49 = vld [vmem:[%s0 + $0x120] sm:$0xff]
  %v50 = vld [vmem:[%s0 + $0x128] sm:$0xff]
  %v51 = vld [vmem:[%s0 + $0x130] sm:$0xff]
  %v52 = vld [vmem:[%s0 + $0x138] sm:$0xff]
  %v53 = vld [vmem:[%s0 + $0x140] sm:$0xff]
  %v54 = vld [vmem:[%s0 + $0x148] sm:$0xff]
  %v55 = vld [vmem:[%s0 + $0x150] sm:$0xff]
  %v56 = vld [vmem:[%s0 + $0x158] sm:$0xff]
  %v57 = vld [vmem:[%s0 + $0x160] sm:$0xff]
  %v58 = vld [vmem:[%s0 + $0x168] sm:$0xff]
  %v59 = vld [vmem:[%s0 + $0x170] sm:$0xff]
  %v60 = vld [vmem:[%s0 + $0x178] sm:$0xff]
  %v61 = vld [vmem:[%s0 + $0x180] sm:$0xff]
  %v62 = vld [vmem:[%s0 + $0x188] sm:$0xff]
  %v63 = vld [vmem:[%s0 + $0x190] sm:$0xff]
  %v64 = vld [vmem:[%s0 + $0x198] sm:$0xff]
  %v65 = vld [vmem:[%s0 + $0x1a0] sm:$0xff]
  %v66 = vld [vmem:[%s0 + $0x1a8] sm:$0xff]
  %v67 = vld [vmem:[%s0 + $0x1b0] sm:$0xff]
  %v68 = vld [vmem:[%s0 + $0x1b8] sm:$0xff]
  %v69 = vld [vmem:[%s0 + $0x1c0] sm:$0xff]
  %v70 = vld [vmem:[%s0 + $0x1c8] sm:$0xff]
  %v71 = vld [vmem:[%s0 + $0x1d0] sm:$0xff]
  %v72 = vld [vmem:[%s0 + $0x1d8] sm:$0xff]
  %v73 = vld [vmem:[%s0 + $0x1e0] sm:$0xff]
  %v74 = vld [vmem:[%s0 + $0x1e8] sm:$0xff]
  %v75 = vld [vmem:[%s0 + $0x1f0] sm:$0xff]
  %v76 = vld [vmem:[%s0 + $0x1f8] sm:$0xff]
  %v77 = vld [vmem:[%s0 + $0x200] sm:$0xff]
  %v78 = vld [vmem:[%s0 + $0x208] sm:$0xff]
  %v79 = vld [vmem:[%s0 + $0x210] sm:$0xff]
  %v80 = vld [vmem:[%s0 + $0x218] sm:$0xff]
  %v81 = vld [vmem:[%s0 + $0x220] sm:$0xff]
  %v82 = vld [vmem:[%s0 + $0x228] sm:$0xff]
  %v83 = vld [vmem:[%s0 + $0x230] sm:$0xff]
  %v84 = vld [vmem:[%s0 + $0x238] sm:$0xff]
  %v85 = vld [vmem:[%s0 + $0x240] sm:$0xff]
  %v86 = vld [vmem:[%s0 + $0x248] sm:$0xff]
  %v87 = vld [vmem:[%s0 + $0x250] sm:$0xff]
  %v88 = vld [vmem:[%s0 + $0x258] sm:$0xff]
  %v89 = vld [vmem:[%s0 + $0x260] sm:$0xff]
  %v90 = vld [vmem:[%s0 + $0x268] sm:$0xff]
  %v91 = vld [vmem:[%s0 + $0x270] sm:$0xff]
  %v92 = vld [vmem:[%s0 + $0x278] sm:$0xff]
  %v93 = vld [vmem:[%s0 + $0x280] sm:$0xff]
  %v94 = vld [vmem:[%s0 + $0x288] sm:$0xff]
  %v95 = vld [vmem:[%s0 + $0x290] sm:$0xff]
  %v96 = vld [vmem:[%s0 + $0x298] sm:$0xff]
  %v97 = vld [vmem:[%s0 + $0x2a0] sm:$0xff]
  %v98 = vld [vmem:[%s0 + $0x2a8] sm:$0xff]
  %v99 = vld [vmem:[%s0 + $0x2b0] sm:$0xff]
  %v100 = vld [vmem:[%s0 + $0x2b8] sm:$0xff]
  %v101 = vld [vmem:[%s0 + $0x2c0] sm:$0xff]
  %v102 = vld [vmem:[%s0 + $0x2c8] sm:$0xff]
  %v103 = vld [vmem:[%s0 + $0x2d0] sm:$0xff]
  %v104 = vld [vmem:[%s0 + $0x2d8] sm:$0xff]
  %v105 = vld [vmem:[%s0 + $0x2e0] sm:$0xff]
  %v106 = vld [vmem:[%s0 + $0x2e8] sm:$0xff]
  %v107 = vld [vmem:[%s0 + $0x2f0] sm:$0xff]
  %v108 = vld [vmem:[%s0 + $0x2f8] sm:$0xff]
  %v109 = vld [vmem:[%s0 + $0x300] sm:$0xff]
  %v110 = vld [vmem:[%s0 + $0x308] sm:$0xff]
  %v111 = vld [vmem:[%s0 + $0x310] sm:$0xff]
  %v112 = vld [vmem:[%s0 + $0x318] sm:$0xff]
  %v113 = vld [vmem:[%s0 + $0x320] sm:$0xff]
  %v114 = vld [vmem:[%s0 + $0x328] sm:$0xff]
  %v115 = vld [vmem:[%s0 + $0x330] sm:$0xff]
  %v116 = vld [vmem:[%s0 + $0x338] sm:$0xff]
  %v117 = vld [vmem:[%s0 + $0x340] sm:$0xff]
  %v118 = vld [vmem:[%s0 + $0x348] sm:$0xff]
  %v119 = vld [vmem:[%s0 + $0x350] sm:$0xff]
  %v120 = vld [vmem:[%s0 + $0x358] sm:$0xff]
  %v121 = vld [vmem:[%s0 + $0x360] sm:$0xff]
  %v122 = vld [vmem:[%s0 + $0x368] sm:$0xff]
  %v123 = vld [vmem:[%s0 + $0x370] sm:$0xff]
  %v124 = vld [vmem:[%s0 + $0x378] sm:$0xff]
  %v125 = vld [vmem:[%s0 + $0x380] sm:$0xff]
  %v126 = vld [vmem:[%s0 + $0x388] sm:$0xff]
  %v127 = vld [vmem:[%s0 + $0x390] sm:$0xff]
  %v128 = vld [vmem:[%s0 + $0x398] sm:$0xff]
  %v129 = vld [vmem:[%s0 + $0x3a0] sm:$0xff]
  %v130 = vld [vmem:[%s0 + $0x3a8] sm:$0xff]
  %v131 = vld [vmem:[%s0 + $0x3b0] sm:$0xff]
  %v132 = vld [vmem:[%s0 + $0x3b8] sm:$0xff]
  %v133 = vld [vmem:[%s0 + $0x3c0] sm:$0xff]
  %v134 = vld [vmem:[%s0 + $0x3c8] sm:$0xff]
  %v135 = vld [vmem:[%s0 + $0x3d0] sm:$0xff]
  %v136 = vld [vmem:[%s0 + $0x3d8] sm:$0xff]
  %v137 = vld [vmem:[%s0 + $0x3e0] sm:$0xff]
  %v138 = vld [vmem:[%s0 + $0x3e8] sm:$0xff]
  %v139 = vld [vmem:[%s0 + $0x3f0] sm:$0xff]
  %v140 = vld [vmem:[%s0 + $0x3f8] sm:$0xff]
  %v141 = vld [vmem:[%s0 + $0x400] sm:$0xff]
  %v142 = vld [vmem:[%s0 + $0x408] sm:$0xff]
  %v143 = vld [vmem:[%s0 + $0x410] sm:$0xff]
  %v144 = vld [vmem:[%s0 + $0x418] sm:$0xff]
  %v145 = vld [vmem:[%s0 + $0x420] sm:$0xff]
  %v146 = vld [vmem:[%s0 + $0x428] sm:$0xff]
  %v147 = vld [vmem:[%s0 + $0x430] sm:$0xff]
  %v148 = vld [vmem:[%s0 + $0x438] sm:$0xff]
  %v149 = vld [vmem:[%s0 + $0x440] sm:$0xff]
  %v150 = vld [vmem:[%s0 + $0x448] sm:$0xff]
  %v151 = vld [vmem:[%s0 + $0x450] sm:$0xff]
  %v152 = vld [vmem:[%s0 + $0x458] sm:$0xff]
  %v153 = vld [vmem:[%s0 + $0x460] sm:$0xff]
  %v154 = vld [vmem:[%s0 + $0x468] sm:$0xff]
  %v155 = vld [vmem:[%s0 + $0x470] sm:$0xff]
  %v156 = vld [vmem:[%s0 + $0x478] sm:$0xff]
  %v157 = vld [vmem:[%s1] sm:$0xff]
  %v158 = vld [vmem:[%s1 + $0x8] sm:$0xff]
  %v159 = vld [vmem:[%s1 + $0x10] sm:$0xff]
  %v160 = vld [vmem:[%s1 + $0x18] sm:$0xff]
  %v161 = vld [vmem:[%s1 + $0x20] sm:$0xff]
  %v162 = vld [vmem:[%s1 + $0x28] sm:$0xff]
  %v163 = vld [vmem:[%s1 + $0x30] sm:$0xff]
  %v164 = vld [vmem:[%s1 + $0x38] sm:$0xff]
  %v165 = vld [vmem:[%s1 + $0x40] sm:$0xff]
  %v166 = vld [vmem:[%s1 + $0x48] sm:$0xff]
  %v167 = vld [vmem:[%s1 + $0x50] sm:$0xff]
  %v168 = vld [vmem:[%s1 + $0x58] sm:$0xff]
  %v169 = vld [vmem:[%s1 + $0x60] sm:$0xff]
  %v170 = vld [vmem:[%s1 + $0x68] sm:$0xff]
  %v171 = vld [vmem:[%s1 + $0x70] sm:$0xff]
  %v172 = vld [vmem:[%s1 + $0x78] sm:$0xff]
  %v173 = vld [vmem:[%s1 + $0x80] sm:$0xff]
  %v174 = vld [vmem:[%s1 + $0x88] sm:$0xff]
  %v175 = vld [vmem:[%s1 + $0x90] sm:$0xff]
  %v176 = vld [vmem:[%s1 + $0x98] sm:$0xff]
  %v177 = vld [vmem:[%s1 + $0xa0] sm:$0xff]
  %v178 = vld [vmem:[%s1 + $0xa8] sm:$0xff]
  %v179 = vld [vmem:[%s1 + $0xb0] sm:$0xff]
  %v180 = vld [vmem:[%s1 + $0xb8] sm:$0xff]
  %v181 = vld [vmem:[%s1 + $0xc0] sm:$0xff]
  %v182 = vld [vmem:[%s1 + $0xc8] sm:$0xff]
  %v183 = vld [vmem:[%s1 + $0xd0] sm:$0xff]
  %v184 = vld [vmem:[%s1 + $0xd8] sm:$0xff]
  %v185 = vld [vmem:[%s1 + $0xe0] sm:$0xff]
  %v186 = vld [vmem:[%s1 + $0xe8] sm:$0xff]
  %v187 = vld [vmem:[%s1 + $0xf0] sm:$0xff]
  %v188 = vld [vmem:[%s1 + $0xf8] sm:$0xff]
  %v189 = vld [vmem:[%s1 + $0x100] sm:$0xff]
  %v190 = vld [vmem:[%s1 + $0x108] sm:$0xff]
  %v191 = vld [vmem:[%s1 + $0x110] sm:$0xff]
  %v192 = vld [vmem:[%s1 + $0x118] sm:$0xff]
  %v193 = vld [vmem:[%s1 + $0x120] sm:$0xff]
  %v194 = vld [vmem:[%s1 + $0x128] sm:$0xff]
  %v195 = vld [vmem:[%s1 + $0x130] sm:$0xff]
  %v196 = vld [vmem:[%s1 + $0x138] sm:$0xff]
  %v197 = vld [vmem:[%s1 + $0x140] sm:$0xff]
  %v198 = vld [vmem:[%s1 + $0x148] sm:$0xff]
  %v199 = vld [vmem:[%s1 + $0x150] sm:$0xff]
  %v200 = vld [vmem:[%s1 + $0x158] sm:$0xff]
  %v201 = vld [vmem:[%s1 + $0x160] sm:$0xff]
  %v202 = vld [vmem:[%s1 + $0x168] sm:$0xff]
  %v203 = vld [vmem:[%s1 + $0x170] sm:$0xff]
  %v204 = vld [vmem:[%s1 + $0x178] sm:$0xff]
  %v205 = vld [vmem:[%s1 + $0x180] sm:$0xff]
  %v206 = vld [vmem:[%s1 + $0x188] sm:$0xff]
  %v207 = vld [vmem:[%s1 + $0x190] sm:$0xff]
  %v208 = vld [vmem:[%s1 + $0x198] sm:$0xff]
  %v209 = vld [vmem:[%s1 + $0x1a0] sm:$0xff]
  %v210 = vld [vmem:[%s1 + $0x1a8] sm:$0xff]
  %v211 = vld [vmem:[%s1 + $0x1b0] sm:$0xff]
  %v212 = vld [vmem:[%s1 + $0x1b8] sm:$0xff]
  %v213 = vld [vmem:[%s1 + $0x1c0] sm:$0xff]
  %v214 = vld [vmem:[%s1 + $0x1c8] sm:$0xff]
  %v215 = vld [vmem:[%s1 + $0x1d0] sm:$0xff]
  %v216 = vld [vmem:[%s1 + $0x1d8] sm:$0xff]
  %v217 = vld [vmem:[%s1 + $0x1e0] sm:$0xff]
  %v218 = vld [vmem:[%s1 + $0x1e8] sm:$0xff]
  %v219 = vld [vmem:[%s1 + $0x1f0] sm:$0xff]
  %v220 = vld [vmem:[%s1 + $0x1f8] sm:$0xff]
  %v221 = vld [vmem:[%s1 + $0x200] sm:$0xff]
  %v222 = vld [vmem:[%s1 + $0x208] sm:$0xff]
  %v223 = vld [vmem:[%s1 + $0x210] sm:$0xff]
  %v224 = vld [vmem:[%s1 + $0x218] sm:$0xff]
  %v225 = vld [vmem:[%s1 + $0x220] sm:$0xff]
  %v226 = vld [vmem:[%s1 + $0x228] sm:$0xff]
  %v227 = vld [vmem:[%s1 + $0x230] sm:$0xff]
  %v228 = vld [vmem:[%s1 + $0x238] sm:$0xff]
  %v229 = vld [vmem:[%s1 + $0x240] sm:$0xff]
  %v230 = vld [vmem:[%s1 + $0x248] sm:$0xff]
  %v231 = vld [vmem:[%s1 + $0x250] sm:$0xff]
  %v232 = vld [vmem:[%s1 + $0x258] sm:$0xff]
  %v233 = vld [vmem:[%s1 + $0x260] sm:$0xff]
  %v234 = vld [vmem:[%s1 + $0x268] sm:$0xff]
  %v235 = vld [vmem:[%s1 + $0x270] sm:$0xff]
  %v236 = vld [vmem:[%s1 + $0x278] sm:$0xff]
  %v237 = vld [vmem:[%s1 + $0x280] sm:$0xff]
  %v238 = vld [vmem:[%s1 + $0x288] sm:$0xff]
  %v239 = vld [vmem:[%s1 + $0x290] sm:$0xff]
  %v240 = vld [vmem:[%s1 + $0x298] sm:$0xff]
  %v241 = vld [vmem:[%s1 + $0x2a0] sm:$0xff]
  %v242 = vld [vmem:[%s1 + $0x2a8] sm:$0xff]
  %v243 = vld [vmem:[%s1 + $0x2b0] sm:$0xff]
  %v244 = vld [vmem:[%s1 + $0x2b8] sm:$0xff]
  %v245 = vld [vmem:[%s1 + $0x2c0] sm:$0xff]
  %v246 = vld [vmem:[%s1 + $0x2c8] sm:$0xff]
  %v247 = vld [vmem:[%s1 + $0x2d0] sm:$0xff]
  %v248 = vld [vmem:[%s1 + $0x2d8] sm:$0xff]
  %v249 = vld [vmem:[%s1 + $0x2e0] sm:$0xff]
  %v250 = vld [vmem:[%s1 + $0x2e8] sm:$0xff]
  %v251 = vld [vmem:[%s1 + $0x2f0] sm:$0xff]
  %v252 = vld [vmem:[%s1 + $0x2f8] sm:$0xff]
  %v253 = vld [vmem:[%s1 + $0x300] sm:$0xff]
  %v254 = vld [vmem:[%s1 + $0x308] sm:$0xff]
  %v255 = vld [vmem:[%s1 + $0x310] sm:$0xff]
  %v256 = vld [vmem:[%s1 + $0x318] sm:$0xff]
  %v257 = vld [vmem:[%s1 + $0x320] sm:$0xff]
  %v258 = vld [vmem:[%s1 + $0x328] sm:$0xff]
  %v259 = vld [vmem:[%s1 + $0x330] sm:$0xff]
  %v260 = vld [vmem:[%s1 + $0x338] sm:$0xff]
  %v261 = vld [vmem:[%s1 + $0x340] sm:$0xff]
  %v262 = vld [vmem:[%s1 + $0x348] sm:$0xff]
  %v263 = vld [vmem:[%s1 + $0x350] sm:$0xff]
  %v264 = vld [vmem:[%s1 + $0x358] sm:$0xff]
  %v265 = vld [vmem:[%s1 + $0x360] sm:$0xff]
  %v266 = vld [vmem:[%s1 + $0x368] sm:$0xff]
  %v267 = vld [vmem:[%s1 + $0x370] sm:$0xff]
  %v268 = vld [vmem:[%s1 + $0x378] sm:$0xff]
  %v269 = vld [vmem:[%s1 + $0x380] sm:$0xff]
  %v270 = vld [vmem:[%s1 + $0x388] sm:$0xff]
  %v271 = vld [vmem:[%s1 + $0x390] sm:$0xff]
  %v272 = vld [vmem:[%s1 + $0x398] sm:$0xff]
  %v273 = vld [vmem:[%s1 + $0x3a0] sm:$0xff]
  %v274 = vld [vmem:[%s1 + $0x3a8] sm:$0xff]
  %v275 = vld [vmem:[%s1 + $0x3b0] sm:$0xff]
  %v276 = vld [vmem:[%s1 + $0x3b8] sm:$0xff]
  %v277 = vld [vmem:[%s1 + $0x3c0] sm:$0xff]
  %v278 = vld [vmem:[%s1 + $0x3c8] sm:$0xff]
  %v279 = vld [vmem:[%s1 + $0x3d0] sm:$0xff]
  %v280 = vld [vmem:[%s1 + $0x3d8] sm:$0xff]
  %v281 = vld [vmem:[%s1 + $0x3e0] sm:$0xff]
  %v282 = vld [vmem:[%s1 + $0x3e8] sm:$0xff]
  %v283 = vld [vmem:[%s1 + $0x3f0] sm:$0xff]
  %v284 = vld [vmem:[%s1 + $0x3f8] sm:$0xff]
  %v285 = vld [vmem:[%s1 + $0x400] sm:$0xff]
  %v286 = vld [vmem:[%s1 + $0x408] sm:$0xff]
  %v287 = vld [vmem:[%s1 + $0x410] sm:$0xff]
  %v288 = vld [vmem:[%s1 + $0x418] sm:$0xff]
  %v289 = vld [vmem:[%s1 + $0x420] sm:$0xff]
  %v290 = vld [vmem:[%s1 + $0x428] sm:$0xff]
  %v291 = vld [vmem:[%s1 + $0x430] sm:$0xff]
  %v292 = vld [vmem:[%s1 + $0x438] sm:$0xff]
  %v293 = vld [vmem:[%s1 + $0x440] sm:$0xff]
  %v294 = vld [vmem:[%s1 + $0x448] sm:$0xff]
  %v295 = vld [vmem:[%s1 + $0x450] sm:$0xff]
  %v296 = vld [vmem:[%s1 + $0x458] sm:$0xff]
  %v297 = vld [vmem:[%s1 + $0x460] sm:$0xff]
  %v298 = vld [vmem:[%s1 + $0x468] sm:$0xff]
  %v299 = vld [vmem:[%s1 + $0x470] sm:$0xff]
  %v300 = vld [vmem:[%s1 + $0x478] sm:$0xff]
  %301 = vmatprep.subr.mxu0 0.0
  %302 = vmatpush1.msra.mxu0 %v157
  %303 = vmatprep.subr.mxu0 0.0
  %304 = vmatpush1.msra.mxu0 %v158
  %305 = vmatprep.subr.mxu0 0.0
  %306 = vmatpush1.msra.mxu0 %v159
  %307 = vmatprep.subr.mxu0 0.0
  %308 = vmatpush1.msra.mxu0 %v160
  %309 = vmatprep.subr.mxu0 0.0
  %310 = vmatpush1.msra.mxu0 %v161
  %311 = vmatprep.subr.mxu0 0.0
  %312 = vmatpush1.msra.mxu0 %v162
  %313 = vmatprep.subr.mxu0 0.0
  %314 = vmatpush1.msra.mxu0 %v163
  %315 = vmatprep.subr.mxu0 0.0
  %316 = vmatpush1.msra.mxu0 %v164
  %317 = vmatprep.subr.mxu0 0.0
  %318 = vmatpush1.msra.mxu0 %v165
  %319 = vmatprep.subr.mxu0 0.0
  %320 = vmatpush1.msra.mxu0 %v166
  %321 = vmatprep.subr.mxu0 0.0
  %322 = vmatpush1.msra.mxu0 %v167
  %323 = vmatprep.subr.mxu0 0.0
  %324 = vmatpush1.msra.mxu0 %v168
  %325 = vmatprep.subr.mxu0 0.0
  %326 = vmatpush1.msra.mxu0 %v169
  %327 = vmatprep.subr.mxu0 0.0
  %328 = vmatpush1.msra.mxu0 %v170
  %329 = vmatprep.subr.mxu0 0.0
  %330 = vmatpush1.msra.mxu0 %v171
  %331 = vmatprep.subr.mxu0 0.0
  %332 = vmatpush1.msra.mxu0 %v172
  %333 = vmatprep.subr.mxu0 0.0
  %334 = vmatpush1.msra.mxu0 %v173
  %335 = vmatprep.subr.mxu0 0.0
  %336 = vmatpush1.msra.mxu0 %v174
  %337 = vmatprep.subr.mxu0 0.0
  %338 = vmatpush1.msra.mxu0 %v175
  %339 = vmatprep.subr.mxu0 0.0
  %340 = vmatpush1.msra.mxu0 %v176
  %341 = vmatprep.subr.mxu0 0.0
  %342 = vmatpush1.msra.mxu0 %v177
  %343 = vmatprep.subr.mxu0 0.0
  %344 = vmatpush1.msra.mxu0 %v178
  %345 = vmatprep.subr.mxu0 0.0
  %346 = vmatpush1.msra.mxu0 %v179
  %347 = vmatprep.subr.mxu0 0.0
  %348 = vmatpush1.msra.mxu0 %v180
  %349 = vmatprep.subr.mxu0 0.0
  %350 = vmatpush1.msra.mxu0 %v181
  %351 = vmatprep.subr.mxu0 0.0
  %352 = vmatpush1.msra.mxu0 %v182
  %353 = vmatprep.subr.mxu0 0.0
  %354 = vmatpush1.msra.mxu0 %v183
  %355 = vmatprep.subr.mxu0 0.0
  %356 = vmatpush1.msra.mxu0 %v184
  %357 = vmatprep.subr.mxu0 0.0
  %358 = vmatpush1.msra.mxu0 %v185
  %359 = vmatprep.subr.mxu0 0.0
  %360 = vmatpush1.msra.mxu0 %v186
  %361 = vmatprep.subr.mxu0 0.0
  %362 = vmatpush1.msra.mxu0 %v187
  %363 = vmatprep.subr.mxu0 0.0
  %364 = vmatpush1.msra.mxu0 %v188
  %365 = vmatprep.mubr.f32.mxu0 %v14
  %366 = vmatmul.mubr.f32.gmra.mrb[0].mxu0 %v13
  %v367 = vpop.f32.mrb[0].mxu0
  %v368 = vadd.f32 0.0, %v367
  %v369 = vpop.f32.mrb[0].mxu0
  %370 = vmatprep.mubr.f32.mxu0 %v23
  %371 = vmatmul.mubr.f32.gmra.mrb[0].mxu0 %v22
  %v372 = vpop.f32.mrb[0].mxu0
  %v373 = vadd.f32 0.0, %v372
  %v374 = vpop.f32.mrb[0].mxu0
  %375 = vmatprep.mubr.f32.mxu0 %v32
  %376 = vmatmul.mubr.f32.gmra.mrb[0].mxu0 %v31
  %v377 = vpop.f32.mrb[0].mxu0
  %v378 = vadd.f32 0.0, %v377
  %v379 = vpop.f32.mrb[0].mxu0
  %380 = vmatprep.mubr.f32.mxu0 %v41
  %381 = vmatmul.mubr.f32.gmra.mrb[0].mxu0 %v40
  %v382 = vpop.f32.mrb[0].mxu0
  %v383 = vadd.f32 0.0, %v382
  %v384 = vpop.f32.mrb[0].mxu0
  %385 = vmatprep.mubr.f32.mxu0 %v50
  %386 = vmatmul.mubr.f32.gmra.mrb[0].mxu0 %v49
  %v387 = vpop.f32.mrb[0].mxu0
  %v388 = vadd.f32 0.0, %v387
  %v389 = vpop.f32.mrb[0].mxu0
  %390 = vmatprep.mubr.f32.mxu0 %v59
  %391 = vmatmul.mubr.f32.gmra.mrb[0].mxu0 %v58
  %v392 = vpop.f32.mrb[0].mxu0
  %v393 = vadd.f32 0.0, %v392
  %v394 = vpop.f32.mrb[0].mxu0
  %395 = vmatprep.mubr.f32.mxu0 %v68
  %396 = vmatmul.mubr.f32.gmra.mrb[0].mxu0 %v67
  %v397 = vpop.f32.mrb[0].mxu0
  %v398 = vadd.f32 0.0, %v397
  %v399 = vpop.f32.mrb[0].mxu0
  %400 = vmatprep.mubr.f32.mxu0 %v77
  %401 = vmatmul.mubr.f32.gmra.mrb[0].mxu0 %v76
  %v402 = vpop.f32.mrb[0].mxu0
  %v403 = vadd.f32 0.0, %v402
  %v404 = vpop.f32.mrb[0].mxu0
  %405 = vmatprep.mubr.f32.mxu0 %v86
  %406 = vmatmul.mubr.f32.gmra.mrb[0].mxu0 %v85
  %v407 = vpop.f32.mrb[0].mxu0
  %v408 = vadd.f32 0.0, %v407
  %v409 = vpop.f32.mrb[0].mxu0
  %410 = vmatprep.mubr.f32.mxu0 %v95
  %411 = vmatmul.mubr.f32.gmra.mrb[0].mxu0 %v94
  %v412 = vpop.f32.mrb[0].mxu0
  %v413 = vadd.f32 0.0, %v412
  %v414 = vpop.f32.mrb[0].mxu0
  %415 = vmatprep.mubr.f32.mxu0 %v104
  %416 = vmatmul.mubr.f32.gmra.mrb[0].mxu0 %v103
  %v417 = vpop.f32.mrb[0].mxu0
  %v418 = vadd.f32 0.0, %v417
  %v419 = vpop.f32.mrb[0].mxu0
  %420 = vmatprep.mubr.f32.mxu0 %v113
  %421 = vmatmul.mubr.f32.gmra.mrb[0].mxu0 %v112
  %v422 = vpop.f32.mrb[0].mxu0
  %v423 = vadd.f32 0.0, %v422
  %v424 = vpop.f32.mrb[0].mxu0
  %425 = vmatprep.mubr.f32.mxu0 %v122
  %426 = vmatmul.mubr.f32.gmra.mrb[0].mxu0 %v121
  %v427 = vpop.f32.mrb[0].mxu0
  %v428 = vadd.f32 0.0, %v427
  %v429 = vpop.f32.mrb[0].mxu0
  %430 = vmatprep.mubr.f32.mxu0 %v131
  %431 = vmatmul.mubr.f32.gmra.mrb[0].mxu0 %v130
  %v432 = vpop.f32.mrb[0].mxu0
  %v433 = vadd.f32 0.0, %v432
  %v434 = vpop.f32.mrb[0].mxu0
  %435 = vmatprep.mubr.f32.mxu0 %v140
  %436 = vmatmul.mubr.f32.gmra.mrb[0].mxu0 %v139
  %v437 = vpop.f32.mrb[0].mxu0
  %v438 = vadd.f32 0.0, %v437
  %v439 = vpop.f32.mrb[0].mxu0
  %440 = vmatprep.mubr.f32.mxu0 %v149
  %441 = vmatmul.mubr.f32.gmra.mrb[0].mxu0 %v148
  %v442 = vpop.f32.mrb[0].mxu0
  %v443 = vadd.f32 0.0, %v442
  %v444 = vpop.f32.mrb[0].mxu0
  %445 = vdwg.mxu0
  %446 = vmatprep.subr.mxu0 0.0
  %447 = vmatpush1.msra.mxu0 %v189
  %448 = vmatprep.subr.mxu0 0.0
  %449 = vmatpush1.msra.mxu0 %v190
  %450 = vmatprep.subr.mxu0 0.0
  %451 = vmatpush1.msra.mxu0 %v191
  %452 = vmatprep.subr.mxu0 0.0
  %453 = vmatpush1.msra.mxu0 %v192
  %454 = vmatprep.subr.mxu0 0.0
  %455 = vmatpush1.msra.mxu0 %v193
  %456 = vmatprep.subr.mxu0 0.0
  %457 = vmatpush1.msra.mxu0 %v194
  %458 = vmatprep.subr.mxu0 0.0
  %459 = vmatpush1.msra.mxu0 %v195
  %460 = vmatprep.subr.mxu0 0.0
  %461 = vmatpush1.msra.mxu0 %v196
  %462 = vmatprep.subr.mxu0 0.0
  %463 = vmatpush1.msra.mxu0 %v197
  %464 = vmatprep.subr.mxu0 0.0
  %465 = vmatpush1.msra.mxu0 %v198
  %466 = vmatprep.subr.mxu0 0.0
  %467 = vmatpush1.msra.mxu0 %v199
  %468 = vmatprep.subr.mxu0 0.0
  %469 = vmatpush1.msra.mxu0 %v200
  %470 = vmatprep.subr.mxu0 0.0
  %471 = vmatpush1.msra.mxu0 %v201
  %472 = vmatprep.subr.mxu0 0.0
  %473 = vmatpush1.msra.mxu0 %v202
  %474 = vmatprep.subr.mxu0 0.0
  %475 = vmatpush1.msra.mxu0 %v203
  %476 = vmatprep.subr.mxu0 0.0
  %477 = vmatpush1.msra.mxu0 %v204
  %478 = vmatprep.subr.mxu0 0.0
  %479 = vmatpush1.msra.mxu0 %v205
  %480 = vmatprep.subr.mxu0 0.0
  %481 = vmatpush1.msra.mxu0 %v206
  %482 = vmatprep.subr.mxu0 0.0
  %483 = vmatpush1.msra.mxu0 %v207
  %484 = vmatprep.subr.mxu0 0.0
  %485 = vmatpush1.msra.mxu0 %v208
  %486 = vmatprep.subr.mxu0 0.0
  %487 = vmatpush1.msra.mxu0 %v209
  %488 = vmatprep.subr.mxu0 0.0
  %489 = vmatpush1.msra.mxu0 %v210
  %490 = vmatprep.subr.mxu0 0.0
  %491 = vmatpush1.msra.mxu0 %v211
  %492 = vmatprep.subr.mxu0 0.0
  %493 = vmatpush1.msra.mxu0 %v212
  %494 = vmatprep.subr.mxu0 0.0
  %495 = vmatpush1.msra.mxu0 %v213
  %496 = vmatprep.subr.mxu0 0.0
  %497 = vmatpush1.msra.mxu0 %v214
  %498 = vmatprep.subr.mxu0 0.0
  %499 = vmatpush1.msra.mxu0 %v215
  %500 = vmatprep.subr.mxu0 0.0
  %501 = vmatpush1.msra.mxu0 %v216
  %502 = vmatprep.subr.mxu0 0.0
  %503 = vmatpush1.msra.mxu0 %v217
  %504 = vmatprep.subr.mxu0 0.0
  %505 = vmatpush1.msra.mxu0 %v218
  %506 = vmatprep.subr.mxu0 0.0
  %507 = vmatpush1.msra.mxu0 %v219
  %508 = vmatprep.subr.mxu0 0.0
  %509 = vmatpush1.msra.mxu0 %v220
  %510 = vmatprep.mubr.f32.mxu0 %v16
  %511 = vmatmul.mubr.f32.gmra.mrb[0].mxu0 %v15
  %v512 = vpop.f32.mrb[0].mxu0
  %v513 = vadd.f32 %v368, %v512
  %v514 = vpop.f32.mrb[0].mxu0
  %515 = vmatprep.mubr.f32.mxu0 %v25
  %516 = vmatmul.mubr.f32.gmra.mrb[0].mxu0 %v24
  %v517 = vpop.f32.mrb[0].mxu0
  %v518 = vadd.f32 %v373, %v517
  %v519 = vpop.f32.mrb[0].mxu0
  %520 = vmatprep.mubr.f32.mxu0 %v34
  %521 = vmatmul.mubr.f32.gmra.mrb[0].mxu0 %v33
  %v522 = vpop.f32.mrb[0].mxu0
  %v523 = vadd.f32 %v378, %v522
  %v524 = vpop.f32.mrb[0].mxu0
  %525 = vmatprep.mubr.f32.mxu0 %v43
  %526 = vmatmul.mubr.f32.gmra.mrb[0].mxu0 %v42
  %v527 = vpop.f32.mrb[0].mxu0
  %v528 = vadd.f32 %v383, %v527
  %v529 = vpop.f32.mrb[0].mxu0
  %530 = vmatprep.mubr.f32.mxu0 %v52
  %531 = vmatmul.mubr.f32.gmra.mrb[0].mxu0 %v51
  %v532 = vpop.f32.mrb[0].mxu0
  %v533 = vadd.f32 %v388, %v532
  %v534 = vpop.f32.mrb[0].mxu0
  %535 = vmatprep.mubr.f32.mxu0 %v61
  %536 = vmatmul.mubr.f32.gmra.mrb[0].mxu0 %v60
  %v537 = vpop.f32.mrb[0].mxu0
  %v538 = vadd.f32 %v393, %v537
  %v539 = vpop.f32.mrb[0].mxu0
  %540 = vmatprep.mubr.f32.mxu0 %v70
  %541 = vmatmul.mubr.f32.gmra.mrb[0].mxu0 %v69
  %v542 = vpop.f32.mrb[0].mxu0
  %v543 = vadd.f32 %v398, %v542
  %v544 = vpop.f32.mrb[0].mxu0
  %545 = vmatprep.mubr.f32.mxu0 %v79
  %546 = vmatmul.mubr.f32.gmra.mrb[0].mxu0 %v78
  %v547 = vpop.f32.mrb[0].mxu0
  %v548 = vadd.f32 %v403, %v547
  %v549 = vpop.f32.mrb[0].mxu0
  %550 = vmatprep.mubr.f32.mxu0 %v88
  %551 = vmatmul.mubr.f32.gmra.mrb[0].mxu0 %v87
  %v552 = vpop.f32.mrb[0].mxu0
  %v553 = vadd.f32 %v408, %v552
  %v554 = vpop.f32.mrb[0].mxu0
  %555 = vmatprep.mubr.f32.mxu0 %v97
  %556 = vmatmul.mubr.f32.gmra.mrb[0].mxu0 %v96
  %v557 = vpop.f32.mrb[0].mxu0
  %v558 = vadd.f32 %v413, %v557
  %v559 = vpop.f32.mrb[0].mxu0
  %560 = vmatprep.mubr.f32.mxu0 %v106
  %561 = vmatmul.mubr.f32.gmra.mrb[0].mxu0 %v105
  %v562 = vpop.f32.mrb[0].mxu0
  %v563 = vadd.f32 %v418, %v562
  %v564 = vpop.f32.mrb[0].mxu0
  %565 = vmatprep.mubr.f32.mxu0 %v115
  %566 = vmatmul.mubr.f32.gmra.mrb[0].mxu0 %v114
  %v567 = vpop.f32.mrb[0].mxu0
  %v568 = vadd.f32 %v423, %v567
  %v569 = vpop.f32.mrb[0].mxu0
  %570 = vmatprep.mubr.f32.mxu0 %v124
  %571 = vmatmul.mubr.f32.gmra.mrb[0].mxu0 %v123
  %v572 = vpop.f32.mrb[0].mxu0
  %v573 = vadd.f32 %v428, %v572
  %v574 = vpop.f32.mrb[0].mxu0
  %575 = vmatprep.mubr.f32.mxu0 %v133
  %576 = vmatmul.mubr.f32.gmra.mrb[0].mxu0 %v132
  %v577 = vpop.f32.mrb[0].mxu0
  %v578 = vadd.f32 %v433, %v577
  %v579 = vpop.f32.mrb[0].mxu0
  %580 = vmatprep.mubr.f32.mxu0 %v142
  %581 = vmatmul.mubr.f32.gmra.mrb[0].mxu0 %v141
  %v582 = vpop.f32.mrb[0].mxu0
  %v583 = vadd.f32 %v438, %v582
  %v584 = vpop.f32.mrb[0].mxu0
  %585 = vmatprep.mubr.f32.mxu0 %v151
  %586 = vmatmul.mubr.f32.gmra.mrb[0].mxu0 %v150
  %v587 = vpop.f32.mrb[0].mxu0
  %v588 = vadd.f32 %v443, %v587
  %v589 = vpop.f32.mrb[0].mxu0
  %590 = vdwg.mxu0
  %591 = vmatprep.subr.mxu0 0.0
  %592 = vmatpush1.msra.mxu0 %v221
  %593 = vmatprep.subr.mxu0 0.0
  %594 = vmatpush1.msra.mxu0 %v222
  %595 = vmatprep.subr.mxu0 0.0
  %596 = vmatpush1.msra.mxu0 %v223
  %597 = vmatprep.subr.mxu0 0.0
  %598 = vmatpush1.msra.mxu0 %v224
  %599 = vmatprep.subr.mxu0 0.0
  %600 = vmatpush1.msra.mxu0 %v225
  %601 = vmatprep.subr.mxu0 0.0
  %602 = vmatpush1.msra.mxu0 %v226
  %603 = vmatprep.subr.mxu0 0.0
  %604 = vmatpush1.msra.mxu0 %v227
  %605 = vmatprep.subr.mxu0 0.0
  %606 = vmatpush1.msra.mxu0 %v228
  %607 = vmatprep.subr.mxu0 0.0
  %608 = vmatpush1.msra.mxu0 %v229
  %609 = vmatprep.subr.mxu0 0.0
  %610 = vmatpush1.msra.mxu0 %v230
  %611 = vmatprep.subr.mxu0 0.0
  %612 = vmatpush1.msra.mxu0 %v231
  %613 = vmatprep.subr.mxu0 0.0
  %614 = vmatpush1.msra.mxu0 %v232
  %615 = vmatprep.subr.mxu0 0.0
  %616 = vmatpush1.msra.mxu0 %v233
  %617 = vmatprep.subr.mxu0 0.0
  %618 = vmatpush1.msra.mxu0 %v234
  %619 = vmatprep.subr.mxu0 0.0
  %620 = vmatpush1.msra.mxu0 %v235
  %621 = vmatprep.subr.mxu0 0.0
  %622 = vmatpush1.msra.mxu0 %v236
  %623 = vmatprep.subr.mxu0 0.0
  %624 = vmatpush1.msra.mxu0 %v237
  %625 = vmatprep.subr.mxu0 0.0
  %626 = vmatpush1.msra.mxu0 %v238
  %627 = vmatprep.subr.mxu0 0.0
  %628 = vmatpush1.msra.mxu0 %v239
  %629 = vmatprep.subr.mxu0 0.0
  %630 = vmatpush1.msra.mxu0 %v240
  %631 = vmatprep.subr.mxu0 0.0
  %632 = vmatpush1.msra.mxu0 %v241
  %633 = vmatprep.subr.mxu0 0.0
  %634 = vmatpush1.msra.mxu0 %v242
  %635 = vmatprep.subr.mxu0 0.0
  %636 = vmatpush1.msra.mxu0 %v243
  %637 = vmatprep.subr.mxu0 0.0
  %638 = vmatpush1.msra.mxu0 %v244
  %639 = vmatprep.subr.mxu0 0.0
  %640 = vmatpush1.msra.mxu0 %v245
  %641 = vmatprep.subr.mxu0 0.0
  %642 = vmatpush1.msra.mxu0 %v246
  %643 = vmatprep.subr.mxu0 0.0
  %644 = vmatpush1.msra.mxu0 %v247
  %645 = vmatprep.subr.mxu0 0.0
  %646 = vmatpush1.msra.mxu0 %v248
  %647 = vmatprep.subr.mxu0 0.0
  %648 = vmatpush1.msra.mxu0 %v249
  %649 = vmatprep.subr.mxu0 0.0
  %650 = vmatpush1.msra.mxu0 %v250
  %651 = vmatprep.subr.mxu0 0.0
  %652 = vmatpush1.msra.mxu0 %v251
  %653 = vmatprep.subr.mxu0 0.0
  %654 = vmatpush1.msra.mxu0 %v252
  %655 = vmatprep.mubr.f32.mxu0 %v18
  %656 = vmatmul.mubr.f32.gmra.mrb[0].mxu0 %v17
  %v657 = vpop.f32.mrb[0].mxu0
  %v658 = vadd.f32 %v513, %v657
  %v659 = vpop.f32.mrb[0].mxu0
  %660 = vmatprep.mubr.f32.mxu0 %v27
  %661 = vmatmul.mubr.f32.gmra.mrb[0].mxu0 %v26
  %v662 = vpop.f32.mrb[0].mxu0
  %v663 = vadd.f32 %v518, %v662
  %v664 = vpop.f32.mrb[0].mxu0
  %665 = vmatprep.mubr.f32.mxu0 %v36
  %666 = vmatmul.mubr.f32.gmra.mrb[0].mxu0 %v35
  %v667 = vpop.f32.mrb[0].mxu0
  %v668 = vadd.f32 %v523, %v667
  %v669 = vpop.f32.mrb[0].mxu0
  %670 = vmatprep.mubr.f32.mxu0 %v45
  %671 = vmatmul.mubr.f32.gmra.mrb[0].mxu0 %v44
  %v672 = vpop.f32.mrb[0].mxu0
  %v673 = vadd.f32 %v528, %v672
  %v674 = vpop.f32.mrb[0].mxu0
  %675 = vmatprep.mubr.f32.mxu0 %v54
  %676 = vmatmul.mubr.f32.gmra.mrb[0].mxu0 %v53
  %v677 = vpop.f32.mrb[0].mxu0
  %v678 = vadd.f32 %v533, %v677
  %v679 = vpop.f32.mrb[0].mxu0
  %680 = vmatprep.mubr.f32.mxu0 %v63
  %681 = vmatmul.mubr.f32.gmra.mrb[0].mxu0 %v62
  %v682 = vpop.f32.mrb[0].mxu0
  %v683 = vadd.f32 %v538, %v682
  %v684 = vpop.f32.mrb[0].mxu0
  %685 = vmatprep.mubr.f32.mxu0 %v72
  %686 = vmatmul.mubr.f32.gmra.mrb[0].mxu0 %v71
  %v687 = vpop.f32.mrb[0].mxu0
  %v688 = vadd.f32 %v543, %v687
  %v689 = vpop.f32.mrb[0].mxu0
  %690 = vmatprep.mubr.f32.mxu0 %v81
  %691 = vmatmul.mubr.f32.gmra.mrb[0].mxu0 %v80
  %v692 = vpop.f32.mrb[0].mxu0
  %v693 = vadd.f32 %v548, %v692
  %v694 = vpop.f32.mrb[0].mxu0
  %695 = vmatprep.mubr.f32.mxu0 %v90
  %696 = vmatmul.mubr.f32.gmra.mrb[0].mxu0 %v89
  %v697 = vpop.f32.mrb[0].mxu0
  %v698 = vadd.f32 %v553, %v697
  %v699 = vpop.f32.mrb[0].mxu0
  %700 = vmatprep.mubr.f32.mxu0 %v99
  %701 = vmatmul.mubr.f32.gmra.mrb[0].mxu0 %v98
  %v702 = vpop.f32.mrb[0].mxu0
  %v703 = vadd.f32 %v558, %v702
  %v704 = vpop.f32.mrb[0].mxu0
  %705 = vmatprep.mubr.f32.mxu0 %v108
  %706 = vmatmul.mubr.f32.gmra.mrb[0].mxu0 %v107
  %v707 = vpop.f32.mrb[0].mxu0
  %v708 = vadd.f32 %v563, %v707
  %v709 = vpop.f32.mrb[0].mxu0
  %710 = vmatprep.mubr.f32.mxu0 %v117
  %711 = vmatmul.mubr.f32.gmra.mrb[0].mxu0 %v116
  %v712 = vpop.f32.mrb[0].mxu0
  %v713 = vadd.f32 %v568, %v712
  %v714 = vpop.f32.mrb[0].mxu0
  %715 = vmatprep.mubr.f32.mxu0 %v126
  %716 = vmatmul.mubr.f32.gmra.mrb[0].mxu0 %v125
  %v717 = vpop.f32.mrb[0].mxu0
  %v718 = vadd.f32 %v573, %v717
  %v719 = vpop.f32.mrb[0].mxu0
  %720 = vmatprep.mubr.f32.mxu0 %v135
  %721 = vmatmul.mubr.f32.gmra.mrb[0].mxu0 %v134
  %v722 = vpop.f32.mrb[0].mxu0
  %v723 = vadd.f32 %v578, %v722
  %v724 = vpop.f32.mrb[0].mxu0
  %725 = vmatprep.mubr.f32.mxu0 %v144
  %726 = vmatmul.mubr.f32.gmra.mrb[0].mxu0 %v143
  %v727 = vpop.f32.mrb[0].mxu0
  %v728 = vadd.f32 %v583, %v727
  %v729 = vpop.f32.mrb[0].mxu0
  %730 = vmatprep.mubr.f32.mxu0 %v153
  %731 = vmatmul.mubr.f32.gmra.mrb[0].mxu0 %v152
  %v732 = vpop.f32.mrb[0].mxu0
  %v733 = vadd.f32 %v588, %v732
  %v734 = vpop.f32.mrb[0].mxu0
  %735 = vdwg.mxu0
  %736 = vmatprep.subr.mxu0 0.0
  %737 = vmatpush1.msra.mxu0 %v253
  %738 = vmatprep.subr.mxu0 0.0
  %739 = vmatpush1.msra.mxu0 %v254
  %740 = vmatprep.subr.mxu0 0.0
  %741 = vmatpush1.msra.mxu0 %v255
  %742 = vmatprep.subr.mxu0 0.0
  %743 = vmatpush1.msra.mxu0 %v256
  %744 = vmatprep.subr.mxu0 0.0
  %745 = vmatpush1.msra.mxu0 %v257
  %746 = vmatprep.subr.mxu0 0.0
  %747 = vmatpush1.msra.mxu0 %v258
  %748 = vmatprep.subr.mxu0 0.0
  %749 = vmatpush1.msra.mxu0 %v259
  %750 = vmatprep.subr.mxu0 0.0
  %751 = vmatpush1.msra.mxu0 %v260
  %752 = vmatprep.subr.mxu0 0.0
  %753 = vmatpush1.msra.mxu0 %v261
  %754 = vmatprep.subr.mxu0 0.0
  %755 = vmatpush1.msra.mxu0 %v262
  %756 = vmatprep.subr.mxu0 0.0
  %757 = vmatpush1.msra.mxu0 %v263
  %758 = vmatprep.subr.mxu0 0.0
  %759 = vmatpush1.msra.mxu0 %v264
  %760 = vmatprep.subr.mxu0 0.0
  %761 = vmatpush1.msra.mxu0 %v265
  %762 = vmatprep.subr.mxu0 0.0
  %763 = vmatpush1.msra.mxu0 %v266
  %764 = vmatprep.subr.mxu0 0.0
  %765 = vmatpush1.msra.mxu0 %v267
  %766 = vmatprep.subr.mxu0 0.0
  %767 = vmatpush1.msra.mxu0 %v268
  %768 = vmatprep.subr.mxu0 0.0
  %769 = vmatpush1.msra.mxu0 %v269
  %770 = vmatprep.subr.mxu0 0.0
  %771 = vmatpush1.msra.mxu0 %v270
  %772 = vmatprep.subr.mxu0 0.0
  %773 = vmatpush1.msra.mxu0 %v271
  %774 = vmatprep.subr.mxu0 0.0
  %775 = vmatpush1.msra.mxu0 %v272
  %776 = vmatprep.subr.mxu0 0.0
  %777 = vmatpush1.msra.mxu0 %v273
  %778 = vmatprep.subr.mxu0 0.0
  %779 = vmatpush1.msra.mxu0 %v274
  %780 = vmatprep.subr.mxu0 0.0
  %781 = vmatpush1.msra.mxu0 %v275
  %782 = vmatprep.subr.mxu0 0.0
  %783 = vmatpush1.msra.mxu0 %v276
  %784 = vmatprep.subr.mxu0 0.0
  %785 = vmatpush1.msra.mxu0 %v277
  %786 = vmatprep.subr.mxu0 0.0
  %787 = vmatpush1.msra.mxu0 %v278
  %788 = vmatprep.subr.mxu0 0.0
  %789 = vmatpush1.msra.mxu0 %v279
  %790 = vmatprep.subr.mxu0 0.0
  %791 = vmatpush1.msra.mxu0 %v280
  %792 = vmatprep.subr.mxu0 0.0
  %793 = vmatpush1.msra.mxu0 %v281
  %794 = vmatprep.subr.mxu0 0.0
  %795 = vmatpush1.msra.mxu0 %v282
  %796 = vmatprep.subr.mxu0 0.0
  %797 = vmatpush1.msra.mxu0 %v283
  %798 = vmatprep.subr.mxu0 0.0
  %799 = vmatpush1.msra.mxu0 %v284
  %800 = vmatprep.mubr.f32.mxu0 %v20
  %801 = vmatmul.mubr.f32.gmra.mrb[0].mxu0 %v19
  %v802 = vpop.f32.mrb[0].mxu0
  %v803 = vadd.f32 %v658, %v802
  %v804 = vpop.f32.mrb[0].mxu0
  %805 = vmatprep.mubr.f32.mxu0 %v29
  %806 = vmatmul.mubr.f32.gmra.mrb[0].mxu0 %v28
  %v807 = vpop.f32.mrb[0].mxu0
  %v808 = vadd.f32 %v663, %v807
  %v809 = vpop.f32.mrb[0].mxu0
  %810 = vmatprep.mubr.f32.mxu0 %v38
  %811 = vmatmul.mubr.f32.gmra.mrb[0].mxu0 %v37
  %v812 = vpop.f32.mrb[0].mxu0
  %v813 = vadd.f32 %v668, %v812
  %v814 = vpop.f32.mrb[0].mxu0
  %815 = vmatprep.mubr.f32.mxu0 %v47
  %816 = vmatmul.mubr.f32.gmra.mrb[0].mxu0 %v46
  %v817 = vpop.f32.mrb[0].mxu0
  %v818 = vadd.f32 %v673, %v817
  %v819 = vpop.f32.mrb[0].mxu0
  %820 = vmatprep.mubr.f32.mxu0 %v56
  %821 = vmatmul.mubr.f32.gmra.mrb[0].mxu0 %v55
  %v822 = vpop.f32.mrb[0].mxu0
  %v823 = vadd.f32 %v678, %v822
  %v824 = vpop.f32.mrb[0].mxu0
  %825 = vmatprep.mubr.f32.mxu0 %v65
  %826 = vmatmul.mubr.f32.gmra.mrb[0].mxu0 %v64
  %v827 = vpop.f32.mrb[0].mxu0
  %v828 = vadd.f32 %v683, %v827
  %v829 = vpop.f32.mrb[0].mxu0
  %830 = vmatprep.mubr.f32.mxu0 %v74
  %831 = vmatmul.mubr.f32.gmra.mrb[0].mxu0 %v73
  %v832 = vpop.f32.mrb[0].mxu0
  %v833 = vadd.f32 %v688, %v832
  %v834 = vpop.f32.mrb[0].mxu0
  %835 = vmatprep.mubr.f32.mxu0 %v83
  %836 = vmatmul.mubr.f32.gmra.mrb[0].mxu0 %v82
  %v837 = vpop.f32.mrb[0].mxu0
  %v838 = vadd.f32 %v693, %v837
  %v839 = vpop.f32.mrb[0].mxu0
  %840 = vmatprep.mubr.f32.mxu0 %v92
  %841 = vmatmul.mubr.f32.gmra.mrb[0].mxu0 %v91
  %v842 = vpop.f32.mrb[0].mxu0
  %v843 = vadd.f32 %v698, %v842
  %v844 = vpop.f32.mrb[0].mxu0
  %845 = vmatprep.mubr.f32.mxu0 %v101
  %846 = vmatmul.mubr.f32.gmra.mrb[0].mxu0 %v100
  %v847 = vpop.f32.mrb[0].mxu0
  %v848 = vadd.f32 %v703, %v847
  %v849 = vpop.f32.mrb[0].mxu0
  %850 = vmatprep.mubr.f32.mxu0 %v110
  %851 = vmatmul.mubr.f32.gmra.mrb[0].mxu0 %v109
  %v852 = vpop.f32.mrb[0].mxu0
  %v853 = vadd.f32 %v708, %v852
  %v854 = vpop.f32.mrb[0].mxu0
  %855 = vmatprep.mubr.f32.mxu0 %v119
  %856 = vmatmul.mubr.f32.gmra.mrb[0].mxu0 %v118
  %v857 = vpop.f32.mrb[0].mxu0
  %v858 = vadd.f32 %v713, %v857
  %v859 = vpop.f32.mrb[0].mxu0
  %860 = vmatprep.mubr.f32.mxu0 %v128
  %861 = vmatmul.mubr.f32.gmra.mrb[0].mxu0 %v127
  %v862 = vpop.f32.mrb[0].mxu0
  %v863 = vadd.f32 %v718, %v862
  %v864 = vpop.f32.mrb[0].mxu0
  %865 = vmatprep.mubr.f32.mxu0 %v137
  %866 = vmatmul.mubr.f32.gmra.mrb[0].mxu0 %v136
  %v867 = vpop.f32.mrb[0].mxu0
  %v868 = vadd.f32 %v723, %v867
  %v869 = vpop.f32.mrb[0].mxu0
  %870 = vmatprep.mubr.f32.mxu0 %v146
  %871 = vmatmul.mubr.f32.gmra.mrb[0].mxu0 %v145
  %v872 = vpop.f32.mrb[0].mxu0
  %v873 = vadd.f32 %v728, %v872
  %v874 = vpop.f32.mrb[0].mxu0
  %875 = vmatprep.mubr.f32.mxu0 %v155
  %876 = vmatmul.mubr.f32.gmra.mrb[0].mxu0 %v154
  %v877 = vpop.f32.mrb[0].mxu0
  %v878 = vadd.f32 %v733, %v877
  %v879 = vpop.f32.mrb[0].mxu0
  %880 = vdwg.mxu0
  %881 = vmatprep.subr.mxu0 0.0
  %882 = vmatpush1.msra.mxu0 %v285
  %883 = vmatprep.subr.mxu0 0.0
  %884 = vmatpush1.msra.mxu0 %v286
  %885 = vmatprep.subr.mxu0 0.0
  %886 = vmatpush1.msra.mxu0 %v287
  %887 = vmatprep.subr.mxu0 0.0
  %888 = vmatpush1.msra.mxu0 %v288
  %889 = vmatprep.subr.mxu0 0.0
  %890 = vmatpush1.msra.mxu0 %v289
  %891 = vmatprep.subr.mxu0 0.0
  %892 = vmatpush1.msra.mxu0 %v290
  %893 = vmatprep.subr.mxu0 0.0
  %894 = vmatpush1.msra.mxu0 %v291
  %895 = vmatprep.subr.mxu0 0.0
  %896 = vmatpush1.msra.mxu0 %v292
  %897 = vmatprep.subr.mxu0 0.0
  %898 = vmatpush1.msra.mxu0 %v293
  %899 = vmatprep.subr.mxu0 0.0
  %900 = vmatpush1.msra.mxu0 %v294
  %901 = vmatprep.subr.mxu0 0.0
  %902 = vmatpush1.msra.mxu0 %v295
  %903 = vmatprep.subr.mxu0 0.0
  %904 = vmatpush1.msra.mxu0 %v296
  %905 = vmatprep.subr.mxu0 0.0
  %906 = vmatpush1.msra.mxu0 %v297
  %907 = vmatprep.subr.mxu0 0.0
  %908 = vmatpush1.msra.mxu0 %v298
  %909 = vmatprep.subr.mxu0 0.0
  %910 = vmatpush1.msra.mxu0 %v299
  %911 = vmatprep.subr.mxu0 0.0
  %912 = vmatpush1.msra.mxu0 %v300
  %913 = vmatprep.subr.mxu0 0.0
  %914 = vmatpush1.msra.mxu0 0.0
  %915 = vmatprep.subr.mxu0 0.0
  %916 = vmatpush1.msra.mxu0 0.0
  %917 = vmatprep.subr.mxu0 0.0
  %918 = vmatpush1.msra.mxu0 0.0
  %919 = vmatprep.subr.mxu0 0.0
  %920 = vmatpush1.msra.mxu0 0.0
  %921 = vmatprep.subr.mxu0 0.0
  %922 = vmatpush1.msra.mxu0 0.0
  %923 = vmatprep.subr.mxu0 0.0
  %924 = vmatpush1.msra.mxu0 0.0
  %925 = vmatprep.subr.mxu0 0.0
  %926 = vmatpush1.msra.mxu0 0.0
  %927 = vmatprep.subr.mxu0 0.0
  %928 = vmatpush1.msra.mxu0 0.0
  %929 = vmatprep.subr.mxu0 0.0
  %930 = vmatpush1.msra.mxu0 0.0
  %931 = vmatprep.subr.mxu0 0.0
  %932 = vmatpush1.msra.mxu0 0.0
  %933 = vmatprep.subr.mxu0 0.0
  %934 = vmatpush1.msra.mxu0 0.0
  %935 = vmatprep.subr.mxu0 0.0
  %936 = vmatpush1.msra.mxu0 0.0
  %937 = vmatprep.subr.mxu0 0.0
  %938 = vmatpush1.msra.mxu0 0.0
  %939 = vmatprep.subr.mxu0 0.0
  %940 = vmatpush1.msra.mxu0 0.0
  %941 = vmatprep.subr.mxu0 0.0
  %942 = vmatpush1.msra.mxu0 0.0
  %943 = vmatprep.subr.mxu0 0.0
  %944 = vmatpush1.msra.mxu0 0.0
  %945 = vmatprep.mubr.f32.mxu0 0.0
  %946 = vmatmul.mubr.f32.gmra.mrb[0].mxu0 %v21
  %v947 = vpop.f32.mrb[0].mxu0
  %v948 = vadd.f32 %v803, %v947
  %v949 = vpop.f32.mrb[0].mxu0
  %950 = vmatprep.mubr.f32.mxu0 0.0
  %951 = vmatmul.mubr.f32.gmra.mrb[0].mxu0 %v30
  %v952 = vpop.f32.mrb[0].mxu0
  %v953 = vadd.f32 %v808, %v952
  %v954 = vpop.f32.mrb[0].mxu0
  %955 = vmatprep.mubr.f32.mxu0 0.0
  %956 = vmatmul.mubr.f32.gmra.mrb[0].mxu0 %v39
  %v957 = vpop.f32.mrb[0].mxu0
  %v958 = vadd.f32 %v813, %v957
  %v959 = vpop.f32.mrb[0].mxu0
  %960 = vmatprep.mubr.f32.mxu0 0.0
  %961 = vmatmul.mubr.f32.gmra.mrb[0].mxu0 %v48
  %v962 = vpop.f32.mrb[0].mxu0
  %v963 = vadd.f32 %v818, %v962
  %v964 = vpop.f32.mrb[0].mxu0
  %965 = vmatprep.mubr.f32.mxu0 0.0
  %966 = vmatmul.mubr.f32.gmra.mrb[0].mxu0 %v57
  %v967 = vpop.f32.mrb[0].mxu0
  %v968 = vadd.f32 %v823, %v967
  %v969 = vpop.f32.mrb[0].mxu0
  %970 = vmatprep.mubr.f32.mxu0 0.0
  %971 = vmatmul.mubr.f32.gmra.mrb[0].mxu0 %v66
  %v972 = vpop.f32.mrb[0].mxu0
  %v973 = vadd.f32 %v828, %v972
  %v974 = vpop.f32.mrb[0].mxu0
  %975 = vmatprep.mubr.f32.mxu0 0.0
  %976 = vmatmul.mubr.f32.gmra.mrb[0].mxu0 %v75
  %v977 = vpop.f32.mrb[0].mxu0
  %v978 = vadd.f32 %v833, %v977
  %v979 = vpop.f32.mrb[0].mxu0
  %980 = vmatprep.mubr.f32.mxu0 0.0
  %981 = vmatmul.mubr.f32.gmra.mrb[0].mxu0 %v84
  %v982 = vpop.f32.mrb[0].mxu0
  %v983 = vadd.f32 %v838, %v982
  %v984 = vpop.f32.mrb[0].mxu0
  %985 = vmatprep.mubr.f32.mxu0 0.0
  %986 = vmatmul.mubr.f32.gmra.mrb[0].mxu0 %v93
  %v987 = vpop.f32.mrb[0].mxu0
  %v988 = vadd.f32 %v843, %v987
  %v989 = vpop.f32.mrb[0].mxu0
  %990 = vmatprep.mubr.f32.mxu0 0.0
  %991 = vmatmul.mubr.f32.gmra.mrb[0].mxu0 %v102
  %v992 = vpop.f32.mrb[0].mxu0
  %v993 = vadd.f32 %v848, %v992
  %v994 = vpop.f32.mrb[0].mxu0
  %995 = vmatprep.mubr.f32.mxu0 0.0
  %996 = vmatmul.mubr.f32.gmra.mrb[0].mxu0 %v111
  %v997 = vpop.f32.mrb[0].mxu0
  %v998 = vadd.f32 %v853, %v997
  %v999 = vpop.f32.mrb[0].mxu0
  %1000 = vmatprep.mubr.f32.mxu0 0.0
  %1001 = vmatmul.mubr.f32.gmra.mrb[0].mxu0 %v120
  %v1002 = vpop.f32.mrb[0].mxu0
  %v1003 = vadd.f32 %v858, %v1002
  %v1004 = vpop.f32.mrb[0].mxu0
  %1005 = vmatprep.mubr.f32.mxu0 0.0
  %1006 = vmatmul.mubr.f32.gmra.mrb[0].mxu0 %v129
  %v1007 = vpop.f32.mrb[0].mxu0
  %v1008 = vadd.f32 %v863, %v1007
  %v1009 = vpop.f32.mrb[0].mxu0
  %1010 = vmatprep.mubr.f32.mxu0 0.0
  %1011 = vmatmul.mubr.f32.gmra.mrb[0].mxu0 %v138
  %v1012 = vpop.f32.mrb[0].mxu0
  %v1013 = vadd.f32 %v868, %v1012
  %v1014 = vpop.f32.mrb[0].mxu0
  %1015 = vmatprep.mubr.f32.mxu0 0.0
  %1016 = vmatmul.mubr.f32.gmra.mrb[0].mxu0 %v147
  %v1017 = vpop.f32.mrb[0].mxu0
  %v1018 = vadd.f32 %v873, %v1017
  %v1019 = vpop.f32.mrb[0].mxu0
  %1020 = vmatprep.mubr.f32.mxu0 0.0
  %1021 = vmatmul.mubr.f32.gmra.mrb[0].mxu0 %v156
  %v1022 = vpop.f32.mrb[0].mxu0
  %v1023 = vadd.f32 %v878, %v1022
  %v1024 = vpop.f32.mrb[0].mxu0
  %1025 = vdwg.mxu0
  %1026 = vst [vmem:[%s2] sm:$0xff] %v948
  %1027 = vst [vmem:[%s2 + $0x8] sm:$0xff] %v953
  %1028 = vst [vmem:[%s2 + $0x10] sm:$0xff] %v958
  %1029 = vst [vmem:[%s2 + $0x18] sm:$0xff] %v963
  %1030 = vst [vmem:[%s2 + $0x20] sm:$0xff] %v968
  %1031 = vst [vmem:[%s2 + $0x28] sm:$0xff] %v973
  %1032 = vst [vmem:[%s2 + $0x30] sm:$0xff] %v978
  %1033 = vst [vmem:[%s2 + $0x38] sm:$0xff] %v983
  %1034 = vst [vmem:[%s2 + $0x40] sm:$0xff] %v988
  %1035 = vst [vmem:[%s2 + $0x48] sm:$0xff] %v993
  %1036 = vst [vmem:[%s2 + $0x50] sm:$0xff] %v998
  %1037 = vst [vmem:[%s2 + $0x58] sm:$0xff] %v1003
  %1038 = vst [vmem:[%s2 + $0x60] sm:$0xff] %v1008
  %1039 = vst [vmem:[%s2 + $0x68] sm:$0xff] %v1013
  %1040 = vst [vmem:[%s2 + $0x70] sm:$0xff] %v1018
  %1041 = vst [vmem:[%s2 + $0x78] sm:$0xff] %v1023
  %v1042 = vadd.f32 %v948, %v953
  %v1043 = vadd.f32 %v1042, %v958
  %v1044 = vadd.f32 %v1043, %v963
  %v1045 = vadd.f32 %v1044, %v968
  %v1046 = vadd.f32 %v1045, %v973
  %v1047 = vadd.f32 %v1046, %v978
  %v1048 = vadd.f32 %v1047, %v983
  %v1049 = vadd.f32 %v1048, %v988
  %v1050 = vadd.f32 %v1049, %v993
  %v1051 = vadd.f32 %v1050, %v998
  %v1052 = vadd.f32 %v1051, %v1003
  %v1053 = vadd.f32 %v1052, %v1008
  %v1054 = vadd.f32 %v1053, %v1013
  %v1055 = vadd.f32 %v1054, %v1018
  %v1056 = vadd.f32 %v1055, %v1023
  %v1057 = vrot.slane %v1056, 4
  %v1058 = vadd.f32 %v1056, %v1057
  %v1059 = vrot.slane %v1058, 2
  %v1060 = vadd.f32 %v1058, %v1059
  %v1061 = vrot.slane %v1060, 1
  %v1062 = vadd.f32 %v1060, %v1061
  %v1063 = vmul.f32 %v948, %v948
  %v1064 = vmul.f32 %v953, %v953
  %v1065 = vmul.f32 %v958, %v958
  %v1066 = vmul.f32 %v963, %v963
  %v1067 = vmul.f32 %v968, %v968
  %v1068 = vmul.f32 %v973, %v973
  %v1069 = vmul.f32 %v978, %v978
  %v1070 = vmul.f32 %v983, %v983
  %v1071 = vmul.f32 %v988, %v988
  %v1072 = vmul.f32 %v993, %v993
  %v1073 = vmul.f32 %v998, %v998
  %v1074 = vmul.f32 %v1003, %v1003
  %v1075 = vmul.f32 %v1008, %v1008
  %v1076 = vmul.f32 %v1013, %v1013
  %v1077 = vmul.f32 %v1018, %v1018
  %v1078 = vmul.f32 %v1023, %v1023
  %v1079 = vadd.f32 %v1063, %v1064
  %v1080 = vadd.f32 %v1079, %v1065
  %v1081 = vadd.f32 %v1080, %v1066
  %v1082 = vadd.f32 %v1081, %v1067
  %v1083 = vadd.f32 %v1082, %v1068
  %v1084 = vadd.f32 %v1083, %v1069
  %v1085 = vadd.f32 %v1084, %v1070
  %v1086 = vadd.f32 %v1085, %v1071
  %v1087 = vadd.f32 %v1086, %v1072
  %v1088 = vadd.f32 %v1087, %v1073
  %v1089 = vadd.f32 %v1088, %v1074
  %v1090 = vadd.f32 %v1089, %v1075
  %v1091 = vadd.f32 %v1090, %v1076
  %v1092 = vadd.f32 %v1091, %v1077
  %v1093 = vadd.f32 %v1092, %v1078
  %v1094 = vrot.slane %v1093, 4
  %v1095 = vadd.f32 %v1093, %v1094
  %v1096 = vrot.slane %v1095, 2
  %v1097 = vadd.f32 %v1095, %v1096
  %v1098 = vrot.slane %v1097, 1
  %v1099 = vadd.f32 %v1097, %v1098
  %v1100 = vlaneseq
  %v1101 = vshrl.u32 %v1100, 7
  %vm1102 = vcmp.eq.s32.totalorder %v1101, 0
  %vm1103 = vcmp.eq.s32.totalorder %v1101, 1
  %v1104 = vsel %vm1103, %v1099, 0.0
  %v1105 = vsel %vm1102, %v1062, %v1104
  %1106 = vst [vmem:[%s3] sm:$0xff] %v1105
  // Predicated region
  $region10: #{resnet_forward.48} parent=0 // pred_check
    _
  $region11: #{resnet_forward.48} parent=0 // pred_check_branch
    %1108 = sbr.rel (0) target = $region13
  $region12: #{resnet_forward.48} parent=0 // pred_region
    _
  $region13: #{resnet_forward.48} parent=0 // pred_fallthru
    _
  // Predicated region
  $region14: #{resnet_forward.48} parent=0 // pred_check
    _
  $region15: #{resnet_forward.48} parent=0 // pred_check_branch
    %1110 = sbr.rel (0) target = $region17
  $region16: #{resnet_forward.48} parent=0 // pred_region
    _
  $region17: #{resnet_forward.48} parent=0 // pred_fallthru
    _
  // Predicated region
  $region18: #{resnet_forward.48} parent=0 // pred_check
    _
  $region19: #{resnet_forward.48} parent=0 // pred_check_branch
    %1112 = sbr.rel (0) target = $region21
  $region20: #{resnet_forward.48} parent=0 // pred_region
    _
  $region21: #{resnet_forward.48} parent=0 // pred_fallthru
    _
  // Predicated region
  $region22: #{resnet_forward.48} parent=0 // pred_check
    _
  $region23: #{resnet_forward.48} parent=0 // pred_check_branch
    %1114 = sbr.rel (0) target = $region25
  $region24: #{resnet_forward.48} parent=0 // pred_region
    _
  $region25: #{resnet_forward.48} parent=0 // pred_fallthru
    _

// kernel: resnet_forward.59
$region0: #{resnet_forward.59}
  #allocation0 [shape = 'u32[]', space=smem, size = 0x4, offset = 0x4, fixed_abs, tag = 'smem constant byte address 0x4 - core index']
  #allocation1 [shape = 'u32[144,128]{1,0:T(1,128)}', space=vmem, size = 0x12000, scoped, tag = 'internal scratch']
  %s0 = inlined_call_operand.vmem [shape: f32[32,128], index: 0, kind: input, shape index: {}]
  %s1 = inlined_call_operand.vmem [shape: f32[1,128], index: 1, kind: input, shape index: {}]
  %s2 = inlined_call_operand.vmem [shape: f32[1,128], index: 2, kind: input, shape index: {}]
  %s3 = inlined_call_operand.vmem [shape: f32[32,128], index: 3, kind: output, shape index: {}]
  %s4 = sld [smem:[#allocation0]]
  $region22: #{resnet_forward.59} parent=0
    _
  %s6 = ssub.s32 1, %s4
  %s7 = scalar_select 0, %s6, %s4
  // Predicated region
  $region2: #{resnet_forward.59} parent=0 // pred_check
    _
  $region3: #{resnet_forward.59} parent=0 // pred_check_branch
    %9 = sbr.rel (0) target = $region5
  $region4: #{resnet_forward.59} parent=0 // pred_region
    _
  $region5: #{resnet_forward.59} parent=0 // pred_fallthru
    _
  // Predicated region
  $region6: #{resnet_forward.59} parent=0 // pred_check
    _
  $region7: #{resnet_forward.59} parent=0 // pred_check_branch
    %11 = sbr.rel (0) target = $region9
  $region8: #{resnet_forward.59} parent=0 // pred_region
    _
  $region9: #{resnet_forward.59} parent=0 // pred_fallthru
    _
  // Predicated region
  $region10: #{resnet_forward.59} parent=0 // pred_check
    _
  $region11: #{resnet_forward.59} parent=0 // pred_check_branch
    %13 = sbr.rel (0) target = $region13
  $region12: #{resnet_forward.59} parent=0 // pred_region
    _
  $region13: #{resnet_forward.59} parent=0 // pred_fallthru
    _
  %v14 = vld [vmem:[%s0] sm:$0xff]
  %v15 = vld [vmem:[%s0 + $0x8] sm:$0xff]
  %v16 = vld [vmem:[%s0 + $0x10] sm:$0xff]
  %v17 = vld [vmem:[%s0 + $0x18] sm:$0xff]
  %v18 = vld [vmem:[%s1] sm:$0x1]
  %v20 = vlaneseq
  %v21 = vshrl.u32 %v20, 7
  %v22 = vsub.s32 0, %v21
  %v23 = vrot.slane %v18, %v22
  %v25 = vmul.f32 %v14, %v23
  %v26 = vmul.f32 %v15, %v23
  %v27 = vmul.f32 %v16, %v23
  %v28 = vmul.f32 %v17, %v23
  %v29 = vld [vmem:[%s2] sm:$0x1]
  %v31 = vlaneseq
  %v32 = vshrl.u32 %v31, 7
  %v33 = vsub.s32 0, %v32
  %v34 = vrot.slane %v29, %v33
  %v36 = vadd.f32 %v25, %v34
  %v37 = vadd.f32 %v26, %v34
  %v38 = vadd.f32 %v27, %v34
  %v39 = vadd.f32 %v28, %v34
  %v40 = vmax.f32 %v36, 0.0
  %v41 = vmax.f32 %v37, 0.0
  %v42 = vmax.f32 %v38, 0.0
  %v43 = vmax.f32 %v39, 0.0
  %44 = vst [vmem:[%s3] sm:$0xff] %v40
  %45 = vst [vmem:[%s3 + $0x8] sm:$0xff] %v41
  %46 = vst [vmem:[%s3 + $0x10] sm:$0xff] %v42
  %47 = vst [vmem:[%s3 + $0x18] sm:$0xff] %v43
  // Predicated region
  $region14: #{resnet_forward.59} parent=0 // pred_check
    _
  $region15: #{resnet_forward.59} parent=0 // pred_check_branch
    %49 = sbr.rel (0) target = $region17
  $region16: #{resnet_forward.59} parent=0 // pred_region
    _
  $region17: #{resnet_forward.59} parent=0 // pred_fallthru
    _
  // Predicated region
  $region18: #{resnet_forward.59} parent=0 // pred_check
    _
  $region19: #{resnet_forward.59} parent=0 // pred_check_branch
    %51 = sbr.rel (0) target = $region21
  $region20: #{resnet_forward.59} parent=0 // pred_region
    _
  $region21: #{resnet_forward.59} parent=0 // pred_fallthru
    _

// kernel: resnet_forward.58
$region0: #{resnet_forward.58}
  #allocation0 [shape = 'u32[]', space=smem, size = 0x4, offset = 0x4, fixed_abs, tag = 'smem constant byte address 0x4 - core index']
  #allocation1 [shape = 'u32[144,128]{1,0:T(1,128)}', space=vmem, size = 0x12000, scoped, tag = 'internal scratch']
  %s0 = inlined_call_operand.vmem [shape: f32[32,1152], index: 0, kind: input, shape index: {}]
  %s1 = inlined_call_operand.vmem [shape: f32[1152,128], index: 1, kind: input, shape index: {}]
  %s2 = inlined_call_operand.vmem [shape: f32[32,128], index: 2, kind: output, shape index: {0}]
  %s3 = inlined_call_operand.vmem [shape: f32[8,128], index: 3, kind: output, shape index: {1}]
  %4 = xla_tuple %s2, %s3
  %s5 = sld [smem:[#allocation0]]
  $region26: #{resnet_forward.58} parent=0
    _
  %s7 = ssub.s32 1, %s5
  %s8 = scalar_select 0, %s7, %s5
  // Predicated region
  $region2: #{resnet_forward.58} parent=0 // pred_check
    _
  $region3: #{resnet_forward.58} parent=0 // pred_check_branch
    %10 = sbr.rel (0) target = $region5
  $region4: #{resnet_forward.58} parent=0 // pred_region
    _
  $region5: #{resnet_forward.58} parent=0 // pred_fallthru
    _
  // Predicated region
  $region6: #{resnet_forward.58} parent=0 // pred_check
    _
  $region7: #{resnet_forward.58} parent=0 // pred_check_branch
    %12 = sbr.rel (0) target = $region9
  $region8: #{resnet_forward.58} parent=0 // pred_region
    _
  $region9: #{resnet_forward.58} parent=0 // pred_fallthru
    _
  %v13 = vld [vmem:[%s0] sm:$0xff]
  %v14 = vld [vmem:[%s0 + $0x8] sm:$0xff]
  %v15 = vld [vmem:[%s0 + $0x10] sm:$0xff]
  %v16 = vld [vmem:[%s0 + $0x18] sm:$0xff]
  %v17 = vld [vmem:[%s0 + $0x20] sm:$0xff]
  %v18 = vld [vmem:[%s0 + $0x28] sm:$0xff]
  %v19 = vld [vmem:[%s0 + $0x30] sm:$0xff]
  %v20 = vld [vmem:[%s0 + $0x38] sm:$0xff]
  %v21 = vld [vmem:[%s0 + $0x40] sm:$0xff]
  %v22 = vld [vmem:[%s0 + $0x48] sm:$0xff]
  %v23 = vld [vmem:[%s0 + $0x50] sm:$0xff]
  %v24 = vld [vmem:[%s0 + $0x58] sm:$0xff]
  %v25 = vld [vmem:[%s0 + $0x60] sm:$0xff]
  %v26 = vld [vmem:[%s0 + $0x68] sm:$0xff]
  %v27 = vld [vmem:[%s0 + $0x70] sm:$0xff]
  %v28 = vld [vmem:[%s0 + $0x78] sm:$0xff]
  %v29 = vld [vmem:[%s0 + $0x80] sm:$0xff]
  %v30 = vld [vmem:[%s0 + $0x88] sm:$0xff]
  %v31 = vld [vmem:[%s0 + $0x90] sm:$0xff]
  %v32 = vld [vmem:[%s0 + $0x98] sm:$0xff]
  %v33 = vld [vmem:[%s0 + $0xa0] sm:$0xff]
  %v34 = vld [vmem:[%s0 + $0xa8] sm:$0xff]
  %v35 = vld [vmem:[%s0 + $0xb0] sm:$0xff]
  %v36 = vld [vmem:[%s0 + $0xb8] sm:$0xff]
  %v37 = vld [vmem:[%s0 + $0xc0] sm:$0xff]
  %v38 = vld [vmem:[%s0 + $0xc8] sm:$0xff]
  %v39 = vld [vmem:[%s0 + $0xd0] sm:$0xff]
  %v40 = vld [vmem:[%s0 + $0xd8] sm:$0xff]
  %v41 = vld [vmem:[%s0 + $0xe0] sm:$0xff]
  %v42 = vld [vmem:[%s0 + $0xe8] sm:$0xff]
  %v43 = vld [vmem:[%s0 + $0xf0] sm:$0xff]
  %v44 = vld [vmem:[%s0 + $0xf8] sm:$0xff]
  %v45 = vld [vmem:[%s0 + $0x100] sm:$0xff]
  %v46 = vld [vmem:[%s0 + $0x108] sm:$0xff]
  %v47 = vld [vmem:[%s0 + $0x110] sm:$0xff]
  %v48 = vld [vmem:[%s0 + $0x118] sm:$0xff]
  %v49 = vld [vmem:[%s1] sm:$0xff]
  %v50 = vld [vmem:[%s1 + $0x8] sm:$0xff]
  %v51 = vld [vmem:[%s1 + $0x10] sm:$0xff]
  %v52 = vld [vmem:[%s1 + $0x18] sm:$0xff]
  %v53 = vld [vmem:[%s1 + $0x20] sm:$0xff]
  %v54 = vld [vmem:[%s1 + $0x28] sm:$0xff]
  %v55 = vld [vmem:[%s1 + $0x30] sm:$0xff]
  %v56 = vld [vmem:[%s1 + $0x38] sm:$0xff]
  %v57 = vld [vmem:[%s1 + $0x40] sm:$0xff]
  %v58 = vld [vmem:[%s1 + $0x48] sm:$0xff]
  %v59 = vld [vmem:[%s1 + $0x50] sm:$0xff]
  %v60 = vld [vmem:[%s1 + $0x58] sm:$0xff]
  %v61 = vld [vmem:[%s1 + $0x60] sm:$0xff]
  %v62 = vld [vmem:[%s1 + $0x68] sm:$0xff]
  %v63 = vld [vmem:[%s1 + $0x70] sm:$0xff]
  %v64 = vld [vmem:[%s1 + $0x78] sm:$0xff]
  %v65 = vld [vmem:[%s1 + $0x80] sm:$0xff]
  %v66 = vld [vmem:[%s1 + $0x88] sm:$0xff]
  %v67 = vld [vmem:[%s1 + $0x90] sm:$0xff]
  %v68 = vld [vmem:[%s1 + $0x98] sm:$0xff]
  %v69 = vld [vmem:[%s1 + $0xa0] sm:$0xff]
  %v70 = vld [vmem:[%s1 + $0xa8] sm:$0xff]
  %v71 = vld [vmem:[%s1 + $0xb0] sm:$0xff]
  %v72 = vld [vmem:[%s1 + $0xb8] sm:$0xff]
  %v73 = vld [vmem:[%s1 + $0xc0] sm:$0xff]
  %v74 = vld [vmem:[%s1 + $0xc8] sm:$0xff]
  %v75 = vld [vmem:[%s1 + $0xd0] sm:$0xff]
  %v76 = vld [vmem:[%s1 + $0xd8] sm:$0xff]
  %v77 = vld [vmem:[%s1 + $0xe0] sm:$0xff]
  %v78 = vld [vmem:[%s1 + $0xe8] sm:$0xff]
  %v79 = vld [vmem:[%s1 + $0xf0] sm:$0xff]
  %v80 = vld [vmem:[%s1 + $0xf8] sm:$0xff]
  %v81 = vld [vmem:[%s1 + $0x100] sm:$0xff]
  %v82 = vld [vmem:[%s1 + $0x108] sm:$0xff]
  %v83 = vld [vmem:[%s1 + $0x110] sm:$0xff]
  %v84 = vld [vmem:[%s1 + $0x118] sm:$0xff]
  %v85 = vld [vmem:[%s1 + $0x120] sm:$0xff]
  %v86 = vld [vmem:[%s1 + $0x128] sm:$0xff]
  %v87 = vld [vmem:[%s1 + $0x130] sm:$0xff]
  %v88 = vld [vmem:[%s1 + $0x138] sm:$0xff]
  %v89 = vld [vmem:[%s1 + $0x140] sm:$0xff]
  %v90 = vld [vmem:[%s1 + $0x148] sm:$0xff]
  %v91 = vld [vmem:[%s1 + $0x150] sm:$0xff]
  %v92 = vld [vmem:[%s1 + $0x158] sm:$0xff]
  %v93 = vld [vmem:[%s1 + $0x160] sm:$0xff]
  %v94 = vld [vmem:[%s1 + $0x168] sm:$0xff]
  %v95 = vld [vmem:[%s1 + $0x170] sm:$0xff]
  %v96 = vld [vmem:[%s1 + $0x178] sm:$0xff]
  %v97 = vld [vmem:[%s1 + $0x180] sm:$0xff]
  %v98 = vld [vmem:[%s1 + $0x188] sm:$0xff]
  %v99 = vld [vmem:[%s1 + $0x190] sm:$0xff]
  %v100 = vld [vmem:[%s1 + $0x198] sm:$0xff]
  %v101 = vld [vmem:[%s1 + $0x1a0] sm:$0xff]
  %v102 = vld [vmem:[%s1 + $0x1a8] sm:$0xff]
  %v103 = vld [vmem:[%s1 + $0x1b0] sm:$0xff]
  %v104 = vld [vmem:[%s1 + $0x1b8] sm:$0xff]
  %v105 = vld [vmem:[%s1 + $0x1c0] sm:$0xff]
  %v106 = vld [vmem:[%s1 + $0x1c8] sm:$0xff]
  %v107 = vld [vmem:[%s1 + $0x1d0] sm:$0xff]
  %v108 = vld [vmem:[%s1 + $0x1d8] sm:$0xff]
  %v109 = vld [vmem:[%s1 + $0x1e0] sm:$0xff]
  %v110 = vld [vmem:[%s1 + $0x1e8] sm:$0xff]
  %v111 = vld [vmem:[%s1 + $0x1f0] sm:$0xff]
  %v112 = vld [vmem:[%s1 + $0x1f8] sm:$0xff]
  %v113 = vld [vmem:[%s1 + $0x200] sm:$0xff]
  %v114 = vld [vmem:[%s1 + $0x208] sm:$0xff]
  %v115 = vld [vmem:[%s1 + $0x210] sm:$0xff]
  %v116 = vld [vmem:[%s1 + $0x218] sm:$0xff]
  %v117 = vld [vmem:[%s1 + $0x220] sm:$0xff]
  %v118 = vld [vmem:[%s1 + $0x228] sm:$0xff]
  %v119 = vld [vmem:[%s1 + $0x230] sm:$0xff]
  %v120 = vld [vmem:[%s1 + $0x238] sm:$0xff]
  %v121 = vld [vmem:[%s1 + $0x240] sm:$0xff]
  %v122 = vld [vmem:[%s1 + $0x248] sm:$0xff]
  %v123 = vld [vmem:[%s1 + $0x250] sm:$0xff]
  %v124 = vld [vmem:[%s1 + $0x258] sm:$0xff]
  %v125 = vld [vmem:[%s1 + $0x260] sm:$0xff]
  %v126 = vld [vmem:[%s1 + $0x268] sm:$0xff]
  %v127 = vld [vmem:[%s1 + $0x270] sm:$0xff]
  %v128 = vld [vmem:[%s1 + $0x278] sm:$0xff]
  %v129 = vld [vmem:[%s1 + $0x280] sm:$0xff]
  %v130 = vld [vmem:[%s1 + $0x288] sm:$0xff]
  %v131 = vld [vmem:[%s1 + $0x290] sm:$0xff]
  %v132 = vld [vmem:[%s1 + $0x298] sm:$0xff]
  %v133 = vld [vmem:[%s1 + $0x2a0] sm:$0xff]
  %v134 = vld [vmem:[%s1 + $0x2a8] sm:$0xff]
  %v135 = vld [vmem:[%s1 + $0x2b0] sm:$0xff]
  %v136 = vld [vmem:[%s1 + $0x2b8] sm:$0xff]
  %v137 = vld [vmem:[%s1 + $0x2c0] sm:$0xff]
  %v138 = vld [vmem:[%s1 + $0x2c8] sm:$0xff]
  %v139 = vld [vmem:[%s1 + $0x2d0] sm:$0xff]
  %v140 = vld [vmem:[%s1 + $0x2d8] sm:$0xff]
  %v141 = vld [vmem:[%s1 + $0x2e0] sm:$0xff]
  %v142 = vld [vmem:[%s1 + $0x2e8] sm:$0xff]
  %v143 = vld [vmem:[%s1 + $0x2f0] sm:$0xff]
  %v144 = vld [vmem:[%s1 + $0x2f8] sm:$0xff]
  %v145 = vld [vmem:[%s1 + $0x300] sm:$0xff]
  %v146 = vld [vmem:[%s1 + $0x308] sm:$0xff]
  %v147 = vld [vmem:[%s1 + $0x310] sm:$0xff]
  %v148 = vld [vmem:[%s1 + $0x318] sm:$0xff]
  %v149 = vld [vmem:[%s1 + $0x320] sm:$0xff]
  %v150 = vld [vmem:[%s1 + $0x328] sm:$0xff]
  %v151 = vld [vmem:[%s1 + $0x330] sm:$0xff]
  %v152 = vld [vmem:[%s1 + $0x338] sm:$0xff]
  %v153 = vld [vmem:[%s1 + $0x340] sm:$0xff]
  %v154 = vld [vmem:[%s1 + $0x348] sm:$0xff]
  %v155 = vld [vmem:[%s1 + $0x350] sm:$0xff]
  %v156 = vld [vmem:[%s1 + $0x358] sm:$0xff]
  %v157 = vld [vmem:[%s1 + $0x360] sm:$0xff]
  %v158 = vld [vmem:[%s1 + $0x368] sm:$0xff]
  %v159 = vld [vmem:[%s1 + $0x370] sm:$0xff]
  %v160 = vld [vmem:[%s1 + $0x378] sm:$0xff]
  %v161 = vld [vmem:[%s1 + $0x380] sm:$0xff]
  %v162 = vld [vmem:[%s1 + $0x388] sm:$0xff]
  %v163 = vld [vmem:[%s1 + $0x390] sm:$0xff]
  %v164 = vld [vmem:[%s1 + $0x398] sm:$0xff]
  %v165 = vld [vmem:[%s1 + $0x3a0] sm:$0xff]
  %v166 = vld [vmem:[%s1 + $0x3a8] sm:$0xff]
  %v167 = vld [vmem:[%s1 + $0x3b0] sm:$0xff]
  %v168 = vld [vmem:[%s1 + $0x3b8] sm:$0xff]
  %v169 = vld [vmem:[%s1 + $0x3c0] sm:$0xff]
  %v170 = vld [vmem:[%s1 + $0x3c8] sm:$0xff]
  %v171 = vld [vmem:[%s1 + $0x3d0] sm:$0xff]
  %v172 = vld [vmem:[%s1 + $0x3d8] sm:$0xff]
  %v173 = vld [vmem:[%s1 + $0x3e0] sm:$0xff]
  %v174 = vld [vmem:[%s1 + $0x3e8] sm:$0xff]
  %v175 = vld [vmem:[%s1 + $0x3f0] sm:$0xff]
  %v176 = vld [vmem:[%s1 + $0x3f8] sm:$0xff]
  %v177 = vld [vmem:[%s1 + $0x400] sm:$0xff]
  %v178 = vld [vmem:[%s1 + $0x408] sm:$0xff]
  %v179 = vld [vmem:[%s1 + $0x410] sm:$0xff]
  %v180 = vld [vmem:[%s1 + $0x418] sm:$0xff]
  %v181 = vld [vmem:[%s1 + $0x420] sm:$0xff]
  %v182 = vld [vmem:[%s1 + $0x428] sm:$0xff]
  %v183 = vld [vmem:[%s1 + $0x430] sm:$0xff]
  %v184 = vld [vmem:[%s1 + $0x438] sm:$0xff]
  %v185 = vld [vmem:[%s1 + $0x440] sm:$0xff]
  %v186 = vld [vmem:[%s1 + $0x448] sm:$0xff]
  %v187 = vld [vmem:[%s1 + $0x450] sm:$0xff]
  %v188 = vld [vmem:[%s1 + $0x458] sm:$0xff]
  %v189 = vld [vmem:[%s1 + $0x460] sm:$0xff]
  %v190 = vld [vmem:[%s1 + $0x468] sm:$0xff]
  %v191 = vld [vmem:[%s1 + $0x470] sm:$0xff]
  %v192 = vld [vmem:[%s1 + $0x478] sm:$0xff]
  %193 = vmatprep.subr.mxu0 0.0
  %194 = vmatpush1.msra.mxu0 %v49
  %195 = vmatprep.subr.mxu0 0.0
  %196 = vmatpush1.msra.mxu0 %v50
  %197 = vmatprep.subr.mxu0 0.0
  %198 = vmatpush1.msra.mxu0 %v51
  %199 = vmatprep.subr.mxu0 0.0
  %200 = vmatpush1.msra.mxu0 %v52
  %201 = vmatprep.subr.mxu0 0.0
  %202 = vmatpush1.msra.mxu0 %v53
  %203 = vmatprep.subr.mxu0 0.0
  %204 = vmatpush1.msra.mxu0 %v54
  %205 = vmatprep.subr.mxu0 0.0
  %206 = vmatpush1.msra.mxu0 %v55
  %207 = vmatprep.subr.mxu0 0.0
  %208 = vmatpush1.msra.mxu0 %v56
  %209 = vmatprep.subr.mxu0 0.0
  %210 = vmatpush1.msra.mxu0 %v57
  %211 = vmatprep.subr.mxu0 0.0
  %212 = vmatpush1.msra.mxu0 %v58
  %213 = vmatprep.subr.mxu0 0.0
  %214 = vmatpush1.msra.mxu0 %v59
  %215 = vmatprep.subr.mxu0 0.0
  %216 = vmatpush1.msra.mxu0 %v60
  %217 = vmatprep.subr.mxu0 0.0
  %218 = vmatpush1.msra.mxu0 %v61
  %219 = vmatprep.subr.mxu0 0.0
  %220 = vmatpush1.msra.mxu0 %v62
  %221 = vmatprep.subr.mxu0 0.0
  %222 = vmatpush1.msra.mxu0 %v63
  %223 = vmatprep.subr.mxu0 0.0
  %224 = vmatpush1.msra.mxu0 %v64
  %225 = vmatprep.subr.mxu0 0.0
  %226 = vmatpush1.msra.mxu0 %v65
  %227 = vmatprep.subr.mxu0 0.0
  %228 = vmatpush1.msra.mxu0 %v66
  %229 = vmatprep.subr.mxu0 0.0
  %230 = vmatpush1.msra.mxu0 %v67
  %231 = vmatprep.subr.mxu0 0.0
  %232 = vmatpush1.msra.mxu0 %v68
  %233 = vmatprep.subr.mxu0 0.0
  %234 = vmatpush1.msra.mxu0 %v69
  %235 = vmatprep.subr.mxu0 0.0
  %236 = vmatpush1.msra.mxu0 %v70
  %237 = vmatprep.subr.mxu0 0.0
  %238 = vmatpush1.msra.mxu0 %v71
  %239 = vmatprep.subr.mxu0 0.0
  %240 = vmatpush1.msra.mxu0 %v72
  %241 = vmatprep.subr.mxu0 0.0
  %242 = vmatpush1.msra.mxu0 %v73
  %243 = vmatprep.subr.mxu0 0.0
  %244 = vmatpush1.msra.mxu0 %v74
  %245 = vmatprep.subr.mxu0 0.0
  %246 = vmatpush1.msra.mxu0 %v75
  %247 = vmatprep.subr.mxu0 0.0
  %248 = vmatpush1.msra.mxu0 %v76
  %249 = vmatprep.subr.mxu0 0.0
  %250 = vmatpush1.msra.mxu0 %v77
  %251 = vmatprep.subr.mxu0 0.0
  %252 = vmatpush1.msra.mxu0 %v78
  %253 = vmatprep.subr.mxu0 0.0
  %254 = vmatpush1.msra.mxu0 %v79
  %255 = vmatprep.subr.mxu0 0.0
  %256 = vmatpush1.msra.mxu0 %v80
  %257 = vmatprep.mubr.f32.mxu0 %v14
  %258 = vmatmul.mubr.f32.gmra.mrb[0].mxu0 %v13
  %v259 = vpop.f32.mrb[0].mxu0
  %v260 = vadd.f32 0.0, %v259
  %v261 = vpop.f32.mrb[0].mxu0
  %262 = vmatprep.mubr.f32.mxu0 %v23
  %263 = vmatmul.mubr.f32.gmra.mrb[0].mxu0 %v22
  %v264 = vpop.f32.mrb[0].mxu0
  %v265 = vadd.f32 0.0, %v264
  %v266 = vpop.f32.mrb[0].mxu0
  %267 = vmatprep.mubr.f32.mxu0 %v32
  %268 = vmatmul.mubr.f32.gmra.mrb[0].mxu0 %v31
  %v269 = vpop.f32.mrb[0].mxu0
  %v270 = vadd.f32 0.0, %v269
  %v271 = vpop.f32.mrb[0].mxu0
  %272 = vmatprep.mubr.f32.mxu0 %v41
  %273 = vmatmul.mubr.f32.gmra.mrb[0].mxu0 %v40
  %v274 = vpop.f32.mrb[0].mxu0
  %v275 = vadd.f32 0.0, %v274
  %v276 = vpop.f32.mrb[0].mxu0
  %277 = vdwg.mxu0
  %278 = vmatprep.subr.mxu0 0.0
  %279 = vmatpush1.msra.mxu0 %v81
  %280 = vmatprep.subr.mxu0 0.0
  %281 = vmatpush1.msra.mxu0 %v82
  %282 = vmatprep.subr.mxu0 0.0
  %283 = vmatpush1.msra.mxu0 %v83
  %284 = vmatprep.subr.mxu0 0.0
  %285 = vmatpush1.msra.mxu0 %v84
  %286 = vmatprep.subr.mxu0 0.0
  %287 = vmatpush1.msra.mxu0 %v85
  %288 = vmatprep.subr.mxu0 0.0
  %289 = vmatpush1.msra.mxu0 %v86
  %290 = vmatprep.subr.mxu0 0.0
  %291 = vmatpush1.msra.mxu0 %v87
  %292 = vmatprep.subr.mxu0 0.0
  %293 = vmatpush1.msra.mxu0 %v88
  %294 = vmatprep.subr.mxu0 0.0
  %295 = vmatpush1.msra.mxu0 %v89
  %296 = vmatprep.subr.mxu0 0.0
  %297 = vmatpush1.msra.mxu0 %v90
  %298 = vmatprep.subr.mxu0 0.0
  %299 = vmatpush1.msra.mxu0 %v91
  %300 = vmatprep.subr.mxu0 0.0
  %301 = vmatpush1.msra.mxu0 %v92
  %302 = vmatprep.subr.mxu0 0.0
  %303 = vmatpush1.msra.mxu0 %v93
  %304 = vmatprep.subr.mxu0 0.0
  %305 = vmatpush1.msra.mxu0 %v94
  %306 = vmatprep.subr.mxu0 0.0
  %307 = vmatpush1.msra.mxu0 %v95
  %308 = vmatprep.subr.mxu0 0.0
  %309 = vmatpush1.msra.mxu0 %v96
  %310 = vmatprep.subr.mxu0 0.0
  %311 = vmatpush1.msra.mxu0 %v97
  %312 = vmatprep.subr.mxu0 0.0
  %313 = vmatpush1.msra.mxu0 %v98
  %314 = vmatprep.subr.mxu0 0.0
  %315 = vmatpush1.msra.mxu0 %v99
  %316 = vmatprep.subr.mxu0 0.0
  %317 = vmatpush1.msra.mxu0 %v100
  %318 = vmatprep.subr.mxu0 0.0
  %319 = vmatpush1.msra.mxu0 %v101
  %320 = vmatprep.subr.mxu0 0.0
  %321 = vmatpush1.msra.mxu0 %v102
  %322 = vmatprep.subr.mxu0 0.0
  %323 = vmatpush1.msra.mxu0 %v103
  %324 = vmatprep.subr.mxu0 0.0
  %325 = vmatpush1.msra.mxu0 %v104
  %326 = vmatprep.subr.mxu0 0.0
  %327 = vmatpush1.msra.mxu0 %v105
  %328 = vmatprep.subr.mxu0 0.0
  %329 = vmatpush1.msra.mxu0 %v106
  %330 = vmatprep.subr.mxu0 0.0
  %331 = vmatpush1.msra.mxu0 %v107
  %332 = vmatprep.subr.mxu0 0.0
  %333 = vmatpush1.msra.mxu0 %v108
  %334 = vmatprep.subr.mxu0 0.0
  %335 = vmatpush1.msra.mxu0 %v109
  %336 = vmatprep.subr.mxu0 0.0
  %337 = vmatpush1.msra.mxu0 %v110
  %338 = vmatprep.subr.mxu0 0.0
  %339 = vmatpush1.msra.mxu0 %v111
  %340 = vmatprep.subr.mxu0 0.0
  %341 = vmatpush1.msra.mxu0 %v112
  %342 = vmatprep.mubr.f32.mxu0 %v16
  %343 = vmatmul.mubr.f32.gmra.mrb[0].mxu0 %v15
  %v344 = vpop.f32.mrb[0].mxu0
  %v345 = vadd.f32 %v260, %v344
  %v346 = vpop.f32.mrb[0].mxu0
  %347 = vmatprep.mubr.f32.mxu0 %v25
  %348 = vmatmul.mubr.f32.gmra.mrb[0].mxu0 %v24
  %v349 = vpop.f32.mrb[0].mxu0
  %v350 = vadd.f32 %v265, %v349
  %v351 = vpop.f32.mrb[0].mxu0
  %352 = vmatprep.mubr.f32.mxu0 %v34
  %353 = vmatmul.mubr.f32.gmra.mrb[0].mxu0 %v33
  %v354 = vpop.f32.mrb[0].mxu0
  %v355 = vadd.f32 %v270, %v354
  %v356 = vpop.f32.mrb[0].mxu0
  %357 = vmatprep.mubr.f32.mxu0 %v43
  %358 = vmatmul.mubr.f32.gmra.mrb[0].mxu0 %v42
  %v359 = vpop.f32.mrb[0].mxu0
  %v360 = vadd.f32 %v275, %v359
  %v361 = vpop.f32.mrb[0].mxu0
  %362 = vdwg.mxu0
  %363 = vmatprep.subr.mxu0 0.0
  %364 = vmatpush1.msra.mxu0 %v113
  %365 = vmatprep.subr.mxu0 0.0
  %366 = vmatpush1.msra.mxu0 %v114
  %367 = vmatprep.subr.mxu0 0.0
  %368 = vmatpush1.msra.mxu0 %v115
  %369 = vmatprep.subr.mxu0 0.0
  %370 = vmatpush1.msra.mxu0 %v116
  %371 = vmatprep.subr.mxu0 0.0
  %372 = vmatpush1.msra.mxu0 %v117
  %373 = vmatprep.subr.mxu0 0.0
  %374 = vmatpush1.msra.mxu0 %v118
  %375 = vmatprep.subr.mxu0 0.0
  %376 = vmatpush1.msra.mxu0 %v119
  %377 = vmatprep.subr.mxu0 0.0
  %378 = vmatpush1.msra.mxu0 %v120
  %379 = vmatprep.subr.mxu0 0.0
  %380 = vmatpush1.msra.mxu0 %v121
  %381 = vmatprep.subr.mxu0 0.0
  %382 = vmatpush1.msra.mxu0 %v122
  %383 = vmatprep.subr.mxu0 0.0
  %384 = vmatpush1.msra.mxu0 %v123
  %385 = vmatprep.subr.mxu0 0.0
  %386 = vmatpush1.msra.mxu0 %v124
  %387 = vmatprep.subr.mxu0 0.0
  %388 = vmatpush1.msra.mxu0 %v125
  %389 = vmatprep.subr.mxu0 0.0
  %390 = vmatpush1.msra.mxu0 %v126
  %391 = vmatprep.subr.mxu0 0.0
  %392 = vmatpush1.msra.mxu0 %v127
  %393 = vmatprep.subr.mxu0 0.0
  %394 = vmatpush1.msra.mxu0 %v128
  %395 = vmatprep.subr.mxu0 0.0
  %396 = vmatpush1.msra.mxu0 %v129
  %397 = vmatprep.subr.mxu0 0.0
  %398 = vmatpush1.msra.mxu0 %v130
  %399 = vmatprep.subr.mxu0 0.0
  %400 = vmatpush1.msra.mxu0 %v131
  %401 = vmatprep.subr.mxu0 0.0
  %402 = vmatpush1.msra.mxu0 %v132
  %403 = vmatprep.subr.mxu0 0.0
  %404 = vmatpush1.msra.mxu0 %v133
  %405 = vmatprep.subr.mxu0 0.0
  %406 = vmatpush1.msra.mxu0 %v134
  %407 = vmatprep.subr.mxu0 0.0
  %408 = vmatpush1.msra.mxu0 %v135
  %409 = vmatprep.subr.mxu0 0.0
  %410 = vmatpush1.msra.mxu0 %v136
  %411 = vmatprep.subr.mxu0 0.0
  %412 = vmatpush1.msra.mxu0 %v137
  %413 = vmatprep.subr.mxu0 0.0
  %414 = vmatpush1.msra.mxu0 %v138
  %415 = vmatprep.subr.mxu0 0.0
  %416 = vmatpush1.msra.mxu0 %v139
  %417 = vmatprep.subr.mxu0 0.0
  %418 = vmatpush1.msra.mxu0 %v140
  %419 = vmatprep.subr.mxu0 0.0
  %420 = vmatpush1.msra.mxu0 %v141
  %421 = vmatprep.subr.mxu0 0.0
  %422 = vmatpush1.msra.mxu0 %v142
  %423 = vmatprep.subr.mxu0 0.0
  %424 = vmatpush1.msra.mxu0 %v143
  %425 = vmatprep.subr.mxu0 0.0
  %426 = vmatpush1.msra.mxu0 %v144
  %427 = vmatprep.mubr.f32.mxu0 %v18
  %428 = vmatmul.mubr.f32.gmra.mrb[0].mxu0 %v17
  %v429 = vpop.f32.mrb[0].mxu0
  %v430 = vadd.f32 %v345, %v429
  %v431 = vpop.f32.mrb[0].mxu0
  %432 = vmatprep.mubr.f32.mxu0 %v27
  %433 = vmatmul.mubr.f32.gmra.mrb[0].mxu0 %v26
  %v434 = vpop.f32.mrb[0].mxu0
  %v435 = vadd.f32 %v350, %v434
  %v436 = vpop.f32.mrb[0].mxu0
  %437 = vmatprep.mubr.f32.mxu0 %v36
  %438 = vmatmul.mubr.f32.gmra.mrb[0].mxu0 %v35
  %v439 = vpop.f32.mrb[0].mxu0
  %v440 = vadd.f32 %v355, %v439
  %v441 = vpop.f32.mrb[0].mxu0
  %442 = vmatprep.mubr.f32.mxu0 %v45
  %443 = vmatmul.mubr.f32.gmra.mrb[0].mxu0 %v44
  %v444 = vpop.f32.mrb[0].mxu0
  %v445 = vadd.f32 %v360, %v444
  %v446 = vpop.f32.mrb[0].mxu0
  %447 = vdwg.mxu0
  %448 = vmatprep.subr.mxu0 0.0
  %449 = vmatpush1.msra.mxu0 %v145
  %450 = vmatprep.subr.mxu0 0.0
  %451 = vmatpush1.msra.mxu0 %v146
  %452 = vmatprep.subr.mxu0 0.0
  %453 = vmatpush1.msra.mxu0 %v147
  %454 = vmatprep.subr.mxu0 0.0
  %455 = vmatpush1.msra.mxu0 %v148
  %456 = vmatprep.subr.mxu0 0.0
  %457 = vmatpush1.msra.mxu0 %v149
  %458 = vmatprep.subr.mxu0 0.0
  %459 = vmatpush1.msra.mxu0 %v150
  %460 = vmatprep.subr.mxu0 0.0
  %461 = vmatpush1.msra.mxu0 %v151
  %462 = vmatprep.subr.mxu0 0.0
  %463 = vmatpush1.msra.mxu0 %v152
  %464 = vmatprep.subr.mxu0 0.0
  %465 = vmatpush1.msra.mxu0 %v153
  %466 = vmatprep.subr.mxu0 0.0
  %467 = vmatpush1.msra.mxu0 %v154
  %468 = vmatprep.subr.mxu0 0.0
  %469 = vmatpush1.msra.mxu0 %v155
  %470 = vmatprep.subr.mxu0 0.0
  %471 = vmatpush1.msra.mxu0 %v156
  %472 = vmatprep.subr.mxu0 0.0
  %473 = vmatpush1.msra.mxu0 %v157
  %474 = vmatprep.subr.mxu0 0.0
  %475 = vmatpush1.msra.mxu0 %v158
  %476 = vmatprep.subr.mxu0 0.0
  %477 = vmatpush1.msra.mxu0 %v159
  %478 = vmatprep.subr.mxu0 0.0
  %479 = vmatpush1.msra.mxu0 %v160
  %480 = vmatprep.subr.mxu0 0.0
  %481 = vmatpush1.msra.mxu0 %v161
  %482 = vmatprep.subr.mxu0 0.0
  %483 = vmatpush1.msra.mxu0 %v162
  %484 = vmatprep.subr.mxu0 0.0
  %485 = vmatpush1.msra.mxu0 %v163
  %486 = vmatprep.subr.mxu0 0.0
  %487 = vmatpush1.msra.mxu0 %v164
  %488 = vmatprep.subr.mxu0 0.0
  %489 = vmatpush1.msra.mxu0 %v165
  %490 = vmatprep.subr.mxu0 0.0
  %491 = vmatpush1.msra.mxu0 %v166
  %492 = vmatprep.subr.mxu0 0.0
  %493 = vmatpush1.msra.mxu0 %v167
  %494 = vmatprep.subr.mxu0 0.0
  %495 = vmatpush1.msra.mxu0 %v168
  %496 = vmatprep.subr.mxu0 0.0
  %497 = vmatpush1.msra.mxu0 %v169
  %498 = vmatprep.subr.mxu0 0.0
  %499 = vmatpush1.msra.mxu0 %v170
  %500 = vmatprep.subr.mxu0 0.0
  %501 = vmatpush1.msra.mxu0 %v171
  %502 = vmatprep.subr.mxu0 0.0
  %503 = vmatpush1.msra.mxu0 %v172
  %504 = vmatprep.subr.mxu0 0.0
  %505 = vmatpush1.msra.mxu0 %v173
  %506 = vmatprep.subr.mxu0 0.0
  %507 = vmatpush1.msra.mxu0 %v174
  %508 = vmatprep.subr.mxu0 0.0
  %509 = vmatpush1.msra.mxu0 %v175
  %510 = vmatprep.subr.mxu0 0.0
  %511 = vmatpush1.msra.mxu0 %v176
  %512 = vmatprep.mubr.f32.mxu0 %v20
  %513 = vmatmul.mubr.f32.gmra.mrb[0].mxu0 %v19
  %v514 = vpop.f32.mrb[0].mxu0
  %v515 = vadd.f32 %v430, %v514
  %v516 = vpop.f32.mrb[0].mxu0
  %517 = vmatprep.mubr.f32.mxu0 %v29
  %518 = vmatmul.mubr.f32.gmra.mrb[0].mxu0 %v28
  %v519 = vpop.f32.mrb[0].mxu0
  %v520 = vadd.f32 %v435, %v519
  %v521 = vpop.f32.mrb[0].mxu0
  %522 = vmatprep.mubr.f32.mxu0 %v38
  %523 = vmatmul.mubr.f32.gmra.mrb[0].mxu0 %v37
  %v524 = vpop.f32.mrb[0].mxu0
  %v525 = vadd.f32 %v440, %v524
  %v526 = vpop.f32.mrb[0].mxu0
  %527 = vmatprep.mubr.f32.mxu0 %v47
  %528 = vmatmul.mubr.f32.gmra.mrb[0].mxu0 %v46
  %v529 = vpop.f32.mrb[0].mxu0
  %v530 = vadd.f32 %v445, %v529
  %v531 = vpop.f32.mrb[0].mxu0
  %532 = vdwg.mxu0
  %533 = vmatprep.subr.mxu0 0.0
  %534 = vmatpush1.msra.mxu0 %v177
  %535 = vmatprep.subr.mxu0 0.0
  %536 = vmatpush1.msra.mxu0 %v178
  %537 = vmatprep.subr.mxu0 0.0
  %538 = vmatpush1.msra.mxu0 %v179
  %539 = vmatprep.subr.mxu0 0.0
  %540 = vmatpush1.msra.mxu0 %v180
  %541 = vmatprep.subr.mxu0 0.0
  %542 = vmatpush1.msra.mxu0 %v181
  %543 = vmatprep.subr.mxu0 0.0
  %544 = vmatpush1.msra.mxu0 %v182
  %545 = vmatprep.subr.mxu0 0.0
  %546 = vmatpush1.msra.mxu0 %v183
  %547 = vmatprep.subr.mxu0 0.0
  %548 = vmatpush1.msra.mxu0 %v184
  %549 = vmatprep.subr.mxu0 0.0
  %550 = vmatpush1.msra.mxu0 %v185
  %551 = vmatprep.subr.mxu0 0.0
  %552 = vmatpush1.msra.mxu0 %v186
  %553 = vmatprep.subr.mxu0 0.0
  %554 = vmatpush1.msra.mxu0 %v187
  %555 = vmatprep.subr.mxu0 0.0
  %556 = vmatpush1.msra.mxu0 %v188
  %557 = vmatprep.subr.mxu0 0.0
  %558 = vmatpush1.msra.mxu0 %v189
  %559 = vmatprep.subr.mxu0 0.0
  %560 = vmatpush1.msra.mxu0 %v190
  %561 = vmatprep.subr.mxu0 0.0
  %562 = vmatpush1.msra.mxu0 %v191
  %563 = vmatprep.subr.mxu0 0.0
  %564 = vmatpush1.msra.mxu0 %v192
  %565 = vmatprep.subr.mxu0 0.0
  %566 = vmatpush1.msra.mxu0 0.0
  %567 = vmatprep.subr.mxu0 0.0
  %568 = vmatpush1.msra.mxu0 0.0
  %569 = vmatprep.subr.mxu0 0.0
  %570 = vmatpush1.msra.mxu0 0.0
  %571 = vmatprep.subr.mxu0 0.0
  %572 = vmatpush1.msra.mxu0 0.0
  %573 = vmatprep.subr.mxu0 0.0
  %574 = vmatpush1.msra.mxu0 0.0
  %575 = vmatprep.subr.mxu0 0.0
  %576 = vmatpush1.msra.mxu0 0.0
  %577 = vmatprep.subr.mxu0 0.0
  %578 = vmatpush1.msra.mxu0 0.0
  %579 = vmatprep.subr.mxu0 0.0
  %580 = vmatpush1.msra.mxu0 0.0
  %581 = vmatprep.subr.mxu0 0.0
  %582 = vmatpush1.msra.mxu0 0.0
  %583 = vmatprep.subr.mxu0 0.0
  %584 = vmatpush1.msra.mxu0 0.0
  %585 = vmatprep.subr.mxu0 0.0
  %586 = vmatpush1.msra.mxu0 0.0
  %587 = vmatprep.subr.mxu0 0.0
  %588 = vmatpush1.msra.mxu0 0.0
  %589 = vmatprep.subr.mxu0 0.0
  %590 = vmatpush1.msra.mxu0 0.0
  %591 = vmatprep.subr.mxu0 0.0
  %592 = vmatpush1.msra.mxu0 0.0
  %593 = vmatprep.subr.mxu0 0.0
  %594 = vmatpush1.msra.mxu0 0.0
  %595 = vmatprep.subr.mxu0 0.0
  %596 = vmatpush1.msra.mxu0 0.0
  %597 = vmatprep.mubr.f32.mxu0 0.0
  %598 = vmatmul.mubr.f32.gmra.mrb[0].mxu0 %v21
  %v599 = vpop.f32.mrb[0].mxu0
  %v600 = vadd.f32 %v515, %v599
  %v601 = vpop.f32.mrb[0].mxu0
  %602 = vmatprep.mubr.f32.mxu0 0.0
  %603 = vmatmul.mubr.f32.gmra.mrb[0].mxu0 %v30
  %v604 = vpop.f32.mrb[0].mxu0
  %v605 = vadd.f32 %v520, %v604
  %v606 = vpop.f32.mrb[0].mxu0
  %607 = vmatprep.mubr.f32.mxu0 0.0
  %608 = vmatmul.mubr.f32.gmra.mrb[0].mxu0 %v39
  %v609 = vpop.f32.mrb[0].mxu0
  %v610 = vadd.f32 %v525, %v609
  %v611 = vpop.f32.mrb[0].mxu0
  %612 = vmatprep.mubr.f32.mxu0 0.0
  %613 = vmatmul.mubr.f32.gmra.mrb[0].mxu0 %v48
  %v614 = vpop.f32.mrb[0].mxu0
  %v615 = vadd.f32 %v530, %v614
  %v616 = vpop.f32.mrb[0].mxu0
  %617 = vdwg.mxu0
  %618 = vst [vmem:[%s2] sm:$0xff] %v600
  %619 = vst [vmem:[%s2 + $0x8] sm:$0xff] %v605
  %620 = vst [vmem:[%s2 + $0x10] sm:$0xff] %v610
  %621 = vst [vmem:[%s2 + $0x18] sm:$0xff] %v615
  %v622 = vadd.f32 %v600, %v605
  %v623 = vadd.f32 %v622, %v610
  %v624 = vadd.f32 %v623, %v615
  %v625 = vrot.slane %v624, 4
  %v626 = vadd.f32 %v624, %v625
  %v627 = vrot.slane %v626, 2
  %v628 = vadd.f32 %v626, %v627
  %v629 = vrot.slane %v628, 1
  %v630 = vadd.f32 %v628, %v629
  %v631 = vmul.f32 %v600, %v600
  %v632 = vmul.f32 %v605, %v605
  %v633 = vmul.f32 %v610, %v610
  %v634 = vmul.f32 %v615, %v615
  %v635 = vadd.f32 %v631, %v632
  %v636 = vadd.f32 %v635, %v633
  %v637 = vadd.f32 %v636, %v634
  %v638 = vrot.slane %v637, 4
  %v639 = vadd.f32 %v637, %v638
  %v640 = vrot.slane %v639, 2
  %v641 = vadd.f32 %v639, %v640
  %v642 = vrot.slane %v641, 1
  %v643 = vadd.f32 %v641, %v642
  %v644 = vlaneseq
  %v645 = vshrl.u32 %v644, 7
  %vm646 = vcmp.eq.s32.totalorder %v645, 0
  %vm647 = vcmp.eq.s32.totalorder %v645, 1
  %v648 = vsel %vm647, %v643, 0.0
  %v649 = vsel %vm646, %v630, %v648
  %650 = vst [vmem:[%s3] sm:$0xff] %v649
  // Predicated region
  $region10: #{resnet_forward.58} parent=0 // pred_check
    _
  $region11: #{resnet_forward.58} parent=0 // pred_check_branch
    %652 = sbr.rel (0) target = $region13
  $region12: #{resnet_forward.58} parent=0 // pred_region
    _
  $region13: #{resnet_forward.58} parent=0 // pred_fallthru
    _
  // Predicated region
  $region14: #{resnet_forward.58} parent=0 // pred_check
    _
  $region15: #{resnet_forward.58} parent=0 // pred_check_branch
    %654 = sbr.rel (0) target = $region17
  $region16: #{resnet_forward.58} parent=0 // pred_region
    _
  $region17: #{resnet_forward.58} parent=0 // pred_fallthru
    _
  // Predicated region
  $region18: #{resnet_forward.58} parent=0 // pred_check
    _
  $region19: #{resnet_forward.58} parent=0 // pred_check_branch
    %656 = sbr.rel (0) target = $region21
  $region20: #{resnet_forward.58} parent=0 // pred_region
    _
  $region21: #{resnet_forward.58} parent=0 // pred_fallthru
    _
  // Predicated region
  $region22: #{resnet_forward.58} parent=0 // pred_check
    _
  $region23: #{resnet_forward.58} parent=0 // pred_check_branch
    %658 = sbr.rel (0) target = $region25
  $region24: #{resnet_forward.58} parent=0 // pred_region
    _
  $region25: #{resnet_forward.58} parent=0 // pred_fallthru
    _

// kernel: resnet_forward.63
$region0: #{resnet_forward.63}
  #allocation0 [shape = 'u32[]', space=smem, size = 0x4, offset = 0x4, fixed_abs, tag = 'smem constant byte address 0x4 - core index']
  #allocation1 [shape = 'u32[144,128]{1,0:T(1,128)}', space=vmem, size = 0x12000, scoped, tag = 'internal scratch']
  %s0 = inlined_call_operand.vmem [shape: f32[32,128], index: 0, kind: input, shape index: {}]
  %s1 = inlined_call_operand.vmem [shape: f32[1,128], index: 1, kind: input, shape index: {}]
  %s2 = inlined_call_operand.vmem [shape: f32[1,128], index: 2, kind: input, shape index: {}]
  %s3 = inlined_call_operand.vmem [shape: f32[32,128], index: 3, kind: input, shape index: {}]
  %s4 = inlined_call_operand.vmem [shape: f32[32,128], index: 4, kind: output, shape index: {}]
  %s5 = sld [smem:[#allocation0]]
  $region26: #{resnet_forward.63} parent=0
    _
  %s7 = ssub.s32 1, %s5
  %s8 = scalar_select 0, %s7, %s5
  // Predicated region
  $region2: #{resnet_forward.63} parent=0 // pred_check
    _
  $region3: #{resnet_forward.63} parent=0 // pred_check_branch
    %10 = sbr.rel (0) target = $region5
  $region4: #{resnet_forward.63} parent=0 // pred_region
    _
  $region5: #{resnet_forward.63} parent=0 // pred_fallthru
    _
  // Predicated region
  $region6: #{resnet_forward.63} parent=0 // pred_check
    _
  $region7: #{resnet_forward.63} parent=0 // pred_check_branch
    %12 = sbr.rel (0) target = $region9
  $region8: #{resnet_forward.63} parent=0 // pred_region
    _
  $region9: #{resnet_forward.63} parent=0 // pred_fallthru
    _
  // Predicated region
  $region10: #{resnet_forward.63} parent=0 // pred_check
    _
  $region11: #{resnet_forward.63} parent=0 // pred_check_branch
    %14 = sbr.rel (0) target = $region13
  $region12: #{resnet_forward.63} parent=0 // pred_region
    _
  $region13: #{resnet_forward.63} parent=0 // pred_fallthru
    _
  // Predicated region
  $region14: #{resnet_forward.63} parent=0 // pred_check
    _
  $region15: #{resnet_forward.63} parent=0 // pred_check_branch
    %16 = sbr.rel (0) target = $region17
  $region16: #{resnet_forward.63} parent=0 // pred_region
    _
  $region17: #{resnet_forward.63} parent=0 // pred_fallthru
    _
  %v17 = vld [vmem:[%s0] sm:$0xff]
  %v18 = vld [vmem:[%s0 + $0x8] sm:$0xff]
  %v19 = vld [vmem:[%s0 + $0x10] sm:$0xff]
  %v20 = vld [vmem:[%s0 + $0x18] sm:$0xff]
  %v21 = vld [vmem:[%s1] sm:$0x1]
  %v23 = vlaneseq
  %v24 = vshrl.u32 %v23, 7
  %v25 = vsub.s32 0, %v24
  %v26 = vrot.slane %v21, %v25
  %v28 = vmul.f32 %v17, %v26
  %v29 = vmul.f32 %v18, %v26
  %v30 = vmul.f32 %v19, %v26
  %v31 = vmul.f32 %v20, %v26
  %v32 = vld [vmem:[%s2] sm:$0x1]
  %v34 = vlaneseq
  %v35 = vshrl.u32 %v34, 7
  %v36 = vsub.s32 0, %v35
  %v37 = vrot.slane %v32, %v36
  %v39 = vadd.f32 %v28, %v37
  %v40 = vadd.f32 %v29, %v37
  %v41 = vadd.f32 %v30, %v37
  %v42 = vadd.f32 %v31, %v37
  %v43 = vld [vmem:[%s3] sm:$0xff]
  %v44 = vld [vmem:[%s3 + $0x8] sm:$0xff]
  %v45 = vld [vmem:[%s3 + $0x10] sm:$0xff]
  %v46 = vld [vmem:[%s3 + $0x18] sm:$0xff]
  %v47 = vadd.f32 %v39, %v43
  %v48 = vadd.f32 %v40, %v44
  %v49 = vadd.f32 %v41, %v45
  %v50 = vadd.f32 %v42, %v46
  %v51 = vmax.f32 %v47, 0.0
  %v52 = vmax.f32 %v48, 0.0
  %v53 = vmax.f32 %v49, 0.0
  %v54 = vmax.f32 %v50, 0.0
  %55 = vst [vmem:[%s4] sm:$0xff] %v51
  %56 = vst [vmem:[%s4 + $0x8] sm:$0xff] %v52
  %57 = vst [vmem:[%s4 + $0x10] sm:$0xff] %v53
  %58 = vst [vmem:[%s4 + $0x18] sm:$0xff] %v54
  // Predicated region
  $region18: #{resnet_forward.63} parent=0 // pred_check
    _
  $region19: #{resnet_forward.63} parent=0 // pred_check_branch
    %60 = sbr.rel (0) target = $region21
  $region20: #{resnet_forward.63} parent=0 // pred_region
    _
  $region21: #{resnet_forward.63} parent=0 // pred_fallthru
    _
  // Predicated region
  $region22: #{resnet_forward.63} parent=0 // pred_check
    _
  $region23: #{resnet_forward.63} parent=0 // pred_check_branch
    %62 = sbr.rel (0) target = $region25
  $region24: #{resnet_forward.63} parent=0 // pred_region
    _
  $region25: #{resnet_forward.63} parent=0 // pred_fallthru
    _

// kernel: resnet_forward.71
$region0: #{resnet_forward.71}
  #allocation0 [shape = 'u32[]', space=smem, size = 0x4, offset = 0x4, fixed_abs, tag = 'smem constant byte address 0x4 - core index']
  #allocation1 [shape = 'u32[144,128]{1,0:T(1,128)}', space=vmem, size = 0x12000, scoped, tag = 'internal scratch']
  %s0 = inlined_call_operand.vmem [shape: f32[8,128], index: 0, kind: input, shape index: {}]
  %s1 = inlined_call_operand.vmem [shape: f32[1,128], index: 1, kind: input, shape index: {}]
  %s2 = inlined_call_operand.vmem [shape: f32[1,128], index: 2, kind: input, shape index: {}]
  %s3 = inlined_call_operand.vmem [shape: f32[8,128], index: 3, kind: output, shape index: {}]
  %s4 = sld [smem:[#allocation0]]
  $region22: #{resnet_forward.71} parent=0
    _
  %s6 = ssub.s32 1, %s4
  %s7 = scalar_select 0, %s6, %s4
  // Predicated region
  $region2: #{resnet_forward.71} parent=0 // pred_check
    _
  $region3: #{resnet_forward.71} parent=0 // pred_check_branch
    %9 = sbr.rel (0) target = $region5
  $region4: #{resnet_forward.71} parent=0 // pred_region
    _
  $region5: #{resnet_forward.71} parent=0 // pred_fallthru
    _
  // Predicated region
  $region6: #{resnet_forward.71} parent=0 // pred_check
    _
  $region7: #{resnet_forward.71} parent=0 // pred_check_branch
    %11 = sbr.rel (0) target = $region9
  $region8: #{resnet_forward.71} parent=0 // pred_region
    _
  $region9: #{resnet_forward.71} parent=0 // pred_fallthru
    _
  // Predicated region
  $region10: #{resnet_forward.71} parent=0 // pred_check
    _
  $region11: #{resnet_forward.71} parent=0 // pred_check_branch
    %13 = sbr.rel (0) target = $region13
  $region12: #{resnet_forward.71} parent=0 // pred_region
    _
  $region13: #{resnet_forward.71} parent=0 // pred_fallthru
    _
  %v14 = vld [vmem:[%s0] sm:$0xff]
  %v15 = vld [vmem:[%s1] sm:$0x1]
  %v17 = vlaneseq
  %v18 = vshrl.u32 %v17, 7
  %v19 = vsub.s32 0, %v18
  %v20 = vrot.slane %v15, %v19
  %v22 = vmul.f32 %v14, %v20
  %v23 = vld [vmem:[%s2] sm:$0x1]
  %v25 = vlaneseq
  %v26 = vshrl.u32 %v25, 7
  %v27 = vsub.s32 0, %v26
  %v28 = vrot.slane %v23, %v27
  %v30 = vadd.f32 %v22, %v28
  %31 = vst [vmem:[%s3] sm:$0xff] %v30
  // Predicated region
  $region14: #{resnet_forward.71} parent=0 // pred_check
    _
  $region15: #{resnet_forward.71} parent=0 // pred_check_branch
    %33 = sbr.rel (0) target = $region17
  $region16: #{resnet_forward.71} parent=0 // pred_region
    _
  $region17: #{resnet_forward.71} parent=0 // pred_fallthru
    _
  // Predicated region
  $region18: #{resnet_forward.71} parent=0 // pred_check
    _
  $region19: #{resnet_forward.71} parent=0 // pred_check_branch
    %35 = sbr.rel (0) target = $region21
  $region20: #{resnet_forward.71} parent=0 // pred_region
    _
  $region21: #{resnet_forward.71} parent=0 // pred_fallthru
    _

// kernel: resnet_forward.70
$region0: #{resnet_forward.70}
  #allocation0 [shape = 'u32[]', space=smem, size = 0x4, offset = 0x4, fixed_abs, tag = 'smem constant byte address 0x4 - core index']
  #allocation1 [shape = 'u32[144,128]{1,0:T(1,128)}', space=vmem, size = 0x12000, scoped, tag = 'internal scratch']
  %s0 = inlined_call_operand.vmem [shape: f32[8,128], index: 0, kind: input, shape index: {}]
  %s1 = inlined_call_operand.vmem [shape: f32[128,128], index: 1, kind: input, shape index: {}]
  %s2 = inlined_call_operand.vmem [shape: f32[8,128], index: 2, kind: output, shape index: {0}]
  %s3 = inlined_call_operand.vmem [shape: f32[8,128], index: 3, kind: output, shape index: {1}]
  %4 = xla_tuple %s2, %s3
  %s5 = sld [smem:[#allocation0]]
  $region26: #{resnet_forward.70} parent=0
    _
  %s7 = ssub.s32 1, %s5
  %s8 = scalar_select 0, %s7, %s5
  // Predicated region
  $region2: #{resnet_forward.70} parent=0 // pred_check
    _
  $region3: #{resnet_forward.70} parent=0 // pred_check_branch
    %10 = sbr.rel (0) target = $region5
  $region4: #{resnet_forward.70} parent=0 // pred_region
    _
  $region5: #{resnet_forward.70} parent=0 // pred_fallthru
    _
  // Predicated region
  $region6: #{resnet_forward.70} parent=0 // pred_check
    _
  $region7: #{resnet_forward.70} parent=0 // pred_check_branch
    %12 = sbr.rel (0) target = $region9
  $region8: #{resnet_forward.70} parent=0 // pred_region
    _
  $region9: #{resnet_forward.70} parent=0 // pred_fallthru
    _
  %v13 = vld [vmem:[%s0] sm:$0xff]
  %v14 = vld [vmem:[%s1] sm:$0xff]
  %v15 = vld [vmem:[%s1 + $0x8] sm:$0xff]
  %v16 = vld [vmem:[%s1 + $0x10] sm:$0xff]
  %v17 = vld [vmem:[%s1 + $0x18] sm:$0xff]
  %v18 = vld [vmem:[%s1 + $0x20] sm:$0xff]
  %v19 = vld [vmem:[%s1 + $0x28] sm:$0xff]
  %v20 = vld [vmem:[%s1 + $0x30] sm:$0xff]
  %v21 = vld [vmem:[%s1 + $0x38] sm:$0xff]
  %v22 = vld [vmem:[%s1 + $0x40] sm:$0xff]
  %v23 = vld [vmem:[%s1 + $0x48] sm:$0xff]
  %v24 = vld [vmem:[%s1 + $0x50] sm:$0xff]
  %v25 = vld [vmem:[%s1 + $0x58] sm:$0xff]
  %v26 = vld [vmem:[%s1 + $0x60] sm:$0xff]
  %v27 = vld [vmem:[%s1 + $0x68] sm:$0xff]
  %v28 = vld [vmem:[%s1 + $0x70] sm:$0xff]
  %v29 = vld [vmem:[%s1 + $0x78] sm:$0xff]
  %30 = vmatprep.subr.mxu0 0.0
  %31 = vmatpush1.msra.mxu0 %v14
  %32 = vmatprep.subr.mxu0 0.0
  %33 = vmatpush1.msra.mxu0 %v15
  %34 = vmatprep.subr.mxu0 0.0
  %35 = vmatpush1.msra.mxu0 %v16
  %36 = vmatprep.subr.mxu0 0.0
  %37 = vmatpush1.msra.mxu0 %v17
  %38 = vmatprep.subr.mxu0 0.0
  %39 = vmatpush1.msra.mxu0 %v18
  %40 = vmatprep.subr.mxu0 0.0
  %41 = vmatpush1.msra.mxu0 %v19
  %42 = vmatprep.subr.mxu0 0.0
  %43 = vmatpush1.msra.mxu0 %v20
  %44 = vmatprep.subr.mxu0 0.0
  %45 = vmatpush1.msra.mxu0 %v21
  %46 = vmatprep.subr.mxu0 0.0
  %47 = vmatpush1.msra.mxu0 %v22
  %48 = vmatprep.subr.mxu0 0.0
  %49 = vmatpush1.msra.mxu0 %v23
  %50 = vmatprep.subr.mxu0 0.0
  %51 = vmatpush1.msra.mxu0 %v24
  %52 = vmatprep.subr.mxu0 0.0
  %53 = vmatpush1.msra.mxu0 %v25
  %54 = vmatprep.subr.mxu0 0.0
  %55 = vmatpush1.msra.mxu0 %v26
  %56 = vmatprep.subr.mxu0 0.0
  %57 = vmatpush1.msra.mxu0 %v27
  %58 = vmatprep.subr.mxu0 0.0
  %59 = vmatpush1.msra.mxu0 %v28
  %60 = vmatprep.subr.mxu0 0.0
  %61 = vmatpush1.msra.mxu0 %v29
  %62 = vmatprep.subr.mxu0 0.0
  %63 = vmatpush1.msra.mxu0 0.0
  %64 = vmatprep.subr.mxu0 0.0
  %65 = vmatpush1.msra.mxu0 0.0
  %66 = vmatprep.subr.mxu0 0.0
  %67 = vmatpush1.msra.mxu0 0.0
  %68 = vmatprep.subr.mxu0 0.0
  %69 = vmatpush1.msra.mxu0 0.0
  %70 = vmatprep.subr.mxu0 0.0
  %71 = vmatpush1.msra.mxu0 0.0
  %72 = vmatprep.subr.mxu0 0.0
  %73 = vmatpush1.msra.mxu0 0.0
  %74 = vmatprep.subr.mxu0 0.0
  %75 = vmatpush1.msra.mxu0 0.0
  %76 = vmatprep.subr.mxu0 0.0
  %77 = vmatpush1.msra.mxu0 0.0
  %78 = vmatprep.subr.mxu0 0.0
  %79 = vmatpush1.msra.mxu0 0.0
  %80 = vmatprep.subr.mxu0 0.0
  %81 = vmatpush1.msra.mxu0 0.0
  %82 = vmatprep.subr.mxu0 0.0
  %83 = vmatpush1.msra.mxu0 0.0
  %84 = vmatprep.subr.mxu0 0.0
  %85 = vmatpush1.msra.mxu0 0.0
  %86 = vmatprep.subr.mxu0 0.0
  %87 = vmatpush1.msra.mxu0 0.0
  %88 = vmatprep.subr.mxu0 0.0
  %89 = vmatpush1.msra.mxu0 0.0
  %90 = vmatprep.subr.mxu0 0.0
  %91 = vmatpush1.msra.mxu0 0.0
  %92 = vmatprep.subr.mxu0 0.0
  %93 = vmatpush1.msra.mxu0 0.0
  %94 = vmatprep.mubr.f32.mxu0 0.0
  %95 = vmatmul.mubr.f32.gmra.mrb[0].mxu0 %v13
  %v96 = vpop.f32.mrb[0].mxu0
  %v97 = vadd.f32 0.0, %v96
  %v98 = vpop.f32.mrb[0].mxu0
  %99 = vdwg.mxu0
  %100 = vst [vmem:[%s2] sm:$0xff] %v97
  %v101 = vrot.slane %v97, 4
  %v102 = vadd.f32 %v97, %v101
  %v103 = vrot.slane %v102, 2
  %v104 = vadd.f32 %v102, %v103
  %v105 = vrot.slane %v104, 1
  %v106 = vadd.f32 %v104, %v105
  %v107 = vmul.f32 %v97, %v97
  %v108 = vrot.slane %v107, 4
  %v109 = vadd.f32 %v107, %v108
  %v110 = vrot.slane %v109, 2
  %v111 = vadd.f32 %v109, %v110
  %v112 = vrot.slane %v111, 1
  %v113 = vadd.f32 %v111, %v112
  %v114 = vlaneseq
  %v115 = vshrl.u32 %v114, 7
  %vm116 = vcmp.eq.s32.totalorder %v115, 0
  %vm117 = vcmp.eq.s32.totalorder %v115, 1
  %v118 = vsel %vm117, %v113, 0.0
  %v119 = vsel %vm116, %v106, %v118
  %120 = vst [vmem:[%s3] sm:$0xff] %v119
  // Predicated region
  $region10: #{resnet_forward.70} parent=0 // pred_check
    _
  $region11: #{resnet_forward.70} parent=0 // pred_check_branch
    %122 = sbr.rel (0) target = $region13
  $region12: #{resnet_forward.70} parent=0 // pred_region
    _
  $region13: #{resnet_forward.70} parent=0 // pred_fallthru
    _
  // Predicated region
  $region14: #{resnet_forward.70} parent=0 // pred_check
    _
  $region15: #{resnet_forward.70} parent=0 // pred_check_branch
    %124 = sbr.rel (0) target = $region17
  $region16: #{resnet_forward.70} parent=0 // pred_region
    _
  $region17: #{resnet_forward.70} parent=0 // pred_fallthru
    _
  // Predicated region
  $region18: #{resnet_forward.70} parent=0 // pred_check
    _
  $region19: #{resnet_forward.70} parent=0 // pred_check_branch
    %126 = sbr.rel (0) target = $region21
  $region20: #{resnet_forward.70} parent=0 // pred_region
    _
  $region21: #{resnet_forward.70} parent=0 // pred_fallthru
    _
  // Predicated region
  $region22: #{resnet_forward.70} parent=0 // pred_check
    _
  $region23: #{resnet_forward.70} parent=0 // pred_check_branch
    %128 = sbr.rel (0) target = $region25
  $region24: #{resnet_forward.70} parent=0 // pred_region
    _
  $region25: #{resnet_forward.70} parent=0 // pred_fallthru
    _

// kernel: resnet_forward.69
$region0: #{resnet_forward.69}
  #allocation0 [shape = 'u32[]', space=smem, size = 0x4, offset = 0x4, fixed_abs, tag = 'smem constant byte address 0x4 - core index']
  #allocation1 [shape = 'u32[144,128]{1,0:T(1,128)}', space=vmem, size = 0x12000, scoped, tag = 'internal scratch']
  %s0 = inlined_call_operand.vmem [shape: f32[8,128], index: 0, kind: input, shape index: {}]
  %s1 = inlined_call_operand.vmem [shape: f32[1,128], index: 1, kind: input, shape index: {}]
  %s2 = inlined_call_operand.vmem [shape: f32[1,128], index: 2, kind: input, shape index: {}]
  %s3 = inlined_call_operand.vmem [shape: f32[8,128], index: 3, kind: output, shape index: {}]
  %s4 = sld [smem:[#allocation0]]
  $region22: #{resnet_forward.69} parent=0
    _
  %s6 = ssub.s32 1, %s4
  %s7 = scalar_select 0, %s6, %s4
  // Predicated region
  $region2: #{resnet_forward.69} parent=0 // pred_check
    _
  $region3: #{resnet_forward.69} parent=0 // pred_check_branch
    %9 = sbr.rel (0) target = $region5
  $region4: #{resnet_forward.69} parent=0 // pred_region
    _
  $region5: #{resnet_forward.69} parent=0 // pred_fallthru
    _
  // Predicated region
  $region6: #{resnet_forward.69} parent=0 // pred_check
    _
  $region7: #{resnet_forward.69} parent=0 // pred_check_branch
    %11 = sbr.rel (0) target = $region9
  $region8: #{resnet_forward.69} parent=0 // pred_region
    _
  $region9: #{resnet_forward.69} parent=0 // pred_fallthru
    _
  // Predicated region
  $region10: #{resnet_forward.69} parent=0 // pred_check
    _
  $region11: #{resnet_forward.69} parent=0 // pred_check_branch
    %13 = sbr.rel (0) target = $region13
  $region12: #{resnet_forward.69} parent=0 // pred_region
    _
  $region13: #{resnet_forward.69} parent=0 // pred_fallthru
    _
  %v14 = vld [vmem:[%s0] sm:$0xff]
  %v15 = vld [vmem:[%s1] sm:$0x1]
  %v17 = vlaneseq
  %v18 = vshrl.u32 %v17, 7
  %v19 = vsub.s32 0, %v18
  %v20 = vrot.slane %v15, %v19
  %v22 = vmul.f32 %v14, %v20
  %v23 = vld [vmem:[%s2] sm:$0x1]
  %v25 = vlaneseq
  %v26 = vshrl.u32 %v25, 7
  %v27 = vsub.s32 0, %v26
  %v28 = vrot.slane %v23, %v27
  %v30 = vadd.f32 %v22, %v28
  %v31 = vmax.f32 %v30, 0.0
  %32 = vst [vmem:[%s3] sm:$0xff] %v31
  // Predicated region
  $region14: #{resnet_forward.69} parent=0 // pred_check
    _
  $region15: #{resnet_forward.69} parent=0 // pred_check_branch
    %34 = sbr.rel (0) target = $region17
  $region16: #{resnet_forward.69} parent=0 // pred_region
    _
  $region17: #{resnet_forward.69} parent=0 // pred_fallthru
    _
  // Predicated region
  $region18: #{resnet_forward.69} parent=0 // pred_check
    _
  $region19: #{resnet_forward.69} parent=0 // pred_check_branch
    %36 = sbr.rel (0) target = $region21
  $region20: #{resnet_forward.69} parent=0 // pred_region
    _
  $region21: #{resnet_forward.69} parent=0 // pred_fallthru
    _

// kernel: resnet_forward.68
$region0: #{resnet_forward.68}
  #allocation0 [shape = 'u32[]', space=smem, size = 0x4, offset = 0x4, fixed_abs, tag = 'smem constant byte address 0x4 - core index']
  #allocation1 [shape = 'u32[144,128]{1,0:T(1,128)}', space=vmem, size = 0x12000, scoped, tag = 'internal scratch']
  %s0 = inlined_call_operand.vmem [shape: f32[8,1152], index: 0, kind: input, shape index: {}]
  %s1 = inlined_call_operand.vmem [shape: f32[1152,128], index: 1, kind: input, shape index: {}]
  %s2 = inlined_call_operand.vmem [shape: f32[8,128], index: 2, kind: output, shape index: {0}]
  %s3 = inlined_call_operand.vmem [shape: f32[8,128], index: 3, kind: output, shape index: {1}]
  %4 = xla_tuple %s2, %s3
  %s5 = sld [smem:[#allocation0]]
  $region26: #{resnet_forward.68} parent=0
    _
  %s7 = ssub.s32 1, %s5
  %s8 = scalar_select 0, %s7, %s5
  // Predicated region
  $region2: #{resnet_forward.68} parent=0 // pred_check
    _
  $region3: #{resnet_forward.68} parent=0 // pred_check_branch
    %10 = sbr.rel (0) target = $region5
  $region4: #{resnet_forward.68} parent=0 // pred_region
    _
  $region5: #{resnet_forward.68} parent=0 // pred_fallthru
    _
  // Predicated region
  $region6: #{resnet_forward.68} parent=0 // pred_check
    _
  $region7: #{resnet_forward.68} parent=0 // pred_check_branch
    %12 = sbr.rel (0) target = $region9
  $region8: #{resnet_forward.68} parent=0 // pred_region
    _
  $region9: #{resnet_forward.68} parent=0 // pred_fallthru
    _
  %v13 = vld [vmem:[%s0] sm:$0xff]
  %v14 = vld [vmem:[%s0 + $0x8] sm:$0xff]
  %v15 = vld [vmem:[%s0 + $0x10] sm:$0xff]
  %v16 = vld [vmem:[%s0 + $0x18] sm:$0xff]
  %v17 = vld [vmem:[%s0 + $0x20] sm:$0xff]
  %v18 = vld [vmem:[%s0 + $0x28] sm:$0xff]
  %v19 = vld [vmem:[%s0 + $0x30] sm:$0xff]
  %v20 = vld [vmem:[%s0 + $0x38] sm:$0xff]
  %v21 = vld [vmem:[%s0 + $0x40] sm:$0xff]
  %v22 = vld [vmem:[%s1] sm:$0xff]
  %v23 = vld [vmem:[%s1 + $0x8] sm:$0xff]
  %v24 = vld [vmem:[%s1 + $0x10] sm:$0xff]
  %v25 = vld [vmem:[%s1 + $0x18] sm:$0xff]
  %v26 = vld [vmem:[%s1 + $0x20] sm:$0xff]
  %v27 = vld [vmem:[%s1 + $0x28] sm:$0xff]
  %v28 = vld [vmem:[%s1 + $0x30] sm:$0xff]
  %v29 = vld [vmem:[%s1 + $0x38] sm:$0xff]
  %v30 = vld [vmem:[%s1 + $0x40] sm:$0xff]
  %v31 = vld [vmem:[%s1 + $0x48] sm:$0xff]
  %v32 = vld [vmem:[%s1 + $0x50] sm:$0xff]
  %v33 = vld [vmem:[%s1 + $0x58] sm:$0xff]
  %v34 = vld [vmem:[%s1 + $0x60] sm:$0xff]
  %v35 = vld [vmem:[%s1 + $0x68] sm:$0xff]
  %v36 = vld [vmem:[%s1 + $0x70] sm:$0xff]
  %v37 = vld [vmem:[%s1 + $0x78] sm:$0xff]
  %v38 = vld [vmem:[%s1 + $0x80] sm:$0xff]
  %v39 = vld [vmem:[%s1 + $0x88] sm:$0xff]
  %v40 = vld [vmem:[%s1 + $0x90] sm:$0xff]
  %v41 = vld [vmem:[%s1 + $0x98] sm:$0xff]
  %v42 = vld [vmem:[%s1 + $0xa0] sm:$0xff]
  %v43 = vld [vmem:[%s1 + $0xa8] sm:$0xff]
  %v44 = vld [vmem:[%s1 + $0xb0] sm:$0xff]
  %v45 = vld [vmem:[%s1 + $0xb8] sm:$0xff]
  %v46 = vld [vmem:[%s1 + $0xc0] sm:$0xff]
  %v47 = vld [vmem:[%s1 + $0xc8] sm:$0xff]
  %v48 = vld [vmem:[%s1 + $0xd0] sm:$0xff]
  %v49 = vld [vmem:[%s1 + $0xd8] sm:$0xff]
  %v50 = vld [vmem:[%s1 + $0xe0] sm:$0xff]
  %v51 = vld [vmem:[%s1 + $0xe8] sm:$0xff]
  %v52 = vld [vmem:[%s1 + $0xf0] sm:$0xff]
  %v53 = vld [vmem:[%s1 + $0xf8] sm:$0xff]
  %v54 = vld [vmem:[%s1 + $0x100] sm:$0xff]
  %v55 = vld [vmem:[%s1 + $0x108] sm:$0xff]
  %v56 = vld [vmem:[%s1 + $0x110] sm:$0xff]
  %v57 = vld [vmem:[%s1 + $0x118] sm:$0xff]
  %v58 = vld [vmem:[%s1 + $0x120] sm:$0xff]
  %v59 = vld [vmem:[%s1 + $0x128] sm:$0xff]
  %v60 = vld [vmem:[%s1 + $0x130] sm:$0xff]
  %v61 = vld [vmem:[%s1 + $0x138] sm:$0xff]
  %v62 = vld [vmem:[%s1 + $0x140] sm:$0xff]
  %v63 = vld [vmem:[%s1 + $0x148] sm:$0xff]
  %v64 = vld [vmem:[%s1 + $0x150] sm:$0xff]
  %v65 = vld [vmem:[%s1 + $0x158] sm:$0xff]
  %v66 = vld [vmem:[%s1 + $0x160] sm:$0xff]
  %v67 = vld [vmem:[%s1 + $0x168] sm:$0xff]
  %v68 = vld [vmem:[%s1 + $0x170] sm:$0xff]
  %v69 = vld [vmem:[%s1 + $0x178] sm:$0xff]
  %v70 = vld [vmem:[%s1 + $0x180] sm:$0xff]
  %v71 = vld [vmem:[%s1 + $0x188] sm:$0xff]
  %v72 = vld [vmem:[%s1 + $0x190] sm:$0xff]
  %v73 = vld [vmem:[%s1 + $0x198] sm:$0xff]
  %v74 = vld [vmem:[%s1 + $0x1a0] sm:$0xff]
  %v75 = vld [vmem:[%s1 + $0x1a8] sm:$0xff]
  %v76 = vld [vmem:[%s1 + $0x1b0] sm:$0xff]
  %v77 = vld [vmem:[%s1 + $0x1b8] sm:$0xff]
  %v78 = vld [vmem:[%s1 + $0x1c0] sm:$0xff]
  %v79 = vld [vmem:[%s1 + $0x1c8] sm:$0xff]
  %v80 = vld [vmem:[%s1 + $0x1d0] sm:$0xff]
  %v81 = vld [vmem:[%s1 + $0x1d8] sm:$0xff]
  %v82 = vld [vmem:[%s1 + $0x1e0] sm:$0xff]
  %v83 = vld [vmem:[%s1 + $0x1e8] sm:$0xff]
  %v84 = vld [vmem:[%s1 + $0x1f0] sm:$0xff]
  %v85 = vld [vmem:[%s1 + $0x1f8] sm:$0xff]
  %v86 = vld [vmem:[%s1 + $0x200] sm:$0xff]
  %v87 = vld [vmem:[%s1 + $0x208] sm:$0xff]
  %v88 = vld [vmem:[%s1 + $0x210] sm:$0xff]
  %v89 = vld [vmem:[%s1 + $0x218] sm:$0xff]
  %v90 = vld [vmem:[%s1 + $0x220] sm:$0xff]
  %v91 = vld [vmem:[%s1 + $0x228] sm:$0xff]
  %v92 = vld [vmem:[%s1 + $0x230] sm:$0xff]
  %v93 = vld [vmem:[%s1 + $0x238] sm:$0xff]
  %v94 = vld [vmem:[%s1 + $0x240] sm:$0xff]
  %v95 = vld [vmem:[%s1 + $0x248] sm:$0xff]
  %v96 = vld [vmem:[%s1 + $0x250] sm:$0xff]
  %v97 = vld [vmem:[%s1 + $0x258] sm:$0xff]
  %v98 = vld [vmem:[%s1 + $0x260] sm:$0xff]
  %v99 = vld [vmem:[%s1 + $0x268] sm:$0xff]
  %v100 = vld [vmem:[%s1 + $0x270] sm:$0xff]
  %v101 = vld [vmem:[%s1 + $0x278] sm:$0xff]
  %v102 = vld [vmem:[%s1 + $0x280] sm:$0xff]
  %v103 = vld [vmem:[%s1 + $0x288] sm:$0xff]
  %v104 = vld [vmem:[%s1 + $0x290] sm:$0xff]
  %v105 = vld [vmem:[%s1 + $0x298] sm:$0xff]
  %v106 = vld [vmem:[%s1 + $0x2a0] sm:$0xff]
  %v107 = vld [vmem:[%s1 + $0x2a8] sm:$0xff]
  %v108 = vld [vmem:[%s1 + $0x2b0] sm:$0xff]
  %v109 = vld [vmem:[%s1 + $0x2b8] sm:$0xff]
  %v110 = vld [vmem:[%s1 + $0x2c0] sm:$0xff]
  %v111 = vld [vmem:[%s1 + $0x2c8] sm:$0xff]
  %v112 = vld [vmem:[%s1 + $0x2d0] sm:$0xff]
  %v113 = vld [vmem:[%s1 + $0x2d8] sm:$0xff]
  %v114 = vld [vmem:[%s1 + $0x2e0] sm:$0xff]
  %v115 = vld [vmem:[%s1 + $0x2e8] sm:$0xff]
  %v116 = vld [vmem:[%s1 + $0x2f0] sm:$0xff]
  %v117 = vld [vmem:[%s1 + $0x2f8] sm:$0xff]
  %v118 = vld [vmem:[%s1 + $0x300] sm:$0xff]
  %v119 = vld [vmem:[%s1 + $0x308] sm:$0xff]
  %v120 = vld [vmem:[%s1 + $0x310] sm:$0xff]
  %v121 = vld [vmem:[%s1 + $0x318] sm:$0xff]
  %v122 = vld [vmem:[%s1 + $0x320] sm:$0xff]
  %v123 = vld [vmem:[%s1 + $0x328] sm:$0xff]
  %v124 = vld [vmem:[%s1 + $0x330] sm:$0xff]
  %v125 = vld [vmem:[%s1 + $0x338] sm:$0xff]
  %v126 = vld [vmem:[%s1 + $0x340] sm:$0xff]
  %v127 = vld [vmem:[%s1 + $0x348] sm:$0xff]
  %v128 = vld [vmem:[%s1 + $0x350] sm:$0xff]
  %v129 = vld [vmem:[%s1 + $0x358] sm:$0xff]
  %v130 = vld [vmem:[%s1 + $0x360] sm:$0xff]
  %v131 = vld [vmem:[%s1 + $0x368] sm:$0xff]
  %v132 = vld [vmem:[%s1 + $0x370] sm:$0xff]
  %v133 = vld [vmem:[%s1 + $0x378] sm:$0xff]
  %v134 = vld [vmem:[%s1 + $0x380] sm:$0xff]
  %v135 = vld [vmem:[%s1 + $0x388] sm:$0xff]
  %v136 = vld [vmem:[%s1 + $0x390] sm:$0xff]
  %v137 = vld [vmem:[%s1 + $0x398] sm:$0xff]
  %v138 = vld [vmem:[%s1 + $0x3a0] sm:$0xff]
  %v139 = vld [vmem:[%s1 + $0x3a8] sm:$0xff]
  %v140 = vld [vmem:[%s1 + $0x3b0] sm:$0xff]
  %v141 = vld [vmem:[%s1 + $0x3b8] sm:$0xff]
  %v142 = vld [vmem:[%s1 + $0x3c0] sm:$0xff]
  %v143 = vld [vmem:[%s1 + $0x3c8] sm:$0xff]
  %v144 = vld [vmem:[%s1 + $0x3d0] sm:$0xff]
  %v145 = vld [vmem:[%s1 + $0x3d8] sm:$0xff]
  %v146 = vld [vmem:[%s1 + $0x3e0] sm:$0xff]
  %v147 = vld [vmem:[%s1 + $0x3e8] sm:$0xff]
  %v148 = vld [vmem:[%s1 + $0x3f0] sm:$0xff]
  %v149 = vld [vmem:[%s1 + $0x3f8] sm:$0xff]
  %v150 = vld [vmem:[%s1 + $0x400] sm:$0xff]
  %v151 = vld [vmem:[%s1 + $0x408] sm:$0xff]
  %v152 = vld [vmem:[%s1 + $0x410] sm:$0xff]
  %v153 = vld [vmem:[%s1 + $0x418] sm:$0xff]
  %v154 = vld [vmem:[%s1 + $0x420] sm:$0xff]
  %v155 = vld [vmem:[%s1 + $0x428] sm:$0xff]
  %v156 = vld [vmem:[%s1 + $0x430] sm:$0xff]
  %v157 = vld [vmem:[%s1 + $0x438] sm:$0xff]
  %v158 = vld [vmem:[%s1 + $0x440] sm:$0xff]
  %v159 = vld [vmem:[%s1 + $0x448] sm:$0xff]
  %v160 = vld [vmem:[%s1 + $0x450] sm:$0xff]
  %v161 = vld [vmem:[%s1 + $0x458] sm:$0xff]
  %v162 = vld [vmem:[%s1 + $0x460] sm:$0xff]
  %v163 = vld [vmem:[%s1 + $0x468] sm:$0xff]
  %v164 = vld [vmem:[%s1 + $0x470] sm:$0xff]
  %v165 = vld [vmem:[%s1 + $0x478] sm:$0xff]
  %166 = vmatprep.subr.mxu0 0.0
  %167 = vmatpush1.msra.mxu0 %v22
  %168 = vmatprep.subr.mxu0 0.0
  %169 = vmatpush1.msra.mxu0 %v23
  %170 = vmatprep.subr.mxu0 0.0
  %171 = vmatpush1.msra.mxu0 %v24
  %172 = vmatprep.subr.mxu0 0.0
  %173 = vmatpush1.msra.mxu0 %v25
  %174 = vmatprep.subr.mxu0 0.0
  %175 = vmatpush1.msra.mxu0 %v26
  %176 = vmatprep.subr.mxu0 0.0
  %177 = vmatpush1.msra.mxu0 %v27
  %178 = vmatprep.subr.mxu0 0.0
  %179 = vmatpush1.msra.mxu0 %v28
  %180 = vmatprep.subr.mxu0 0.0
  %181 = vmatpush1.msra.mxu0 %v29
  %182 = vmatprep.subr.mxu0 0.0
  %183 = vmatpush1.msra.mxu0 %v30
  %184 = vmatprep.subr.mxu0 0.0
  %185 = vmatpush1.msra.mxu0 %v31
  %186 = vmatprep.subr.mxu0 0.0
  %187 = vmatpush1.msra.mxu0 %v32
  %188 = vmatprep.subr.mxu0 0.0
  %189 = vmatpush1.msra.mxu0 %v33
  %190 = vmatprep.subr.mxu0 0.0
  %191 = vmatpush1.msra.mxu0 %v34
  %192 = vmatprep.subr.mxu0 0.0
  %193 = vmatpush1.msra.mxu0 %v35
  %194 = vmatprep.subr.mxu0 0.0
  %195 = vmatpush1.msra.mxu0 %v36
  %196 = vmatprep.subr.mxu0 0.0
  %197 = vmatpush1.msra.mxu0 %v37
  %198 = vmatprep.subr.mxu0 0.0
  %199 = vmatpush1.msra.mxu0 %v38
  %200 = vmatprep.subr.mxu0 0.0
  %201 = vmatpush1.msra.mxu0 %v39
  %202 = vmatprep.subr.mxu0 0.0
  %203 = vmatpush1.msra.mxu0 %v40
  %204 = vmatprep.subr.mxu0 0.0
  %205 = vmatpush1.msra.mxu0 %v41
  %206 = vmatprep.subr.mxu0 0.0
  %207 = vmatpush1.msra.mxu0 %v42
  %208 = vmatprep.subr.mxu0 0.0
  %209 = vmatpush1.msra.mxu0 %v43
  %210 = vmatprep.subr.mxu0 0.0
  %211 = vmatpush1.msra.mxu0 %v44
  %212 = vmatprep.subr.mxu0 0.0
  %213 = vmatpush1.msra.mxu0 %v45
  %214 = vmatprep.subr.mxu0 0.0
  %215 = vmatpush1.msra.mxu0 %v46
  %216 = vmatprep.subr.mxu0 0.0
  %217 = vmatpush1.msra.mxu0 %v47
  %218 = vmatprep.subr.mxu0 0.0
  %219 = vmatpush1.msra.mxu0 %v48
  %220 = vmatprep.subr.mxu0 0.0
  %221 = vmatpush1.msra.mxu0 %v49
  %222 = vmatprep.subr.mxu0 0.0
  %223 = vmatpush1.msra.mxu0 %v50
  %224 = vmatprep.subr.mxu0 0.0
  %225 = vmatpush1.msra.mxu0 %v51
  %226 = vmatprep.subr.mxu0 0.0
  %227 = vmatpush1.msra.mxu0 %v52
  %228 = vmatprep.subr.mxu0 0.0
  %229 = vmatpush1.msra.mxu0 %v53
  %230 = vmatprep.mubr.f32.mxu0 %v14
  %231 = vmatmul.mubr.f32.gmra.mrb[0].mxu0 %v13
  %v232 = vpop.f32.mrb[0].mxu0
  %v233 = vadd.f32 0.0, %v232
  %v234 = vpop.f32.mrb[0].mxu0
  %235 = vdwg.mxu0
  %236 = vmatprep.subr.mxu0 0.0
  %237 = vmatpush1.msra.mxu0 %v54
  %238 = vmatprep.subr.mxu0 0.0
  %239 = vmatpush1.msra.mxu0 %v55
  %240 = vmatprep.subr.mxu0 0.0
  %241 = vmatpush1.msra.mxu0 %v56
  %242 = vmatprep.subr.mxu0 0.0
  %243 = vmatpush1.msra.mxu0 %v57
  %244 = vmatprep.subr.mxu0 0.0
  %245 = vmatpush1.msra.mxu0 %v58
  %246 = vmatprep.subr.mxu0 0.0
  %247 = vmatpush1.msra.mxu0 %v59
  %248 = vmatprep.subr.mxu0 0.0
  %249 = vmatpush1.msra.mxu0 %v60
  %250 = vmatprep.subr.mxu0 0.0
  %251 = vmatpush1.msra.mxu0 %v61
  %252 = vmatprep.subr.mxu0 0.0
  %253 = vmatpush1.msra.mxu0 %v62
  %254 = vmatprep.subr.mxu0 0.0
  %255 = vmatpush1.msra.mxu0 %v63
  %256 = vmatprep.subr.mxu0 0.0
  %257 = vmatpush1.msra.mxu0 %v64
  %258 = vmatprep.subr.mxu0 0.0
  %259 = vmatpush1.msra.mxu0 %v65
  %260 = vmatprep.subr.mxu0 0.0
  %261 = vmatpush1.msra.mxu0 %v66
  %262 = vmatprep.subr.mxu0 0.0
  %263 = vmatpush1.msra.mxu0 %v67
  %264 = vmatprep.subr.mxu0 0.0
  %265 = vmatpush1.msra.mxu0 %v68
  %266 = vmatprep.subr.mxu0 0.0
  %267 = vmatpush1.msra.mxu0 %v69
  %268 = vmatprep.subr.mxu0 0.0
  %269 = vmatpush1.msra.mxu0 %v70
  %270 = vmatprep.subr.mxu0 0.0
  %271 = vmatpush1.msra.mxu0 %v71
  %272 = vmatprep.subr.mxu0 0.0
  %273 = vmatpush1.msra.mxu0 %v72
  %274 = vmatprep.subr.mxu0 0.0
  %275 = vmatpush1.msra.mxu0 %v73
  %276 = vmatprep.subr.mxu0 0.0
  %277 = vmatpush1.msra.mxu0 %v74
  %278 = vmatprep.subr.mxu0 0.0
  %279 = vmatpush1.msra.mxu0 %v75
  %280 = vmatprep.subr.mxu0 0.0
  %281 = vmatpush1.msra.mxu0 %v76
  %282 = vmatprep.subr.mxu0 0.0
  %283 = vmatpush1.msra.mxu0 %v77
  %284 = vmatprep.subr.mxu0 0.0
  %285 = vmatpush1.msra.mxu0 %v78
  %286 = vmatprep.subr.mxu0 0.0
  %287 = vmatpush1.msra.mxu0 %v79
  %288 = vmatprep.subr.mxu0 0.0
  %289 = vmatpush1.msra.mxu0 %v80
  %290 = vmatprep.subr.mxu0 0.0
  %291 = vmatpush1.msra.mxu0 %v81
  %292 = vmatprep.subr.mxu0 0.0
  %293 = vmatpush1.msra.mxu0 %v82
  %294 = vmatprep.subr.mxu0 0.0
  %295 = vmatpush1.msra.mxu0 %v83
  %296 = vmatprep.subr.mxu0 0.0
  %297 = vmatpush1.msra.mxu0 %v84
  %298 = vmatprep.subr.mxu0 0.0
  %299 = vmatpush1.msra.mxu0 %v85
  %300 = vmatprep.mubr.f32.mxu0 %v16
  %301 = vmatmul.mubr.f32.gmra.mrb[0].mxu0 %v15
  %v302 = vpop.f32.mrb[0].mxu0
  %v303 = vadd.f32 %v233, %v302
  %v304 = vpop.f32.mrb[0].mxu0
  %305 = vdwg.mxu0
  %306 = vmatprep.subr.mxu0 0.0
  %307 = vmatpush1.msra.mxu0 %v86
  %308 = vmatprep.subr.mxu0 0.0
  %309 = vmatpush1.msra.mxu0 %v87
  %310 = vmatprep.subr.mxu0 0.0
  %311 = vmatpush1.msra.mxu0 %v88
  %312 = vmatprep.subr.mxu0 0.0
  %313 = vmatpush1.msra.mxu0 %v89
  %314 = vmatprep.subr.mxu0 0.0
  %315 = vmatpush1.msra.mxu0 %v90
  %316 = vmatprep.subr.mxu0 0.0
  %317 = vmatpush1.msra.mxu0 %v91
  %318 = vmatprep.subr.mxu0 0.0
  %319 = vmatpush1.msra.mxu0 %v92
  %320 = vmatprep.subr.mxu0 0.0
  %321 = vmatpush1.msra.mxu0 %v93
  %322 = vmatprep.subr.mxu0 0.0
  %323 = vmatpush1.msra.mxu0 %v94
  %324 = vmatprep.subr.mxu0 0.0
  %325 = vmatpush1.msra.mxu0 %v95
  %326 = vmatprep.subr.mxu0 0.0
  %327 = vmatpush1.msra.mxu0 %v96
  %328 = vmatprep.subr.mxu0 0.0
  %329 = vmatpush1.msra.mxu0 %v97
  %330 = vmatprep.subr.mxu0 0.0
  %331 = vmatpush1.msra.mxu0 %v98
  %332 = vmatprep.subr.mxu0 0.0
  %333 = vmatpush1.msra.mxu0 %v99
  %334 = vmatprep.subr.mxu0 0.0
  %335 = vmatpush1.msra.mxu0 %v100
  %336 = vmatprep.subr.mxu0 0.0
  %337 = vmatpush1.msra.mxu0 %v101
  %338 = vmatprep.subr.mxu0 0.0
  %339 = vmatpush1.msra.mxu0 %v102
  %340 = vmatprep.subr.mxu0 0.0
  %341 = vmatpush1.msra.mxu0 %v103
  %342 = vmatprep.subr.mxu0 0.0
  %343 = vmatpush1.msra.mxu0 %v104
  %344 = vmatprep.subr.mxu0 0.0
  %345 = vmatpush1.msra.mxu0 %v105
  %346 = vmatprep.subr.mxu0 0.0
  %347 = vmatpush1.msra.mxu0 %v106
  %348 = vmatprep.subr.mxu0 0.0
  %349 = vmatpush1.msra.mxu0 %v107
  %350 = vmatprep.subr.mxu0 0.0
  %351 = vmatpush1.msra.mxu0 %v108
  %352 = vmatprep.subr.mxu0 0.0
  %353 = vmatpush1.msra.mxu0 %v109
  %354 = vmatprep.subr.mxu0 0.0
  %355 = vmatpush1.msra.mxu0 %v110
  %356 = vmatprep.subr.mxu0 0.0
  %357 = vmatpush1.msra.mxu0 %v111
  %358 = vmatprep.subr.mxu0 0.0
  %359 = vmatpush1.msra.mxu0 %v112
  %360 = vmatprep.subr.mxu0 0.0
  %361 = vmatpush1.msra.mxu0 %v113
  %362 = vmatprep.subr.mxu0 0.0
  %363 = vmatpush1.msra.mxu0 %v114
  %364 = vmatprep.subr.mxu0 0.0
  %365 = vmatpush1.msra.mxu0 %v115
  %366 = vmatprep.subr.mxu0 0.0
  %367 = vmatpush1.msra.mxu0 %v116
  %368 = vmatprep.subr.mxu0 0.0
  %369 = vmatpush1.msra.mxu0 %v117
  %370 = vmatprep.mubr.f32.mxu0 %v18
  %371 = vmatmul.mubr.f32.gmra.mrb[0].mxu0 %v17
  %v372 = vpop.f32.mrb[0].mxu0
  %v373 = vadd.f32 %v303, %v372
  %v374 = vpop.f32.mrb[0].mxu0
  %375 = vdwg.mxu0
  %376 = vmatprep.subr.mxu0 0.0
  %377 = vmatpush1.msra.mxu0 %v118
  %378 = vmatprep.subr.mxu0 0.0
  %379 = vmatpush1.msra.mxu0 %v119
  %380 = vmatprep.subr.mxu0 0.0
  %381 = vmatpush1.msra.mxu0 %v120
  %382 = vmatprep.subr.mxu0 0.0
  %383 = vmatpush1.msra.mxu0 %v121
  %384 = vmatprep.subr.mxu0 0.0
  %385 = vmatpush1.msra.mxu0 %v122
  %386 = vmatprep.subr.mxu0 0.0
  %387 = vmatpush1.msra.mxu0 %v123
  %388 = vmatprep.subr.mxu0 0.0
  %389 = vmatpush1.msra.mxu0 %v124
  %390 = vmatprep.subr.mxu0 0.0
  %391 = vmatpush1.msra.mxu0 %v125
  %392 = vmatprep.subr.mxu0 0.0
  %393 = vmatpush1.msra.mxu0 %v126
  %394 = vmatprep.subr.mxu0 0.0
  %395 = vmatpush1.msra.mxu0 %v127
  %396 = vmatprep.subr.mxu0 0.0
  %397 = vmatpush1.msra.mxu0 %v128
  %398 = vmatprep.subr.mxu0 0.0
  %399 = vmatpush1.msra.mxu0 %v129
  %400 = vmatprep.subr.mxu0 0.0
  %401 = vmatpush1.msra.mxu0 %v130
  %402 = vmatprep.subr.mxu0 0.0
  %403 = vmatpush1.msra.mxu0 %v131
  %404 = vmatprep.subr.mxu0 0.0
  %405 = vmatpush1.msra.mxu0 %v132
  %406 = vmatprep.subr.mxu0 0.0
  %407 = vmatpush1.msra.mxu0 %v133
  %408 = vmatprep.subr.mxu0 0.0
  %409 = vmatpush1.msra.mxu0 %v134
  %410 = vmatprep.subr.mxu0 0.0
  %411 = vmatpush1.msra.mxu0 %v135
  %412 = vmatprep.subr.mxu0 0.0
  %413 = vmatpush1.msra.mxu0 %v136
  %414 = vmatprep.subr.mxu0 0.0
  %415 = vmatpush1.msra.mxu0 %v137
  %416 = vmatprep.subr.mxu0 0.0
  %417 = vmatpush1.msra.mxu0 %v138
  %418 = vmatprep.subr.mxu0 0.0
  %419 = vmatpush1.msra.mxu0 %v139
  %420 = vmatprep.subr.mxu0 0.0
  %421 = vmatpush1.msra.mxu0 %v140
  %422 = vmatprep.subr.mxu0 0.0
  %423 = vmatpush1.msra.mxu0 %v141
  %424 = vmatprep.subr.mxu0 0.0
  %425 = vmatpush1.msra.mxu0 %v142
  %426 = vmatprep.subr.mxu0 0.0
  %427 = vmatpush1.msra.mxu0 %v143
  %428 = vmatprep.subr.mxu0 0.0
  %429 = vmatpush1.msra.mxu0 %v144
  %430 = vmatprep.subr.mxu0 0.0
  %431 = vmatpush1.msra.mxu0 %v145
  %432 = vmatprep.subr.mxu0 0.0
  %433 = vmatpush1.msra.mxu0 %v146
  %434 = vmatprep.subr.mxu0 0.0
  %435 = vmatpush1.msra.mxu0 %v147
  %436 = vmatprep.subr.mxu0 0.0
  %437 = vmatpush1.msra.mxu0 %v148
  %438 = vmatprep.subr.mxu0 0.0
  %439 = vmatpush1.msra.mxu0 %v149
  %440 = vmatprep.mubr.f32.mxu0 %v20
  %441 = vmatmul.mubr.f32.gmra.mrb[0].mxu0 %v19
  %v442 = vpop.f32.mrb[0].mxu0
  %v443 = vadd.f32 %v373, %v442
  %v444 = vpop.f32.mrb[0].mxu0
  %445 = vdwg.mxu0
  %446 = vmatprep.subr.mxu0 0.0
  %447 = vmatpush1.msra.mxu0 %v150
  %448 = vmatprep.subr.mxu0 0.0
  %449 = vmatpush1.msra.mxu0 %v151
  %450 = vmatprep.subr.mxu0 0.0
  %451 = vmatpush1.msra.mxu0 %v152
  %452 = vmatprep.subr.mxu0 0.0
  %453 = vmatpush1.msra.mxu0 %v153
  %454 = vmatprep.subr.mxu0 0.0
  %455 = vmatpush1.msra.mxu0 %v154
  %456 = vmatprep.subr.mxu0 0.0
  %457 = vmatpush1.msra.mxu0 %v155
  %458 = vmatprep.subr.mxu0 0.0
  %459 = vmatpush1.msra.mxu0 %v156
  %460 = vmatprep.subr.mxu0 0.0
  %461 = vmatpush1.msra.mxu0 %v157
  %462 = vmatprep.subr.mxu0 0.0
  %463 = vmatpush1.msra.mxu0 %v158
  %464 = vmatprep.subr.mxu0 0.0
  %465 = vmatpush1.msra.mxu0 %v159
  %466 = vmatprep.subr.mxu0 0.0
  %467 = vmatpush1.msra.mxu0 %v160
  %468 = vmatprep.subr.mxu0 0.0
  %469 = vmatpush1.msra.mxu0 %v161
  %470 = vmatprep.subr.mxu0 0.0
  %471 = vmatpush1.msra.mxu0 %v162
  %472 = vmatprep.subr.mxu0 0.0
  %473 = vmatpush1.msra.mxu0 %v163
  %474 = vmatprep.subr.mxu0 0.0
  %475 = vmatpush1.msra.mxu0 %v164
  %476 = vmatprep.subr.mxu0 0.0
  %477 = vmatpush1.msra.mxu0 %v165
  %478 = vmatprep.subr.mxu0 0.0
  %479 = vmatpush1.msra.mxu0 0.0
  %480 = vmatprep.subr.mxu0 0.0
  %481 = vmatpush1.msra.mxu0 0.0
  %482 = vmatprep.subr.mxu0 0.0
  %483 = vmatpush1.msra.mxu0 0.0
  %484 = vmatprep.subr.mxu0 0.0
  %485 = vmatpush1.msra.mxu0 0.0
  %486 = vmatprep.subr.mxu0 0.0
  %487 = vmatpush1.msra.mxu0 0.0
  %488 = vmatprep.subr.mxu0 0.0
  %489 = vmatpush1.msra.mxu0 0.0
  %490 = vmatprep.subr.mxu0 0.0
  %491 = vmatpush1.msra.mxu0 0.0
  %492 = vmatprep.subr.mxu0 0.0
  %493 = vmatpush1.msra.mxu0 0.0
  %494 = vmatprep.subr.mxu0 0.0
  %495 = vmatpush1.msra.mxu0 0.0
  %496 = vmatprep.subr.mxu0 0.0
  %497 = vmatpush1.msra.mxu0 0.0
  %498 = vmatprep.subr.mxu0 0.0
  %499 = vmatpush1.msra.mxu0 0.0
  %500 = vmatprep.subr.mxu0 0.0
  %501 = vmatpush1.msra.mxu0 0.0
  %502 = vmatprep.subr.mxu0 0.0
  %503 = vmatpush1.msra.mxu0 0.0
  %504 = vmatprep.subr.mxu0 0.0
  %505 = vmatpush1.msra.mxu0 0.0
  %506 = vmatprep.subr.mxu0 0.0
  %507 = vmatpush1.msra.mxu0 0.0
  %508 = vmatprep.subr.mxu0 0.0
  %509 = vmatpush1.msra.mxu0 0.0
  %510 = vmatprep.mubr.f32.mxu0 0.0
  %511 = vmatmul.mubr.f32.gmra.mrb[0].mxu0 %v21
  %v512 = vpop.f32.mrb[0].mxu0
  %v513 = vadd.f32 %v443, %v512
  %v514 = vpop.f32.mrb[0].mxu0
  %515 = vdwg.mxu0
  %516 = vst [vmem:[%s2] sm:$0xff] %v513
  %v517 = vrot.slane %v513, 4
  %v518 = vadd.f32 %v513, %v517
  %v519 = vrot.slane %v518, 2
  %v520 = vadd.f32 %v518, %v519
  %v521 = vrot.slane %v520, 1
  %v522 = vadd.f32 %v520, %v521
  %v523 = vmul.f32 %v513, %v513
  %v524 = vrot.slane %v523, 4
  %v525 = vadd.f32 %v523, %v524
  %v526 = vrot.slane %v525, 2
  %v527 = vadd.f32 %v525, %v526
  %v528 = vrot.slane %v527, 1
  %v529 = vadd.f32 %v527, %v528
  %v530 = vlaneseq
  %v531 = vshrl.u32 %v530, 7
  %vm532 = vcmp.eq.s32.totalorder %v531, 0
  %vm533 = vcmp.eq.s32.totalorder %v531, 1
  %v534 = vsel %vm533, %v529, 0.0
  %v535 = vsel %vm532, %v522, %v534
  %536 = vst [vmem:[%s3] sm:$0xff] %v535
  // Predicated region
  $region10: #{resnet_forward.68} parent=0 // pred_check
    _
  $region11: #{resnet_forward.68} parent=0 // pred_check_branch
    %538 = sbr.rel (0) target = $region13
  $region12: #{resnet_forward.68} parent=0 // pred_region
    _
  $region13: #{resnet_forward.68} parent=0 // pred_fallthru
    _
  // Predicated region
  $region14: #{resnet_forward.68} parent=0 // pred_check
    _
  $region15: #{resnet_forward.68} parent=0 // pred_check_branch
    %540 = sbr.rel (0) target = $region17
  $region16: #{resnet_forward.68} parent=0 // pred_region
    _
  $region17: #{resnet_forward.68} parent=0 // pred_fallthru
    _
  // Predicated region
  $region18: #{resnet_forward.68} parent=0 // pred_check
    _
  $region19: #{resnet_forward.68} parent=0 // pred_check_branch
    %542 = sbr.rel (0) target = $region21
  $region20: #{resnet_forward.68} parent=0 // pred_region
    _
  $region21: #{resnet_forward.68} parent=0 // pred_fallthru
    _
  // Predicated region
  $region22: #{resnet_forward.68} parent=0 // pred_check
    _
  $region23: #{resnet_forward.68} parent=0 // pred_check_branch
    %544 = sbr.rel (0) target = $region25
  $region24: #{resnet_forward.68} parent=0 // pred_region
    _
  $region25: #{resnet_forward.68} parent=0 // pred_fallthru
    _

// kernel: resnet_forward.73
$region0: #{resnet_forward.73}
  #allocation0 [shape = 'u32[]', space=smem, size = 0x4, offset = 0x4, fixed_abs, tag = 'smem constant byte address 0x4 - core index']
  #allocation1 [shape = 'u32[144,128]{1,0:T(1,128)}', space=vmem, size = 0x12000, scoped, tag = 'internal scratch']
  %s0 = inlined_call_operand.vmem [shape: f32[8,128], index: 0, kind: input, shape index: {}]
  %s1 = inlined_call_operand.vmem [shape: f32[1,128], index: 1, kind: input, shape index: {}]
  %s2 = inlined_call_operand.vmem [shape: f32[1,128], index: 2, kind: input, shape index: {}]
  %s3 = inlined_call_operand.vmem [shape: f32[8,128], index: 3, kind: input, shape index: {}]
  %s4 = inlined_call_operand.vmem [shape: f32[8,128], index: 4, kind: output, shape index: {}]
  %s5 = sld [smem:[#allocation0]]
  $region26: #{resnet_forward.73} parent=0
    _
  %s7 = ssub.s32 1, %s5
  %s8 = scalar_select 0, %s7, %s5
  // Predicated region
  $region2: #{resnet_forward.73} parent=0 // pred_check
    _
  $region3: #{resnet_forward.73} parent=0 // pred_check_branch
    %10 = sbr.rel (0) target = $region5
  $region4: #{resnet_forward.73} parent=0 // pred_region
    _
  $region5: #{resnet_forward.73} parent=0 // pred_fallthru
    _
  // Predicated region
  $region6: #{resnet_forward.73} parent=0 // pred_check
    _
  $region7: #{resnet_forward.73} parent=0 // pred_check_branch
    %12 = sbr.rel (0) target = $region9
  $region8: #{resnet_forward.73} parent=0 // pred_region
    _
  $region9: #{resnet_forward.73} parent=0 // pred_fallthru
    _
  // Predicated region
  $region10: #{resnet_forward.73} parent=0 // pred_check
    _
  $region11: #{resnet_forward.73} parent=0 // pred_check_branch
    %14 = sbr.rel (0) target = $region13
  $region12: #{resnet_forward.73} parent=0 // pred_region
    _
  $region13: #{resnet_forward.73} parent=0 // pred_fallthru
    _
  // Predicated region
  $region14: #{resnet_forward.73} parent=0 // pred_check
    _
  $region15: #{resnet_forward.73} parent=0 // pred_check_branch
    %16 = sbr.rel (0) target = $region17
  $region16: #{resnet_forward.73} parent=0 // pred_region
    _
  $region17: #{resnet_forward.73} parent=0 // pred_fallthru
    _
  %v17 = vld [vmem:[%s0] sm:$0xff]
  %v18 = vld [vmem:[%s1] sm:$0x1]
  %v20 = vlaneseq
  %v21 = vshrl.u32 %v20, 7
  %v22 = vsub.s32 0, %v21
  %v23 = vrot.slane %v18, %v22
  %v25 = vmul.f32 %v17, %v23
  %v26 = vld [vmem:[%s2] sm:$0x1]
  %v28 = vlaneseq
  %v29 = vshrl.u32 %v28, 7
  %v30 = vsub.s32 0, %v29
  %v31 = vrot.slane %v26, %v30
  %v33 = vadd.f32 %v25, %v31
  %v34 = vld [vmem:[%s3] sm:$0xff]
  %v35 = vadd.f32 %v33, %v34
  %v36 = vmax.f32 %v35, 0.0
  %37 = vst [vmem:[%s4] sm:$0xff] %v36
  // Predicated region
  $region18: #{resnet_forward.73} parent=0 // pred_check
    _
  $region19: #{resnet_forward.73} parent=0 // pred_check_branch
    %39 = sbr.rel (0) target = $region21
  $region20: #{resnet_forward.73} parent=0 // pred_region
    _
  $region21: #{resnet_forward.73} parent=0 // pred_fallthru
    _
  // Predicated region
  $region22: #{resnet_forward.73} parent=0 // pred_check
    _
  $region23: #{resnet_forward.73} parent=0 // pred_check_branch
    %41 = sbr.rel (0) target = $region25
  $region24: #{resnet_forward.73} parent=0 // pred_region
    _
  $region25: #{resnet_forward.73} parent=0 // pred_fallthru
    _

// kernel: resnet_forward.88
$region0: #{resnet_forward.88}
  #allocation0 [shape = 'u32[]', space=smem, size = 0x4, offset = 0x4, fixed_abs, tag = 'smem constant byte address 0x4 - core index']
  #allocation1 [shape = 'u32[144,128]{1,0:T(1,128)}', space=vmem, size = 0x12000, scoped, tag = 'internal scratch']
  %s0 = inlined_call_operand.vmem [shape: f32[8,1,128], index: 0, kind: input, shape index: {}]
  %s1 = inlined_call_operand.vmem [shape: f32[8,128], index: 1, kind: output, shape index: {}]
  %s2 = sld [smem:[#allocation0]]
  $region14: #{resnet_forward.88} parent=0
    _
  %s4 = ssub.s32 1, %s2
  %s5 = scalar_select 0, %s4, %s2
  // Predicated region
  $region2: #{resnet_forward.88} parent=0 // pred_check
    _
  $region3: #{resnet_forward.88} parent=0 // pred_check_branch
    %7 = sbr.rel (0) target = $region5
  $region4: #{resnet_forward.88} parent=0 // pred_region
    _
  $region5: #{resnet_forward.88} parent=0 // pred_fallthru
    _
  %v8 = vld [vmem:[%s0] sm:$0x1]
  %v9 = vld [vmem:[%s0 + $0x1] sm:$0x1]
  %v10 = vld [vmem:[%s0 + $0x2] sm:$0x1]
  %v11 = vld [vmem:[%s0 + $0x3] sm:$0x1]
  %v12 = vld [vmem:[%s0 + $0x4] sm:$0x1]
  %v13 = vld [vmem:[%s0 + $0x5] sm:$0x1]
  %v14 = vld [vmem:[%s0 + $0x6] sm:$0x1]
  %v15 = vld [vmem:[%s0 + $0x7] sm:$0x1]
  %v16 = vadd.f32 %v8, 0.0
  %v17 = vadd.f32 %v9, 0.0
  %v18 = vadd.f32 %v10, 0.0
  %v19 = vadd.f32 %v11, 0.0
  %v20 = vadd.f32 %v12, 0.0
  %v21 = vadd.f32 %v13, 0.0
  %v22 = vadd.f32 %v14, 0.0
  %v23 = vadd.f32 %v15, 0.0
  %v32 = vcombine.low %v16, %v17
  %v33 = vcombine.low %v18, %v19
  %v34 = vcombine.low %v20, %v21
  %v35 = vcombine.low %v22, %v23
  %v37 = vunpack.c.l.s4 1966171168
  %v38 = vunpack.c.0.s8 %v37
  %v39 = vlaneseq
  %v40 = vshrl.u32 %v39, 7
  %v41 = vsub.s32 %v38, %v40
  %v42 = vrot.slane %v32, %v41
  %v44 = vunpack.c.l.s4 1966171168
  %v45 = vunpack.c.0.s8 %v44
  %v46 = vlaneseq
  %v47 = vshrl.u32 %v46, 7
  %v48 = vsub.s32 %v45, %v47
  %v49 = vrot.slane %v33, %v48
  %v51 = vunpack.c.l.s4 1966171168
  %v52 = vunpack.c.0.s8 %v51
  %v53 = vlaneseq
  %v54 = vshrl.u32 %v53, 7
  %v55 = vsub.s32 %v52, %v54
  %v56 = vrot.slane %v34, %v55
  %v58 = vunpack.c.l.s4 1966171168
  %v59 = vunpack.c.0.s8 %v58
  %v60 = vlaneseq
  %v61 = vshrl.u32 %v60, 7
  %v62 = vsub.s32 %v59, %v61
  %v63 = vrot.slane %v35, %v62
  %v64 = vcombine.low %v42, %v49
  %v65 = vcombine.low %v56, %v63
  %v67 = vunpack.c.l.s4 1966171168
  %v68 = vunpack.c.0.s8 %v67
  %v69 = vlaneseq
  %v70 = vshrl.u32 %v69, 7
  %v71 = vsub.s32 %v68, %v70
  %v72 = vrot.slane %v64, %v71
  %v74 = vunpack.c.l.s4 1966171168
  %v75 = vunpack.c.0.s8 %v74
  %v76 = vlaneseq
  %v77 = vshrl.u32 %v76, 7
  %v78 = vsub.s32 %v75, %v77
  %v79 = vrot.slane %v65, %v78
  %v80 = vcombine.low %v72, %v79
  %82 = vst [vmem:[%s1] sm:$0xff] %v80
  // Predicated region
  $region6: #{resnet_forward.88} parent=0 // pred_check
    _
  $region7: #{resnet_forward.88} parent=0 // pred_check_branch
    %84 = sbr.rel (0) target = $region9
  $region8: #{resnet_forward.88} parent=0 // pred_region
    _
  $region9: #{resnet_forward.88} parent=0 // pred_fallthru
    _
  // Predicated region
  $region10: #{resnet_forward.88} parent=0 // pred_check
    _
  $region11: #{resnet_forward.88} parent=0 // pred_check_branch
    %86 = sbr.rel (0) target = $region13
  $region12: #{resnet_forward.88} parent=0 // pred_region
    _
  $region13: #{resnet_forward.88} parent=0 // pred_fallthru
    _

// kernel: resnet_forward.89
$region0: #{resnet_forward.89}
  #allocation0 [shape = 'u32[]', space=smem, size = 0x4, offset = 0x4, fixed_abs, tag = 'smem constant byte address 0x4 - core index']
  #allocation1 [shape = 'u32[144,128]{1,0:T(1,128)}', space=vmem, size = 0x12000, scoped, tag = 'internal scratch']
  %s0 = inlined_call_operand.vmem [shape: f32[8,128], index: 0, kind: input, shape index: {}]
  %s1 = inlined_call_operand.vmem [shape: f32[128,128], index: 1, kind: input, shape index: {}]
  %s2 = inlined_call_operand.vmem [shape: f32[1,128], index: 2, kind: input, shape index: {}]
  %s3 = inlined_call_operand.vmem [shape: f32[8,128], index: 3, kind: output, shape index: {}]
  %s4 = sld [smem:[#allocation0]]
  $region22: #{resnet_forward.89} parent=0
    _
  %s6 = ssub.s32 1, %s4
  %s7 = scalar_select 0, %s6, %s4
  // Predicated region
  $region2: #{resnet_forward.89} parent=0 // pred_check
    _
  $region3: #{resnet_forward.89} parent=0 // pred_check_branch
    %9 = sbr.rel (0) target = $region5
  $region4: #{resnet_forward.89} parent=0 // pred_region
    _
  $region5: #{resnet_forward.89} parent=0 // pred_fallthru
    _
  // Predicated region
  $region6: #{resnet_forward.89} parent=0 // pred_check
    _
  $region7: #{resnet_forward.89} parent=0 // pred_check_branch
    %11 = sbr.rel (0) target = $region9
  $region8: #{resnet_forward.89} parent=0 // pred_region
    _
  $region9: #{resnet_forward.89} parent=0 // pred_fallthru
    _
  // Predicated region
  $region10: #{resnet_forward.89} parent=0 // pred_check
    _
  $region11: #{resnet_forward.89} parent=0 // pred_check_branch
    %13 = sbr.rel (0) target = $region13
  $region12: #{resnet_forward.89} parent=0 // pred_region
    _
  $region13: #{resnet_forward.89} parent=0 // pred_fallthru
    _
  %v14 = vld [vmem:[%s0] sm:$0xff]
  %v15 = vld [vmem:[%s1] sm:$0xff]
  %v16 = vld [vmem:[%s1 + $0x8] sm:$0xff]
  %v17 = vld [vmem:[%s1 + $0x10] sm:$0xff]
  %v18 = vld [vmem:[%s1 + $0x18] sm:$0xff]
  %v19 = vld [vmem:[%s1 + $0x20] sm:$0xff]
  %v20 = vld [vmem:[%s1 + $0x28] sm:$0xff]
  %v21 = vld [vmem:[%s1 + $0x30] sm:$0xff]
  %v22 = vld [vmem:[%s1 + $0x38] sm:$0xff]
  %v23 = vld [vmem:[%s1 + $0x40] sm:$0xff]
  %v24 = vld [vmem:[%s1 + $0x48] sm:$0xff]
  %v25 = vld [vmem:[%s1 + $0x50] sm:$0xff]
  %v26 = vld [vmem:[%s1 + $0x58] sm:$0xff]
  %v27 = vld [vmem:[%s1 + $0x60] sm:$0xff]
  %v28 = vld [vmem:[%s1 + $0x68] sm:$0xff]
  %v29 = vld [vmem:[%s1 + $0x70] sm:$0xff]
  %v30 = vld [vmem:[%s1 + $0x78] sm:$0xff]
  %v31 = vld [vmem:[%s2] sm:$0x1]
  %v33 = vlaneseq
  %v34 = vshrl.u32 %v33, 7
  %v35 = vsub.s32 0, %v34
  %v36 = vrot.slane %v31, %v35
  %38 = vmatprep.subr.mxu0 0.0
  %39 = vmatpush1.msra.mxu0 %v15
  %40 = vmatprep.subr.mxu0 0.0
  %41 = vmatpush1.msra.mxu0 %v16
  %42 = vmatprep.subr.mxu0 0.0
  %43 = vmatpush1.msra.mxu0 %v17
  %44 = vmatprep.subr.mxu0 0.0
  %45 = vmatpush1.msra.mxu0 %v18
  %46 = vmatprep.subr.mxu0 0.0
  %47 = vmatpush1.msra.mxu0 %v19
  %48 = vmatprep.subr.mxu0 0.0
  %49 = vmatpush1.msra.mxu0 %v20
  %50 = vmatprep.subr.mxu0 0.0
  %51 = vmatpush1.msra.mxu0 %v21
  %52 = vmatprep.subr.mxu0 0.0
  %53 = vmatpush1.msra.mxu0 %v22
  %54 = vmatprep.subr.mxu0 0.0
  %55 = vmatpush1.msra.mxu0 %v23
  %56 = vmatprep.subr.mxu0 0.0
  %57 = vmatpush1.msra.mxu0 %v24
  %58 = vmatprep.subr.mxu0 0.0
  %59 = vmatpush1.msra.mxu0 %v25
  %60 = vmatprep.subr.mxu0 0.0
  %61 = vmatpush1.msra.mxu0 %v26
  %62 = vmatprep.subr.mxu0 0.0
  %63 = vmatpush1.msra.mxu0 %v27
  %64 = vmatprep.subr.mxu0 0.0
  %65 = vmatpush1.msra.mxu0 %v28
  %66 = vmatprep.subr.mxu0 0.0
  %67 = vmatpush1.msra.mxu0 %v29
  %68 = vmatprep.subr.mxu0 0.0
  %69 = vmatpush1.msra.mxu0 %v30
  %70 = vmatprep.subr.mxu0 0.0
  %71 = vmatpush1.msra.mxu0 0.0
  %72 = vmatprep.subr.mxu0 0.0
  %73 = vmatpush1.msra.mxu0 0.0
  %74 = vmatprep.subr.mxu0 0.0
  %75 = vmatpush1.msra.mxu0 0.0
  %76 = vmatprep.subr.mxu0 0.0
  %77 = vmatpush1.msra.mxu0 0.0
  %78 = vmatprep.subr.mxu0 0.0
  %79 = vmatpush1.msra.mxu0 0.0
  %80 = vmatprep.subr.mxu0 0.0
  %81 = vmatpush1.msra.mxu0 0.0
  %82 = vmatprep.subr.mxu0 0.0
  %83 = vmatpush1.msra.mxu0 0.0
  %84 = vmatprep.subr.mxu0 0.0
  %85 = vmatpush1.msra.mxu0 0.0
  %86 = vmatprep.subr.mxu0 0.0
  %87 = vmatpush1.msra.mxu0 0.0
  %88 = vmatprep.subr.mxu0 0.0
  %89 = vmatpush1.msra.mxu0 0.0
  %90 = vmatprep.subr.mxu0 0.0
  %91 = vmatpush1.msra.mxu0 0.0
  %92 = vmatprep.subr.mxu0 0.0
  %93 = vmatpush1.msra.mxu0 0.0
  %94 = vmatprep.subr.mxu0 0.0
  %95 = vmatpush1.msra.mxu0 0.0
  %96 = vmatprep.subr.mxu0 0.0
  %97 = vmatpush1.msra.mxu0 0.0
  %98 = vmatprep.subr.mxu0 0.0
  %99 = vmatpush1.msra.mxu0 0.0
  %100 = vmatprep.subr.mxu0 0.0
  %101 = vmatpush1.msra.mxu0 0.0
  %102 = vmatprep.mubr.f32.mxu0 0.0
  %103 = vmatmul.mubr.f32.gmra.mrb[0].mxu0 %v14
  %v104 = vpop.f32.mrb[0].mxu0
  %v105 = vadd.f32 %v36, %v104
  %v106 = vpop.f32.mrb[0].mxu0
  %107 = vdwg.mxu0
  %108 = vst [vmem:[%s3] sm:$0xff] %v105
  // Predicated region
  $region14: #{resnet_forward.89} parent=0 // pred_check
    _
  $region15: #{resnet_forward.89} parent=0 // pred_check_branch
    %110 = sbr.rel (0) target = $region17
  $region16: #{resnet_forward.89} parent=0 // pred_region
    _
  $region17: #{resnet_forward.89} parent=0 // pred_fallthru
    _
  // Predicated region
  $region18: #{resnet_forward.89} parent=0 // pred_check
    _
  $region19: #{resnet_forward.89} parent=0 // pred_check_branch
    %112 = sbr.rel (0) target = $region21
  $region20: #{resnet_forward.89} parent=0 // pred_region
    _
  $region21: #{resnet_forward.89} parent=0 // pred_fallthru
    _

</llo_original>
